<compile_context>
chip_gen: v7x
topology: tpu7x:2x2x1
jax: 0.10.0
libtpu: 0.0.40
codegen_flags: <defaults>
</compile_context>

<pallas_src>
import jax
import jax.numpy as jnp
from jax.experimental import pallas as pl
from jax.experimental.pallas import tpu as pltpu

EPS = 1e-5            # PyTorch BatchNorm2d default eps
LANE = 128            # TPU lane width: pad all output-channel dims to this
TM_CAP = 256          # M-tile rows (v7x-safe; raise to 512-1024 on v5e/v6e)
VMEM_LIMIT = 64 * 1024 * 1024


def _round_up(x, m):
    return (x + m - 1) // m * m


def _pick_tm(m, cap=TM_CAP):
    return max(8, min(cap, _round_up(m, 8)))


# ----------------------------------------------------------------------------
# Pallas kernels
# ----------------------------------------------------------------------------
def _make_matmul_stats_kernel(n_ops, relu, m_true, tm, need_mask):
    """Fused (split-K) matmul + bias (+ReLU) + per-column sum / sum-of-squares.

    Args layout: a_0..a_{n-1}, w_0..w_{n-1}, bias, y_out, sum_out, ssq_out.
    sum/ssq outputs use a constant block index across the M grid axis, so they
    stay resident in VMEM and act as cross-tile accumulators (P3 pattern).
    """
    def kernel(*refs):
        a_refs = refs[:n_ops]
        w_refs = refs[n_ops:2 * n_ops]
        b_ref = refs[2 * n_ops]
        y_ref, sum_ref, ssq_ref = refs[2 * n_ops + 1:]

        acc = jnp.dot(a_refs[0][...], w_refs[0][...],
                      preferred_element_type=jnp.float32)
        for t in range(1, n_ops):
            acc = acc + jnp.dot(a_refs[t][...], w_refs[t][...],
                                preferred_element_type=jnp.float32)
        acc = acc + b_ref[...]
        if relu:
            acc = jnp.maximum(acc, 0.0)
        if need_mask:
            # zero padded rows so they neither pollute BN stats nor HBM
            row = (pl.program_id(0) * tm
                   + jax.lax.broadcasted_iota(jnp.int32, (tm, 1), 0))
            acc = jnp.where(row < m_true, acc, 0.0)

        y_ref[...] = acc

        @pl.when(pl.program_id(0) == 0)
        def _():
            sum_ref[...] = jnp.zeros_like(sum_ref)
            ssq_ref[...] = jnp.zeros_like(ssq_ref)

        sum_ref[...] += jnp.sum(acc, axis=0, keepdims=True)
        ssq_ref[...] += jnp.sum(acc * acc, axis=0, keepdims=True)

    return kernel


def _make_affine_kernel(relu):
    """Per-column scale/shift (BatchNorm apply) + optional ReLU, bf16 out."""
    def kernel(y_ref, scale_ref, shift_ref, o_ref):
        v = y_ref[...] * scale_ref[...] + shift_ref[...]
        if relu:
            v = jnp.maximum(v, 0.0)
        o_ref[...] = v.astype(o_ref.dtype)
    return kernel


# ----------------------------------------------------------------------------
# pallas_call wrappers
# ----------------------------------------------------------------------------
def _matmul_stats(lhs_list, w_list, bias, *, relu):
    """Row-tiled split-K matmul with fused BN-stat accumulation."""
    m = lhs_list[0].shape[0]
    cout = w_list[0].shape[1]
    tm = _pick_tm(m)
    m_pad = _round_up(m, tm)
    need_mask = m_pad != m
    if need_mask:
        lhs_list = [jnp.pad(a, ((0, m_pad - m), (0, 0))) for a in lhs_list]

    n_ops = len(lhs_list)
    kernel = _make_matmul_stats_kernel(n_ops, relu, m, tm, need_mask)

    in_specs = (
        [pl.BlockSpec((tm, a.shape[1]), lambda i: (i, 0)) for a in lhs_list]
        + [pl.BlockSpec(w.shape, lambda i: (0, 0)) for w in w_list]
        + [pl.BlockSpec((1, cout), lambda i: (0, 0))]
    )
    out_specs = [
        pl.BlockSpec((tm, cout), lambda i: (i, 0)),   # conv output (lane-dense)
        pl.BlockSpec((1, cout), lambda i: (0, 0)),    # per-column sum (resident)
        pl.BlockSpec((1, cout), lambda i: (0, 0)),    # per-column sumsq (resident)
    ]
    out_shape = [
        jax.ShapeDtypeStruct((m_pad, cout), jnp.float32),
        jax.ShapeDtypeStruct((1, cout), jnp.float32),
        jax.ShapeDtypeStruct((1, cout), jnp.float32),
    ]

    y, s, ss = pl.pallas_call(
        kernel,
        grid=(m_pad // tm,),
        in_specs=in_specs,
        out_specs=out_specs,
        out_shape=out_shape,
        compiler_params=pltpu.CompilerParams(
            dimension_semantics=("arbitrary",),   # stats accumulate across M
            vmem_limit_bytes=VMEM_LIMIT,
        ),
    )(*lhs_list, *w_list, bias)
    return y, s, ss, tm


def _affine_apply(y_pad, scale, shift, *, relu, tm, out_dtype=jnp.bfloat16):
    """Row-tiled BN apply (+ReLU); M axis is 'parallel' (megacore-shardable)."""
    m_pad, cout = y_pad.shape
    return pl.pallas_call(
        _make_affine_kernel(relu),
        grid=(m_pad // tm,),
        in_specs=[pl.BlockSpec((tm, cout), lambda i: (i, 0)),
                  pl.BlockSpec((1, cout), lambda i: (0, 0)),
                  pl.BlockSpec((1, cout), lambda i: (0, 0))],
        out_specs=pl.BlockSpec((tm, cout), lambda i: (i, 0)),
        out_shape=jax.ShapeDtypeStruct((m_pad, cout), out_dtype),
        compiler_params=pltpu.CompilerParams(
            dimension_semantics=("parallel",),
            vmem_limit_bytes=VMEM_LIMIT,
        ),
    )(y_pad, scale, shift)


# ----------------------------------------------------------------------------
# Glue: im2col, weight re-layout, stage wrappers (plain JAX, bf16 traffic)
# ----------------------------------------------------------------------------
def _im2col_3x3(x_nhwc):
    # 3x3, padding=1, stride=1 -> (N*H*W, 9*C); tap order (dy, dx) row-major.
    n, h, w, c = x_nhwc.shape
    xp = jnp.pad(x_nhwc, ((0, 0), (1, 1), (1, 1), (0, 0)))
    cols = [xp[:, dy:dy + h, dx:dx + w, :] for dy in range(3) for dx in range(3)]
    return jnp.concatenate(cols, axis=-1).reshape(n * h * w, 9 * c)


def _conv3x3_bn_relu(lhs_list, nhw, w_oihw, b, gamma, beta):
    """Conv3x3(pad=1) over channel-concat -> BN(train) -> ReLU.

    `lhs_list` holds pre-computed im2col matrices (m, 9*Cg) per concat
    operand; the channel concat is never materialized — each operand gets its
    own weight slice and the kernel accumulates the split-K matmuls.
    """
    n, h, w = nhw
    cout = w_oihw.shape[0]
    cpad = _round_up(cout, LANE)
    m = n * h * w

    w_mats, off = [], 0
    for lhs in lhs_list:
        cg = lhs.shape[1] // 9
        wg = w_oihw[:, off:off + cg]                    # (cout, cg, 3, 3)
        wm = jnp.transpose(wg, (2, 3, 1, 0)).reshape(9 * cg, cout)
        w_mats.append(jnp.pad(wm, ((0, 0), (0, cpad - cout))).astype(jnp.bfloat16))
        off += cg

    bias = jnp.pad(b, (0, cpad - cout)).reshape(1, cpad).astype(jnp.float32)
    y, s, ss, tm = _matmul_stats(lhs_list, w_mats, bias, relu=False)

    mean = s / m
    var = jnp.maximum(ss / m - mean * mean, 0.0)        # biased variance
    g = jnp.pad(gamma, (0, cpad - cout)).reshape(1, cpad)
    bt = jnp.pad(beta, (0, cpad - cout)).reshape(1, cpad)
    scale = (g * jax.lax.rsqrt(var + EPS)).astype(jnp.float32)
    shift = (bt - mean * scale).astype(jnp.float32)

    out = _affine_apply(y, scale, shift, relu=True, tm=tm)
    return out[:m, :cout].reshape(n, h, w, cout)        # bf16 NHWC


def _conv_transpose_relu_bn(x_nhwc, w_iohw, b, gamma, beta):
    """ConvTranspose2d(k=2,s=2) -> ReLU -> BN(train), fused matmul path."""
    n, h, w, cin = x_nhwc.shape
    half = w_iohw.shape[1]
    hpad = _round_up(half, LANE)
    m = n * h * w

    # (Cin, half, 2, 2) -> columns ordered (di, dj, c), each tap group padded
    wm = jnp.transpose(w_iohw, (0, 2, 3, 1))                     # (cin,2,2,half)
    wm = jnp.pad(wm, ((0, 0), (0, 0), (0, 0), (0, hpad - half)))
    wm = wm.reshape(cin, 4 * hpad).astype(jnp.bfloat16)
    bias = jnp.tile(jnp.pad(b, (0, hpad - half)), 4).reshape(1, 4 * hpad)
    bias = bias.astype(jnp.float32)

    lhs = x_nhwc.reshape(m, cin)                                 # bf16
    y, s, ss, tm = _matmul_stats([lhs], [wm], bias, relu=True)   # relu pre-BN

    # Per-channel stats combine the 4 taps (BN invariant to spatial interleave)
    cnt = 4.0 * m
    s_c = s.reshape(4, hpad).sum(axis=0)
    ss_c = ss.reshape(4, hpad).sum(axis=0)
    mean_c = s_c / cnt
    var_c = jnp.maximum(ss_c / cnt - mean_c * mean_c, 0.0)
    scale_c = jnp.pad(gamma, (0, hpad - half)) * jax.lax.rsqrt(var_c + EPS)
    shift_c = jnp.pad(beta, (0, hpad - half)) - mean_c * scale_c
    scale = jnp.tile(scale_c, 4).reshape(1, 4 * hpad).astype(jnp.float32)
    shift = jnp.tile(shift_c, 4).reshape(1, 4 * hpad).astype(jnp.float32)

    yb = _affine_apply(y, scale, shift, relu=False, tm=tm)[:m]   # (m, 4*hpad) bf16
    # single XLA permute: interleave taps (n,i,j,di,dj,c) -> (n, 2i+di, 2j+dj, c)
    yb = yb.reshape(n, h, w, 2, 2, hpad).transpose(0, 1, 3, 2, 4, 5)
    return yb.reshape(n, 2 * h, 2 * w, hpad)[..., :half]         # bf16 NHWC


# ----------------------------------------------------------------------------
# Forward pass
# ----------------------------------------------------------------------------
def decoder_block_forward(params, x_nchw, enc_nchw):
    x = jnp.transpose(x_nchw, (0, 2, 3, 1)).astype(jnp.bfloat16)      # NHWC
    enc = jnp.transpose(enc_nchw, (0, 2, 3, 1)).astype(jnp.bfloat16)  # NHWC

    # cnn_upsample: ConvTranspose2d -> ReLU -> BatchNorm2d
    x_up = _conv_transpose_relu_bn(x, params["up_w"], params["up_b"],
                                   params["up_gamma"], params["up_beta"])
    n, h2x, w2x, _ = x_up.shape
    nhw = (n, h2x, w2x)

    # im2col of the reused operands computed once, shared across stages.
    im_up = _im2col_3x3(x_up)
    im_enc = _im2col_3x3(enc)

    # cat([x_up, enc]) -> double_conv   (concat realized as split-K operands)
    h1 = _conv3x3_bn_relu([im_up, im_enc], nhw,
                          params["dc1_w"], params["dc1_b"],
                          params["dc1_gamma"], params["dc1_beta"])
    h2 = _conv3x3_bn_relu([_im2col_3x3(h1)], nhw,
                          params["dc2_w"], params["dc2_b"],
                          params["dc2_gamma"], params["dc2_beta"])

    # cat([h2, x_up, enc]) -> single_conv  (split-K; shared im2cols reused)
    out = _conv3x3_bn_relu([_im2col_3x3(h2), im_up, im_enc], nhw,
                           params["sc_w"], params["sc_b"],
                           params["sc_gamma"], params["sc_beta"])

    return jnp.transpose(out, (0, 3, 1, 2)).astype(jnp.float32)       # NCHW


# ----------------------------------------------------------------------------
# Deterministic parameter initialization (shapes follow the PyTorch __init__).
# ----------------------------------------------------------------------------
def init_params(key, in_channels, enc_channels, out_channels):
    half = in_channels // 2
    c_dc_in = half + enc_channels
    c_sc_in = half + 2 * enc_channels
    ks = jax.random.split(key, 8)
    f32 = jnp.float32

    def rn(k, shape, scale=0.1):
        return scale * jax.random.normal(k, shape, f32)

    return {
        # ConvTranspose2d(in, in//2, 2, 2): weight (Cin, Cout, kH, kW)
        "up_w": rn(ks[0], (in_channels, half, 2, 2)),
        "up_b": rn(ks[1], (half,)),
        "up_gamma": jnp.ones((half,), f32), "up_beta": jnp.zeros((half,), f32),
        # double_conv: Conv2d(c_dc_in, enc, 3) ; Conv2d(enc, enc, 3)
        "dc1_w": rn(ks[2], (enc_channels, c_dc_in, 3, 3)),
        "dc1_b": rn(ks[3], (enc_channels,)),
        "dc1_gamma": jnp.ones((enc_channels,), f32),
        "dc1_beta": jnp.zeros((enc_channels,), f32),
        "dc2_w": rn(ks[4], (enc_channels, enc_channels, 3, 3)),
        "dc2_b": rn(ks[5], (enc_channels,)),
        "dc2_gamma": jnp.ones((enc_channels,), f32),
        "dc2_beta": jnp.zeros((enc_channels,), f32),
        # single_conv: Conv2d(c_sc_in, out, 3)
        "sc_w": rn(ks[6], (out_channels, c_sc_in, 3, 3)),
        "sc_b": rn(ks[7], (out_channels,)),
        "sc_gamma": jnp.ones((out_channels,), f32),
        "sc_beta": jnp.zeros((out_channels,), f32),
    }


if __name__ == "__main__":
    # x : (N, in_channels, H, W) -> upsampled to 2H x 2W
    # enc_x : (N, enc_channels, 2H, 2W)
    N, IN_C, ENC_C, OUT_C, H, W = 2, 16, 8, 8, 8, 8

    key = jax.random.PRNGKey(0)
    k_x, k_enc, k_p = jax.random.split(key, 3)
    x = jax.random.normal(k_x, (N, IN_C, H, W), jnp.float32)
    enc_x = jax.random.normal(k_enc, (N, ENC_C, 2 * H, 2 * W), jnp.float32)
    params = init_params(k_p, IN_C, ENC_C, OUT_C)

    fwd = jax.jit(decoder_block_forward)
    out = fwd(params, x, enc_x)
    out = jax.block_until_ready(out)

    assert out.shape == (N, OUT_C, 2 * H, 2 * W), out.shape
    assert bool(jnp.all(jnp.isfinite(out)))
    assert bool(jnp.all(out >= 0.0))  # final op is ReLU
    print("KERNEL_OK")
</pallas_src>

<mosaic_0001>
module attributes {stable_mosaic.version = 11 : i64} {
  func.func @kernel(%arg0: i32, %arg1: memref<128x512xf32, #tpu.memory_space<vmem>>, %arg2: memref<1x512xf32, #tpu.memory_space<vmem>>, %arg3: memref<1x512xf32, #tpu.memory_space<vmem>>, %arg4: memref<128x512xbf16, #tpu.memory_space<vmem>>) attributes {dimension_semantics = [#tpu.dimension_semantics<parallel>], iteration_bounds = array<i64: 1>, scalar_prefetch = 0 : i64, scratch_operands = 0 : i64, tpu.core_type = #tpu.core_type<tc>, window_params = [{transform_indices = @transform_0, window_bounds = array<i64: 128, 512>}, {pipeline_mode = #tpu.pipeline_mode<synchronous>, transform_indices = @transform_1, window_bounds = array<i64: 1, 512>}, {pipeline_mode = #tpu.pipeline_mode<synchronous>, transform_indices = @transform_2, window_bounds = array<i64: 1, 512>}, {transform_indices = @transform_3, window_bounds = array<i64: 128, 512>}]} {
    %c0 = arith.constant 0 : index
    %c0_0 = arith.constant 0 : index
    %0 = vector.load %arg1[%c0, %c0_0] : memref<128x512xf32, #tpu.memory_space<vmem>>, vector<128x512xf32>
    %c0_1 = arith.constant 0 : index
    %c0_2 = arith.constant 0 : index
    %1 = vector.load %arg2[%c0_1, %c0_2] : memref<1x512xf32, #tpu.memory_space<vmem>>, vector<1x512xf32>
    %2 = vector.broadcast %1 : vector<1x512xf32> to vector<128x512xf32>
    %3 = arith.mulf %0, %2 : vector<128x512xf32>
    %c0_3 = arith.constant 0 : index
    %c0_4 = arith.constant 0 : index
    %4 = vector.load %arg3[%c0_3, %c0_4] : memref<1x512xf32, #tpu.memory_space<vmem>>, vector<1x512xf32>
    %5 = vector.broadcast %4 : vector<1x512xf32> to vector<128x512xf32>
    %6 = arith.addf %3, %5 : vector<128x512xf32>
    %7 = arith.truncf %6 : vector<128x512xf32> to vector<128x512xbf16>
    %c0_5 = arith.constant 0 : index
    %c0_6 = arith.constant 0 : index
    %8 = vector.load %arg4[%c0_5, %c0_6] : memref<128x512xbf16, #tpu.memory_space<vmem>>, vector<128x512xbf16>
    tpu.vector_store %arg4[%c0_5, %c0_6], %7 {strides = array<i32>} : memref<128x512xbf16, #tpu.memory_space<vmem>>, vector<128x512xbf16>,
    return
  }
  func.func @transform_0(%arg0: i32) -> (i32, i32) {
    %c0_i32 = arith.constant 0 : i32
    %c0_i32_0 = arith.constant 0 : i32
    return %arg0, %c0_i32 : i32, i32
  }
  func.func @transform_1(%arg0: i32) -> (i32, i32) {
    %c0_i32 = arith.constant 0 : i32
    %c0_i32_0 = arith.constant 0 : i32
    %c0_i32_1 = arith.constant 0 : i32
    return %c0_i32, %c0_i32_0 : i32, i32
  }
  func.func @transform_2(%arg0: i32) -> (i32, i32) {
    %c0_i32 = arith.constant 0 : i32
    %c0_i32_0 = arith.constant 0 : i32
    %c0_i32_1 = arith.constant 0 : i32
    return %c0_i32, %c0_i32_0 : i32, i32
  }
  func.func @transform_3(%arg0: i32) -> (i32, i32) {
    %c0_i32 = arith.constant 0 : i32
    %c0_i32_0 = arith.constant 0 : i32
    return %arg0, %c0_i32 : i32, i32
  }
}

module attributes {stable_mosaic.version = 11 : i64} {
  func.func @kernel(%arg0: i32, %arg1: memref<128x16xbf16, #tpu.memory_space<vmem>>, %arg2: memref<16x512xbf16, #tpu.memory_space<vmem>>, %arg3: memref<1x512xf32, #tpu.memory_space<vmem>>, %arg4: memref<128x512xf32, #tpu.memory_space<vmem>>, %arg5: memref<1x512xf32, #tpu.memory_space<vmem>>, %arg6: memref<1x512xf32, #tpu.memory_space<vmem>>) attributes {dimension_semantics = [#tpu.dimension_semantics<arbitrary>], iteration_bounds = array<i64: 1>, scalar_prefetch = 0 : i64, scratch_operands = 0 : i64, tpu.core_type = #tpu.core_type<tc>, window_params = [{transform_indices = @transform_0, window_bounds = array<i64: 128, 16>}, {pipeline_mode = #tpu.pipeline_mode<synchronous>, transform_indices = @transform_1, window_bounds = array<i64: 16, 512>}, {pipeline_mode = #tpu.pipeline_mode<synchronous>, transform_indices = @transform_2, window_bounds = array<i64: 1, 512>}, {transform_indices = @transform_3, window_bounds = array<i64: 128, 512>}, {pipeline_mode = #tpu.pipeline_mode<synchronous>, transform_indices = @transform_4, window_bounds = array<i64: 1, 512>}, {pipeline_mode = #tpu.pipeline_mode<synchronous>, transform_indices = @transform_5, window_bounds = array<i64: 1, 512>}]} {
    %c0 = arith.constant 0 : index
    %c0_0 = arith.constant 0 : index
    %0 = vector.load %arg1[%c0, %c0_0] : memref<128x16xbf16, #tpu.memory_space<vmem>>, vector<128x16xbf16>
    %c0_1 = arith.constant 0 : index
    %c0_2 = arith.constant 0 : index
    %1 = vector.load %arg2[%c0_1, %c0_2] : memref<16x512xbf16, #tpu.memory_space<vmem>>, vector<16x512xbf16>
    %cst = arith.constant dense<0.000000e+00> : vector<128x512xf32>
    %2 = tpu.matmul %0, %1, %cst {dimension_numbers = #tpu.dot_dimension_numbers<[1], [0], [0], [1], [0, 0, 1, 1], [], []>} : vector<128x16xbf16>, vector<16x512xbf16>, vector<128x512xf32> -> vector<128x512xf32>
    %c0_3 = arith.constant 0 : index
    %c0_4 = arith.constant 0 : index
    %3 = vector.load %arg3[%c0_3, %c0_4] : memref<1x512xf32, #tpu.memory_space<vmem>>, vector<1x512xf32>
    %4 = vector.broadcast %3 : vector<1x512xf32> to vector<128x512xf32>
    %5 = arith.addf %2, %4 : vector<128x512xf32>
    %cst_5 = arith.constant 0.000000e+00 : f32
    %6 = vector.broadcast %cst_5 : f32 to vector<128x512xf32>
    %7 = arith.maximumf %5, %6 : vector<128x512xf32>
    %c0_6 = arith.constant 0 : index
    %c0_7 = arith.constant 0 : index
    %8 = vector.load %arg4[%c0_6, %c0_7] : memref<128x512xf32, #tpu.memory_space<vmem>>, vector<128x512xf32>
    tpu.vector_store %arg4[%c0_6, %c0_7], %7 {strides = array<i32>} : memref<128x512xf32, #tpu.memory_space<vmem>>, vector<128x512xf32>,
    %c0_i32 = arith.constant 0 : i32
    %9 = arith.cmpi eq, %arg0, %c0_i32 : i32
    %10 = arith.extui %9 : i1 to i32
    %c0_i32_8 = arith.constant 0 : i32
    %11 = arith.cmpi ne, %10, %c0_i32_8 : i32
    scf.if %11 {
      %cst_19 = arith.constant 0.000000e+00 : f32
      %23 = vector.broadcast %cst_19 : f32 to vector<1x512xf32>
      %c0_20 = arith.constant 0 : index
      %c0_21 = arith.constant 0 : index
      %24 = vector.load %arg5[%c0_20, %c0_21] : memref<1x512xf32, #tpu.memory_space<vmem>>, vector<1x512xf32>
      tpu.vector_store %arg5[%c0_20, %c0_21], %23 {strides = array<i32>} : memref<1x512xf32, #tpu.memory_space<vmem>>, vector<1x512xf32>,
      %cst_22 = arith.constant 0.000000e+00 : f32
      %25 = vector.broadcast %cst_22 : f32 to vector<1x512xf32>
      %c0_23 = arith.constant 0 : index
      %c0_24 = arith.constant 0 : index
      %26 = vector.load %arg6[%c0_23, %c0_24] : memref<1x512xf32, #tpu.memory_space<vmem>>, vector<1x512xf32>
      tpu.vector_store %arg6[%c0_23, %c0_24], %25 {strides = array<i32>} : memref<1x512xf32, #tpu.memory_space<vmem>>, vector<1x512xf32>,
    } else {
    }
    %c0_9 = arith.constant 0 : index
    %c0_10 = arith.constant 0 : index
    %12 = vector.load %arg5[%c0_9, %c0_10] : memref<1x512xf32, #tpu.memory_space<vmem>>, vector<1x512xf32>
    %cst_11 = arith.constant dense<0.000000e+00> : vector<512xf32>
    %13 = vector.multi_reduction <add>, %7, %cst_11 [0] : vector<128x512xf32> to vector<512xf32>
    %14 = vector.shape_cast %13 : vector<512xf32> to vector<1x512xf32>
    %15 = arith.addf %12, %14 : vector<1x512xf32>
    %c0_12 = arith.constant 0 : index
    %c0_13 = arith.constant 0 : index
    %16 = vector.load %arg5[%c0_12, %c0_13] : memref<1x512xf32, #tpu.memory_space<vmem>>, vector<1x512xf32>
    tpu.vector_store %arg5[%c0_12, %c0_13], %15 {strides = array<i32>} : memref<1x512xf32, #tpu.memory_space<vmem>>, vector<1x512xf32>,
    %c0_14 = arith.constant 0 : index
    %c0_15 = arith.constant 0 : index
    %17 = vector.load %arg6[%c0_14, %c0_15] : memref<1x512xf32, #tpu.memory_space<vmem>>, vector<1x512xf32>
    %18 = arith.mulf %7, %7 : vector<128x512xf32>
    %cst_16 = arith.constant dense<0.000000e+00> : vector<512xf32>
    %19 = vector.multi_reduction <add>, %18, %cst_16 [0] : vector<128x512xf32> to vector<512xf32>
    %20 = vector.shape_cast %19 : vector<512xf32> to vector<1x512xf32>
    %21 = arith.addf %17, %20 : vector<1x512xf32>
    %c0_17 = arith.constant 0 : index
    %c0_18 = arith.constant 0 : index
    %22 = vector.load %arg6[%c0_17, %c0_18] : memref<1x512xf32, #tpu.memory_space<vmem>>, vector<1x512xf32>
    tpu.vector_store %arg6[%c0_17, %c0_18], %21 {strides = array<i32>} : memref<1x512xf32, #tpu.memory_space<vmem>>, vector<1x512xf32>,
    return
  }
  func.func @transform_0(%arg0: i32) -> (i32, i32) {
    %c0_i32 = arith.constant 0 : i32
    %c0_i32_0 = arith.constant 0 : i32
    return %arg0, %c0_i32 : i32, i32
  }
  func.func @transform_1(%arg0: i32) -> (i32, i32) {
    %c0_i32 = arith.constant 0 : i32
    %c0_i32_0 = arith.constant 0 : i32
    %c0_i32_1 = arith.constant 0 : i32
    return %c0_i32, %c0_i32_0 : i32, i32
  }
  func.func @transform_2(%arg0: i32) -> (i32, i32) {
    %c0_i32 = arith.constant 0 : i32
    %c0_i32_0 = arith.constant 0 : i32
    %c0_i32_1 = arith.constant 0 : i32
    return %c0_i32, %c0_i32_0 : i32, i32
  }
  func.func @transform_3(%arg0: i32) -> (i32, i32) {
    %c0_i32 = arith.constant 0 : i32
    %c0_i32_0 = arith.constant 0 : i32
    return %arg0, %c0_i32 : i32, i32
  }
  func.func @transform_4(%arg0: i32) -> (i32, i32) {
    %c0_i32 = arith.constant 0 : i32
    %c0_i32_0 = arith.constant 0 : i32
    %c0_i32_1 = arith.constant 0 : i32
    return %c0_i32, %c0_i32_0 : i32, i32
  }
  func.func @transform_5(%arg0: i32) -> (i32, i32) {
    %c0_i32 = arith.constant 0 : i32
    %c0_i32_0 = arith.constant 0 : i32
    %c0_i32_1 = arith.constant 0 : i32
    return %c0_i32, %c0_i32_0 : i32, i32
  }
}

module attributes {stable_mosaic.version = 11 : i64} {
  func.func @kernel(%arg0: i32, %arg1: memref<256x72xbf16, #tpu.memory_space<vmem>>, %arg2: memref<256x72xbf16, #tpu.memory_space<vmem>>, %arg3: memref<72x128xbf16, #tpu.memory_space<vmem>>, %arg4: memref<72x128xbf16, #tpu.memory_space<vmem>>, %arg5: memref<1x128xf32, #tpu.memory_space<vmem>>, %arg6: memref<256x128xf32, #tpu.memory_space<vmem>>, %arg7: memref<1x128xf32, #tpu.memory_space<vmem>>, %arg8: memref<1x128xf32, #tpu.memory_space<vmem>>) attributes {dimension_semantics = [#tpu.dimension_semantics<arbitrary>], iteration_bounds = array<i64: 2>, scalar_prefetch = 0 : i64, scratch_operands = 0 : i64, tpu.core_type = #tpu.core_type<tc>, window_params = [{transform_indices = @transform_0, window_bounds = array<i64: 256, 72>}, {transform_indices = @transform_1, window_bounds = array<i64: 256, 72>}, {pipeline_mode = #tpu.pipeline_mode<synchronous>, transform_indices = @transform_2, window_bounds = array<i64: 72, 128>}, {pipeline_mode = #tpu.pipeline_mode<synchronous>, transform_indices = @transform_3, window_bounds = array<i64: 72, 128>}, {pipeline_mode = #tpu.pipeline_mode<synchronous>, transform_indices = @transform_4, window_bounds = array<i64: 1, 128>}, {transform_indices = @transform_5, window_bounds = array<i64: 256, 128>}, {pipeline_mode = #tpu.pipeline_mode<synchronous>, transform_indices = @transform_6, window_bounds = array<i64: 1, 128>}, {pipeline_mode = #tpu.pipeline_mode<synchronous>, transform_indices = @transform_7, window_bounds = array<i64: 1, 128>}]} {
    %c0 = arith.constant 0 : index
    %c0_0 = arith.constant 0 : index
    %0 = vector.load %arg1[%c0, %c0_0] : memref<256x72xbf16, #tpu.memory_space<vmem>>, vector<256x72xbf16>
    %c0_1 = arith.constant 0 : index
    %c0_2 = arith.constant 0 : index
    %1 = vector.load %arg3[%c0_1, %c0_2] : memref<72x128xbf16, #tpu.memory_space<vmem>>, vector<72x128xbf16>
    %cst = arith.constant dense<0.000000e+00> : vector<256x128xf32>
    %2 = tpu.matmul %0, %1, %cst {dimension_numbers = #tpu.dot_dimension_numbers<[1], [0], [0], [1], [0, 0, 1, 1], [], []>} : vector<256x72xbf16>, vector<72x128xbf16>, vector<256x128xf32> -> vector<256x128xf32>
    %c0_3 = arith.constant 0 : index
    %c0_4 = arith.constant 0 : index
    %3 = vector.load %arg2[%c0_3, %c0_4] : memref<256x72xbf16, #tpu.memory_space<vmem>>, vector<256x72xbf16>
    %c0_5 = arith.constant 0 : index
    %c0_6 = arith.constant 0 : index
    %4 = vector.load %arg4[%c0_5, %c0_6] : memref<72x128xbf16, #tpu.memory_space<vmem>>, vector<72x128xbf16>
    %cst_7 = arith.constant dense<0.000000e+00> : vector<256x128xf32>
    %5 = tpu.matmul %3, %4, %cst_7 {dimension_numbers = #tpu.dot_dimension_numbers<[1], [0], [0], [1], [0, 0, 1, 1], [], []>} : vector<256x72xbf16>, vector<72x128xbf16>, vector<256x128xf32> -> vector<256x128xf32>
    %6 = arith.addf %2, %5 : vector<256x128xf32>
    %c0_8 = arith.constant 0 : index
    %c0_9 = arith.constant 0 : index
    %7 = vector.load %arg5[%c0_8, %c0_9] : memref<1x128xf32, #tpu.memory_space<vmem>>, vector<1x128xf32>
    %8 = vector.broadcast %7 : vector<1x128xf32> to vector<256x128xf32>
    %9 = arith.addf %6, %8 : vector<256x128xf32>
    %c0_10 = arith.constant 0 : index
    %c0_11 = arith.constant 0 : index
    %10 = vector.load %arg6[%c0_10, %c0_11] : memref<256x128xf32, #tpu.memory_space<vmem>>, vector<256x128xf32>
    tpu.vector_store %arg6[%c0_10, %c0_11], %9 {strides = array<i32>} : memref<256x128xf32, #tpu.memory_space<vmem>>, vector<256x128xf32>,
    %c0_i32 = arith.constant 0 : i32
    %11 = arith.cmpi eq, %arg0, %c0_i32 : i32
    %12 = arith.extui %11 : i1 to i32
    %c0_i32_12 = arith.constant 0 : i32
    %13 = arith.cmpi ne, %12, %c0_i32_12 : i32
    scf.if %13 {
      %cst_23 = arith.constant 0.000000e+00 : f32
      %25 = vector.broadcast %cst_23 : f32 to vector<1x128xf32>
      %c0_24 = arith.constant 0 : index
      %c0_25 = arith.constant 0 : index
      %26 = vector.load %arg7[%c0_24, %c0_25] : memref<1x128xf32, #tpu.memory_space<vmem>>, vector<1x128xf32>
      tpu.vector_store %arg7[%c0_24, %c0_25], %25 {strides = array<i32>} : memref<1x128xf32, #tpu.memory_space<vmem>>, vector<1x128xf32>,
      %cst_26 = arith.constant 0.000000e+00 : f32
      %27 = vector.broadcast %cst_26 : f32 to vector<1x128xf32>
      %c0_27 = arith.constant 0 : index
      %c0_28 = arith.constant 0 : index
      %28 = vector.load %arg8[%c0_27, %c0_28] : memref<1x128xf32, #tpu.memory_space<vmem>>, vector<1x128xf32>
      tpu.vector_store %arg8[%c0_27, %c0_28], %27 {strides = array<i32>} : memref<1x128xf32, #tpu.memory_space<vmem>>, vector<1x128xf32>,
    } else {
    }
    %c0_13 = arith.constant 0 : index
    %c0_14 = arith.constant 0 : index
    %14 = vector.load %arg7[%c0_13, %c0_14] : memref<1x128xf32, #tpu.memory_space<vmem>>, vector<1x128xf32>
    %cst_15 = arith.constant dense<0.000000e+00> : vector<128xf32>
    %15 = vector.multi_reduction <add>, %9, %cst_15 [0] : vector<256x128xf32> to vector<128xf32>
    %16 = vector.shape_cast %15 : vector<128xf32> to vector<1x128xf32>
    %17 = arith.addf %14, %16 : vector<1x128xf32>
    %c0_16 = arith.constant 0 : index
    %c0_17 = arith.constant 0 : index
    %18 = vector.load %arg7[%c0_16, %c0_17] : memref<1x128xf32, #tpu.memory_space<vmem>>, vector<1x128xf32>
    tpu.vector_store %arg7[%c0_16, %c0_17], %17 {strides = array<i32>} : memref<1x128xf32, #tpu.memory_space<vmem>>, vector<1x128xf32>,
    %c0_18 = arith.constant 0 : index
    %c0_19 = arith.constant 0 : index
    %19 = vector.load %arg8[%c0_18, %c0_19] : memref<1x128xf32, #tpu.memory_space<vmem>>, vector<1x128xf32>
    %20 = arith.mulf %9, %9 : vector<256x128xf32>
    %cst_20 = arith.constant dense<0.000000e+00> : vector<128xf32>
    %21 = vector.multi_reduction <add>, %20, %cst_20 [0] : vector<256x128xf32> to vector<128xf32>
    %22 = vector.shape_cast %21 : vector<128xf32> to vector<1x128xf32>
    %23 = arith.addf %19, %22 : vector<1x128xf32>
    %c0_21 = arith.constant 0 : index
    %c0_22 = arith.constant 0 : index
    %24 = vector.load %arg8[%c0_21, %c0_22] : memref<1x128xf32, #tpu.memory_space<vmem>>, vector<1x128xf32>
    tpu.vector_store %arg8[%c0_21, %c0_22], %23 {strides = array<i32>} : memref<1x128xf32, #tpu.memory_space<vmem>>, vector<1x128xf32>,
    return
  }
  func.func @transform_0(%arg0: i32) -> (i32, i32) {
    %c0_i32 = arith.constant 0 : i32
    %c0_i32_0 = arith.constant 0 : i32
    return %arg0, %c0_i32 : i32, i32
  }
  func.func @transform_1(%arg0: i32) -> (i32, i32) {
    %c0_i32 = arith.constant 0 : i32
    %c0_i32_0 = arith.constant 0 : i32
    return %arg0, %c0_i32 : i32, i32
  }
  func.func @transform_2(%arg0: i32) -> (i32, i32) {
    %c0_i32 = arith.constant 0 : i32
    %c0_i32_0 = arith.constant 0 : i32
    %c0_i32_1 = arith.constant 0 : i32
    return %c0_i32, %c0_i32_0 : i32, i32
  }
  func.func @transform_3(%arg0: i32) -> (i32, i32) {
    %c0_i32 = arith.constant 0 : i32
    %c0_i32_0 = arith.constant 0 : i32
    %c0_i32_1 = arith.constant 0 : i32
    return %c0_i32, %c0_i32_0 : i32, i32
  }
  func.func @transform_4(%arg0: i32) -> (i32, i32) {
    %c0_i32 = arith.constant 0 : i32
    %c0_i32_0 = arith.constant 0 : i32
    %c0_i32_1 = arith.constant 0 : i32
    return %c0_i32, %c0_i32_0 : i32, i32
  }
  func.func @transform_5(%arg0: i32) -> (i32, i32) {
    %c0_i32 = arith.constant 0 : i32
    %c0_i32_0 = arith.constant 0 : i32
    return %arg0, %c0_i32 : i32, i32
  }
  func.func @transform_6(%arg0: i32) -> (i32, i32) {
    %c0_i32 = arith.constant 0 : i32
    %c0_i32_0 = arith.constant 0 : i32
    %c0_i32_1 = arith.constant 0 : i32
    return %c0_i32, %c0_i32_0 : i32, i32
  }
  func.func @transform_7(%arg0: i32) -> (i32, i32) {
    %c0_i32 = arith.constant 0 : i32
    %c0_i32_0 = arith.constant 0 : i32
    %c0_i32_1 = arith.constant 0 : i32
    return %c0_i32, %c0_i32_0 : i32, i32
  }
}

module attributes {stable_mosaic.version = 11 : i64} {
  func.func @kernel(%arg0: i32, %arg1: memref<256x128xf32, #tpu.memory_space<vmem>>, %arg2: memref<1x128xf32, #tpu.memory_space<vmem>>, %arg3: memref<1x128xf32, #tpu.memory_space<vmem>>, %arg4: memref<256x128xbf16, #tpu.memory_space<vmem>>) attributes {dimension_semantics = [#tpu.dimension_semantics<parallel>], iteration_bounds = array<i64: 2>, scalar_prefetch = 0 : i64, scratch_operands = 0 : i64, tpu.core_type = #tpu.core_type<tc>, window_params = [{transform_indices = @transform_0, window_bounds = array<i64: 256, 128>}, {pipeline_mode = #tpu.pipeline_mode<synchronous>, transform_indices = @transform_1, window_bounds = array<i64: 1, 128>}, {pipeline_mode = #tpu.pipeline_mode<synchronous>, transform_indices = @transform_2, window_bounds = array<i64: 1, 128>}, {transform_indices = @transform_3, window_bounds = array<i64: 256, 128>}]} {
    %c0 = arith.constant 0 : index
    %c0_0 = arith.constant 0 : index
    %0 = vector.load %arg1[%c0, %c0_0] : memref<256x128xf32, #tpu.memory_space<vmem>>, vector<256x128xf32>
    %c0_1 = arith.constant 0 : index
    %c0_2 = arith.constant 0 : index
    %1 = vector.load %arg2[%c0_1, %c0_2] : memref<1x128xf32, #tpu.memory_space<vmem>>, vector<1x128xf32>
    %2 = vector.broadcast %1 : vector<1x128xf32> to vector<256x128xf32>
    %3 = arith.mulf %0, %2 : vector<256x128xf32>
    %c0_3 = arith.constant 0 : index
    %c0_4 = arith.constant 0 : index
    %4 = vector.load %arg3[%c0_3, %c0_4] : memref<1x128xf32, #tpu.memory_space<vmem>>, vector<1x128xf32>
    %5 = vector.broadcast %4 : vector<1x128xf32> to vector<256x128xf32>
    %6 = arith.addf %3, %5 : vector<256x128xf32>
    %cst = arith.constant 0.000000e+00 : f32
    %7 = vector.broadcast %cst : f32 to vector<256x128xf32>
    %8 = arith.maximumf %6, %7 : vector<256x128xf32>
    %9 = arith.truncf %8 : vector<256x128xf32> to vector<256x128xbf16>
    %c0_5 = arith.constant 0 : index
    %c0_6 = arith.constant 0 : index
    %10 = vector.load %arg4[%c0_5, %c0_6] : memref<256x128xbf16, #tpu.memory_space<vmem>>, vector<256x128xbf16>
    tpu.vector_store %arg4[%c0_5, %c0_6], %9 {strides = array<i32>} : memref<256x128xbf16, #tpu.memory_space<vmem>>, vector<256x128xbf16>,
    return
  }
  func.func @transform_0(%arg0: i32) -> (i32, i32) {
    %c0_i32 = arith.constant 0 : i32
    %c0_i32_0 = arith.constant 0 : i32
    return %arg0, %c0_i32 : i32, i32
  }
  func.func @transform_1(%arg0: i32) -> (i32, i32) {
    %c0_i32 = arith.constant 0 : i32
    %c0_i32_0 = arith.constant 0 : i32
    %c0_i32_1 = arith.constant 0 : i32
    return %c0_i32, %c0_i32_0 : i32, i32
  }
  func.func @transform_2(%arg0: i32) -> (i32, i32) {
    %c0_i32 = arith.constant 0 : i32
    %c0_i32_0 = arith.constant 0 : i32
    %c0_i32_1 = arith.constant 0 : i32
    return %c0_i32, %c0_i32_0 : i32, i32
  }
  func.func @transform_3(%arg0: i32) -> (i32, i32) {
    %c0_i32 = arith.constant 0 : i32
    %c0_i32_0 = arith.constant 0 : i32
    return %arg0, %c0_i32 : i32, i32
  }
}

module attributes {stable_mosaic.version = 11 : i64} {
  func.func @kernel(%arg0: i32, %arg1: memref<256x72xbf16, #tpu.memory_space<vmem>>, %arg2: memref<72x128xbf16, #tpu.memory_space<vmem>>, %arg3: memref<1x128xf32, #tpu.memory_space<vmem>>, %arg4: memref<256x128xf32, #tpu.memory_space<vmem>>, %arg5: memref<1x128xf32, #tpu.memory_space<vmem>>, %arg6: memref<1x128xf32, #tpu.memory_space<vmem>>) attributes {dimension_semantics = [#tpu.dimension_semantics<arbitrary>], iteration_bounds = array<i64: 2>, scalar_prefetch = 0 : i64, scratch_operands = 0 : i64, tpu.core_type = #tpu.core_type<tc>, window_params = [{transform_indices = @transform_0, window_bounds = array<i64: 256, 72>}, {pipeline_mode = #tpu.pipeline_mode<synchronous>, transform_indices = @transform_1, window_bounds = array<i64: 72, 128>}, {pipeline_mode = #tpu.pipeline_mode<synchronous>, transform_indices = @transform_2, window_bounds = array<i64: 1, 128>}, {transform_indices = @transform_3, window_bounds = array<i64: 256, 128>}, {pipeline_mode = #tpu.pipeline_mode<synchronous>, transform_indices = @transform_4, window_bounds = array<i64: 1, 128>}, {pipeline_mode = #tpu.pipeline_mode<synchronous>, transform_indices = @transform_5, window_bounds = array<i64: 1, 128>}]} {
    %c0 = arith.constant 0 : index
    %c0_0 = arith.constant 0 : index
    %0 = vector.load %arg1[%c0, %c0_0] : memref<256x72xbf16, #tpu.memory_space<vmem>>, vector<256x72xbf16>
    %c0_1 = arith.constant 0 : index
    %c0_2 = arith.constant 0 : index
    %1 = vector.load %arg2[%c0_1, %c0_2] : memref<72x128xbf16, #tpu.memory_space<vmem>>, vector<72x128xbf16>
    %cst = arith.constant dense<0.000000e+00> : vector<256x128xf32>
    %2 = tpu.matmul %0, %1, %cst {dimension_numbers = #tpu.dot_dimension_numbers<[1], [0], [0], [1], [0, 0, 1, 1], [], []>} : vector<256x72xbf16>, vector<72x128xbf16>, vector<256x128xf32> -> vector<256x128xf32>
    %c0_3 = arith.constant 0 : index
    %c0_4 = arith.constant 0 : index
    %3 = vector.load %arg3[%c0_3, %c0_4] : memref<1x128xf32, #tpu.memory_space<vmem>>, vector<1x128xf32>
    %4 = vector.broadcast %3 : vector<1x128xf32> to vector<256x128xf32>
    %5 = arith.addf %2, %4 : vector<256x128xf32>
    %c0_5 = arith.constant 0 : index
    %c0_6 = arith.constant 0 : index
    %6 = vector.load %arg4[%c0_5, %c0_6] : memref<256x128xf32, #tpu.memory_space<vmem>>, vector<256x128xf32>
    tpu.vector_store %arg4[%c0_5, %c0_6], %5 {strides = array<i32>} : memref<256x128xf32, #tpu.memory_space<vmem>>, vector<256x128xf32>,
    %c0_i32 = arith.constant 0 : i32
    %7 = arith.cmpi eq, %arg0, %c0_i32 : i32
    %8 = arith.extui %7 : i1 to i32
    %c0_i32_7 = arith.constant 0 : i32
    %9 = arith.cmpi ne, %8, %c0_i32_7 : i32
    scf.if %9 {
      %cst_18 = arith.constant 0.000000e+00 : f32
      %21 = vector.broadcast %cst_18 : f32 to vector<1x128xf32>
      %c0_19 = arith.constant 0 : index
      %c0_20 = arith.constant 0 : index
      %22 = vector.load %arg5[%c0_19, %c0_20] : memref<1x128xf32, #tpu.memory_space<vmem>>, vector<1x128xf32>
      tpu.vector_store %arg5[%c0_19, %c0_20], %21 {strides = array<i32>} : memref<1x128xf32, #tpu.memory_space<vmem>>, vector<1x128xf32>,
      %cst_21 = arith.constant 0.000000e+00 : f32
      %23 = vector.broadcast %cst_21 : f32 to vector<1x128xf32>
      %c0_22 = arith.constant 0 : index
      %c0_23 = arith.constant 0 : index
      %24 = vector.load %arg6[%c0_22, %c0_23] : memref<1x128xf32, #tpu.memory_space<vmem>>, vector<1x128xf32>
      tpu.vector_store %arg6[%c0_22, %c0_23], %23 {strides = array<i32>} : memref<1x128xf32, #tpu.memory_space<vmem>>, vector<1x128xf32>,
    } else {
    }
    %c0_8 = arith.constant 0 : index
    %c0_9 = arith.constant 0 : index
    %10 = vector.load %arg5[%c0_8, %c0_9] : memref<1x128xf32, #tpu.memory_space<vmem>>, vector<1x128xf32>
    %cst_10 = arith.constant dense<0.000000e+00> : vector<128xf32>
    %11 = vector.multi_reduction <add>, %5, %cst_10 [0] : vector<256x128xf32> to vector<128xf32>
    %12 = vector.shape_cast %11 : vector<128xf32> to vector<1x128xf32>
    %13 = arith.addf %10, %12 : vector<1x128xf32>
    %c0_11 = arith.constant 0 : index
    %c0_12 = arith.constant 0 : index
    %14 = vector.load %arg5[%c0_11, %c0_12] : memref<1x128xf32, #tpu.memory_space<vmem>>, vector<1x128xf32>
    tpu.vector_store %arg5[%c0_11, %c0_12], %13 {strides = array<i32>} : memref<1x128xf32, #tpu.memory_space<vmem>>, vector<1x128xf32>,
    %c0_13 = arith.constant 0 : index
    %c0_14 = arith.constant 0 : index
    %15 = vector.load %arg6[%c0_13, %c0_14] : memref<1x128xf32, #tpu.memory_space<vmem>>, vector<1x128xf32>
    %16 = arith.mulf %5, %5 : vector<256x128xf32>
    %cst_15 = arith.constant dense<0.000000e+00> : vector<128xf32>
    %17 = vector.multi_reduction <add>, %16, %cst_15 [0] : vector<256x128xf32> to vector<128xf32>
    %18 = vector.shape_cast %17 : vector<128xf32> to vector<1x128xf32>
    %19 = arith.addf %15, %18 : vector<1x128xf32>
    %c0_16 = arith.constant 0 : index
    %c0_17 = arith.constant 0 : index
    %20 = vector.load %arg6[%c0_16, %c0_17] : memref<1x128xf32, #tpu.memory_space<vmem>>, vector<1x128xf32>
    tpu.vector_store %arg6[%c0_16, %c0_17], %19 {strides = array<i32>} : memref<1x128xf32, #tpu.memory_space<vmem>>, vector<1x128xf32>,
    return
  }
  func.func @transform_0(%arg0: i32) -> (i32, i32) {
    %c0_i32 = arith.constant 0 : i32
    %c0_i32_0 = arith.constant 0 : i32
    return %arg0, %c0_i32 : i32, i32
  }
  func.func @transform_1(%arg0: i32) -> (i32, i32) {
    %c0_i32 = arith.constant 0 : i32
    %c0_i32_0 = arith.constant 0 : i32
    %c0_i32_1 = arith.constant 0 : i32
    return %c0_i32, %c0_i32_0 : i32, i32
  }
  func.func @transform_2(%arg0: i32) -> (i32, i32) {
    %c0_i32 = arith.constant 0 : i32
    %c0_i32_0 = arith.constant 0 : i32
    %c0_i32_1 = arith.constant 0 : i32
    return %c0_i32, %c0_i32_0 : i32, i32
  }
  func.func @transform_3(%arg0: i32) -> (i32, i32) {
    %c0_i32 = arith.constant 0 : i32
    %c0_i32_0 = arith.constant 0 : i32
    return %arg0, %c0_i32 : i32, i32
  }
  func.func @transform_4(%arg0: i32) -> (i32, i32) {
    %c0_i32 = arith.constant 0 : i32
    %c0_i32_0 = arith.constant 0 : i32
    %c0_i32_1 = arith.constant 0 : i32
    return %c0_i32, %c0_i32_0 : i32, i32
  }
  func.func @transform_5(%arg0: i32) -> (i32, i32) {
    %c0_i32 = arith.constant 0 : i32
    %c0_i32_0 = arith.constant 0 : i32
    %c0_i32_1 = arith.constant 0 : i32
    return %c0_i32, %c0_i32_0 : i32, i32
  }
}

module attributes {stable_mosaic.version = 11 : i64} {
  func.func @kernel(%arg0: i32, %arg1: memref<256x72xbf16, #tpu.memory_space<vmem>>, %arg2: memref<256x72xbf16, #tpu.memory_space<vmem>>, %arg3: memref<256x72xbf16, #tpu.memory_space<vmem>>, %arg4: memref<72x128xbf16, #tpu.memory_space<vmem>>, %arg5: memref<72x128xbf16, #tpu.memory_space<vmem>>, %arg6: memref<72x128xbf16, #tpu.memory_space<vmem>>, %arg7: memref<1x128xf32, #tpu.memory_space<vmem>>, %arg8: memref<256x128xf32, #tpu.memory_space<vmem>>, %arg9: memref<1x128xf32, #tpu.memory_space<vmem>>, %arg10: memref<1x128xf32, #tpu.memory_space<vmem>>) attributes {dimension_semantics = [#tpu.dimension_semantics<arbitrary>], iteration_bounds = array<i64: 2>, scalar_prefetch = 0 : i64, scratch_operands = 0 : i64, tpu.core_type = #tpu.core_type<tc>, window_params = [{transform_indices = @transform_0, window_bounds = array<i64: 256, 72>}, {transform_indices = @transform_1, window_bounds = array<i64: 256, 72>}, {transform_indices = @transform_2, window_bounds = array<i64: 256, 72>}, {pipeline_mode = #tpu.pipeline_mode<synchronous>, transform_indices = @transform_3, window_bounds = array<i64: 72, 128>}, {pipeline_mode = #tpu.pipeline_mode<synchronous>, transform_indices = @transform_4, window_bounds = array<i64: 72, 128>}, {pipeline_mode = #tpu.pipeline_mode<synchronous>, transform_indices = @transform_5, window_bounds = array<i64: 72, 128>}, {pipeline_mode = #tpu.pipeline_mode<synchronous>, transform_indices = @transform_6, window_bounds = array<i64: 1, 128>}, {transform_indices = @transform_7, window_bounds = array<i64: 256, 128>}, {pipeline_mode = #tpu.pipeline_mode<synchronous>, transform_indices = @transform_8, window_bounds = array<i64: 1, 128>}, {pipeline_mode = #tpu.pipeline_mode<synchronous>, transform_indices = @transform_9, window_bounds = array<i64: 1, 128>}]} {
    %c0 = arith.constant 0 : index
    %c0_0 = arith.constant 0 : index
    %0 = vector.load %arg1[%c0, %c0_0] : memref<256x72xbf16, #tpu.memory_space<vmem>>, vector<256x72xbf16>
    %c0_1 = arith.constant 0 : index
    %c0_2 = arith.constant 0 : index
    %1 = vector.load %arg4[%c0_1, %c0_2] : memref<72x128xbf16, #tpu.memory_space<vmem>>, vector<72x128xbf16>
    %cst = arith.constant dense<0.000000e+00> : vector<256x128xf32>
    %2 = tpu.matmul %0, %1, %cst {dimension_numbers = #tpu.dot_dimension_numbers<[1], [0], [0], [1], [0, 0, 1, 1], [], []>} : vector<256x72xbf16>, vector<72x128xbf16>, vector<256x128xf32> -> vector<256x128xf32>
    %c0_3 = arith.constant 0 : index
    %c0_4 = arith.constant 0 : index
    %3 = vector.load %arg2[%c0_3, %c0_4] : memref<256x72xbf16, #tpu.memory_space<vmem>>, vector<256x72xbf16>
    %c0_5 = arith.constant 0 : index
    %c0_6 = arith.constant 0 : index
    %4 = vector.load %arg5[%c0_5, %c0_6] : memref<72x128xbf16, #tpu.memory_space<vmem>>, vector<72x128xbf16>
    %cst_7 = arith.constant dense<0.000000e+00> : vector<256x128xf32>
    %5 = tpu.matmul %3, %4, %cst_7 {dimension_numbers = #tpu.dot_dimension_numbers<[1], [0], [0], [1], [0, 0, 1, 1], [], []>} : vector<256x72xbf16>, vector<72x128xbf16>, vector<256x128xf32> -> vector<256x128xf32>
    %6 = arith.addf %2, %5 : vector<256x128xf32>
    %c0_8 = arith.constant 0 : index
    %c0_9 = arith.constant 0 : index
    %7 = vector.load %arg3[%c0_8, %c0_9] : memref<256x72xbf16, #tpu.memory_space<vmem>>, vector<256x72xbf16>
    %c0_10 = arith.constant 0 : index
    %c0_11 = arith.constant 0 : index
    %8 = vector.load %arg6[%c0_10, %c0_11] : memref<72x128xbf16, #tpu.memory_space<vmem>>, vector<72x128xbf16>
    %cst_12 = arith.constant dense<0.000000e+00> : vector<256x128xf32>
    %9 = tpu.matmul %7, %8, %cst_12 {dimension_numbers = #tpu.dot_dimension_numbers<[1], [0], [0], [1], [0, 0, 1, 1], [], []>} : vector<256x72xbf16>, vector<72x128xbf16>, vector<256x128xf32> -> vector<256x128xf32>
    %10 = arith.addf %6, %9 : vector<256x128xf32>
    %c0_13 = arith.constant 0 : index
    %c0_14 = arith.constant 0 : index
    %11 = vector.load %arg7[%c0_13, %c0_14] : memref<1x128xf32, #tpu.memory_space<vmem>>, vector<1x128xf32>
    %12 = vector.broadcast %11 : vector<1x128xf32> to vector<256x128xf32>
    %13 = arith.addf %10, %12 : vector<256x128xf32>
    %c0_15 = arith.constant 0 : index
    %c0_16 = arith.constant 0 : index
    %14 = vector.load %arg8[%c0_15, %c0_16] : memref<256x128xf32, #tpu.memory_space<vmem>>, vector<256x128xf32>
    tpu.vector_store %arg8[%c0_15, %c0_16], %13 {strides = array<i32>} : memref<256x128xf32, #tpu.memory_space<vmem>>, vector<256x128xf32>,
    %c0_i32 = arith.constant 0 : i32
    %15 = arith.cmpi eq, %arg0, %c0_i32 : i32
    %16 = arith.extui %15 : i1 to i32
    %c0_i32_17 = arith.constant 0 : i32
    %17 = arith.cmpi ne, %16, %c0_i32_17 : i32
    scf.if %17 {
      %cst_28 = arith.constant 0.000000e+00 : f32
      %29 = vector.broadcast %cst_28 : f32 to vector<1x128xf32>
      %c0_29 = arith.constant 0 : index
      %c0_30 = arith.constant 0 : index
      %30 = vector.load %arg9[%c0_29, %c0_30] : memref<1x128xf32, #tpu.memory_space<vmem>>, vector<1x128xf32>
      tpu.vector_store %arg9[%c0_29, %c0_30], %29 {strides = array<i32>} : memref<1x128xf32, #tpu.memory_space<vmem>>, vector<1x128xf32>,
      %cst_31 = arith.constant 0.000000e+00 : f32
      %31 = vector.broadcast %cst_31 : f32 to vector<1x128xf32>
      %c0_32 = arith.constant 0 : index
      %c0_33 = arith.constant 0 : index
      %32 = vector.load %arg10[%c0_32, %c0_33] : memref<1x128xf32, #tpu.memory_space<vmem>>, vector<1x128xf32>
      tpu.vector_store %arg10[%c0_32, %c0_33], %31 {strides = array<i32>} : memref<1x128xf32, #tpu.memory_space<vmem>>, vector<1x128xf32>,
    } else {
    }
    %c0_18 = arith.constant 0 : index
    %c0_19 = arith.constant 0 : index
    %18 = vector.load %arg9[%c0_18, %c0_19] : memref<1x128xf32, #tpu.memory_space<vmem>>, vector<1x128xf32>
    %cst_20 = arith.constant dense<0.000000e+00> : vector<128xf32>
    %19 = vector.multi_reduction <add>, %13, %cst_20 [0] : vector<256x128xf32> to vector<128xf32>
    %20 = vector.shape_cast %19 : vector<128xf32> to vector<1x128xf32>
    %21 = arith.addf %18, %20 : vector<1x128xf32>
    %c0_21 = arith.constant 0 : index
    %c0_22 = arith.constant 0 : index
    %22 = vector.load %arg9[%c0_21, %c0_22] : memref<1x128xf32, #tpu.memory_space<vmem>>, vector<1x128xf32>
    tpu.vector_store %arg9[%c0_21, %c0_22], %21 {strides = array<i32>} : memref<1x128xf32, #tpu.memory_space<vmem>>, vector<1x128xf32>,
    %c0_23 = arith.constant 0 : index
    %c0_24 = arith.constant 0 : index
    %23 = vector.load %arg10[%c0_23, %c0_24] : memref<1x128xf32, #tpu.memory_space<vmem>>, vector<1x128xf32>
    %24 = arith.mulf %13, %13 : vector<256x128xf32>
    %cst_25 = arith.constant dense<0.000000e+00> : vector<128xf32>
    %25 = vector.multi_reduction <add>, %24, %cst_25 [0] : vector<256x128xf32> to vector<128xf32>
    %26 = vector.shape_cast %25 : vector<128xf32> to vector<1x128xf32>
    %27 = arith.addf %23, %26 : vector<1x128xf32>
    %c0_26 = arith.constant 0 : index
    %c0_27 = arith.constant 0 : index
    %28 = vector.load %arg10[%c0_26, %c0_27] : memref<1x128xf32, #tpu.memory_space<vmem>>, vector<1x128xf32>
    tpu.vector_store %arg10[%c0_26, %c0_27], %27 {strides = array<i32>} : memref<1x128xf32, #tpu.memory_space<vmem>>, vector<1x128xf32>,
    return
  }
  func.func @transform_0(%arg0: i32) -> (i32, i32) {
    %c0_i32 = arith.constant 0 : i32
    %c0_i32_0 = arith.constant 0 : i32
    return %arg0, %c0_i32 : i32, i32
  }
  func.func @transform_1(%arg0: i32) -> (i32, i32) {
    %c0_i32 = arith.constant 0 : i32
    %c0_i32_0 = arith.constant 0 : i32
    return %arg0, %c0_i32 : i32, i32
  }
  func.func @transform_2(%arg0: i32) -> (i32, i32) {
    %c0_i32 = arith.constant 0 : i32
    %c0_i32_0 = arith.constant 0 : i32
    return %arg0, %c0_i32 : i32, i32
  }
  func.func @transform_3(%arg0: i32) -> (i32, i32) {
    %c0_i32 = arith.constant 0 : i32
    %c0_i32_0 = arith.constant 0 : i32
    %c0_i32_1 = arith.constant 0 : i32
    return %c0_i32, %c0_i32_0 : i32, i32
  }
  func.func @transform_4(%arg0: i32) -> (i32, i32) {
    %c0_i32 = arith.constant 0 : i32
    %c0_i32_0 = arith.constant 0 : i32
    %c0_i32_1 = arith.constant 0 : i32
    return %c0_i32, %c0_i32_0 : i32, i32
  }
  func.func @transform_5(%arg0: i32) -> (i32, i32) {
    %c0_i32 = arith.constant 0 : i32
    %c0_i32_0 = arith.constant 0 : i32
    %c0_i32_1 = arith.constant 0 : i32
    return %c0_i32, %c0_i32_0 : i32, i32
  }
  func.func @transform_6(%arg0: i32) -> (i32, i32) {
    %c0_i32 = arith.constant 0 : i32
    %c0_i32_0 = arith.constant 0 : i32
    %c0_i32_1 = arith.constant 0 : i32
    return %c0_i32, %c0_i32_0 : i32, i32
  }
  func.func @transform_7(%arg0: i32) -> (i32, i32) {
    %c0_i32 = arith.constant 0 : i32
    %c0_i32_0 = arith.constant 0 : i32
    return %arg0, %c0_i32 : i32, i32
  }
  func.func @transform_8(%arg0: i32) -> (i32, i32) {
    %c0_i32 = arith.constant 0 : i32
    %c0_i32_0 = arith.constant 0 : i32
    %c0_i32_1 = arith.constant 0 : i32
    return %c0_i32, %c0_i32_0 : i32, i32
  }
  func.func @transform_9(%arg0: i32) -> (i32, i32) {
    %c0_i32 = arith.constant 0 : i32
    %c0_i32_0 = arith.constant 0 : i32
    %c0_i32_1 = arith.constant 0 : i32
    return %c0_i32, %c0_i32_0 : i32, i32
  }
}

</mosaic_0001>

<llo_original>
// kernel: tile.18
$region0: #{tile.18}
  #allocation2 [shape = 's32[1]{0}', space=sflag, size = 0x4, scoped, tag = 'scoped memory for tile.18']
  %s0 = inlined_call_operand.vmem [shape: f32[128], index: 0, kind: input, shape index: {}]
  %s1 = inlined_call_operand.hbm [shape: f32[4,128], index: 1, kind: output, shape index: {}]
  $region1: #{tile.18} parent=0
    #allocation0 [shape = 'u8[2048]{0}', space=vmem, size = 0x800, scoped, tag = 'operand span for operand 1']
    #allocation1 [shape = 's32[1]{0}', space=sflag, size = 0x4, scoped, tag = 'scoped memory for tile.18']
    %2 = vsyncpa [#allocation1], 0
    // Predicated region
    $region2: #{tile.18} parent=1 // pred_check
      _
    $region3: #{tile.18} parent=1 // pred_check_branch
      %4 = sbr.rel (0) target = $region5
    $region4: #{tile.18} parent=1 // pred_region
      _
    $region5: #{tile.18} parent=1 // pred_fallthru
      _
    %v5 = vld [vmem:[%s0] ss:$0 sm:$0xff]
    %6 = vst [vmem:[#allocation0] sm:$0xf] %v5
    %s8 = ssub.s32 64, 64
    %9 = vsyncadd [#allocation1], %s8
    %s11 = sshll.u32 [#allocation0], 4
    %s12 = int_to_ptr.vmem [resolvable:$true] %s11
    %14 = dma.vmem_to_hbm [thread:$0]  %s12, 64, %s1, [#allocation1]
    %15 = dma.done [#allocation1], 64
    %16 = vsyncpa [#allocation1], 1

// kernel: decoder_block_forward.9
$region0: #{decoder_block_forward.9}
  #allocation0 [shape = 'u32[]', space=smem, size = 0x4, offset = 0x4, fixed_abs, tag = 'smem constant byte address 0x4 - core index']
  #allocation1 [shape = 'u32[144,128]{1,0:T(1,128)}', space=vmem, size = 0x12000, scoped, tag = 'internal scratch']
  %s0 = inlined_call_operand.hbm [shape: f32[128,512], index: 0, kind: input, shape index: {}]
  %s1 = inlined_call_operand.hbm [shape: f32[1,512], index: 1, kind: input, shape index: {}]
  %s2 = inlined_call_operand.hbm [shape: f32[1,512], index: 2, kind: input, shape index: {}]
  %s3 = inlined_call_operand.hbm [shape: bf16[128,512], index: 3, kind: output, shape index: {}]
  %s4 = sld [smem:[#allocation0]]
  $region34: #{decoder_block_forward.9} parent=0
    _
  %s6 = ssub.s32 1, %s4
  %s7 = scalar_select 0, %s6, %s4
  $region1: #{decoder_block_forward.9} parent=0
    #allocation2 [shape = 'u8[262144]{0}', space=vmem, size = 0x40000, scoped, tag = 'input window, operand 0, single buffered']
    #allocation3 [shape = 's32[1]{0}', space=sflag, size = 0x4, scoped, tag = 'scoped memory for decoder_block_forward.9']
    #allocation4 [shape = 's32[1]{0}', space=sflag, size = 0x4, scoped, tag = 'scoped memory for decoder_block_forward.9']
    #allocation5 [shape = 'u8[2048]{0}', space=vmem, size = 0x800, scoped, tag = 'input window, operand 1, single buffered']
    #allocation6 [shape = 's32[1]{0}', space=sflag, size = 0x4, scoped, tag = 'scoped memory for decoder_block_forward.9']
    #allocation7 [shape = 'u8[2048]{0}', space=vmem, size = 0x800, scoped, tag = 'input window, operand 2, single buffered']
    #allocation8 [shape = 'u8[131072]{0}', space=vmem, size = 0x20000, scoped, tag = 'output window, operand 0, single buffered']
    %8 = vsyncpa [#allocation3], 0
    %9 = vsyncpa [#allocation6], 0
    %10 = vsyncpa [#allocation4], 0
    // Predicated region
    $region2: #{decoder_block_forward.9} parent=1 // pred_check
      _
    $region3: #{decoder_block_forward.9} parent=1 // pred_check_branch
      %12 = sbr.rel (0) target = $region5
    $region4: #{decoder_block_forward.9} parent=1 // pred_region
      %s14 = ssub.s32 8192, 8192
      %15 = vsyncadd [#allocation3], %s14
      %s16 = sshll.u32 [#allocation2], 4
      %s17 = int_to_ptr.vmem [resolvable:$true] %s16
      %22 = dma.hbm_to_vmem [thread:$0]  %s0, 8192, %s17, [#allocation3], 512, 512, 32
    $region5: #{decoder_block_forward.9} parent=1 // pred_fallthru
      _
    // Predicated region
    $region6: #{decoder_block_forward.9} parent=1 // pred_check
      _
    $region7: #{decoder_block_forward.9} parent=1 // pred_check_branch
      %24 = sbr.rel (0) target = $region9
    $region8: #{decoder_block_forward.9} parent=1 // pred_region
      %s26 = ssub.s32 64, 64
      %27 = vsyncadd [#allocation6], %s26
      %s29 = sshll.u32 [#allocation5], 4
      %s30 = int_to_ptr.vmem [resolvable:$true] %s29
      %32 = dma.hbm_to_vmem [thread:$0]  %s1, 64, %s30, [#allocation6]
    $region9: #{decoder_block_forward.9} parent=1 // pred_fallthru
      _
    // Predicated region
    $region10: #{decoder_block_forward.9} parent=1 // pred_check
      _
    $region11: #{decoder_block_forward.9} parent=1 // pred_check_branch
      %34 = sbr.rel (0) target = $region13
    $region12: #{decoder_block_forward.9} parent=1 // pred_region
      %s36 = ssub.s32 64, 64
      %37 = vsyncadd [#allocation6], %s36
      %s39 = sshll.u32 [#allocation7], 4
      %s40 = int_to_ptr.vmem [resolvable:$true] %s39
      %42 = dma.hbm_to_vmem [thread:$0]  %s2, 64, %s40, [#allocation6]
    $region13: #{decoder_block_forward.9} parent=1 // pred_fallthru
      _
    // Predicated region
    $region14: #{decoder_block_forward.9} parent=1 // pred_check
      _
    $region15: #{decoder_block_forward.9} parent=1 // pred_check_branch
      %44 = sbr.rel (0) target = $region17
    $region16: #{decoder_block_forward.9} parent=1 // pred_region
      %45 = dma.done [#allocation3], 8192
    $region17: #{decoder_block_forward.9} parent=1 // pred_fallthru
      _
    // Predicated region
    $region18: #{decoder_block_forward.9} parent=1 // pred_check
      _
    $region19: #{decoder_block_forward.9} parent=1 // pred_check_branch
      %47 = sbr.rel (0) target = $region21
    $region20: #{decoder_block_forward.9} parent=1 // pred_region
      %48 = dma.done [#allocation6], 64
    $region21: #{decoder_block_forward.9} parent=1 // pred_fallthru
      _
    // Predicated region
    $region22: #{decoder_block_forward.9} parent=1 // pred_check
      _
    $region23: #{decoder_block_forward.9} parent=1 // pred_check_branch
      %50 = sbr.rel (0) target = $region25
    $region24: #{decoder_block_forward.9} parent=1 // pred_region
      %51 = dma.done [#allocation6], 64
    $region25: #{decoder_block_forward.9} parent=1 // pred_fallthru
      _
    %v52 = vld [vmem:[#allocation2] sm:$0xff]
    %v53 = vld [vmem:[#allocation2 + $0x8] sm:$0xff]
    %v54 = vld [vmem:[#allocation2 + $0x10] sm:$0xff]
    %v55 = vld [vmem:[#allocation2 + $0x18] sm:$0xff]
    %v56 = vld [vmem:[#allocation2 + $0x20] sm:$0xff]
    %v57 = vld [vmem:[#allocation2 + $0x28] sm:$0xff]
    %v58 = vld [vmem:[#allocation2 + $0x30] sm:$0xff]
    %v59 = vld [vmem:[#allocation2 + $0x38] sm:$0xff]
    %v60 = vld [vmem:[#allocation2 + $0x40] sm:$0xff]
    %v61 = vld [vmem:[#allocation2 + $0x48] sm:$0xff]
    %v62 = vld [vmem:[#allocation2 + $0x50] sm:$0xff]
    %v63 = vld [vmem:[#allocation2 + $0x58] sm:$0xff]
    %v64 = vld [vmem:[#allocation2 + $0x60] sm:$0xff]
    %v65 = vld [vmem:[#allocation2 + $0x68] sm:$0xff]
    %v66 = vld [vmem:[#allocation2 + $0x70] sm:$0xff]
    %v67 = vld [vmem:[#allocation2 + $0x78] sm:$0xff]
    %v68 = vld [vmem:[#allocation2 + $0x80] sm:$0xff]
    %v69 = vld [vmem:[#allocation2 + $0x88] sm:$0xff]
    %v70 = vld [vmem:[#allocation2 + $0x90] sm:$0xff]
    %v71 = vld [vmem:[#allocation2 + $0x98] sm:$0xff]
    %v72 = vld [vmem:[#allocation2 + $0xa0] sm:$0xff]
    %v73 = vld [vmem:[#allocation2 + $0xa8] sm:$0xff]
    %v74 = vld [vmem:[#allocation2 + $0xb0] sm:$0xff]
    %v75 = vld [vmem:[#allocation2 + $0xb8] sm:$0xff]
    %v76 = vld [vmem:[#allocation2 + $0xc0] sm:$0xff]
    %v77 = vld [vmem:[#allocation2 + $0xc8] sm:$0xff]
    %v78 = vld [vmem:[#allocation2 + $0xd0] sm:$0xff]
    %v79 = vld [vmem:[#allocation2 + $0xd8] sm:$0xff]
    %v80 = vld [vmem:[#allocation2 + $0xe0] sm:$0xff]
    %v81 = vld [vmem:[#allocation2 + $0xe8] sm:$0xff]
    %v82 = vld [vmem:[#allocation2 + $0xf0] sm:$0xff]
    %v83 = vld [vmem:[#allocation2 + $0xf8] sm:$0xff]
    %v84 = vld [vmem:[#allocation2 + $0x100] sm:$0xff]
    %v85 = vld [vmem:[#allocation2 + $0x108] sm:$0xff]
    %v86 = vld [vmem:[#allocation2 + $0x110] sm:$0xff]
    %v87 = vld [vmem:[#allocation2 + $0x118] sm:$0xff]
    %v88 = vld [vmem:[#allocation2 + $0x120] sm:$0xff]
    %v89 = vld [vmem:[#allocation2 + $0x128] sm:$0xff]
    %v90 = vld [vmem:[#allocation2 + $0x130] sm:$0xff]
    %v91 = vld [vmem:[#allocation2 + $0x138] sm:$0xff]
    %v92 = vld [vmem:[#allocation2 + $0x140] sm:$0xff]
    %v93 = vld [vmem:[#allocation2 + $0x148] sm:$0xff]
    %v94 = vld [vmem:[#allocation2 + $0x150] sm:$0xff]
    %v95 = vld [vmem:[#allocation2 + $0x158] sm:$0xff]
    %v96 = vld [vmem:[#allocation2 + $0x160] sm:$0xff]
    %v97 = vld [vmem:[#allocation2 + $0x168] sm:$0xff]
    %v98 = vld [vmem:[#allocation2 + $0x170] sm:$0xff]
    %v99 = vld [vmem:[#allocation2 + $0x178] sm:$0xff]
    %v100 = vld [vmem:[#allocation2 + $0x180] sm:$0xff]
    %v101 = vld [vmem:[#allocation2 + $0x188] sm:$0xff]
    %v102 = vld [vmem:[#allocation2 + $0x190] sm:$0xff]
    %v103 = vld [vmem:[#allocation2 + $0x198] sm:$0xff]
    %v104 = vld [vmem:[#allocation2 + $0x1a0] sm:$0xff]
    %v105 = vld [vmem:[#allocation2 + $0x1a8] sm:$0xff]
    %v106 = vld [vmem:[#allocation2 + $0x1b0] sm:$0xff]
    %v107 = vld [vmem:[#allocation2 + $0x1b8] sm:$0xff]
    %v108 = vld [vmem:[#allocation2 + $0x1c0] sm:$0xff]
    %v109 = vld [vmem:[#allocation2 + $0x1c8] sm:$0xff]
    %v110 = vld [vmem:[#allocation2 + $0x1d0] sm:$0xff]
    %v111 = vld [vmem:[#allocation2 + $0x1d8] sm:$0xff]
    %v112 = vld [vmem:[#allocation2 + $0x1e0] sm:$0xff]
    %v113 = vld [vmem:[#allocation2 + $0x1e8] sm:$0xff]
    %v114 = vld [vmem:[#allocation2 + $0x1f0] sm:$0xff]
    %v115 = vld [vmem:[#allocation2 + $0x1f8] sm:$0xff]
    %v116 = vld [vmem:[#allocation5] sm:$0xf]
    %v118 = vlaneseq
    %v119 = vshrl.u32 %v118, 7
    %v120 = vsub.s32 0, %v119
    %v121 = vrot.slane %v116, %v120
    %v122 = vlaneseq
    %v123 = vshrl.u32 %v122, 7
    %v124 = vsub.s32 1, %v123
    %v125 = vrot.slane %v116, %v124
    %v126 = vlaneseq
    %v127 = vshrl.u32 %v126, 7
    %v128 = vsub.s32 2, %v127
    %v129 = vrot.slane %v116, %v128
    %v130 = vlaneseq
    %v131 = vshrl.u32 %v130, 7
    %v132 = vsub.s32 3, %v131
    %v133 = vrot.slane %v116, %v132
    %v138 = vmul.f32 %v52, %v121
    %v139 = vmul.f32 %v53, %v125
    %v140 = vmul.f32 %v54, %v129
    %v141 = vmul.f32 %v55, %v133
    %v142 = vmul.f32 %v56, %v121
    %v143 = vmul.f32 %v57, %v125
    %v144 = vmul.f32 %v58, %v129
    %v145 = vmul.f32 %v59, %v133
    %v146 = vmul.f32 %v60, %v121
    %v147 = vmul.f32 %v61, %v125
    %v148 = vmul.f32 %v62, %v129
    %v149 = vmul.f32 %v63, %v133
    %v150 = vmul.f32 %v64, %v121
    %v151 = vmul.f32 %v65, %v125
    %v152 = vmul.f32 %v66, %v129
    %v153 = vmul.f32 %v67, %v133
    %v154 = vmul.f32 %v68, %v121
    %v155 = vmul.f32 %v69, %v125
    %v156 = vmul.f32 %v70, %v129
    %v157 = vmul.f32 %v71, %v133
    %v158 = vmul.f32 %v72, %v121
    %v159 = vmul.f32 %v73, %v125
    %v160 = vmul.f32 %v74, %v129
    %v161 = vmul.f32 %v75, %v133
    %v162 = vmul.f32 %v76, %v121
    %v163 = vmul.f32 %v77, %v125
    %v164 = vmul.f32 %v78, %v129
    %v165 = vmul.f32 %v79, %v133
    %v166 = vmul.f32 %v80, %v121
    %v167 = vmul.f32 %v81, %v125
    %v168 = vmul.f32 %v82, %v129
    %v169 = vmul.f32 %v83, %v133
    %v170 = vmul.f32 %v84, %v121
    %v171 = vmul.f32 %v85, %v125
    %v172 = vmul.f32 %v86, %v129
    %v173 = vmul.f32 %v87, %v133
    %v174 = vmul.f32 %v88, %v121
    %v175 = vmul.f32 %v89, %v125
    %v176 = vmul.f32 %v90, %v129
    %v177 = vmul.f32 %v91, %v133
    %v178 = vmul.f32 %v92, %v121
    %v179 = vmul.f32 %v93, %v125
    %v180 = vmul.f32 %v94, %v129
    %v181 = vmul.f32 %v95, %v133
    %v182 = vmul.f32 %v96, %v121
    %v183 = vmul.f32 %v97, %v125
    %v184 = vmul.f32 %v98, %v129
    %v185 = vmul.f32 %v99, %v133
    %v186 = vmul.f32 %v100, %v121
    %v187 = vmul.f32 %v101, %v125
    %v188 = vmul.f32 %v102, %v129
    %v189 = vmul.f32 %v103, %v133
    %v190 = vmul.f32 %v104, %v121
    %v191 = vmul.f32 %v105, %v125
    %v192 = vmul.f32 %v106, %v129
    %v193 = vmul.f32 %v107, %v133
    %v194 = vmul.f32 %v108, %v121
    %v195 = vmul.f32 %v109, %v125
    %v196 = vmul.f32 %v110, %v129
    %v197 = vmul.f32 %v111, %v133
    %v198 = vmul.f32 %v112, %v121
    %v199 = vmul.f32 %v113, %v125
    %v200 = vmul.f32 %v114, %v129
    %v201 = vmul.f32 %v115, %v133
    %v202 = vld [vmem:[#allocation7] sm:$0xf]
    %v204 = vlaneseq
    %v205 = vshrl.u32 %v204, 7
    %v206 = vsub.s32 0, %v205
    %v207 = vrot.slane %v202, %v206
    %v208 = vlaneseq
    %v209 = vshrl.u32 %v208, 7
    %v210 = vsub.s32 1, %v209
    %v211 = vrot.slane %v202, %v210
    %v212 = vlaneseq
    %v213 = vshrl.u32 %v212, 7
    %v214 = vsub.s32 2, %v213
    %v215 = vrot.slane %v202, %v214
    %v216 = vlaneseq
    %v217 = vshrl.u32 %v216, 7
    %v218 = vsub.s32 3, %v217
    %v219 = vrot.slane %v202, %v218
    %v224 = vadd.f32 %v138, %v207
    %v225 = vadd.f32 %v139, %v211
    %v226 = vadd.f32 %v140, %v215
    %v227 = vadd.f32 %v141, %v219
    %v228 = vadd.f32 %v142, %v207
    %v229 = vadd.f32 %v143, %v211
    %v230 = vadd.f32 %v144, %v215
    %v231 = vadd.f32 %v145, %v219
    %v232 = vadd.f32 %v146, %v207
    %v233 = vadd.f32 %v147, %v211
    %v234 = vadd.f32 %v148, %v215
    %v235 = vadd.f32 %v149, %v219
    %v236 = vadd.f32 %v150, %v207
    %v237 = vadd.f32 %v151, %v211
    %v238 = vadd.f32 %v152, %v215
    %v239 = vadd.f32 %v153, %v219
    %v240 = vadd.f32 %v154, %v207
    %v241 = vadd.f32 %v155, %v211
    %v242 = vadd.f32 %v156, %v215
    %v243 = vadd.f32 %v157, %v219
    %v244 = vadd.f32 %v158, %v207
    %v245 = vadd.f32 %v159, %v211
    %v246 = vadd.f32 %v160, %v215
    %v247 = vadd.f32 %v161, %v219
    %v248 = vadd.f32 %v162, %v207
    %v249 = vadd.f32 %v163, %v211
    %v250 = vadd.f32 %v164, %v215
    %v251 = vadd.f32 %v165, %v219
    %v252 = vadd.f32 %v166, %v207
    %v253 = vadd.f32 %v167, %v211
    %v254 = vadd.f32 %v168, %v215
    %v255 = vadd.f32 %v169, %v219
    %v256 = vadd.f32 %v170, %v207
    %v257 = vadd.f32 %v171, %v211
    %v258 = vadd.f32 %v172, %v215
    %v259 = vadd.f32 %v173, %v219
    %v260 = vadd.f32 %v174, %v207
    %v261 = vadd.f32 %v175, %v211
    %v262 = vadd.f32 %v176, %v215
    %v263 = vadd.f32 %v177, %v219
    %v264 = vadd.f32 %v178, %v207
    %v265 = vadd.f32 %v179, %v211
    %v266 = vadd.f32 %v180, %v215
    %v267 = vadd.f32 %v181, %v219
    %v268 = vadd.f32 %v182, %v207
    %v269 = vadd.f32 %v183, %v211
    %v270 = vadd.f32 %v184, %v215
    %v271 = vadd.f32 %v185, %v219
    %v272 = vadd.f32 %v186, %v207
    %v273 = vadd.f32 %v187, %v211
    %v274 = vadd.f32 %v188, %v215
    %v275 = vadd.f32 %v189, %v219
    %v276 = vadd.f32 %v190, %v207
    %v277 = vadd.f32 %v191, %v211
    %v278 = vadd.f32 %v192, %v215
    %v279 = vadd.f32 %v193, %v219
    %v280 = vadd.f32 %v194, %v207
    %v281 = vadd.f32 %v195, %v211
    %v282 = vadd.f32 %v196, %v215
    %v283 = vadd.f32 %v197, %v219
    %v284 = vadd.f32 %v198, %v207
    %v285 = vadd.f32 %v199, %v211
    %v286 = vadd.f32 %v200, %v215
    %v287 = vadd.f32 %v201, %v219
    %v288 = vpack.c.bf16 %v228, %v224
    %v289 = vpack.c.bf16 %v229, %v225
    %v290 = vpack.c.bf16 %v230, %v226
    %v291 = vpack.c.bf16 %v231, %v227
    %v292 = vpack.c.bf16 %v236, %v232
    %v293 = vpack.c.bf16 %v237, %v233
    %v294 = vpack.c.bf16 %v238, %v234
    %v295 = vpack.c.bf16 %v239, %v235
    %v296 = vpack.c.bf16 %v244, %v240
    %v297 = vpack.c.bf16 %v245, %v241
    %v298 = vpack.c.bf16 %v246, %v242
    %v299 = vpack.c.bf16 %v247, %v243
    %v300 = vpack.c.bf16 %v252, %v248
    %v301 = vpack.c.bf16 %v253, %v249
    %v302 = vpack.c.bf16 %v254, %v250
    %v303 = vpack.c.bf16 %v255, %v251
    %v304 = vpack.c.bf16 %v260, %v256
    %v305 = vpack.c.bf16 %v261, %v257
    %v306 = vpack.c.bf16 %v262, %v258
    %v307 = vpack.c.bf16 %v263, %v259
    %v308 = vpack.c.bf16 %v268, %v264
    %v309 = vpack.c.bf16 %v269, %v265
    %v310 = vpack.c.bf16 %v270, %v266
    %v311 = vpack.c.bf16 %v271, %v267
    %v312 = vpack.c.bf16 %v276, %v272
    %v313 = vpack.c.bf16 %v277, %v273
    %v314 = vpack.c.bf16 %v278, %v274
    %v315 = vpack.c.bf16 %v279, %v275
    %v316 = vpack.c.bf16 %v284, %v280
    %v317 = vpack.c.bf16 %v285, %v281
    %v318 = vpack.c.bf16 %v286, %v282
    %v319 = vpack.c.bf16 %v287, %v283
    %v352 = vunpack.c.l.b16 %v288
    %v353 = vunpack.c.l.b16 %v289
    %v354 = vunpack.c.l.b16 %v290
    %v355 = vunpack.c.l.b16 %v291
    %v356 = vunpack.c.h.b16 %v288
    %v357 = vunpack.c.h.b16 %v289
    %v358 = vunpack.c.h.b16 %v290
    %v359 = vunpack.c.h.b16 %v291
    %v360 = vunpack.c.l.b16 %v292
    %v361 = vunpack.c.l.b16 %v293
    %v362 = vunpack.c.l.b16 %v294
    %v363 = vunpack.c.l.b16 %v295
    %v364 = vunpack.c.h.b16 %v292
    %v365 = vunpack.c.h.b16 %v293
    %v366 = vunpack.c.h.b16 %v294
    %v367 = vunpack.c.h.b16 %v295
    %v368 = vunpack.c.l.b16 %v296
    %v369 = vunpack.c.l.b16 %v297
    %v370 = vunpack.c.l.b16 %v298
    %v371 = vunpack.c.l.b16 %v299
    %v372 = vunpack.c.h.b16 %v296
    %v373 = vunpack.c.h.b16 %v297
    %v374 = vunpack.c.h.b16 %v298
    %v375 = vunpack.c.h.b16 %v299
    %v376 = vunpack.c.l.b16 %v300
    %v377 = vunpack.c.l.b16 %v301
    %v378 = vunpack.c.l.b16 %v302
    %v379 = vunpack.c.l.b16 %v303
    %v380 = vunpack.c.h.b16 %v300
    %v381 = vunpack.c.h.b16 %v301
    %v382 = vunpack.c.h.b16 %v302
    %v383 = vunpack.c.h.b16 %v303
    %v384 = vunpack.c.l.b16 %v304
    %v385 = vunpack.c.l.b16 %v305
    %v386 = vunpack.c.l.b16 %v306
    %v387 = vunpack.c.l.b16 %v307
    %v388 = vunpack.c.h.b16 %v304
    %v389 = vunpack.c.h.b16 %v305
    %v390 = vunpack.c.h.b16 %v306
    %v391 = vunpack.c.h.b16 %v307
    %v392 = vunpack.c.l.b16 %v308
    %v393 = vunpack.c.l.b16 %v309
    %v394 = vunpack.c.l.b16 %v310
    %v395 = vunpack.c.l.b16 %v311
    %v396 = vunpack.c.h.b16 %v308
    %v397 = vunpack.c.h.b16 %v309
    %v398 = vunpack.c.h.b16 %v310
    %v399 = vunpack.c.h.b16 %v311
    %v400 = vunpack.c.l.b16 %v312
    %v401 = vunpack.c.l.b16 %v313
    %v402 = vunpack.c.l.b16 %v314
    %v403 = vunpack.c.l.b16 %v315
    %v404 = vunpack.c.h.b16 %v312
    %v405 = vunpack.c.h.b16 %v313
    %v406 = vunpack.c.h.b16 %v314
    %v407 = vunpack.c.h.b16 %v315
    %v408 = vunpack.c.l.b16 %v316
    %v409 = vunpack.c.l.b16 %v317
    %v410 = vunpack.c.l.b16 %v318
    %v411 = vunpack.c.l.b16 %v319
    %v412 = vunpack.c.h.b16 %v316
    %v413 = vunpack.c.h.b16 %v317
    %v414 = vunpack.c.h.b16 %v318
    %v415 = vunpack.c.h.b16 %v319
    %v416 = vpack.c.b16 %v353, %v352
    %v417 = vpack.c.b16 %v355, %v354
    %v418 = vpack.c.b16 %v357, %v356
    %v419 = vpack.c.b16 %v359, %v358
    %v420 = vpack.c.b16 %v361, %v360
    %v421 = vpack.c.b16 %v363, %v362
    %v422 = vpack.c.b16 %v365, %v364
    %v423 = vpack.c.b16 %v367, %v366
    %v424 = vpack.c.b16 %v369, %v368
    %v425 = vpack.c.b16 %v371, %v370
    %v426 = vpack.c.b16 %v373, %v372
    %v427 = vpack.c.b16 %v375, %v374
    %v428 = vpack.c.b16 %v377, %v376
    %v429 = vpack.c.b16 %v379, %v378
    %v430 = vpack.c.b16 %v381, %v380
    %v431 = vpack.c.b16 %v383, %v382
    %v432 = vpack.c.b16 %v385, %v384
    %v433 = vpack.c.b16 %v387, %v386
    %v434 = vpack.c.b16 %v389, %v388
    %v435 = vpack.c.b16 %v391, %v390
    %v436 = vpack.c.b16 %v393, %v392
    %v437 = vpack.c.b16 %v395, %v394
    %v438 = vpack.c.b16 %v397, %v396
    %v439 = vpack.c.b16 %v399, %v398
    %v440 = vpack.c.b16 %v401, %v400
    %v441 = vpack.c.b16 %v403, %v402
    %v442 = vpack.c.b16 %v405, %v404
    %v443 = vpack.c.b16 %v407, %v406
    %v444 = vpack.c.b16 %v409, %v408
    %v445 = vpack.c.b16 %v411, %v410
    %v446 = vpack.c.b16 %v413, %v412
    %v447 = vpack.c.b16 %v415, %v414
    %480 = vst [vmem:[#allocation8] sm:$0xff] %v416
    %481 = vst [vmem:[#allocation8 + $0x8] sm:$0xff] %v417
    %482 = vst [vmem:[#allocation8 + $0x10] sm:$0xff] %v418
    %483 = vst [vmem:[#allocation8 + $0x18] sm:$0xff] %v419
    %484 = vst [vmem:[#allocation8 + $0x20] sm:$0xff] %v420
    %485 = vst [vmem:[#allocation8 + $0x28] sm:$0xff] %v421
    %486 = vst [vmem:[#allocation8 + $0x30] sm:$0xff] %v422
    %487 = vst [vmem:[#allocation8 + $0x38] sm:$0xff] %v423
    %488 = vst [vmem:[#allocation8 + $0x40] sm:$0xff] %v424
    %489 = vst [vmem:[#allocation8 + $0x48] sm:$0xff] %v425
    %490 = vst [vmem:[#allocation8 + $0x50] sm:$0xff] %v426
    %491 = vst [vmem:[#allocation8 + $0x58] sm:$0xff] %v427
    %492 = vst [vmem:[#allocation8 + $0x60] sm:$0xff] %v428
    %493 = vst [vmem:[#allocation8 + $0x68] sm:$0xff] %v429
    %494 = vst [vmem:[#allocation8 + $0x70] sm:$0xff] %v430
    %495 = vst [vmem:[#allocation8 + $0x78] sm:$0xff] %v431
    %496 = vst [vmem:[#allocation8 + $0x80] sm:$0xff] %v432
    %497 = vst [vmem:[#allocation8 + $0x88] sm:$0xff] %v433
    %498 = vst [vmem:[#allocation8 + $0x90] sm:$0xff] %v434
    %499 = vst [vmem:[#allocation8 + $0x98] sm:$0xff] %v435
    %500 = vst [vmem:[#allocation8 + $0xa0] sm:$0xff] %v436
    %501 = vst [vmem:[#allocation8 + $0xa8] sm:$0xff] %v437
    %502 = vst [vmem:[#allocation8 + $0xb0] sm:$0xff] %v438
    %503 = vst [vmem:[#allocation8 + $0xb8] sm:$0xff] %v439
    %504 = vst [vmem:[#allocation8 + $0xc0] sm:$0xff] %v440
    %505 = vst [vmem:[#allocation8 + $0xc8] sm:$0xff] %v441
    %506 = vst [vmem:[#allocation8 + $0xd0] sm:$0xff] %v442
    %507 = vst [vmem:[#allocation8 + $0xd8] sm:$0xff] %v443
    %508 = vst [vmem:[#allocation8 + $0xe0] sm:$0xff] %v444
    %509 = vst [vmem:[#allocation8 + $0xe8] sm:$0xff] %v445
    %510 = vst [vmem:[#allocation8 + $0xf0] sm:$0xff] %v446
    %511 = vst [vmem:[#allocation8 + $0xf8] sm:$0xff] %v447
    // Predicated region
    $region26: #{decoder_block_forward.9} parent=1 // pred_check
      _
    $region27: #{decoder_block_forward.9} parent=1 // pred_check_branch
      %513 = sbr.rel (0) target = $region29
    $region28: #{decoder_block_forward.9} parent=1 // pred_region
      %s515 = ssub.s32 4096, 4096
      %516 = vsyncadd [#allocation4], %s515
      %s517 = sshll.u32 [#allocation8], 4
      %s518 = int_to_ptr.vmem [resolvable:$true] %s517
      %523 = dma.vmem_to_hbm [thread:$0]  %s518, 4096, %s3, [#allocation4], 256, 256, 16
    $region29: #{decoder_block_forward.9} parent=1 // pred_fallthru
      _
    // Predicated region
    $region30: #{decoder_block_forward.9} parent=1 // pred_check
      _
    $region31: #{decoder_block_forward.9} parent=1 // pred_check_branch
      %525 = sbr.rel (0) target = $region33
    $region32: #{decoder_block_forward.9} parent=1 // pred_region
      %526 = dma.done [#allocation4], 4096
    $region33: #{decoder_block_forward.9} parent=1 // pred_fallthru
      _
    %527 = vsyncpa [#allocation3], 1
    %528 = vsyncpa [#allocation6], 1
    %529 = vsyncpa [#allocation4], 1

// kernel: decoder_block_forward.8
$region0: #{decoder_block_forward.8}
  #allocation0 [shape = 'u32[]', space=smem, size = 0x4, offset = 0x4, fixed_abs, tag = 'smem constant byte address 0x4 - core index']
  #allocation1 [shape = 'u32[144,128]{1,0:T(1,128)}', space=vmem, size = 0x12000, scoped, tag = 'internal scratch']
  %s0 = inlined_call_operand.hbm [shape: bf16[128,16], index: 0, kind: input, shape index: {}]
  %s1 = inlined_call_operand.hbm [shape: bf16[16,512], index: 1, kind: input, shape index: {}]
  %s2 = inlined_call_operand.hbm [shape: f32[1,512], index: 2, kind: input, shape index: {}]
  %s3 = inlined_call_operand.hbm [shape: f32[128,512], index: 3, kind: output, shape index: {0}]
  %s4 = inlined_call_operand.hbm [shape: f32[1,512], index: 4, kind: output, shape index: {1}]
  %s5 = inlined_call_operand.hbm [shape: f32[1,512], index: 5, kind: output, shape index: {2}]
  %6 = xla_tuple %s3, %s4, %s5
  %s7 = sld [smem:[#allocation0]]
  $region54: #{decoder_block_forward.8} parent=0
    _
  %s9 = ssub.s32 1, %s7
  %s10 = scalar_select 0, %s9, %s7
  $region1: #{decoder_block_forward.8} parent=0
    #allocation2 [shape = 'u8[32768]{0}', space=vmem, size = 0x8000, scoped, tag = 'input window, operand 0, single buffered']
    #allocation3 [shape = 's32[1]{0}', space=sflag, size = 0x4, scoped, tag = 'scoped memory for decoder_block_forward.8']
    #allocation4 [shape = 's32[1]{0}', space=sflag, size = 0x4, scoped, tag = 'scoped memory for decoder_block_forward.8']
    #allocation5 [shape = 'u8[16384]{0}', space=vmem, size = 0x4000, scoped, tag = 'input window, operand 1, single buffered']
    #allocation6 [shape = 's32[1]{0}', space=sflag, size = 0x4, scoped, tag = 'scoped memory for decoder_block_forward.8']
    #allocation7 [shape = 'u8[2048]{0}', space=vmem, size = 0x800, scoped, tag = 'input window, operand 2, single buffered']
    #allocation8 [shape = 'u8[262144]{0}', space=vmem, size = 0x40000, scoped, tag = 'output window, operand 0, single buffered']
    #allocation9 [shape = 'u8[2048]{0}', space=vmem, size = 0x800, scoped, tag = 'output window, operand 1, single buffered']
    #allocation10 [shape = 's32[1]{0}', space=sflag, size = 0x4, scoped, tag = 'scoped memory for decoder_block_forward.8']
    #allocation11 [shape = 'u8[2048]{0}', space=vmem, size = 0x800, scoped, tag = 'output window, operand 2, single buffered']
    %11 = vsyncpa [#allocation3], 0
    %12 = vsyncpa [#allocation6], 0
    %13 = vsyncpa [#allocation4], 0
    %14 = vsyncpa [#allocation10], 0
    // Predicated region
    $region2: #{decoder_block_forward.8} parent=1 // pred_check
      _
    $region3: #{decoder_block_forward.8} parent=1 // pred_check_branch
      %16 = sbr.rel (0) target = $region5
    $region4: #{decoder_block_forward.8} parent=1 // pred_region
      %s18 = ssub.s32 1024, 1024
      %19 = vsyncadd [#allocation3], %s18
      %s20 = sshll.u32 [#allocation2], 4
      %s21 = int_to_ptr.vmem [resolvable:$true] %s20
      %26 = dma.hbm_to_vmem [thread:$0]  %s0, 1024, %s21, [#allocation3], 64, 64, 4
    $region5: #{decoder_block_forward.8} parent=1 // pred_fallthru
      _
    // Predicated region
    $region6: #{decoder_block_forward.8} parent=1 // pred_check
      _
    $region7: #{decoder_block_forward.8} parent=1 // pred_check_branch
      %28 = sbr.rel (0) target = $region9
    $region8: #{decoder_block_forward.8} parent=1 // pred_region
      %s30 = ssub.s32 512, 512
      %31 = vsyncadd [#allocation6], %s30
      %s32 = sshll.u32 [#allocation5], 4
      %s33 = int_to_ptr.vmem [resolvable:$true] %s32
      %38 = dma.hbm_to_vmem [thread:$0]  %s1, 512, %s33, [#allocation6], 256, 256, 16
    $region9: #{decoder_block_forward.8} parent=1 // pred_fallthru
      _
    // Predicated region
    $region10: #{decoder_block_forward.8} parent=1 // pred_check
      _
    $region11: #{decoder_block_forward.8} parent=1 // pred_check_branch
      %40 = sbr.rel (0) target = $region13
    $region12: #{decoder_block_forward.8} parent=1 // pred_region
      %s42 = ssub.s32 64, 64
      %43 = vsyncadd [#allocation6], %s42
      %s45 = sshll.u32 [#allocation7], 4
      %s46 = int_to_ptr.vmem [resolvable:$true] %s45
      %48 = dma.hbm_to_vmem [thread:$0]  %s2, 64, %s46, [#allocation6]
    $region13: #{decoder_block_forward.8} parent=1 // pred_fallthru
      _
    // Predicated region
    $region14: #{decoder_block_forward.8} parent=1 // pred_check
      _
    $region15: #{decoder_block_forward.8} parent=1 // pred_check_branch
      %50 = sbr.rel (0) target = $region17
    $region16: #{decoder_block_forward.8} parent=1 // pred_region
      %51 = dma.done [#allocation3], 1024
    $region17: #{decoder_block_forward.8} parent=1 // pred_fallthru
      _
    // Predicated region
    $region18: #{decoder_block_forward.8} parent=1 // pred_check
      _
    $region19: #{decoder_block_forward.8} parent=1 // pred_check_branch
      %53 = sbr.rel (0) target = $region21
    $region20: #{decoder_block_forward.8} parent=1 // pred_region
      %54 = dma.done [#allocation6], 512
    $region21: #{decoder_block_forward.8} parent=1 // pred_fallthru
      _
    // Predicated region
    $region22: #{decoder_block_forward.8} parent=1 // pred_check
      _
    $region23: #{decoder_block_forward.8} parent=1 // pred_check_branch
      %56 = sbr.rel (0) target = $region25
    $region24: #{decoder_block_forward.8} parent=1 // pred_region
      %57 = dma.done [#allocation6], 64
    $region25: #{decoder_block_forward.8} parent=1 // pred_fallthru
      _
    %v59 = vld [vmem:[#allocation2] sm:$0xf]
    %v60 = vld [vmem:[#allocation2 + $0x4] sm:$0xf]
    %v61 = vld [vmem:[#allocation2 + $0x8] sm:$0xf]
    %v62 = vld [vmem:[#allocation2 + $0xc] sm:$0xf]
    %v63 = vld [vmem:[#allocation2 + $0x10] sm:$0xf]
    %v64 = vld [vmem:[#allocation2 + $0x14] sm:$0xf]
    %v65 = vld [vmem:[#allocation2 + $0x18] sm:$0xf]
    %v66 = vld [vmem:[#allocation2 + $0x1c] sm:$0xf]
    %v67 = vld [vmem:[#allocation2 + $0x20] sm:$0xf]
    %v68 = vld [vmem:[#allocation2 + $0x24] sm:$0xf]
    %v69 = vld [vmem:[#allocation2 + $0x28] sm:$0xf]
    %v70 = vld [vmem:[#allocation2 + $0x2c] sm:$0xf]
    %v71 = vld [vmem:[#allocation2 + $0x30] sm:$0xf]
    %v72 = vld [vmem:[#allocation2 + $0x34] sm:$0xf]
    %v73 = vld [vmem:[#allocation2 + $0x38] sm:$0xf]
    %v74 = vld [vmem:[#allocation2 + $0x3c] sm:$0xf]
    %v75 = vld [vmem:[#allocation5] sm:$0xff]
    %v76 = vld [vmem:[#allocation5 + $0x8] sm:$0xff]
    %v77 = vld [vmem:[#allocation5 + $0x10] sm:$0xff]
    %v78 = vld [vmem:[#allocation5 + $0x18] sm:$0xff]
    %v79 = vld [vmem:[#allocation7] sm:$0xf]
    %v81 = vlaneseq
    %v82 = vshrl.u32 %v81, 7
    %v83 = vsub.s32 0, %v82
    %v84 = vrot.slane %v79, %v83
    %v85 = vlaneseq
    %v86 = vshrl.u32 %v85, 7
    %v87 = vsub.s32 1, %v86
    %v88 = vrot.slane %v79, %v87
    %v89 = vlaneseq
    %v90 = vshrl.u32 %v89, 7
    %v91 = vsub.s32 2, %v90
    %v92 = vrot.slane %v79, %v91
    %v93 = vlaneseq
    %v94 = vshrl.u32 %v93, 7
    %v95 = vsub.s32 3, %v94
    %v96 = vrot.slane %v79, %v95
    %v117 = vunpack.c.l.b16 %v59
    %v118 = vunpack.c.l.b16 %v60
    %v119 = vunpack.c.l.b16 %v61
    %v120 = vunpack.c.l.b16 %v62
    %v121 = vunpack.c.l.b16 %v63
    %v122 = vunpack.c.l.b16 %v64
    %v123 = vunpack.c.l.b16 %v65
    %v124 = vunpack.c.l.b16 %v66
    %v125 = vunpack.c.l.b16 %v67
    %v126 = vunpack.c.l.b16 %v68
    %v127 = vunpack.c.l.b16 %v69
    %v128 = vunpack.c.l.b16 %v70
    %v129 = vunpack.c.l.b16 %v71
    %v130 = vunpack.c.l.b16 %v72
    %v131 = vunpack.c.l.b16 %v73
    %v132 = vunpack.c.l.b16 %v74
    %v133 = vpack.c.b16 %v118, %v117
    %v134 = vpack.c.b16 %v120, %v119
    %v135 = vpack.c.b16 %v122, %v121
    %v136 = vpack.c.b16 %v124, %v123
    %v137 = vpack.c.b16 %v126, %v125
    %v138 = vpack.c.b16 %v128, %v127
    %v139 = vpack.c.b16 %v130, %v129
    %v140 = vpack.c.b16 %v132, %v131
    %v145 = vunpack.c.l.b16 %v75
    %v146 = vunpack.c.h.b16 %v75
    %v147 = vunpack.c.l.b16 %v76
    %v148 = vunpack.c.h.b16 %v76
    %v149 = vunpack.c.l.b16 %v77
    %v150 = vunpack.c.h.b16 %v77
    %v151 = vunpack.c.l.b16 %v78
    %v152 = vunpack.c.h.b16 %v78
    %v153 = vpack.c.b16 %v149, %v145
    %v154 = vpack.c.b16 %v150, %v146
    %v155 = vpack.c.b16 %v151, %v147
    %v156 = vpack.c.b16 %v152, %v148
    %vm161 = vcmask 130048
    %v163 = vsel %vm161, %v133, 0
    %v166 = vsel %vm161, %v134, 0
    %v169 = vsel %vm161, %v135, 0
    %v172 = vsel %vm161, %v136, 0
    %v175 = vsel %vm161, %v137, 0
    %v178 = vsel %vm161, %v138, 0
    %v181 = vsel %vm161, %v139, 0
    %v184 = vsel %vm161, %v140, 0
    %186 = vmatprep.subr.bf16.mxu0 %v154
    %187 = vmatpush1.bf16.msra.mxu0 %v153
    %188 = vmatprep.subr.bf16.mxu0 0
    %189 = vmatpush1.bf16.msra.mxu0 0
    %190 = vmatprep.subr.bf16.mxu0 0
    %191 = vmatpush1.bf16.msra.mxu0 0
    %192 = vmatprep.subr.bf16.mxu0 0
    %193 = vmatpush1.bf16.msra.mxu0 0
    %194 = vmatprep.subr.bf16.mxu0 0
    %195 = vmatpush1.bf16.msra.mxu0 0
    %196 = vmatprep.subr.bf16.mxu0 0
    %197 = vmatpush1.bf16.msra.mxu0 0
    %198 = vmatprep.subr.bf16.mxu0 0
    %199 = vmatpush1.bf16.msra.mxu0 0
    %200 = vmatprep.subr.bf16.mxu0 0
    %201 = vmatpush1.bf16.msra.mxu0 0
    %202 = vmatprep.subr.bf16.mxu0 0
    %203 = vmatpush1.bf16.msra.mxu0 0
    %204 = vmatprep.subr.bf16.mxu0 0
    %205 = vmatpush1.bf16.msra.mxu0 0
    %206 = vmatprep.subr.bf16.mxu0 0
    %207 = vmatpush1.bf16.msra.mxu0 0
    %208 = vmatprep.subr.bf16.mxu0 0
    %209 = vmatpush1.bf16.msra.mxu0 0
    %210 = vmatprep.subr.bf16.mxu0 0
    %211 = vmatpush1.bf16.msra.mxu0 0
    %212 = vmatprep.subr.bf16.mxu0 0
    %213 = vmatpush1.bf16.msra.mxu0 0
    %214 = vmatprep.subr.bf16.mxu0 0
    %215 = vmatpush1.bf16.msra.mxu0 0
    %216 = vmatprep.subr.bf16.mxu0 0
    %217 = vmatpush1.bf16.msra.mxu0 0
    %218 = vmatprep.mubr.bf16.mxu0 0
    %219 = vmatmul.mubr.bf16.gmra.mrb[0].mxu0 %v163
    %v220 = vpop.f32.mrb[0].mxu0
    %v221 = vadd.f32 %v84, %v220
    %v222 = vpop.f32.mrb[0].mxu0
    %v223 = vadd.f32 %v88, %v222
    %v224 = vpop.f32.mrb[0].mxu0
    %v225 = vadd.f32 %v84, %v224
    %v226 = vpop.f32.mrb[0].mxu0
    %v227 = vadd.f32 %v88, %v226
    %228 = vmatprep.mubr.bf16.mxu0 0
    %229 = vmatmul.mubr.bf16.gmra.mrb[0].mxu0 %v166
    %v230 = vpop.f32.mrb[0].mxu0
    %v231 = vadd.f32 %v84, %v230
    %v232 = vpop.f32.mrb[0].mxu0
    %v233 = vadd.f32 %v88, %v232
    %v234 = vpop.f32.mrb[0].mxu0
    %v235 = vadd.f32 %v84, %v234
    %v236 = vpop.f32.mrb[0].mxu0
    %v237 = vadd.f32 %v88, %v236
    %238 = vmatprep.mubr.bf16.mxu0 0
    %239 = vmatmul.mubr.bf16.gmra.mrb[0].mxu0 %v169
    %v240 = vpop.f32.mrb[0].mxu0
    %v241 = vadd.f32 %v84, %v240
    %v242 = vpop.f32.mrb[0].mxu0
    %v243 = vadd.f32 %v88, %v242
    %v244 = vpop.f32.mrb[0].mxu0
    %v245 = vadd.f32 %v84, %v244
    %v246 = vpop.f32.mrb[0].mxu0
    %v247 = vadd.f32 %v88, %v246
    %248 = vmatprep.mubr.bf16.mxu0 0
    %249 = vmatmul.mubr.bf16.gmra.mrb[0].mxu0 %v172
    %v250 = vpop.f32.mrb[0].mxu0
    %v251 = vadd.f32 %v84, %v250
    %v252 = vpop.f32.mrb[0].mxu0
    %v253 = vadd.f32 %v88, %v252
    %v254 = vpop.f32.mrb[0].mxu0
    %v255 = vadd.f32 %v84, %v254
    %v256 = vpop.f32.mrb[0].mxu0
    %v257 = vadd.f32 %v88, %v256
    %258 = vmatprep.mubr.bf16.mxu0 0
    %259 = vmatmul.mubr.bf16.gmra.mrb[0].mxu0 %v175
    %v260 = vpop.f32.mrb[0].mxu0
    %v261 = vadd.f32 %v84, %v260
    %v262 = vpop.f32.mrb[0].mxu0
    %v263 = vadd.f32 %v88, %v262
    %v264 = vpop.f32.mrb[0].mxu0
    %v265 = vadd.f32 %v84, %v264
    %v266 = vpop.f32.mrb[0].mxu0
    %v267 = vadd.f32 %v88, %v266
    %268 = vmatprep.mubr.bf16.mxu0 0
    %269 = vmatmul.mubr.bf16.gmra.mrb[0].mxu0 %v178
    %v270 = vpop.f32.mrb[0].mxu0
    %v271 = vadd.f32 %v84, %v270
    %v272 = vpop.f32.mrb[0].mxu0
    %v273 = vadd.f32 %v88, %v272
    %v274 = vpop.f32.mrb[0].mxu0
    %v275 = vadd.f32 %v84, %v274
    %v276 = vpop.f32.mrb[0].mxu0
    %v277 = vadd.f32 %v88, %v276
    %278 = vmatprep.mubr.bf16.mxu0 0
    %279 = vmatmul.mubr.bf16.gmra.mrb[0].mxu0 %v181
    %v280 = vpop.f32.mrb[0].mxu0
    %v281 = vadd.f32 %v84, %v280
    %v282 = vpop.f32.mrb[0].mxu0
    %v283 = vadd.f32 %v88, %v282
    %v284 = vpop.f32.mrb[0].mxu0
    %v285 = vadd.f32 %v84, %v284
    %v286 = vpop.f32.mrb[0].mxu0
    %v287 = vadd.f32 %v88, %v286
    %288 = vmatprep.mubr.bf16.mxu0 0
    %289 = vmatmul.mubr.bf16.gmra.mrb[0].mxu0 %v184
    %v290 = vpop.f32.mrb[0].mxu0
    %v291 = vadd.f32 %v84, %v290
    %v292 = vpop.f32.mrb[0].mxu0
    %v293 = vadd.f32 %v88, %v292
    %v294 = vpop.f32.mrb[0].mxu0
    %v295 = vadd.f32 %v84, %v294
    %v296 = vpop.f32.mrb[0].mxu0
    %v297 = vadd.f32 %v88, %v296
    %298 = vdwg.mxu0
    %299 = vmatprep.subr.bf16.mxu0 %v156
    %300 = vmatpush1.bf16.msra.mxu0 %v155
    %301 = vmatprep.subr.bf16.mxu0 0
    %302 = vmatpush1.bf16.msra.mxu0 0
    %303 = vmatprep.subr.bf16.mxu0 0
    %304 = vmatpush1.bf16.msra.mxu0 0
    %305 = vmatprep.subr.bf16.mxu0 0
    %306 = vmatpush1.bf16.msra.mxu0 0
    %307 = vmatprep.subr.bf16.mxu0 0
    %308 = vmatpush1.bf16.msra.mxu0 0
    %309 = vmatprep.subr.bf16.mxu0 0
    %310 = vmatpush1.bf16.msra.mxu0 0
    %311 = vmatprep.subr.bf16.mxu0 0
    %312 = vmatpush1.bf16.msra.mxu0 0
    %313 = vmatprep.subr.bf16.mxu0 0
    %314 = vmatpush1.bf16.msra.mxu0 0
    %315 = vmatprep.subr.bf16.mxu0 0
    %316 = vmatpush1.bf16.msra.mxu0 0
    %317 = vmatprep.subr.bf16.mxu0 0
    %318 = vmatpush1.bf16.msra.mxu0 0
    %319 = vmatprep.subr.bf16.mxu0 0
    %320 = vmatpush1.bf16.msra.mxu0 0
    %321 = vmatprep.subr.bf16.mxu0 0
    %322 = vmatpush1.bf16.msra.mxu0 0
    %323 = vmatprep.subr.bf16.mxu0 0
    %324 = vmatpush1.bf16.msra.mxu0 0
    %325 = vmatprep.subr.bf16.mxu0 0
    %326 = vmatpush1.bf16.msra.mxu0 0
    %327 = vmatprep.subr.bf16.mxu0 0
    %328 = vmatpush1.bf16.msra.mxu0 0
    %329 = vmatprep.subr.bf16.mxu0 0
    %330 = vmatpush1.bf16.msra.mxu0 0
    %331 = vmatprep.mubr.bf16.mxu0 0
    %332 = vmatmul.mubr.bf16.gmra.mrb[0].mxu0 %v163
    %v333 = vpop.f32.mrb[0].mxu0
    %v334 = vadd.f32 %v92, %v333
    %v335 = vpop.f32.mrb[0].mxu0
    %v336 = vadd.f32 %v96, %v335
    %v337 = vpop.f32.mrb[0].mxu0
    %v338 = vadd.f32 %v92, %v337
    %v339 = vpop.f32.mrb[0].mxu0
    %v340 = vadd.f32 %v96, %v339
    %341 = vmatprep.mubr.bf16.mxu0 0
    %342 = vmatmul.mubr.bf16.gmra.mrb[0].mxu0 %v166
    %v343 = vpop.f32.mrb[0].mxu0
    %v344 = vadd.f32 %v92, %v343
    %v345 = vpop.f32.mrb[0].mxu0
    %v346 = vadd.f32 %v96, %v345
    %v347 = vpop.f32.mrb[0].mxu0
    %v348 = vadd.f32 %v92, %v347
    %v349 = vpop.f32.mrb[0].mxu0
    %v350 = vadd.f32 %v96, %v349
    %351 = vmatprep.mubr.bf16.mxu0 0
    %352 = vmatmul.mubr.bf16.gmra.mrb[0].mxu0 %v169
    %v353 = vpop.f32.mrb[0].mxu0
    %v354 = vadd.f32 %v92, %v353
    %v355 = vpop.f32.mrb[0].mxu0
    %v356 = vadd.f32 %v96, %v355
    %v357 = vpop.f32.mrb[0].mxu0
    %v358 = vadd.f32 %v92, %v357
    %v359 = vpop.f32.mrb[0].mxu0
    %v360 = vadd.f32 %v96, %v359
    %361 = vmatprep.mubr.bf16.mxu0 0
    %362 = vmatmul.mubr.bf16.gmra.mrb[0].mxu0 %v172
    %v363 = vpop.f32.mrb[0].mxu0
    %v364 = vadd.f32 %v92, %v363
    %v365 = vpop.f32.mrb[0].mxu0
    %v366 = vadd.f32 %v96, %v365
    %v367 = vpop.f32.mrb[0].mxu0
    %v368 = vadd.f32 %v92, %v367
    %v369 = vpop.f32.mrb[0].mxu0
    %v370 = vadd.f32 %v96, %v369
    %371 = vmatprep.mubr.bf16.mxu0 0
    %372 = vmatmul.mubr.bf16.gmra.mrb[0].mxu0 %v175
    %v373 = vpop.f32.mrb[0].mxu0
    %v374 = vadd.f32 %v92, %v373
    %v375 = vpop.f32.mrb[0].mxu0
    %v376 = vadd.f32 %v96, %v375
    %v377 = vpop.f32.mrb[0].mxu0
    %v378 = vadd.f32 %v92, %v377
    %v379 = vpop.f32.mrb[0].mxu0
    %v380 = vadd.f32 %v96, %v379
    %381 = vmatprep.mubr.bf16.mxu0 0
    %382 = vmatmul.mubr.bf16.gmra.mrb[0].mxu0 %v178
    %v383 = vpop.f32.mrb[0].mxu0
    %v384 = vadd.f32 %v92, %v383
    %v385 = vpop.f32.mrb[0].mxu0
    %v386 = vadd.f32 %v96, %v385
    %v387 = vpop.f32.mrb[0].mxu0
    %v388 = vadd.f32 %v92, %v387
    %v389 = vpop.f32.mrb[0].mxu0
    %v390 = vadd.f32 %v96, %v389
    %391 = vmatprep.mubr.bf16.mxu0 0
    %392 = vmatmul.mubr.bf16.gmra.mrb[0].mxu0 %v181
    %v393 = vpop.f32.mrb[0].mxu0
    %v394 = vadd.f32 %v92, %v393
    %v395 = vpop.f32.mrb[0].mxu0
    %v396 = vadd.f32 %v96, %v395
    %v397 = vpop.f32.mrb[0].mxu0
    %v398 = vadd.f32 %v92, %v397
    %v399 = vpop.f32.mrb[0].mxu0
    %v400 = vadd.f32 %v96, %v399
    %401 = vmatprep.mubr.bf16.mxu0 0
    %402 = vmatmul.mubr.bf16.gmra.mrb[0].mxu0 %v184
    %v403 = vpop.f32.mrb[0].mxu0
    %v404 = vadd.f32 %v92, %v403
    %v405 = vpop.f32.mrb[0].mxu0
    %v406 = vadd.f32 %v96, %v405
    %v407 = vpop.f32.mrb[0].mxu0
    %v408 = vadd.f32 %v92, %v407
    %v409 = vpop.f32.mrb[0].mxu0
    %v410 = vadd.f32 %v96, %v409
    %411 = vdwg.mxu0
    %v412 = vmax.f32 %v221, 0.0
    %v413 = vmax.f32 %v223, 0.0
    %v414 = vmax.f32 %v334, 0.0
    %v415 = vmax.f32 %v336, 0.0
    %v416 = vmax.f32 %v225, 0.0
    %v417 = vmax.f32 %v227, 0.0
    %v418 = vmax.f32 %v338, 0.0
    %v419 = vmax.f32 %v340, 0.0
    %v420 = vmax.f32 %v231, 0.0
    %v421 = vmax.f32 %v233, 0.0
    %v422 = vmax.f32 %v344, 0.0
    %v423 = vmax.f32 %v346, 0.0
    %v424 = vmax.f32 %v235, 0.0
    %v425 = vmax.f32 %v237, 0.0
    %v426 = vmax.f32 %v348, 0.0
    %v427 = vmax.f32 %v350, 0.0
    %v428 = vmax.f32 %v241, 0.0
    %v429 = vmax.f32 %v243, 0.0
    %v430 = vmax.f32 %v354, 0.0
    %v431 = vmax.f32 %v356, 0.0
    %v432 = vmax.f32 %v245, 0.0
    %v433 = vmax.f32 %v247, 0.0
    %v434 = vmax.f32 %v358, 0.0
    %v435 = vmax.f32 %v360, 0.0
    %v436 = vmax.f32 %v251, 0.0
    %v437 = vmax.f32 %v253, 0.0
    %v438 = vmax.f32 %v364, 0.0
    %v439 = vmax.f32 %v366, 0.0
    %v440 = vmax.f32 %v255, 0.0
    %v441 = vmax.f32 %v257, 0.0
    %v442 = vmax.f32 %v368, 0.0
    %v443 = vmax.f32 %v370, 0.0
    %v444 = vmax.f32 %v261, 0.0
    %v445 = vmax.f32 %v263, 0.0
    %v446 = vmax.f32 %v374, 0.0
    %v447 = vmax.f32 %v376, 0.0
    %v448 = vmax.f32 %v265, 0.0
    %v449 = vmax.f32 %v267, 0.0
    %v450 = vmax.f32 %v378, 0.0
    %v451 = vmax.f32 %v380, 0.0
    %v452 = vmax.f32 %v271, 0.0
    %v453 = vmax.f32 %v273, 0.0
    %v454 = vmax.f32 %v384, 0.0
    %v455 = vmax.f32 %v386, 0.0
    %v456 = vmax.f32 %v275, 0.0
    %v457 = vmax.f32 %v277, 0.0
    %v458 = vmax.f32 %v388, 0.0
    %v459 = vmax.f32 %v390, 0.0
    %v460 = vmax.f32 %v281, 0.0
    %v461 = vmax.f32 %v283, 0.0
    %v462 = vmax.f32 %v394, 0.0
    %v463 = vmax.f32 %v396, 0.0
    %v464 = vmax.f32 %v285, 0.0
    %v465 = vmax.f32 %v287, 0.0
    %v466 = vmax.f32 %v398, 0.0
    %v467 = vmax.f32 %v400, 0.0
    %v468 = vmax.f32 %v291, 0.0
    %v469 = vmax.f32 %v293, 0.0
    %v470 = vmax.f32 %v404, 0.0
    %v471 = vmax.f32 %v406, 0.0
    %v472 = vmax.f32 %v295, 0.0
    %v473 = vmax.f32 %v297, 0.0
    %v474 = vmax.f32 %v408, 0.0
    %v475 = vmax.f32 %v410, 0.0
    %476 = vst [vmem:[#allocation8] sm:$0xff] %v412
    %477 = vst [vmem:[#allocation8 + $0x8] sm:$0xff] %v413
    %478 = vst [vmem:[#allocation8 + $0x10] sm:$0xff] %v414
    %479 = vst [vmem:[#allocation8 + $0x18] sm:$0xff] %v415
    %480 = vst [vmem:[#allocation8 + $0x20] sm:$0xff] %v416
    %481 = vst [vmem:[#allocation8 + $0x28] sm:$0xff] %v417
    %482 = vst [vmem:[#allocation8 + $0x30] sm:$0xff] %v418
    %483 = vst [vmem:[#allocation8 + $0x38] sm:$0xff] %v419
    %484 = vst [vmem:[#allocation8 + $0x40] sm:$0xff] %v420
    %485 = vst [vmem:[#allocation8 + $0x48] sm:$0xff] %v421
    %486 = vst [vmem:[#allocation8 + $0x50] sm:$0xff] %v422
    %487 = vst [vmem:[#allocation8 + $0x58] sm:$0xff] %v423
    %488 = vst [vmem:[#allocation8 + $0x60] sm:$0xff] %v424
    %489 = vst [vmem:[#allocation8 + $0x68] sm:$0xff] %v425
    %490 = vst [vmem:[#allocation8 + $0x70] sm:$0xff] %v426
    %491 = vst [vmem:[#allocation8 + $0x78] sm:$0xff] %v427
    %492 = vst [vmem:[#allocation8 + $0x80] sm:$0xff] %v428
    %493 = vst [vmem:[#allocation8 + $0x88] sm:$0xff] %v429
    %494 = vst [vmem:[#allocation8 + $0x90] sm:$0xff] %v430
    %495 = vst [vmem:[#allocation8 + $0x98] sm:$0xff] %v431
    %496 = vst [vmem:[#allocation8 + $0xa0] sm:$0xff] %v432
    %497 = vst [vmem:[#allocation8 + $0xa8] sm:$0xff] %v433
    %498 = vst [vmem:[#allocation8 + $0xb0] sm:$0xff] %v434
    %499 = vst [vmem:[#allocation8 + $0xb8] sm:$0xff] %v435
    %500 = vst [vmem:[#allocation8 + $0xc0] sm:$0xff] %v436
    %501 = vst [vmem:[#allocation8 + $0xc8] sm:$0xff] %v437
    %502 = vst [vmem:[#allocation8 + $0xd0] sm:$0xff] %v438
    %503 = vst [vmem:[#allocation8 + $0xd8] sm:$0xff] %v439
    %504 = vst [vmem:[#allocation8 + $0xe0] sm:$0xff] %v440
    %505 = vst [vmem:[#allocation8 + $0xe8] sm:$0xff] %v441
    %506 = vst [vmem:[#allocation8 + $0xf0] sm:$0xff] %v442
    %507 = vst [vmem:[#allocation8 + $0xf8] sm:$0xff] %v443
    %508 = vst [vmem:[#allocation8 + $0x100] sm:$0xff] %v444
    %509 = vst [vmem:[#allocation8 + $0x108] sm:$0xff] %v445
    %510 = vst [vmem:[#allocation8 + $0x110] sm:$0xff] %v446
    %511 = vst [vmem:[#allocation8 + $0x118] sm:$0xff] %v447
    %512 = vst [vmem:[#allocation8 + $0x120] sm:$0xff] %v448
    %513 = vst [vmem:[#allocation8 + $0x128] sm:$0xff] %v449
    %514 = vst [vmem:[#allocation8 + $0x130] sm:$0xff] %v450
    %515 = vst [vmem:[#allocation8 + $0x138] sm:$0xff] %v451
    %516 = vst [vmem:[#allocation8 + $0x140] sm:$0xff] %v452
    %517 = vst [vmem:[#allocation8 + $0x148] sm:$0xff] %v453
    %518 = vst [vmem:[#allocation8 + $0x150] sm:$0xff] %v454
    %519 = vst [vmem:[#allocation8 + $0x158] sm:$0xff] %v455
    %520 = vst [vmem:[#allocation8 + $0x160] sm:$0xff] %v456
    %521 = vst [vmem:[#allocation8 + $0x168] sm:$0xff] %v457
    %522 = vst [vmem:[#allocation8 + $0x170] sm:$0xff] %v458
    %523 = vst [vmem:[#allocation8 + $0x178] sm:$0xff] %v459
    %524 = vst [vmem:[#allocation8 + $0x180] sm:$0xff] %v460
    %525 = vst [vmem:[#allocation8 + $0x188] sm:$0xff] %v461
    %526 = vst [vmem:[#allocation8 + $0x190] sm:$0xff] %v462
    %527 = vst [vmem:[#allocation8 + $0x198] sm:$0xff] %v463
    %528 = vst [vmem:[#allocation8 + $0x1a0] sm:$0xff] %v464
    %529 = vst [vmem:[#allocation8 + $0x1a8] sm:$0xff] %v465
    %530 = vst [vmem:[#allocation8 + $0x1b0] sm:$0xff] %v466
    %531 = vst [vmem:[#allocation8 + $0x1b8] sm:$0xff] %v467
    %532 = vst [vmem:[#allocation8 + $0x1c0] sm:$0xff] %v468
    %533 = vst [vmem:[#allocation8 + $0x1c8] sm:$0xff] %v469
    %534 = vst [vmem:[#allocation8 + $0x1d0] sm:$0xff] %v470
    %535 = vst [vmem:[#allocation8 + $0x1d8] sm:$0xff] %v471
    %536 = vst [vmem:[#allocation8 + $0x1e0] sm:$0xff] %v472
    %537 = vst [vmem:[#allocation8 + $0x1e8] sm:$0xff] %v473
    %538 = vst [vmem:[#allocation8 + $0x1f0] sm:$0xff] %v474
    %539 = vst [vmem:[#allocation8 + $0x1f8] sm:$0xff] %v475
    %p540 = scmp.eq.s32.totalorder 0, 0
    // Predicated region
    $region26: #{decoder_block_forward.8} parent=1 // pred_check
      %p541 = pneg %p540
    $region27: #{decoder_block_forward.8} parent=1 // pred_check_branch
      %543 = sbr.rel (%p541) target = $region29
    $region28: #{decoder_block_forward.8} parent=1 // pred_region
      %v544 = vlaneseq
      %vm545 = vcmp.ge.s32.totalorder %v544, 0
      %vm546 = vcmp.lt.s32.totalorder %v544, 512
      %vm547 = vmand %vm545, %vm546
      %548 = vst.msk [vmem:[#allocation9] sm:$0xf] %vm547, 0.0
      %549 = vst.msk [vmem:[#allocation11] sm:$0xf] %vm547, 0.0
    $region29: #{decoder_block_forward.8} parent=1 // pred_fallthru
      _
    %v550 = vld [vmem:[#allocation9] sm:$0xf]
    %v551 = vadd.f32 %v412, %v416
    %v552 = vadd.f32 %v551, %v420
    %v553 = vadd.f32 %v552, %v424
    %v554 = vadd.f32 %v553, %v428
    %v555 = vadd.f32 %v554, %v432
    %v556 = vadd.f32 %v555, %v436
    %v557 = vadd.f32 %v556, %v440
    %v558 = vadd.f32 %v557, %v444
    %v559 = vadd.f32 %v558, %v448
    %v560 = vadd.f32 %v559, %v452
    %v561 = vadd.f32 %v560, %v456
    %v562 = vadd.f32 %v561, %v460
    %v563 = vadd.f32 %v562, %v464
    %v564 = vadd.f32 %v563, %v468
    %v565 = vadd.f32 %v564, %v472
    %v566 = vrot.slane %v565, 4
    %v567 = vadd.f32 %v565, %v566
    %v568 = vrot.slane %v567, 2
    %v569 = vadd.f32 %v567, %v568
    %v570 = vrot.slane %v569, 1
    %v571 = vadd.f32 %v569, %v570
    %v572 = vadd.f32 %v413, %v417
    %v573 = vadd.f32 %v572, %v421
    %v574 = vadd.f32 %v573, %v425
    %v575 = vadd.f32 %v574, %v429
    %v576 = vadd.f32 %v575, %v433
    %v577 = vadd.f32 %v576, %v437
    %v578 = vadd.f32 %v577, %v441
    %v579 = vadd.f32 %v578, %v445
    %v580 = vadd.f32 %v579, %v449
    %v581 = vadd.f32 %v580, %v453
    %v582 = vadd.f32 %v581, %v457
    %v583 = vadd.f32 %v582, %v461
    %v584 = vadd.f32 %v583, %v465
    %v585 = vadd.f32 %v584, %v469
    %v586 = vadd.f32 %v585, %v473
    %v587 = vrot.slane %v586, 4
    %v588 = vadd.f32 %v586, %v587
    %v589 = vrot.slane %v588, 2
    %v590 = vadd.f32 %v588, %v589
    %v591 = vrot.slane %v590, 1
    %v592 = vadd.f32 %v590, %v591
    %v593 = vadd.f32 %v414, %v418
    %v594 = vadd.f32 %v593, %v422
    %v595 = vadd.f32 %v594, %v426
    %v596 = vadd.f32 %v595, %v430
    %v597 = vadd.f32 %v596, %v434
    %v598 = vadd.f32 %v597, %v438
    %v599 = vadd.f32 %v598, %v442
    %v600 = vadd.f32 %v599, %v446
    %v601 = vadd.f32 %v600, %v450
    %v602 = vadd.f32 %v601, %v454
    %v603 = vadd.f32 %v602, %v458
    %v604 = vadd.f32 %v603, %v462
    %v605 = vadd.f32 %v604, %v466
    %v606 = vadd.f32 %v605, %v470
    %v607 = vadd.f32 %v606, %v474
    %v608 = vrot.slane %v607, 4
    %v609 = vadd.f32 %v607, %v608
    %v610 = vrot.slane %v609, 2
    %v611 = vadd.f32 %v609, %v610
    %v612 = vrot.slane %v611, 1
    %v613 = vadd.f32 %v611, %v612
    %v614 = vadd.f32 %v415, %v419
    %v615 = vadd.f32 %v614, %v423
    %v616 = vadd.f32 %v615, %v427
    %v617 = vadd.f32 %v616, %v431
    %v618 = vadd.f32 %v617, %v435
    %v619 = vadd.f32 %v618, %v439
    %v620 = vadd.f32 %v619, %v443
    %v621 = vadd.f32 %v620, %v447
    %v622 = vadd.f32 %v621, %v451
    %v623 = vadd.f32 %v622, %v455
    %v624 = vadd.f32 %v623, %v459
    %v625 = vadd.f32 %v624, %v463
    %v626 = vadd.f32 %v625, %v467
    %v627 = vadd.f32 %v626, %v471
    %v628 = vadd.f32 %v627, %v475
    %v629 = vrot.slane %v628, 4
    %v630 = vadd.f32 %v628, %v629
    %v631 = vrot.slane %v630, 2
    %v632 = vadd.f32 %v630, %v631
    %v633 = vrot.slane %v632, 1
    %v634 = vadd.f32 %v632, %v633
    %v639 = vcombine.low %v571, %v592
    %v640 = vcombine.low %v613, %v634
    %v642 = vunpack.c.l.s4 1966171168
    %v643 = vunpack.c.0.s8 %v642
    %v644 = vlaneseq
    %v645 = vshrl.u32 %v644, 7
    %v646 = vsub.s32 %v643, %v645
    %v647 = vrot.slane %v639, %v646
    %v649 = vunpack.c.l.s4 1966171168
    %v650 = vunpack.c.0.s8 %v649
    %v651 = vlaneseq
    %v652 = vshrl.u32 %v651, 7
    %v653 = vsub.s32 %v650, %v652
    %v654 = vrot.slane %v640, %v653
    %v655 = vcombine.low %v647, %v654
    %v657 = vunpack.c.l.s4 1966171168
    %v658 = vunpack.c.0.s8 %v657
    %v659 = vlaneseq
    %v660 = vshrl.u32 %v659, 7
    %v661 = vsub.s32 %v658, %v660
    %v662 = vrot.slane %v655, %v661
    %v664 = vadd.f32 %v550, %v662
    %v665 = vlaneseq
    %vm666 = vcmp.ge.s32.totalorder %v665, 0
    %vm667 = vcmp.lt.s32.totalorder %v665, 512
    %vm668 = vmand %vm666, %vm667
    %669 = vst.msk [vmem:[#allocation9] sm:$0xf] %vm668, %v664
    %v670 = vld [vmem:[#allocation11] sm:$0xf]
    %v671 = vmul.f32 %v412, %v412
    %v672 = vmul.f32 %v413, %v413
    %v673 = vmul.f32 %v414, %v414
    %v674 = vmul.f32 %v415, %v415
    %v675 = vmul.f32 %v416, %v416
    %v676 = vmul.f32 %v417, %v417
    %v677 = vmul.f32 %v418, %v418
    %v678 = vmul.f32 %v419, %v419
    %v679 = vmul.f32 %v420, %v420
    %v680 = vmul.f32 %v421, %v421
    %v681 = vmul.f32 %v422, %v422
    %v682 = vmul.f32 %v423, %v423
    %v683 = vmul.f32 %v424, %v424
    %v684 = vmul.f32 %v425, %v425
    %v685 = vmul.f32 %v426, %v426
    %v686 = vmul.f32 %v427, %v427
    %v687 = vmul.f32 %v428, %v428
    %v688 = vmul.f32 %v429, %v429
    %v689 = vmul.f32 %v430, %v430
    %v690 = vmul.f32 %v431, %v431
    %v691 = vmul.f32 %v432, %v432
    %v692 = vmul.f32 %v433, %v433
    %v693 = vmul.f32 %v434, %v434
    %v694 = vmul.f32 %v435, %v435
    %v695 = vmul.f32 %v436, %v436
    %v696 = vmul.f32 %v437, %v437
    %v697 = vmul.f32 %v438, %v438
    %v698 = vmul.f32 %v439, %v439
    %v699 = vmul.f32 %v440, %v440
    %v700 = vmul.f32 %v441, %v441
    %v701 = vmul.f32 %v442, %v442
    %v702 = vmul.f32 %v443, %v443
    %v703 = vmul.f32 %v444, %v444
    %v704 = vmul.f32 %v445, %v445
    %v705 = vmul.f32 %v446, %v446
    %v706 = vmul.f32 %v447, %v447
    %v707 = vmul.f32 %v448, %v448
    %v708 = vmul.f32 %v449, %v449
    %v709 = vmul.f32 %v450, %v450
    %v710 = vmul.f32 %v451, %v451
    %v711 = vmul.f32 %v452, %v452
    %v712 = vmul.f32 %v453, %v453
    %v713 = vmul.f32 %v454, %v454
    %v714 = vmul.f32 %v455, %v455
    %v715 = vmul.f32 %v456, %v456
    %v716 = vmul.f32 %v457, %v457
    %v717 = vmul.f32 %v458, %v458
    %v718 = vmul.f32 %v459, %v459
    %v719 = vmul.f32 %v460, %v460
    %v720 = vmul.f32 %v461, %v461
    %v721 = vmul.f32 %v462, %v462
    %v722 = vmul.f32 %v463, %v463
    %v723 = vmul.f32 %v464, %v464
    %v724 = vmul.f32 %v465, %v465
    %v725 = vmul.f32 %v466, %v466
    %v726 = vmul.f32 %v467, %v467
    %v727 = vmul.f32 %v468, %v468
    %v728 = vmul.f32 %v469, %v469
    %v729 = vmul.f32 %v470, %v470
    %v730 = vmul.f32 %v471, %v471
    %v731 = vmul.f32 %v472, %v472
    %v732 = vmul.f32 %v473, %v473
    %v733 = vmul.f32 %v474, %v474
    %v734 = vmul.f32 %v475, %v475
    %v735 = vadd.f32 %v671, %v675
    %v736 = vadd.f32 %v735, %v679
    %v737 = vadd.f32 %v736, %v683
    %v738 = vadd.f32 %v737, %v687
    %v739 = vadd.f32 %v738, %v691
    %v740 = vadd.f32 %v739, %v695
    %v741 = vadd.f32 %v740, %v699
    %v742 = vadd.f32 %v741, %v703
    %v743 = vadd.f32 %v742, %v707
    %v744 = vadd.f32 %v743, %v711
    %v745 = vadd.f32 %v744, %v715
    %v746 = vadd.f32 %v745, %v719
    %v747 = vadd.f32 %v746, %v723
    %v748 = vadd.f32 %v747, %v727
    %v749 = vadd.f32 %v748, %v731
    %v750 = vrot.slane %v749, 4
    %v751 = vadd.f32 %v749, %v750
    %v752 = vrot.slane %v751, 2
    %v753 = vadd.f32 %v751, %v752
    %v754 = vrot.slane %v753, 1
    %v755 = vadd.f32 %v753, %v754
    %v756 = vadd.f32 %v672, %v676
    %v757 = vadd.f32 %v756, %v680
    %v758 = vadd.f32 %v757, %v684
    %v759 = vadd.f32 %v758, %v688
    %v760 = vadd.f32 %v759, %v692
    %v761 = vadd.f32 %v760, %v696
    %v762 = vadd.f32 %v761, %v700
    %v763 = vadd.f32 %v762, %v704
    %v764 = vadd.f32 %v763, %v708
    %v765 = vadd.f32 %v764, %v712
    %v766 = vadd.f32 %v765, %v716
    %v767 = vadd.f32 %v766, %v720
    %v768 = vadd.f32 %v767, %v724
    %v769 = vadd.f32 %v768, %v728
    %v770 = vadd.f32 %v769, %v732
    %v771 = vrot.slane %v770, 4
    %v772 = vadd.f32 %v770, %v771
    %v773 = vrot.slane %v772, 2
    %v774 = vadd.f32 %v772, %v773
    %v775 = vrot.slane %v774, 1
    %v776 = vadd.f32 %v774, %v775
    %v777 = vadd.f32 %v673, %v677
    %v778 = vadd.f32 %v777, %v681
    %v779 = vadd.f32 %v778, %v685
    %v780 = vadd.f32 %v779, %v689
    %v781 = vadd.f32 %v780, %v693
    %v782 = vadd.f32 %v781, %v697
    %v783 = vadd.f32 %v782, %v701
    %v784 = vadd.f32 %v783, %v705
    %v785 = vadd.f32 %v784, %v709
    %v786 = vadd.f32 %v785, %v713
    %v787 = vadd.f32 %v786, %v717
    %v788 = vadd.f32 %v787, %v721
    %v789 = vadd.f32 %v788, %v725
    %v790 = vadd.f32 %v789, %v729
    %v791 = vadd.f32 %v790, %v733
    %v792 = vrot.slane %v791, 4
    %v793 = vadd.f32 %v791, %v792
    %v794 = vrot.slane %v793, 2
    %v795 = vadd.f32 %v793, %v794
    %v796 = vrot.slane %v795, 1
    %v797 = vadd.f32 %v795, %v796
    %v798 = vadd.f32 %v674, %v678
    %v799 = vadd.f32 %v798, %v682
    %v800 = vadd.f32 %v799, %v686
    %v801 = vadd.f32 %v800, %v690
    %v802 = vadd.f32 %v801, %v694
    %v803 = vadd.f32 %v802, %v698
    %v804 = vadd.f32 %v803, %v702
    %v805 = vadd.f32 %v804, %v706
    %v806 = vadd.f32 %v805, %v710
    %v807 = vadd.f32 %v806, %v714
    %v808 = vadd.f32 %v807, %v718
    %v809 = vadd.f32 %v808, %v722
    %v810 = vadd.f32 %v809, %v726
    %v811 = vadd.f32 %v810, %v730
    %v812 = vadd.f32 %v811, %v734
    %v813 = vrot.slane %v812, 4
    %v814 = vadd.f32 %v812, %v813
    %v815 = vrot.slane %v814, 2
    %v816 = vadd.f32 %v814, %v815
    %v817 = vrot.slane %v816, 1
    %v818 = vadd.f32 %v816, %v817
    %v823 = vcombine.low %v755, %v776
    %v824 = vcombine.low %v797, %v818
    %v826 = vunpack.c.l.s4 1966171168
    %v827 = vunpack.c.0.s8 %v826
    %v828 = vlaneseq
    %v829 = vshrl.u32 %v828, 7
    %v830 = vsub.s32 %v827, %v829
    %v831 = vrot.slane %v823, %v830
    %v833 = vunpack.c.l.s4 1966171168
    %v834 = vunpack.c.0.s8 %v833
    %v835 = vlaneseq
    %v836 = vshrl.u32 %v835, 7
    %v837 = vsub.s32 %v834, %v836
    %v838 = vrot.slane %v824, %v837
    %v839 = vcombine.low %v831, %v838
    %v841 = vunpack.c.l.s4 1966171168
    %v842 = vunpack.c.0.s8 %v841
    %v843 = vlaneseq
    %v844 = vshrl.u32 %v843, 7
    %v845 = vsub.s32 %v842, %v844
    %v846 = vrot.slane %v839, %v845
    %v848 = vadd.f32 %v670, %v846
    %849 = vst.msk [vmem:[#allocation11] sm:$0xf] %vm668, %v848
    // Predicated region
    $region30: #{decoder_block_forward.8} parent=1 // pred_check
      _
    $region31: #{decoder_block_forward.8} parent=1 // pred_check_branch
      %851 = sbr.rel (0) target = $region33
    $region32: #{decoder_block_forward.8} parent=1 // pred_region
      %s853 = ssub.s32 8192, 8192
      %854 = vsyncadd [#allocation4], %s853
      %s855 = sshll.u32 [#allocation8], 4
      %s856 = int_to_ptr.vmem [resolvable:$true] %s855
      %861 = dma.vmem_to_hbm [thread:$0]  %s856, 8192, %s3, [#allocation4], 512, 512, 32
    $region33: #{decoder_block_forward.8} parent=1 // pred_fallthru
      _
    // Predicated region
    $region34: #{decoder_block_forward.8} parent=1 // pred_check
      _
    $region35: #{decoder_block_forward.8} parent=1 // pred_check_branch
      %863 = sbr.rel (0) target = $region37
    $region36: #{decoder_block_forward.8} parent=1 // pred_region
      %s865 = ssub.s32 64, 64
      %866 = vsyncadd [#allocation10], %s865
      %s868 = sshll.u32 [#allocation9], 4
      %s869 = int_to_ptr.vmem [resolvable:$true] %s868
      %871 = dma.vmem_to_hbm [thread:$0]  %s869, 64, %s4, [#allocation10]
    $region37: #{decoder_block_forward.8} parent=1 // pred_fallthru
      _
    // Predicated region
    $region38: #{decoder_block_forward.8} parent=1 // pred_check
      _
    $region39: #{decoder_block_forward.8} parent=1 // pred_check_branch
      %873 = sbr.rel (0) target = $region41
    $region40: #{decoder_block_forward.8} parent=1 // pred_region
      %s875 = ssub.s32 64, 64
      %876 = vsyncadd [#allocation10], %s875
      %s878 = sshll.u32 [#allocation11], 4
      %s879 = int_to_ptr.vmem [resolvable:$true] %s878
      %881 = dma.vmem_to_hbm [thread:$0]  %s879, 64, %s5, [#allocation10]
    $region41: #{decoder_block_forward.8} parent=1 // pred_fallthru
      _
    // Predicated region
    $region42: #{decoder_block_forward.8} parent=1 // pred_check
      _
    $region43: #{decoder_block_forward.8} parent=1 // pred_check_branch
      %883 = sbr.rel (0) target = $region45
    $region44: #{decoder_block_forward.8} parent=1 // pred_region
      %884 = dma.done [#allocation4], 8192
    $region45: #{decoder_block_forward.8} parent=1 // pred_fallthru
      _
    // Predicated region
    $region46: #{decoder_block_forward.8} parent=1 // pred_check
      _
    $region47: #{decoder_block_forward.8} parent=1 // pred_check_branch
      %886 = sbr.rel (0) target = $region49
    $region48: #{decoder_block_forward.8} parent=1 // pred_region
      %887 = dma.done [#allocation10], 64
    $region49: #{decoder_block_forward.8} parent=1 // pred_fallthru
      _
    // Predicated region
    $region50: #{decoder_block_forward.8} parent=1 // pred_check
      _
    $region51: #{decoder_block_forward.8} parent=1 // pred_check_branch
      %889 = sbr.rel (0) target = $region53
    $region52: #{decoder_block_forward.8} parent=1 // pred_region
      %890 = dma.done [#allocation10], 64
    $region53: #{decoder_block_forward.8} parent=1 // pred_fallthru
      _
    %891 = vsyncpa [#allocation3], 1
    %892 = vsyncpa [#allocation6], 1
    %893 = vsyncpa [#allocation4], 1
    %894 = vsyncpa [#allocation10], 1

// kernel: decoder_block_forward.11
$region0: #{decoder_block_forward.11}
  #allocation0 [shape = 'u32[]', space=smem, size = 0x4, offset = 0x4, fixed_abs, tag = 'smem constant byte address 0x4 - core index']
  #allocation1 [shape = 'u32[144,128]{1,0:T(1,128)}', space=vmem, size = 0x12000, scoped, tag = 'internal scratch']
  %s0 = inlined_call_operand.hbm [shape: f32[512,128], index: 0, kind: input, shape index: {}]
  %s1 = inlined_call_operand.hbm [shape: f32[1,128], index: 1, kind: input, shape index: {}]
  %s2 = inlined_call_operand.hbm [shape: f32[1,128], index: 2, kind: input, shape index: {}]
  %s3 = inlined_call_operand.hbm [shape: bf16[512,128], index: 3, kind: output, shape index: {}]
  %s4 = sld [smem:[#allocation0]]
  $region57: #{decoder_block_forward.11} parent=0
    _
  %s6 = ssub.s32 1, %s4
  %s7 = scalar_select 0, %s6, %s4
  $region1: #{decoder_block_forward.11} parent=0
    #allocation2 [shape = 'u8[262144]{0}', space=vmem, size = 0x40000, scoped, tag = 'input window, operand 0']
    #allocation3 [shape = 's32[2]{0}', space=sflag, size = 0x8, scoped, tag = 'scoped memory for decoder_block_forward.11']
    #allocation4 [shape = 's32[2]{0}', space=sflag, size = 0x8, scoped, tag = 'scoped memory for decoder_block_forward.11']
    #allocation5 [shape = 'u8[512]{0}', space=vmem, size = 0x400, scoped, tag = 'input window, operand 1, single buffered']
    #allocation6 [shape = 's32[1]{0}', space=sflag, size = 0x4, scoped, tag = 'scoped memory for decoder_block_forward.11']
    #allocation7 [shape = 'u8[512]{0}', space=vmem, size = 0x400, scoped, tag = 'input window, operand 2, single buffered']
    #allocation8 [shape = 'u8[131072]{0}', space=vmem, size = 0x20000, scoped, tag = 'output window, operand 0']
    %8 = vsyncpa [#allocation3], 0
    %s9 = scalar_lea.sflag [#allocation3], 1
    %10 = vsyncpa %s9, 0
    %11 = vsyncpa [#allocation6], 0
    %12 = vsyncpa [#allocation4], 0
    %s13 = scalar_lea.sflag [#allocation4], 1
    %14 = vsyncpa %s13, 0
    loop: start=0, step=1, limit=4
    $region2: #{decoder_block_forward.11} parent=1 // loop_pre_header
      _
    $region3: #{decoder_block_forward.11} parent=1 // loop_header
      %s16 = sphi 0, %s20
      %p17 = scmp.ge.s32.totalorder %s16, 4
      %s26 = sphi 0, %s28
      %s29 = sphi 0, %s26
      %s30 = sphi 0, %s29
      %s46 = sphi 0, %s30
      %s50 = sphi 0, %s50
      %s52 = sphi 0, %s50
      %s53 = sphi 0, %s52
      %s67 = sphi 0, %s53
      %s71 = sphi 0, %s71
      %s73 = sphi 0, %s71
      %s74 = sphi 0, %s73
      %s88 = sphi 0, %s74
      %s94 = sphi 0, %s96
      %s97 = sphi 0, %s94
      %s98 = sphi 0, %s97
      %s114 = sphi 0, %s98
    $region4: #{decoder_block_forward.11} parent=1 // loop_header_branch
      %19 = sbr.rel (%p17) target = $region8
    $region5: #{decoder_block_forward.11} parent=1 // loop_body
      %s21 = ssub.s32 %s16, 1
      %s22 = ssub.s32 %s16, 2
      %s23 = sadd.s32 %s16, 1
      %s24 = ssub.s32 %s16, %s23
      %p25 = scmp.eq.s32.totalorder %s24, 0
      %s27 = sadd.s32 %s26, 1
      %s28 = scalar_select %p25, %s26, %s27
      %p31 = pneg %p25
      %p32 = scmp.eq.s32.totalorder %s16, 1
      %p33 = por %p31, %p32
      %p34 = scmp.ne.s32.totalorder %s26, %s29
      %p35 = scmp.eq.s32.totalorder %s16, 0
      %p36 = por %p34, %p35
      %p37 = scmp.ne.s32.totalorder %s26, %s29
      %p38 = scmp.eq.s32.totalorder %s21, 1
      %p39 = por %p37, %p38
      %p40 = scmp.ne.s32.totalorder %s29, %s30
      %p41 = scmp.eq.s32.totalorder %s21, 0
      %p42 = por %p40, %p41
      %p43 = scmp.ne.s32.totalorder %s29, %s30
      %p44 = scmp.eq.s32.totalorder %s22, 1
      %p45 = por %p43, %p44
      %p47 = scmp.ne.s32.totalorder %s30, %s46
      %p48 = scmp.eq.s32.totalorder %s22, 0
      %p49 = por %p47, %p48
      %s51 = sadd.s32 %s50, 1
      %p54 = scmp.eq.s32.totalorder %s16, 1
      %p55 = scmp.ne.s32.totalorder %s50, %s52
      %p56 = scmp.eq.s32.totalorder %s16, 0
      %p57 = por %p55, %p56
      %p58 = scmp.ne.s32.totalorder %s50, %s52
      %p59 = scmp.eq.s32.totalorder %s21, 1
      %p60 = por %p58, %p59
      %p61 = scmp.ne.s32.totalorder %s52, %s53
      %p62 = scmp.eq.s32.totalorder %s21, 0
      %p63 = por %p61, %p62
      %p64 = scmp.ne.s32.totalorder %s52, %s53
      %p65 = scmp.eq.s32.totalorder %s22, 1
      %p66 = por %p64, %p65
      %p68 = scmp.ne.s32.totalorder %s53, %s67
      %p69 = scmp.eq.s32.totalorder %s22, 0
      %p70 = por %p68, %p69
      %s72 = sadd.s32 %s71, 1
      %p75 = scmp.eq.s32.totalorder %s16, 1
      %p76 = scmp.ne.s32.totalorder %s71, %s73
      %p77 = scmp.eq.s32.totalorder %s16, 0
      %p78 = por %p76, %p77
      %p79 = scmp.ne.s32.totalorder %s71, %s73
      %p80 = scmp.eq.s32.totalorder %s21, 1
      %p81 = por %p79, %p80
      %p82 = scmp.ne.s32.totalorder %s73, %s74
      %p83 = scmp.eq.s32.totalorder %s21, 0
      %p84 = por %p82, %p83
      %p85 = scmp.ne.s32.totalorder %s73, %s74
      %p86 = scmp.eq.s32.totalorder %s22, 1
      %p87 = por %p85, %p86
      %p89 = scmp.ne.s32.totalorder %s74, %s88
      %p90 = scmp.eq.s32.totalorder %s22, 0
      %p91 = por %p89, %p90
      %s92 = ssub.s32 %s16, %s23
      %p93 = scmp.eq.s32.totalorder %s92, 0
      %s95 = sadd.s32 %s94, 1
      %s96 = scalar_select %p93, %s94, %s95
      %p99 = pneg %p93
      %p100 = scmp.eq.s32.totalorder %s16, 1
      %p101 = por %p99, %p100
      %p102 = scmp.ne.s32.totalorder %s94, %s97
      %p103 = scmp.eq.s32.totalorder %s16, 0
      %p104 = por %p102, %p103
      %p105 = scmp.ne.s32.totalorder %s94, %s97
      %p106 = scmp.eq.s32.totalorder %s21, 1
      %p107 = por %p105, %p106
      %p108 = scmp.ne.s32.totalorder %s97, %s98
      %p109 = scmp.eq.s32.totalorder %s21, 0
      %p110 = por %p108, %p109
      %p111 = scmp.ne.s32.totalorder %s97, %s98
      %p112 = scmp.eq.s32.totalorder %s22, 1
      %p113 = por %p111, %p112
      %p115 = scmp.ne.s32.totalorder %s98, %s114
      %p116 = scmp.eq.s32.totalorder %s22, 0
      %p117 = por %p115, %p116
      %p118 = scmp.le.s32.totalorder 1, %s16
      %p119 = scmp.lt.s32.totalorder %s16, 3
      %p120 = pnand %p118, %p119
      %p121 = pneg %p120
      // Predicated region
      $region9: #{decoder_block_forward.11} parent=5 // pred_check
        _
      $region10: #{decoder_block_forward.11} parent=5 // pred_check_branch
        %123 = sbr.rel (%p120) target = $region12
      $region11: #{decoder_block_forward.11} parent=5 // pred_region
        %s124 = ssub.s32 %s16, 1
        // Predicated region
        $region13: #{decoder_block_forward.11} parent=11 // pred_check
          %p125 = pneg %p63
        $region14: #{decoder_block_forward.11} parent=11 // pred_check_branch
          %127 = sbr.rel (%p125) target = $region16
        $region15: #{decoder_block_forward.11} parent=11 // pred_region
          %s129 = ssub.s32 16, 16
          %130 = vsyncadd [#allocation6], %s129
          %s132 = sshll.u32 [#allocation5], 4
          %s133 = int_to_ptr.vmem [resolvable:$true] %s132
          %135 = dma.hbm_to_vmem [thread:$0]  %s1, 16, %s133, [#allocation6]
        $region16: #{decoder_block_forward.11} parent=11 // pred_fallthru
          _
        // Predicated region
        $region17: #{decoder_block_forward.11} parent=11 // pred_check
          %p136 = pneg %p84
        $region18: #{decoder_block_forward.11} parent=11 // pred_check_branch
          %138 = sbr.rel (%p136) target = $region20
        $region19: #{decoder_block_forward.11} parent=11 // pred_region
          %s140 = ssub.s32 16, 16
          %141 = vsyncadd [#allocation6], %s140
          %s143 = sshll.u32 [#allocation7], 4
          %s144 = int_to_ptr.vmem [resolvable:$true] %s143
          %146 = dma.hbm_to_vmem [thread:$0]  %s2, 16, %s144, [#allocation6]
        $region20: #{decoder_block_forward.11} parent=11 // pred_fallthru
          _
      $region12: #{decoder_block_forward.11} parent=5 // pred_fallthru
        _
      %p147 = scmp.lt.s32.totalorder %s16, 2
      // Predicated region
      $region21: #{decoder_block_forward.11} parent=5 // pred_check
        %p148 = pneg %p147
      $region22: #{decoder_block_forward.11} parent=5 // pred_check_branch
        %150 = sbr.rel (%p148) target = $region24
      $region23: #{decoder_block_forward.11} parent=5 // pred_region
        // Predicated region
        $region25: #{decoder_block_forward.11} parent=23 // pred_check
          %p151 = pneg %p36
        $region26: #{decoder_block_forward.11} parent=23 // pred_check_branch
          %153 = sbr.rel (%p151) target = $region28
        $region27: #{decoder_block_forward.11} parent=23 // pred_region
          %s154 = sand.u32 %s26, 1
          %s155 = scalar_lea.sflag [#allocation3], %s154
          %s156 = sand.u32 %s26, 1
          %s157 = smul.addr %s156, 256
          %s158 = scalar_lea.vmem [#allocation2], %s157
          %s159 = smul.u32 32, %s16
          %s161 = ssub.s32 4096, 4096
          %162 = vsyncadd %s155, %s161
          %s163 = smul.addr %s159, 128
          %s164 = scalar_lea.hbm %s0, %s163
          %s165 = sshll.u32 %s158, 4
          %s166 = int_to_ptr.vmem [resolvable:$true] %s165
          %171 = dma.hbm_to_vmem [thread:$0]  %s164, 4096, %s166, %s155, 128, 128, 8
        $region28: #{decoder_block_forward.11} parent=23 // pred_fallthru
          _
      $region24: #{decoder_block_forward.11} parent=5 // pred_fallthru
        _
      %p172 = scmp.le.s32.totalorder 1, %s16
      %p173 = scmp.lt.s32.totalorder %s16, 3
      %p174 = pnand %p172, %p173
      %p175 = pneg %p174
      // Predicated region
      $region29: #{decoder_block_forward.11} parent=5 // pred_check
        _
      $region30: #{decoder_block_forward.11} parent=5 // pred_check_branch
        %177 = sbr.rel (%p174) target = $region32
      $region31: #{decoder_block_forward.11} parent=5 // pred_region
        %s178 = ssub.s32 %s16, 1
        %s179 = sand.u32 %s29, 1
        %s180 = scalar_lea.sflag [#allocation3], %s179
        %s181 = sand.u32 %s29, 1
        %s182 = smul.addr %s181, 256
        %s183 = scalar_lea.vmem [#allocation2], %s182
        // Predicated region
        $region33: #{decoder_block_forward.11} parent=31 // pred_check
          %p184 = pneg %p42
        $region34: #{decoder_block_forward.11} parent=31 // pred_check_branch
          %186 = sbr.rel (%p184) target = $region36
        $region35: #{decoder_block_forward.11} parent=31 // pred_region
          %187 = dma.done %s180, 4096
        $region36: #{decoder_block_forward.11} parent=31 // pred_fallthru
          _
        // Predicated region
        $region37: #{decoder_block_forward.11} parent=31 // pred_check
          %p188 = pneg %p63
        $region38: #{decoder_block_forward.11} parent=31 // pred_check_branch
          %190 = sbr.rel (%p188) target = $region40
        $region39: #{decoder_block_forward.11} parent=31 // pred_region
          %191 = dma.done [#allocation6], 16
        $region40: #{decoder_block_forward.11} parent=31 // pred_fallthru
          _
        // Predicated region
        $region41: #{decoder_block_forward.11} parent=31 // pred_check
          %p192 = pneg %p84
        $region42: #{decoder_block_forward.11} parent=31 // pred_check_branch
          %194 = sbr.rel (%p192) target = $region44
        $region43: #{decoder_block_forward.11} parent=31 // pred_region
          %195 = dma.done [#allocation6], 16
        $region44: #{decoder_block_forward.11} parent=31 // pred_fallthru
          _
        %s196 = sand.u32 %s29, 1
        %s197 = scalar_lea.sflag [#allocation3], %s196
        %s198 = sand.u32 %s29, 1
        %s199 = smul.addr %s198, 256
        %s200 = scalar_lea.vmem [#allocation2], %s199
        %p201 = pneg %p42
        %p202 = pneg %p39
        %p203 = pneg %p63
        %p204 = pneg %p60
        %p205 = pneg %p84
        %p206 = pneg %p81
        %p207 = pneg %p110
        %p208 = pneg %p107
        %s209 = sand.u32 %s97, 1
        %s210 = scalar_lea.sflag [#allocation4], %s209
        %s211 = sand.u32 %s97, 1
        %s212 = smul.addr %s211, 128
        %s213 = scalar_lea.vmem [#allocation8], %s212
        %s214 = smul.u32 32, %s21
        %s215 = smul.u32 32, %s21
        %v216 = vld [vmem:[%s183] sm:$0xff]
        %v217 = vld [vmem:[%s183 + $0x8] sm:$0xff]
        %v218 = vld [vmem:[%s183 + $0x10] sm:$0xff]
        %v219 = vld [vmem:[%s183 + $0x18] sm:$0xff]
        %v220 = vld [vmem:[%s183 + $0x20] sm:$0xff]
        %v221 = vld [vmem:[%s183 + $0x28] sm:$0xff]
        %v222 = vld [vmem:[%s183 + $0x30] sm:$0xff]
        %v223 = vld [vmem:[%s183 + $0x38] sm:$0xff]
        %v224 = vld [vmem:[%s183 + $0x40] sm:$0xff]
        %v225 = vld [vmem:[%s183 + $0x48] sm:$0xff]
        %v226 = vld [vmem:[%s183 + $0x50] sm:$0xff]
        %v227 = vld [vmem:[%s183 + $0x58] sm:$0xff]
        %v228 = vld [vmem:[%s183 + $0x60] sm:$0xff]
        %v229 = vld [vmem:[%s183 + $0x68] sm:$0xff]
        %v230 = vld [vmem:[%s183 + $0x70] sm:$0xff]
        %v231 = vld [vmem:[%s183 + $0x78] sm:$0xff]
        %v232 = vld [vmem:[%s183 + $0x80] sm:$0xff]
        %v233 = vld [vmem:[%s183 + $0x88] sm:$0xff]
        %v234 = vld [vmem:[%s183 + $0x90] sm:$0xff]
        %v235 = vld [vmem:[%s183 + $0x98] sm:$0xff]
        %v236 = vld [vmem:[%s183 + $0xa0] sm:$0xff]
        %v237 = vld [vmem:[%s183 + $0xa8] sm:$0xff]
        %v238 = vld [vmem:[%s183 + $0xb0] sm:$0xff]
        %v239 = vld [vmem:[%s183 + $0xb8] sm:$0xff]
        %v240 = vld [vmem:[%s183 + $0xc0] sm:$0xff]
        %v241 = vld [vmem:[%s183 + $0xc8] sm:$0xff]
        %v242 = vld [vmem:[%s183 + $0xd0] sm:$0xff]
        %v243 = vld [vmem:[%s183 + $0xd8] sm:$0xff]
        %v244 = vld [vmem:[%s183 + $0xe0] sm:$0xff]
        %v245 = vld [vmem:[%s183 + $0xe8] sm:$0xff]
        %v246 = vld [vmem:[%s183 + $0xf0] sm:$0xff]
        %v247 = vld [vmem:[%s183 + $0xf8] sm:$0xff]
        %v248 = vld [vmem:[#allocation5] sm:$0x1]
        %v250 = vlaneseq
        %v251 = vshrl.u32 %v250, 7
        %v252 = vsub.s32 0, %v251
        %v253 = vrot.slane %v248, %v252
        %v255 = vmul.f32 %v216, %v253
        %v256 = vmul.f32 %v217, %v253
        %v257 = vmul.f32 %v218, %v253
        %v258 = vmul.f32 %v219, %v253
        %v259 = vmul.f32 %v220, %v253
        %v260 = vmul.f32 %v221, %v253
        %v261 = vmul.f32 %v222, %v253
        %v262 = vmul.f32 %v223, %v253
        %v263 = vmul.f32 %v224, %v253
        %v264 = vmul.f32 %v225, %v253
        %v265 = vmul.f32 %v226, %v253
        %v266 = vmul.f32 %v227, %v253
        %v267 = vmul.f32 %v228, %v253
        %v268 = vmul.f32 %v229, %v253
        %v269 = vmul.f32 %v230, %v253
        %v270 = vmul.f32 %v231, %v253
        %v271 = vmul.f32 %v232, %v253
        %v272 = vmul.f32 %v233, %v253
        %v273 = vmul.f32 %v234, %v253
        %v274 = vmul.f32 %v235, %v253
        %v275 = vmul.f32 %v236, %v253
        %v276 = vmul.f32 %v237, %v253
        %v277 = vmul.f32 %v238, %v253
        %v278 = vmul.f32 %v239, %v253
        %v279 = vmul.f32 %v240, %v253
        %v280 = vmul.f32 %v241, %v253
        %v281 = vmul.f32 %v242, %v253
        %v282 = vmul.f32 %v243, %v253
        %v283 = vmul.f32 %v244, %v253
        %v284 = vmul.f32 %v245, %v253
        %v285 = vmul.f32 %v246, %v253
        %v286 = vmul.f32 %v247, %v253
        %v287 = vld [vmem:[#allocation7] sm:$0x1]
        %v289 = vlaneseq
        %v290 = vshrl.u32 %v289, 7
        %v291 = vsub.s32 0, %v290
        %v292 = vrot.slane %v287, %v291
        %v294 = vadd.f32 %v255, %v292
        %v295 = vadd.f32 %v256, %v292
        %v296 = vadd.f32 %v257, %v292
        %v297 = vadd.f32 %v258, %v292
        %v298 = vadd.f32 %v259, %v292
        %v299 = vadd.f32 %v260, %v292
        %v300 = vadd.f32 %v261, %v292
        %v301 = vadd.f32 %v262, %v292
        %v302 = vadd.f32 %v263, %v292
        %v303 = vadd.f32 %v264, %v292
        %v304 = vadd.f32 %v265, %v292
        %v305 = vadd.f32 %v266, %v292
        %v306 = vadd.f32 %v267, %v292
        %v307 = vadd.f32 %v268, %v292
        %v308 = vadd.f32 %v269, %v292
        %v309 = vadd.f32 %v270, %v292
        %v310 = vadd.f32 %v271, %v292
        %v311 = vadd.f32 %v272, %v292
        %v312 = vadd.f32 %v273, %v292
        %v313 = vadd.f32 %v274, %v292
        %v314 = vadd.f32 %v275, %v292
        %v315 = vadd.f32 %v276, %v292
        %v316 = vadd.f32 %v277, %v292
        %v317 = vadd.f32 %v278, %v292
        %v318 = vadd.f32 %v279, %v292
        %v319 = vadd.f32 %v280, %v292
        %v320 = vadd.f32 %v281, %v292
        %v321 = vadd.f32 %v282, %v292
        %v322 = vadd.f32 %v283, %v292
        %v323 = vadd.f32 %v284, %v292
        %v324 = vadd.f32 %v285, %v292
        %v325 = vadd.f32 %v286, %v292
        %v326 = vmax.f32 %v294, 0.0
        %v327 = vmax.f32 %v295, 0.0
        %v328 = vmax.f32 %v296, 0.0
        %v329 = vmax.f32 %v297, 0.0
        %v330 = vmax.f32 %v298, 0.0
        %v331 = vmax.f32 %v299, 0.0
        %v332 = vmax.f32 %v300, 0.0
        %v333 = vmax.f32 %v301, 0.0
        %v334 = vmax.f32 %v302, 0.0
        %v335 = vmax.f32 %v303, 0.0
        %v336 = vmax.f32 %v304, 0.0
        %v337 = vmax.f32 %v305, 0.0
        %v338 = vmax.f32 %v306, 0.0
        %v339 = vmax.f32 %v307, 0.0
        %v340 = vmax.f32 %v308, 0.0
        %v341 = vmax.f32 %v309, 0.0
        %v342 = vmax.f32 %v310, 0.0
        %v343 = vmax.f32 %v311, 0.0
        %v344 = vmax.f32 %v312, 0.0
        %v345 = vmax.f32 %v313, 0.0
        %v346 = vmax.f32 %v314, 0.0
        %v347 = vmax.f32 %v315, 0.0
        %v348 = vmax.f32 %v316, 0.0
        %v349 = vmax.f32 %v317, 0.0
        %v350 = vmax.f32 %v318, 0.0
        %v351 = vmax.f32 %v319, 0.0
        %v352 = vmax.f32 %v320, 0.0
        %v353 = vmax.f32 %v321, 0.0
        %v354 = vmax.f32 %v322, 0.0
        %v355 = vmax.f32 %v323, 0.0
        %v356 = vmax.f32 %v324, 0.0
        %v357 = vmax.f32 %v325, 0.0
        %v358 = vpack.c.bf16 %v327, %v326
        %v359 = vpack.c.bf16 %v329, %v328
        %v360 = vpack.c.bf16 %v331, %v330
        %v361 = vpack.c.bf16 %v333, %v332
        %v362 = vpack.c.bf16 %v335, %v334
        %v363 = vpack.c.bf16 %v337, %v336
        %v364 = vpack.c.bf16 %v339, %v338
        %v365 = vpack.c.bf16 %v341, %v340
        %v366 = vpack.c.bf16 %v343, %v342
        %v367 = vpack.c.bf16 %v345, %v344
        %v368 = vpack.c.bf16 %v347, %v346
        %v369 = vpack.c.bf16 %v349, %v348
        %v370 = vpack.c.bf16 %v351, %v350
        %v371 = vpack.c.bf16 %v353, %v352
        %v372 = vpack.c.bf16 %v355, %v354
        %v373 = vpack.c.bf16 %v357, %v356
        %v390 = vunpack.c.l.b16 %v358
        %v391 = vunpack.c.h.b16 %v358
        %v392 = vunpack.c.l.b16 %v359
        %v393 = vunpack.c.h.b16 %v359
        %v394 = vunpack.c.l.b16 %v360
        %v395 = vunpack.c.h.b16 %v360
        %v396 = vunpack.c.l.b16 %v361
        %v397 = vunpack.c.h.b16 %v361
        %v398 = vunpack.c.l.b16 %v362
        %v399 = vunpack.c.h.b16 %v362
        %v400 = vunpack.c.l.b16 %v363
        %v401 = vunpack.c.h.b16 %v363
        %v402 = vunpack.c.l.b16 %v364
        %v403 = vunpack.c.h.b16 %v364
        %v404 = vunpack.c.l.b16 %v365
        %v405 = vunpack.c.h.b16 %v365
        %v406 = vunpack.c.l.b16 %v366
        %v407 = vunpack.c.h.b16 %v366
        %v408 = vunpack.c.l.b16 %v367
        %v409 = vunpack.c.h.b16 %v367
        %v410 = vunpack.c.l.b16 %v368
        %v411 = vunpack.c.h.b16 %v368
        %v412 = vunpack.c.l.b16 %v369
        %v413 = vunpack.c.h.b16 %v369
        %v414 = vunpack.c.l.b16 %v370
        %v415 = vunpack.c.h.b16 %v370
        %v416 = vunpack.c.l.b16 %v371
        %v417 = vunpack.c.h.b16 %v371
        %v418 = vunpack.c.l.b16 %v372
        %v419 = vunpack.c.h.b16 %v372
        %v420 = vunpack.c.l.b16 %v373
        %v421 = vunpack.c.h.b16 %v373
        %v422 = vpack.c.b16 %v390, %v390
        %v423 = vpack.c.b16 %v391, %v391
        %v424 = vpack.c.b16 %v392, %v392
        %v425 = vpack.c.b16 %v393, %v393
        %v426 = vpack.c.b16 %v394, %v394
        %v427 = vpack.c.b16 %v395, %v395
        %v428 = vpack.c.b16 %v396, %v396
        %v429 = vpack.c.b16 %v397, %v397
        %v430 = vpack.c.b16 %v398, %v398
        %v431 = vpack.c.b16 %v399, %v399
        %v432 = vpack.c.b16 %v400, %v400
        %v433 = vpack.c.b16 %v401, %v401
        %v434 = vpack.c.b16 %v402, %v402
        %v435 = vpack.c.b16 %v403, %v403
        %v436 = vpack.c.b16 %v404, %v404
        %v437 = vpack.c.b16 %v405, %v405
        %v438 = vpack.c.b16 %v406, %v406
        %v439 = vpack.c.b16 %v407, %v407
        %v440 = vpack.c.b16 %v408, %v408
        %v441 = vpack.c.b16 %v409, %v409
        %v442 = vpack.c.b16 %v410, %v410
        %v443 = vpack.c.b16 %v411, %v411
        %v444 = vpack.c.b16 %v412, %v412
        %v445 = vpack.c.b16 %v413, %v413
        %v446 = vpack.c.b16 %v414, %v414
        %v447 = vpack.c.b16 %v415, %v415
        %v448 = vpack.c.b16 %v416, %v416
        %v449 = vpack.c.b16 %v417, %v417
        %v450 = vpack.c.b16 %v418, %v418
        %v451 = vpack.c.b16 %v419, %v419
        %v452 = vpack.c.b16 %v420, %v420
        %v453 = vpack.c.b16 %v421, %v421
        %486 = vst [vmem:[%s213] sm:$0xf] %v422
        %487 = vst [vmem:[%s213 + $0x4] sm:$0xf] %v423
        %488 = vst [vmem:[%s213 + $0x8] sm:$0xf] %v424
        %489 = vst [vmem:[%s213 + $0xc] sm:$0xf] %v425
        %490 = vst [vmem:[%s213 + $0x10] sm:$0xf] %v426
        %491 = vst [vmem:[%s213 + $0x14] sm:$0xf] %v427
        %492 = vst [vmem:[%s213 + $0x18] sm:$0xf] %v428
        %493 = vst [vmem:[%s213 + $0x1c] sm:$0xf] %v429
        %494 = vst [vmem:[%s213 + $0x20] sm:$0xf] %v430
        %495 = vst [vmem:[%s213 + $0x24] sm:$0xf] %v431
        %496 = vst [vmem:[%s213 + $0x28] sm:$0xf] %v432
        %497 = vst [vmem:[%s213 + $0x2c] sm:$0xf] %v433
        %498 = vst [vmem:[%s213 + $0x30] sm:$0xf] %v434
        %499 = vst [vmem:[%s213 + $0x34] sm:$0xf] %v435
        %500 = vst [vmem:[%s213 + $0x38] sm:$0xf] %v436
        %501 = vst [vmem:[%s213 + $0x3c] sm:$0xf] %v437
        %502 = vst [vmem:[%s213 + $0x40] sm:$0xf] %v438
        %503 = vst [vmem:[%s213 + $0x44] sm:$0xf] %v439
        %504 = vst [vmem:[%s213 + $0x48] sm:$0xf] %v440
        %505 = vst [vmem:[%s213 + $0x4c] sm:$0xf] %v441
        %506 = vst [vmem:[%s213 + $0x50] sm:$0xf] %v442
        %507 = vst [vmem:[%s213 + $0x54] sm:$0xf] %v443
        %508 = vst [vmem:[%s213 + $0x58] sm:$0xf] %v444
        %509 = vst [vmem:[%s213 + $0x5c] sm:$0xf] %v445
        %510 = vst [vmem:[%s213 + $0x60] sm:$0xf] %v446
        %511 = vst [vmem:[%s213 + $0x64] sm:$0xf] %v447
        %512 = vst [vmem:[%s213 + $0x68] sm:$0xf] %v448
        %513 = vst [vmem:[%s213 + $0x6c] sm:$0xf] %v449
        %514 = vst [vmem:[%s213 + $0x70] sm:$0xf] %v450
        %515 = vst [vmem:[%s213 + $0x74] sm:$0xf] %v451
        %516 = vst [vmem:[%s213 + $0x78] sm:$0xf] %v452
        %517 = vst [vmem:[%s213 + $0x7c] sm:$0xf] %v453
        %s518 = sand.u32 %s97, 1
        %s519 = scalar_lea.sflag [#allocation4], %s518
        %s520 = sand.u32 %s97, 1
        %s521 = smul.addr %s520, 128
        %s522 = scalar_lea.vmem [#allocation8], %s521
        // Predicated region
        $region45: #{decoder_block_forward.11} parent=31 // pred_check
          %p523 = pneg %p107
        $region46: #{decoder_block_forward.11} parent=31 // pred_check_branch
          %525 = sbr.rel (%p523) target = $region48
        $region47: #{decoder_block_forward.11} parent=31 // pred_region
          %s526 = smul.u32 32, %s21
          %s528 = ssub.s32 2048, 2048
          %529 = vsyncadd %s519, %s528
          %s530 = smul.addr %s526, 64
          %s531 = scalar_lea.hbm %s3, %s530
          %s532 = sshll.u32 %s522, 4
          %s533 = int_to_ptr.vmem [resolvable:$true] %s532
          %538 = dma.vmem_to_hbm [thread:$0]  %s533, 2048, %s531, %s519, 64, 64, 4
        $region48: #{decoder_block_forward.11} parent=31 // pred_fallthru
          _
      $region32: #{decoder_block_forward.11} parent=5 // pred_fallthru
        _
      %p539 = scmp.le.s32.totalorder 2, %s16
      // Predicated region
      $region49: #{decoder_block_forward.11} parent=5 // pred_check
        %p540 = pneg %p539
      $region50: #{decoder_block_forward.11} parent=5 // pred_check_branch
        %542 = sbr.rel (%p540) target = $region52
      $region51: #{decoder_block_forward.11} parent=5 // pred_region
        %s543 = ssub.s32 %s16, 2
        // Predicated region
        $region53: #{decoder_block_forward.11} parent=51 // pred_check
          %p544 = pneg %p113
        $region54: #{decoder_block_forward.11} parent=51 // pred_check_branch
          %546 = sbr.rel (%p544) target = $region56
        $region55: #{decoder_block_forward.11} parent=51 // pred_region
          %s547 = sand.u32 %s98, 1
          %s548 = scalar_lea.sflag [#allocation4], %s547
          %s549 = sand.u32 %s98, 1
          %s550 = smul.addr %s549, 128
          %s551 = scalar_lea.vmem [#allocation8], %s550
          %552 = dma.done %s548, 2048
        $region56: #{decoder_block_forward.11} parent=51 // pred_fallthru
          _
      $region52: #{decoder_block_forward.11} parent=5 // pred_fallthru
        _
    $region6: #{decoder_block_forward.11} parent=1 // loop_footer
      %s20 = sadd.s32 1, %s16
    $region7: #{decoder_block_forward.11} parent=1 // loop_footer_branch
      %15 = sbr.rel target = $region3
    $region8: #{decoder_block_forward.11} parent=1 // loop_exit
      _
    %553 = vsyncpa [#allocation3], 1
    %s554 = scalar_lea.sflag [#allocation3], 1
    %555 = vsyncpa %s554, 1
    %556 = vsyncpa [#allocation6], 1
    %557 = vsyncpa [#allocation4], 1
    %s558 = scalar_lea.sflag [#allocation4], 1
    %559 = vsyncpa %s558, 1

// kernel: decoder_block_forward.10
$region0: #{decoder_block_forward.10}
  #allocation0 [shape = 'u32[]', space=smem, size = 0x4, offset = 0x4, fixed_abs, tag = 'smem constant byte address 0x4 - core index']
  #allocation1 [shape = 'u32[144,128]{1,0:T(1,128)}', space=vmem, size = 0x12000, scoped, tag = 'internal scratch']
  %s0 = inlined_call_operand.hbm [shape: bf16[512,72], index: 0, kind: input, shape index: {}]
  %s1 = inlined_call_operand.hbm [shape: bf16[512,72], index: 1, kind: input, shape index: {}]
  %s2 = inlined_call_operand.hbm [shape: bf16[72,128], index: 2, kind: input, shape index: {}]
  %s3 = inlined_call_operand.hbm [shape: bf16[72,128], index: 3, kind: input, shape index: {}]
  %s4 = inlined_call_operand.hbm [shape: f32[1,128], index: 4, kind: input, shape index: {}]
  %s5 = inlined_call_operand.hbm [shape: f32[512,128], index: 5, kind: output, shape index: {0}]
  %s6 = inlined_call_operand.hbm [shape: f32[1,128], index: 6, kind: output, shape index: {1}]
  %s7 = inlined_call_operand.hbm [shape: f32[1,128], index: 7, kind: output, shape index: {2}]
  %8 = xla_tuple %s5, %s6, %s7
  %s9 = sld [smem:[#allocation0]]
  $region93: #{decoder_block_forward.10} parent=0
    _
  %s11 = ssub.s32 1, %s9
  %s12 = scalar_select 0, %s11, %s9
  $region1: #{decoder_block_forward.10} parent=0
    #allocation2 [shape = 'u8[131072]{0}', space=vmem, size = 0x20000, scoped, tag = 'input window, operand 0']
    #allocation3 [shape = 's32[2]{0}', space=sflag, size = 0x8, scoped, tag = 'scoped memory for decoder_block_forward.10']
    #allocation4 [shape = 's32[2]{0}', space=sflag, size = 0x8, scoped, tag = 'scoped memory for decoder_block_forward.10']
    #allocation5 [shape = 'u8[131072]{0}', space=vmem, size = 0x20000, scoped, tag = 'input window, operand 1']
    #allocation6 [shape = 's32[2]{0}', space=sflag, size = 0x8, scoped, tag = 'scoped memory for decoder_block_forward.10']
    #allocation7 [shape = 'u8[18432]{0}', space=vmem, size = 0x4800, scoped, tag = 'input window, operand 2, single buffered']
    #allocation8 [shape = 'u8[18432]{0}', space=vmem, size = 0x4800, scoped, tag = 'input window, operand 3, single buffered']
    #allocation9 [shape = 's32[1]{0}', space=sflag, size = 0x4, scoped, tag = 'scoped memory for decoder_block_forward.10']
    #allocation10 [shape = 'u8[512]{0}', space=vmem, size = 0x400, scoped, tag = 'input window, operand 4, single buffered']
    #allocation11 [shape = 'u8[262144]{0}', space=vmem, size = 0x40000, scoped, tag = 'output window, operand 0']
    #allocation12 [shape = 'u8[512]{0}', space=vmem, size = 0x400, scoped, tag = 'output window, operand 1, single buffered']
    #allocation13 [shape = 's32[1]{0}', space=sflag, size = 0x4, scoped, tag = 'scoped memory for decoder_block_forward.10']
    #allocation14 [shape = 'u8[512]{0}', space=vmem, size = 0x400, scoped, tag = 'output window, operand 2, single buffered']
    %13 = vsyncpa [#allocation3], 0
    %s14 = scalar_lea.sflag [#allocation3], 1
    %15 = vsyncpa %s14, 0
    %16 = vsyncpa [#allocation6], 0
    %s17 = scalar_lea.sflag [#allocation6], 1
    %18 = vsyncpa %s17, 0
    %19 = vsyncpa [#allocation9], 0
    %20 = vsyncpa [#allocation4], 0
    %s21 = scalar_lea.sflag [#allocation4], 1
    %22 = vsyncpa %s21, 0
    %23 = vsyncpa [#allocation13], 0
    loop: start=0, step=1, limit=4
    $region2: #{decoder_block_forward.10} parent=1 // loop_pre_header
      _
    $region3: #{decoder_block_forward.10} parent=1 // loop_header
      %s25 = sphi 0, %s29
      %p26 = scmp.ge.s32.totalorder %s25, 4
      %s35 = sphi 0, %s37
      %s38 = sphi 0, %s35
      %s39 = sphi 0, %s38
      %s55 = sphi 0, %s39
      %s61 = sphi 0, %s63
      %s64 = sphi 0, %s61
      %s65 = sphi 0, %s64
      %s81 = sphi 0, %s65
      %s85 = sphi 0, %s85
      %s87 = sphi 0, %s85
      %s88 = sphi 0, %s87
      %s102 = sphi 0, %s88
      %s106 = sphi 0, %s106
      %s108 = sphi 0, %s106
      %s109 = sphi 0, %s108
      %s123 = sphi 0, %s109
      %s127 = sphi 0, %s127
      %s129 = sphi 0, %s127
      %s130 = sphi 0, %s129
      %s144 = sphi 0, %s130
      %s150 = sphi 0, %s152
      %s153 = sphi 0, %s150
      %s154 = sphi 0, %s153
      %s170 = sphi 0, %s154
      %s174 = sphi 0, %s174
      %s176 = sphi 0, %s174
      %s177 = sphi 0, %s176
      %s191 = sphi 0, %s177
      %s195 = sphi 0, %s195
      %s197 = sphi 0, %s195
      %s198 = sphi 0, %s197
      %s212 = sphi 0, %s198
    $region4: #{decoder_block_forward.10} parent=1 // loop_header_branch
      %28 = sbr.rel (%p26) target = $region8
    $region5: #{decoder_block_forward.10} parent=1 // loop_body
      %s30 = ssub.s32 %s25, 1
      %s31 = ssub.s32 %s25, 2
      %s32 = sadd.s32 %s25, 1
      %s33 = ssub.s32 %s25, %s32
      %p34 = scmp.eq.s32.totalorder %s33, 0
      %s36 = sadd.s32 %s35, 1
      %s37 = scalar_select %p34, %s35, %s36
      %p40 = pneg %p34
      %p41 = scmp.eq.s32.totalorder %s25, 1
      %p42 = por %p40, %p41
      %p43 = scmp.ne.s32.totalorder %s35, %s38
      %p44 = scmp.eq.s32.totalorder %s25, 0
      %p45 = por %p43, %p44
      %p46 = scmp.ne.s32.totalorder %s35, %s38
      %p47 = scmp.eq.s32.totalorder %s30, 1
      %p48 = por %p46, %p47
      %p49 = scmp.ne.s32.totalorder %s38, %s39
      %p50 = scmp.eq.s32.totalorder %s30, 0
      %p51 = por %p49, %p50
      %p52 = scmp.ne.s32.totalorder %s38, %s39
      %p53 = scmp.eq.s32.totalorder %s31, 1
      %p54 = por %p52, %p53
      %p56 = scmp.ne.s32.totalorder %s39, %s55
      %p57 = scmp.eq.s32.totalorder %s31, 0
      %p58 = por %p56, %p57
      %s59 = ssub.s32 %s25, %s32
      %p60 = scmp.eq.s32.totalorder %s59, 0
      %s62 = sadd.s32 %s61, 1
      %s63 = scalar_select %p60, %s61, %s62
      %p66 = pneg %p60
      %p67 = scmp.eq.s32.totalorder %s25, 1
      %p68 = por %p66, %p67
      %p69 = scmp.ne.s32.totalorder %s61, %s64
      %p70 = scmp.eq.s32.totalorder %s25, 0
      %p71 = por %p69, %p70
      %p72 = scmp.ne.s32.totalorder %s61, %s64
      %p73 = scmp.eq.s32.totalorder %s30, 1
      %p74 = por %p72, %p73
      %p75 = scmp.ne.s32.totalorder %s64, %s65
      %p76 = scmp.eq.s32.totalorder %s30, 0
      %p77 = por %p75, %p76
      %p78 = scmp.ne.s32.totalorder %s64, %s65
      %p79 = scmp.eq.s32.totalorder %s31, 1
      %p80 = por %p78, %p79
      %p82 = scmp.ne.s32.totalorder %s65, %s81
      %p83 = scmp.eq.s32.totalorder %s31, 0
      %p84 = por %p82, %p83
      %s86 = sadd.s32 %s85, 1
      %p89 = scmp.eq.s32.totalorder %s25, 1
      %p90 = scmp.ne.s32.totalorder %s85, %s87
      %p91 = scmp.eq.s32.totalorder %s25, 0
      %p92 = por %p90, %p91
      %p93 = scmp.ne.s32.totalorder %s85, %s87
      %p94 = scmp.eq.s32.totalorder %s30, 1
      %p95 = por %p93, %p94
      %p96 = scmp.ne.s32.totalorder %s87, %s88
      %p97 = scmp.eq.s32.totalorder %s30, 0
      %p98 = por %p96, %p97
      %p99 = scmp.ne.s32.totalorder %s87, %s88
      %p100 = scmp.eq.s32.totalorder %s31, 1
      %p101 = por %p99, %p100
      %p103 = scmp.ne.s32.totalorder %s88, %s102
      %p104 = scmp.eq.s32.totalorder %s31, 0
      %p105 = por %p103, %p104
      %s107 = sadd.s32 %s106, 1
      %p110 = scmp.eq.s32.totalorder %s25, 1
      %p111 = scmp.ne.s32.totalorder %s106, %s108
      %p112 = scmp.eq.s32.totalorder %s25, 0
      %p113 = por %p111, %p112
      %p114 = scmp.ne.s32.totalorder %s106, %s108
      %p115 = scmp.eq.s32.totalorder %s30, 1
      %p116 = por %p114, %p115
      %p117 = scmp.ne.s32.totalorder %s108, %s109
      %p118 = scmp.eq.s32.totalorder %s30, 0
      %p119 = por %p117, %p118
      %p120 = scmp.ne.s32.totalorder %s108, %s109
      %p121 = scmp.eq.s32.totalorder %s31, 1
      %p122 = por %p120, %p121
      %p124 = scmp.ne.s32.totalorder %s109, %s123
      %p125 = scmp.eq.s32.totalorder %s31, 0
      %p126 = por %p124, %p125
      %s128 = sadd.s32 %s127, 1
      %p131 = scmp.eq.s32.totalorder %s25, 1
      %p132 = scmp.ne.s32.totalorder %s127, %s129
      %p133 = scmp.eq.s32.totalorder %s25, 0
      %p134 = por %p132, %p133
      %p135 = scmp.ne.s32.totalorder %s127, %s129
      %p136 = scmp.eq.s32.totalorder %s30, 1
      %p137 = por %p135, %p136
      %p138 = scmp.ne.s32.totalorder %s129, %s130
      %p139 = scmp.eq.s32.totalorder %s30, 0
      %p140 = por %p138, %p139
      %p141 = scmp.ne.s32.totalorder %s129, %s130
      %p142 = scmp.eq.s32.totalorder %s31, 1
      %p143 = por %p141, %p142
      %p145 = scmp.ne.s32.totalorder %s130, %s144
      %p146 = scmp.eq.s32.totalorder %s31, 0
      %p147 = por %p145, %p146
      %s148 = ssub.s32 %s25, %s32
      %p149 = scmp.eq.s32.totalorder %s148, 0
      %s151 = sadd.s32 %s150, 1
      %s152 = scalar_select %p149, %s150, %s151
      %p155 = pneg %p149
      %p156 = scmp.eq.s32.totalorder %s25, 1
      %p157 = por %p155, %p156
      %p158 = scmp.ne.s32.totalorder %s150, %s153
      %p159 = scmp.eq.s32.totalorder %s25, 0
      %p160 = por %p158, %p159
      %p161 = scmp.ne.s32.totalorder %s150, %s153
      %p162 = scmp.eq.s32.totalorder %s30, 1
      %p163 = por %p161, %p162
      %p164 = scmp.ne.s32.totalorder %s153, %s154
      %p165 = scmp.eq.s32.totalorder %s30, 0
      %p166 = por %p164, %p165
      %p167 = scmp.ne.s32.totalorder %s153, %s154
      %p168 = scmp.eq.s32.totalorder %s31, 1
      %p169 = por %p167, %p168
      %p171 = scmp.ne.s32.totalorder %s154, %s170
      %p172 = scmp.eq.s32.totalorder %s31, 0
      %p173 = por %p171, %p172
      %s175 = sadd.s32 %s174, 1
      %p178 = scmp.eq.s32.totalorder %s25, 1
      %p179 = scmp.ne.s32.totalorder %s174, %s176
      %p180 = scmp.eq.s32.totalorder %s25, 0
      %p181 = por %p179, %p180
      %p182 = scmp.ne.s32.totalorder %s174, %s176
      %p183 = scmp.eq.s32.totalorder %s30, 1
      %p184 = por %p182, %p183
      %p185 = scmp.ne.s32.totalorder %s176, %s177
      %p186 = scmp.eq.s32.totalorder %s30, 0
      %p187 = por %p185, %p186
      %p188 = scmp.ne.s32.totalorder %s176, %s177
      %p189 = scmp.eq.s32.totalorder %s31, 1
      %p190 = por %p188, %p189
      %p192 = scmp.ne.s32.totalorder %s177, %s191
      %p193 = scmp.eq.s32.totalorder %s31, 0
      %p194 = por %p192, %p193
      %s196 = sadd.s32 %s195, 1
      %p199 = scmp.eq.s32.totalorder %s25, 1
      %p200 = scmp.ne.s32.totalorder %s195, %s197
      %p201 = scmp.eq.s32.totalorder %s25, 0
      %p202 = por %p200, %p201
      %p203 = scmp.ne.s32.totalorder %s195, %s197
      %p204 = scmp.eq.s32.totalorder %s30, 1
      %p205 = por %p203, %p204
      %p206 = scmp.ne.s32.totalorder %s197, %s198
      %p207 = scmp.eq.s32.totalorder %s30, 0
      %p208 = por %p206, %p207
      %p209 = scmp.ne.s32.totalorder %s197, %s198
      %p210 = scmp.eq.s32.totalorder %s31, 1
      %p211 = por %p209, %p210
      %p213 = scmp.ne.s32.totalorder %s198, %s212
      %p214 = scmp.eq.s32.totalorder %s31, 0
      %p215 = por %p213, %p214
      %p216 = scmp.le.s32.totalorder 1, %s25
      %p217 = scmp.lt.s32.totalorder %s25, 3
      %p218 = pnand %p216, %p217
      %p219 = pneg %p218
      // Predicated region
      $region9: #{decoder_block_forward.10} parent=5 // pred_check
        _
      $region10: #{decoder_block_forward.10} parent=5 // pred_check_branch
        %221 = sbr.rel (%p218) target = $region12
      $region11: #{decoder_block_forward.10} parent=5 // pred_region
        %s222 = ssub.s32 %s25, 1
        // Predicated region
        $region13: #{decoder_block_forward.10} parent=11 // pred_check
          %p223 = pneg %p98
        $region14: #{decoder_block_forward.10} parent=11 // pred_check_branch
          %225 = sbr.rel (%p223) target = $region16
        $region15: #{decoder_block_forward.10} parent=11 // pred_region
          %s227 = ssub.s32 576, 576
          %228 = vsyncadd [#allocation6], %s227
          %s229 = sshll.u32 [#allocation7], 4
          %s230 = int_to_ptr.vmem [resolvable:$true] %s229
          %235 = dma.hbm_to_vmem [thread:$0]  %s2, 576, %s230, [#allocation6], 64, 64, 4
        $region16: #{decoder_block_forward.10} parent=11 // pred_fallthru
          _
        // Predicated region
        $region17: #{decoder_block_forward.10} parent=11 // pred_check
          %p236 = pneg %p119
        $region18: #{decoder_block_forward.10} parent=11 // pred_check_branch
          %238 = sbr.rel (%p236) target = $region20
        $region19: #{decoder_block_forward.10} parent=11 // pred_region
          %s240 = ssub.s32 576, 576
          %241 = vsyncadd [#allocation9], %s240
          %s242 = sshll.u32 [#allocation8], 4
          %s243 = int_to_ptr.vmem [resolvable:$true] %s242
          %248 = dma.hbm_to_vmem [thread:$0]  %s3, 576, %s243, [#allocation9], 64, 64, 4
        $region20: #{decoder_block_forward.10} parent=11 // pred_fallthru
          _
        // Predicated region
        $region21: #{decoder_block_forward.10} parent=11 // pred_check
          %p249 = pneg %p140
        $region22: #{decoder_block_forward.10} parent=11 // pred_check_branch
          %251 = sbr.rel (%p249) target = $region24
        $region23: #{decoder_block_forward.10} parent=11 // pred_region
          %s253 = ssub.s32 16, 16
          %254 = vsyncadd [#allocation9], %s253
          %s256 = sshll.u32 [#allocation10], 4
          %s257 = int_to_ptr.vmem [resolvable:$true] %s256
          %259 = dma.hbm_to_vmem [thread:$0]  %s4, 16, %s257, [#allocation9]
        $region24: #{decoder_block_forward.10} parent=11 // pred_fallthru
          _
      $region12: #{decoder_block_forward.10} parent=5 // pred_fallthru
        _
      %p260 = scmp.lt.s32.totalorder %s25, 2
      // Predicated region
      $region25: #{decoder_block_forward.10} parent=5 // pred_check
        %p261 = pneg %p260
      $region26: #{decoder_block_forward.10} parent=5 // pred_check_branch
        %263 = sbr.rel (%p261) target = $region28
      $region27: #{decoder_block_forward.10} parent=5 // pred_region
        // Predicated region
        $region29: #{decoder_block_forward.10} parent=27 // pred_check
          %p264 = pneg %p45
        $region30: #{decoder_block_forward.10} parent=27 // pred_check_branch
          %266 = sbr.rel (%p264) target = $region32
        $region31: #{decoder_block_forward.10} parent=27 // pred_region
          %s267 = sand.u32 %s35, 1
          %s268 = scalar_lea.sflag [#allocation3], %s267
          %s269 = sand.u32 %s35, 1
          %s270 = smul.addr %s269, 128
          %s271 = scalar_lea.vmem [#allocation2], %s270
          %s272 = smul.u32 32, %s25
          %s274 = ssub.s32 2048, 2048
          %275 = vsyncadd %s268, %s274
          %s276 = smul.addr %s272, 64
          %s277 = scalar_lea.hbm %s0, %s276
          %s278 = sshll.u32 %s271, 4
          %s279 = int_to_ptr.vmem [resolvable:$true] %s278
          %284 = dma.hbm_to_vmem [thread:$0]  %s277, 2048, %s279, %s268, 64, 64, 4
        $region32: #{decoder_block_forward.10} parent=27 // pred_fallthru
          _
        // Predicated region
        $region33: #{decoder_block_forward.10} parent=27 // pred_check
          %p285 = pneg %p71
        $region34: #{decoder_block_forward.10} parent=27 // pred_check_branch
          %287 = sbr.rel (%p285) target = $region36
        $region35: #{decoder_block_forward.10} parent=27 // pred_region
          %s288 = sand.u32 %s25, 1
          %s289 = scalar_lea.sflag [#allocation6], %s288
          %s290 = sand.u32 %s61, 1
          %s291 = smul.addr %s290, 128
          %s292 = scalar_lea.vmem [#allocation5], %s291
          %s293 = smul.u32 32, %s25
          %s295 = ssub.s32 2048, 2048
          %296 = vsyncadd %s289, %s295
          %s297 = smul.addr %s293, 64
          %s298 = scalar_lea.hbm %s1, %s297
          %s299 = sshll.u32 %s292, 4
          %s300 = int_to_ptr.vmem [resolvable:$true] %s299
          %305 = dma.hbm_to_vmem [thread:$0]  %s298, 2048, %s300, %s289, 64, 64, 4
        $region36: #{decoder_block_forward.10} parent=27 // pred_fallthru
          _
      $region28: #{decoder_block_forward.10} parent=5 // pred_fallthru
        _
      %p306 = scmp.le.s32.totalorder 1, %s25
      %p307 = scmp.lt.s32.totalorder %s25, 3
      %p308 = pnand %p306, %p307
      %p309 = pneg %p308
      // Predicated region
      $region37: #{decoder_block_forward.10} parent=5 // pred_check
        _
      $region38: #{decoder_block_forward.10} parent=5 // pred_check_branch
        %311 = sbr.rel (%p308) target = $region40
      $region39: #{decoder_block_forward.10} parent=5 // pred_region
        %s312 = ssub.s32 %s25, 1
        %s313 = sand.u32 %s38, 1
        %s314 = scalar_lea.sflag [#allocation3], %s313
        %s315 = sand.u32 %s38, 1
        %s316 = smul.addr %s315, 128
        %s317 = scalar_lea.vmem [#allocation2], %s316
        // Predicated region
        $region41: #{decoder_block_forward.10} parent=39 // pred_check
          %p318 = pneg %p51
        $region42: #{decoder_block_forward.10} parent=39 // pred_check_branch
          %320 = sbr.rel (%p318) target = $region44
        $region43: #{decoder_block_forward.10} parent=39 // pred_region
          %321 = dma.done %s314, 2048
        $region44: #{decoder_block_forward.10} parent=39 // pred_fallthru
          _
        %s322 = sand.u32 %s30, 1
        %s323 = scalar_lea.sflag [#allocation6], %s322
        %s324 = sand.u32 %s64, 1
        %s325 = smul.addr %s324, 128
        %s326 = scalar_lea.vmem [#allocation5], %s325
        // Predicated region
        $region45: #{decoder_block_forward.10} parent=39 // pred_check
          %p327 = pneg %p77
        $region46: #{decoder_block_forward.10} parent=39 // pred_check_branch
          %329 = sbr.rel (%p327) target = $region48
        $region47: #{decoder_block_forward.10} parent=39 // pred_region
          %330 = dma.done %s323, 2048
        $region48: #{decoder_block_forward.10} parent=39 // pred_fallthru
          _
        // Predicated region
        $region49: #{decoder_block_forward.10} parent=39 // pred_check
          %p331 = pneg %p98
        $region50: #{decoder_block_forward.10} parent=39 // pred_check_branch
          %333 = sbr.rel (%p331) target = $region52
        $region51: #{decoder_block_forward.10} parent=39 // pred_region
          %334 = dma.done [#allocation6], 576
        $region52: #{decoder_block_forward.10} parent=39 // pred_fallthru
          _
        // Predicated region
        $region53: #{decoder_block_forward.10} parent=39 // pred_check
          %p335 = pneg %p119
        $region54: #{decoder_block_forward.10} parent=39 // pred_check_branch
          %337 = sbr.rel (%p335) target = $region56
        $region55: #{decoder_block_forward.10} parent=39 // pred_region
          %338 = dma.done [#allocation9], 576
        $region56: #{decoder_block_forward.10} parent=39 // pred_fallthru
          _
        // Predicated region
        $region57: #{decoder_block_forward.10} parent=39 // pred_check
          %p339 = pneg %p140
        $region58: #{decoder_block_forward.10} parent=39 // pred_check_branch
          %341 = sbr.rel (%p339) target = $region60
        $region59: #{decoder_block_forward.10} parent=39 // pred_region
          %342 = dma.done [#allocation9], 16
        $region60: #{decoder_block_forward.10} parent=39 // pred_fallthru
          _
        %s343 = sand.u32 %s38, 1
        %s344 = scalar_lea.sflag [#allocation3], %s343
        %s345 = sand.u32 %s38, 1
        %s346 = smul.addr %s345, 128
        %s347 = scalar_lea.vmem [#allocation2], %s346
        %p348 = pneg %p51
        %p349 = pneg %p48
        %s350 = sand.u32 %s30, 1
        %s351 = scalar_lea.sflag [#allocation6], %s350
        %s352 = sand.u32 %s64, 1
        %s353 = smul.addr %s352, 128
        %s354 = scalar_lea.vmem [#allocation5], %s353
        %p355 = pneg %p77
        %p356 = pneg %p74
        %p357 = pneg %p98
        %p358 = pneg %p95
        %p359 = pneg %p119
        %p360 = pneg %p116
        %p361 = pneg %p140
        %p362 = pneg %p137
        %p363 = pneg %p166
        %p364 = pneg %p163
        %s365 = sand.u32 %s153, 1
        %s366 = scalar_lea.sflag [#allocation4], %s365
        %s367 = sand.u32 %s153, 1
        %s368 = smul.addr %s367, 256
        %s369 = scalar_lea.vmem [#allocation11], %s368
        %p370 = pneg %p187
        %p371 = pneg %p184
        %p372 = pneg %p208
        %p373 = pneg %p205
        %s374 = smul.u32 32, %s30
        %s375 = smul.u32 32, %s30
        %s376 = smul.u32 32, %s30
        %v378 = vld [vmem:[%s317] sm:$0xf]
        %v379 = vld [vmem:[%s317 + $0x4] sm:$0xf]
        %v380 = vld [vmem:[%s317 + $0x8] sm:$0xf]
        %v381 = vld [vmem:[%s317 + $0xc] sm:$0xf]
        %v382 = vld [vmem:[%s317 + $0x10] sm:$0xf]
        %v383 = vld [vmem:[%s317 + $0x14] sm:$0xf]
        %v384 = vld [vmem:[%s317 + $0x18] sm:$0xf]
        %v385 = vld [vmem:[%s317 + $0x1c] sm:$0xf]
        %v386 = vld [vmem:[%s317 + $0x20] sm:$0xf]
        %v387 = vld [vmem:[%s317 + $0x24] sm:$0xf]
        %v388 = vld [vmem:[%s317 + $0x28] sm:$0xf]
        %v389 = vld [vmem:[%s317 + $0x2c] sm:$0xf]
        %v390 = vld [vmem:[%s317 + $0x30] sm:$0xf]
        %v391 = vld [vmem:[%s317 + $0x34] sm:$0xf]
        %v392 = vld [vmem:[%s317 + $0x38] sm:$0xf]
        %v393 = vld [vmem:[%s317 + $0x3c] sm:$0xf]
        %v394 = vld [vmem:[%s317 + $0x40] sm:$0xf]
        %v395 = vld [vmem:[%s317 + $0x44] sm:$0xf]
        %v396 = vld [vmem:[%s317 + $0x48] sm:$0xf]
        %v397 = vld [vmem:[%s317 + $0x4c] sm:$0xf]
        %v398 = vld [vmem:[%s317 + $0x50] sm:$0xf]
        %v399 = vld [vmem:[%s317 + $0x54] sm:$0xf]
        %v400 = vld [vmem:[%s317 + $0x58] sm:$0xf]
        %v401 = vld [vmem:[%s317 + $0x5c] sm:$0xf]
        %v402 = vld [vmem:[%s317 + $0x60] sm:$0xf]
        %v403 = vld [vmem:[%s317 + $0x64] sm:$0xf]
        %v404 = vld [vmem:[%s317 + $0x68] sm:$0xf]
        %v405 = vld [vmem:[%s317 + $0x6c] sm:$0xf]
        %v406 = vld [vmem:[%s317 + $0x70] sm:$0xf]
        %v407 = vld [vmem:[%s317 + $0x74] sm:$0xf]
        %v408 = vld [vmem:[%s317 + $0x78] sm:$0xf]
        %v409 = vld [vmem:[%s317 + $0x7c] sm:$0xf]
        %v410 = vld [vmem:[#allocation7] sm:$0xf]
        %v411 = vld [vmem:[#allocation7 + $0x4] sm:$0xf]
        %v412 = vld [vmem:[#allocation7 + $0x8] sm:$0xf]
        %v413 = vld [vmem:[#allocation7 + $0xc] sm:$0xf]
        %v414 = vld [vmem:[#allocation7 + $0x10] sm:$0xf]
        %v415 = vld [vmem:[#allocation7 + $0x14] sm:$0xf]
        %v416 = vld [vmem:[#allocation7 + $0x18] sm:$0xf]
        %v417 = vld [vmem:[#allocation7 + $0x1c] sm:$0xf]
        %v418 = vld [vmem:[#allocation7 + $0x20] sm:$0xf]
        %v419 = vld [vmem:[%s326] sm:$0xf]
        %v420 = vld [vmem:[%s326 + $0x4] sm:$0xf]
        %v421 = vld [vmem:[%s326 + $0x8] sm:$0xf]
        %v422 = vld [vmem:[%s326 + $0xc] sm:$0xf]
        %v423 = vld [vmem:[%s326 + $0x10] sm:$0xf]
        %v424 = vld [vmem:[%s326 + $0x14] sm:$0xf]
        %v425 = vld [vmem:[%s326 + $0x18] sm:$0xf]
        %v426 = vld [vmem:[%s326 + $0x1c] sm:$0xf]
        %v427 = vld [vmem:[%s326 + $0x20] sm:$0xf]
        %v428 = vld [vmem:[%s326 + $0x24] sm:$0xf]
        %v429 = vld [vmem:[%s326 + $0x28] sm:$0xf]
        %v430 = vld [vmem:[%s326 + $0x2c] sm:$0xf]
        %v431 = vld [vmem:[%s326 + $0x30] sm:$0xf]
        %v432 = vld [vmem:[%s326 + $0x34] sm:$0xf]
        %v433 = vld [vmem:[%s326 + $0x38] sm:$0xf]
        %v434 = vld [vmem:[%s326 + $0x3c] sm:$0xf]
        %v435 = vld [vmem:[%s326 + $0x40] sm:$0xf]
        %v436 = vld [vmem:[%s326 + $0x44] sm:$0xf]
        %v437 = vld [vmem:[%s326 + $0x48] sm:$0xf]
        %v438 = vld [vmem:[%s326 + $0x4c] sm:$0xf]
        %v439 = vld [vmem:[%s326 + $0x50] sm:$0xf]
        %v440 = vld [vmem:[%s326 + $0x54] sm:$0xf]
        %v441 = vld [vmem:[%s326 + $0x58] sm:$0xf]
        %v442 = vld [vmem:[%s326 + $0x5c] sm:$0xf]
        %v443 = vld [vmem:[%s326 + $0x60] sm:$0xf]
        %v444 = vld [vmem:[%s326 + $0x64] sm:$0xf]
        %v445 = vld [vmem:[%s326 + $0x68] sm:$0xf]
        %v446 = vld [vmem:[%s326 + $0x6c] sm:$0xf]
        %v447 = vld [vmem:[%s326 + $0x70] sm:$0xf]
        %v448 = vld [vmem:[%s326 + $0x74] sm:$0xf]
        %v449 = vld [vmem:[%s326 + $0x78] sm:$0xf]
        %v450 = vld [vmem:[%s326 + $0x7c] sm:$0xf]
        %v451 = vld [vmem:[#allocation8] sm:$0xf]
        %v452 = vld [vmem:[#allocation8 + $0x4] sm:$0xf]
        %v453 = vld [vmem:[#allocation8 + $0x8] sm:$0xf]
        %v454 = vld [vmem:[#allocation8 + $0xc] sm:$0xf]
        %v455 = vld [vmem:[#allocation8 + $0x10] sm:$0xf]
        %v456 = vld [vmem:[#allocation8 + $0x14] sm:$0xf]
        %v457 = vld [vmem:[#allocation8 + $0x18] sm:$0xf]
        %v458 = vld [vmem:[#allocation8 + $0x1c] sm:$0xf]
        %v459 = vld [vmem:[#allocation8 + $0x20] sm:$0xf]
        %v492 = vunpack.c.l.b16 %v419
        %v493 = vunpack.c.l.b16 %v420
        %v494 = vunpack.c.l.b16 %v421
        %v495 = vunpack.c.l.b16 %v422
        %v496 = vunpack.c.l.b16 %v423
        %v497 = vunpack.c.l.b16 %v424
        %v498 = vunpack.c.l.b16 %v425
        %v499 = vunpack.c.l.b16 %v426
        %v500 = vunpack.c.l.b16 %v427
        %v501 = vunpack.c.l.b16 %v428
        %v502 = vunpack.c.l.b16 %v429
        %v503 = vunpack.c.l.b16 %v430
        %v504 = vunpack.c.l.b16 %v431
        %v505 = vunpack.c.l.b16 %v432
        %v506 = vunpack.c.l.b16 %v433
        %v507 = vunpack.c.l.b16 %v434
        %v508 = vunpack.c.l.b16 %v435
        %v509 = vunpack.c.l.b16 %v436
        %v510 = vunpack.c.l.b16 %v437
        %v511 = vunpack.c.l.b16 %v438
        %v512 = vunpack.c.l.b16 %v439
        %v513 = vunpack.c.l.b16 %v440
        %v514 = vunpack.c.l.b16 %v441
        %v515 = vunpack.c.l.b16 %v442
        %v516 = vunpack.c.l.b16 %v443
        %v517 = vunpack.c.l.b16 %v444
        %v518 = vunpack.c.l.b16 %v445
        %v519 = vunpack.c.l.b16 %v446
        %v520 = vunpack.c.l.b16 %v447
        %v521 = vunpack.c.l.b16 %v448
        %v522 = vunpack.c.l.b16 %v449
        %v523 = vunpack.c.l.b16 %v450
        %v524 = vpack.c.b16 %v493, %v492
        %v525 = vpack.c.b16 %v495, %v494
        %v526 = vpack.c.b16 %v497, %v496
        %v527 = vpack.c.b16 %v499, %v498
        %v528 = vpack.c.b16 %v501, %v500
        %v529 = vpack.c.b16 %v503, %v502
        %v530 = vpack.c.b16 %v505, %v504
        %v531 = vpack.c.b16 %v507, %v506
        %v532 = vpack.c.b16 %v509, %v508
        %v533 = vpack.c.b16 %v511, %v510
        %v534 = vpack.c.b16 %v513, %v512
        %v535 = vpack.c.b16 %v515, %v514
        %v536 = vpack.c.b16 %v517, %v516
        %v537 = vpack.c.b16 %v519, %v518
        %v538 = vpack.c.b16 %v521, %v520
        %v539 = vpack.c.b16 %v523, %v522
        %v549 = vunpack.c.l.b16 %v451
        %v550 = vunpack.c.l.b16 %v452
        %v551 = vunpack.c.l.b16 %v453
        %v552 = vunpack.c.l.b16 %v454
        %v553 = vunpack.c.l.b16 %v455
        %v554 = vunpack.c.l.b16 %v456
        %v555 = vunpack.c.l.b16 %v457
        %v556 = vunpack.c.l.b16 %v458
        %v557 = vunpack.c.l.b16 %v459
        %v558 = vpack.c.b16 %v550, %v549
        %v559 = vpack.c.b16 %v552, %v551
        %v560 = vpack.c.b16 %v554, %v553
        %v561 = vpack.c.b16 %v556, %v555
        %v562 = vpack.c.b16 %v557, %v557
        %vm567 = vcmask 588800
        %v569 = vsel %vm567, %v524, 0
        %v572 = vsel %vm567, %v525, 0
        %v575 = vsel %vm567, %v526, 0
        %v578 = vsel %vm567, %v527, 0
        %v581 = vsel %vm567, %v528, 0
        %v584 = vsel %vm567, %v529, 0
        %v587 = vsel %vm567, %v530, 0
        %v590 = vsel %vm567, %v531, 0
        %v593 = vsel %vm567, %v532, 0
        %v596 = vsel %vm567, %v533, 0
        %v599 = vsel %vm567, %v534, 0
        %v602 = vsel %vm567, %v535, 0
        %v605 = vsel %vm567, %v536, 0
        %v608 = vsel %vm567, %v537, 0
        %v611 = vsel %vm567, %v538, 0
        %v614 = vsel %vm567, %v539, 0
        %vm616 = vcmask 1043456
        %v618 = vsel %vm616, %v562, 0
        %620 = vmatprep.subr.bf16.mxu0 0
        %621 = vmatpush1.bf16.msra.mxu0 %v558
        %622 = vmatprep.subr.bf16.mxu0 0
        %623 = vmatpush1.bf16.msra.mxu0 %v559
        %624 = vmatprep.subr.bf16.mxu0 0
        %625 = vmatpush1.bf16.msra.mxu0 %v560
        %626 = vmatprep.subr.bf16.mxu0 0
        %627 = vmatpush1.bf16.msra.mxu0 %v561
        %628 = vmatprep.subr.bf16.mxu0 0
        %629 = vmatpush1.bf16.msra.mxu0 %v618
        %630 = vmatprep.subr.bf16.mxu0 0
        %631 = vmatpush1.bf16.msra.mxu0 0
        %632 = vmatprep.subr.bf16.mxu0 0
        %633 = vmatpush1.bf16.msra.mxu0 0
        %634 = vmatprep.subr.bf16.mxu0 0
        %635 = vmatpush1.bf16.msra.mxu0 0
        %636 = vmatprep.subr.bf16.mxu0 0
        %637 = vmatpush1.bf16.msra.mxu0 0
        %638 = vmatprep.subr.bf16.mxu0 0
        %639 = vmatpush1.bf16.msra.mxu0 0
        %640 = vmatprep.subr.bf16.mxu0 0
        %641 = vmatpush1.bf16.msra.mxu0 0
        %642 = vmatprep.subr.bf16.mxu0 0
        %643 = vmatpush1.bf16.msra.mxu0 0
        %644 = vmatprep.subr.bf16.mxu0 0
        %645 = vmatpush1.bf16.msra.mxu0 0
        %646 = vmatprep.subr.bf16.mxu0 0
        %647 = vmatpush1.bf16.msra.mxu0 0
        %648 = vmatprep.subr.bf16.mxu0 0
        %649 = vmatpush1.bf16.msra.mxu0 0
        %650 = vmatprep.subr.bf16.mxu0 0
        %651 = vmatpush1.bf16.msra.mxu0 0
        %652 = vmatprep.mubr.bf16.mxu0 0
        %653 = vmatmul.mubr.bf16.gmra.mrb[0].mxu0 %v569
        %v654 = vpop.f32.mrb[0].mxu0
        %v655 = vadd.f32 0.0, %v654
        %v656 = vpop.f32.mrb[0].mxu0
        %v657 = vpop.f32.mrb[0].mxu0
        %v658 = vadd.f32 0.0, %v657
        %v659 = vpop.f32.mrb[0].mxu0
        %660 = vmatprep.mubr.bf16.mxu0 0
        %661 = vmatmul.mubr.bf16.gmra.mrb[0].mxu0 %v572
        %v662 = vpop.f32.mrb[0].mxu0
        %v663 = vadd.f32 0.0, %v662
        %v664 = vpop.f32.mrb[0].mxu0
        %v665 = vpop.f32.mrb[0].mxu0
        %v666 = vadd.f32 0.0, %v665
        %v667 = vpop.f32.mrb[0].mxu0
        %668 = vmatprep.mubr.bf16.mxu0 0
        %669 = vmatmul.mubr.bf16.gmra.mrb[0].mxu0 %v575
        %v670 = vpop.f32.mrb[0].mxu0
        %v671 = vadd.f32 0.0, %v670
        %v672 = vpop.f32.mrb[0].mxu0
        %v673 = vpop.f32.mrb[0].mxu0
        %v674 = vadd.f32 0.0, %v673
        %v675 = vpop.f32.mrb[0].mxu0
        %676 = vmatprep.mubr.bf16.mxu0 0
        %677 = vmatmul.mubr.bf16.gmra.mrb[0].mxu0 %v578
        %v678 = vpop.f32.mrb[0].mxu0
        %v679 = vadd.f32 0.0, %v678
        %v680 = vpop.f32.mrb[0].mxu0
        %v681 = vpop.f32.mrb[0].mxu0
        %v682 = vadd.f32 0.0, %v681
        %v683 = vpop.f32.mrb[0].mxu0
        %684 = vmatprep.mubr.bf16.mxu0 0
        %685 = vmatmul.mubr.bf16.gmra.mrb[0].mxu0 %v581
        %v686 = vpop.f32.mrb[0].mxu0
        %v687 = vadd.f32 0.0, %v686
        %v688 = vpop.f32.mrb[0].mxu0
        %v689 = vpop.f32.mrb[0].mxu0
        %v690 = vadd.f32 0.0, %v689
        %v691 = vpop.f32.mrb[0].mxu0
        %692 = vmatprep.mubr.bf16.mxu0 0
        %693 = vmatmul.mubr.bf16.gmra.mrb[0].mxu0 %v584
        %v694 = vpop.f32.mrb[0].mxu0
        %v695 = vadd.f32 0.0, %v694
        %v696 = vpop.f32.mrb[0].mxu0
        %v697 = vpop.f32.mrb[0].mxu0
        %v698 = vadd.f32 0.0, %v697
        %v699 = vpop.f32.mrb[0].mxu0
        %700 = vmatprep.mubr.bf16.mxu0 0
        %701 = vmatmul.mubr.bf16.gmra.mrb[0].mxu0 %v587
        %v702 = vpop.f32.mrb[0].mxu0
        %v703 = vadd.f32 0.0, %v702
        %v704 = vpop.f32.mrb[0].mxu0
        %v705 = vpop.f32.mrb[0].mxu0
        %v706 = vadd.f32 0.0, %v705
        %v707 = vpop.f32.mrb[0].mxu0
        %708 = vmatprep.mubr.bf16.mxu0 0
        %709 = vmatmul.mubr.bf16.gmra.mrb[0].mxu0 %v590
        %v710 = vpop.f32.mrb[0].mxu0
        %v711 = vadd.f32 0.0, %v710
        %v712 = vpop.f32.mrb[0].mxu0
        %v713 = vpop.f32.mrb[0].mxu0
        %v714 = vadd.f32 0.0, %v713
        %v715 = vpop.f32.mrb[0].mxu0
        %716 = vmatprep.mubr.bf16.mxu0 0
        %717 = vmatmul.mubr.bf16.gmra.mrb[0].mxu0 %v593
        %v718 = vpop.f32.mrb[0].mxu0
        %v719 = vadd.f32 0.0, %v718
        %v720 = vpop.f32.mrb[0].mxu0
        %v721 = vpop.f32.mrb[0].mxu0
        %v722 = vadd.f32 0.0, %v721
        %v723 = vpop.f32.mrb[0].mxu0
        %724 = vmatprep.mubr.bf16.mxu0 0
        %725 = vmatmul.mubr.bf16.gmra.mrb[0].mxu0 %v596
        %v726 = vpop.f32.mrb[0].mxu0
        %v727 = vadd.f32 0.0, %v726
        %v728 = vpop.f32.mrb[0].mxu0
        %v729 = vpop.f32.mrb[0].mxu0
        %v730 = vadd.f32 0.0, %v729
        %v731 = vpop.f32.mrb[0].mxu0
        %732 = vmatprep.mubr.bf16.mxu0 0
        %733 = vmatmul.mubr.bf16.gmra.mrb[0].mxu0 %v599
        %v734 = vpop.f32.mrb[0].mxu0
        %v735 = vadd.f32 0.0, %v734
        %v736 = vpop.f32.mrb[0].mxu0
        %v737 = vpop.f32.mrb[0].mxu0
        %v738 = vadd.f32 0.0, %v737
        %v739 = vpop.f32.mrb[0].mxu0
        %740 = vmatprep.mubr.bf16.mxu0 0
        %741 = vmatmul.mubr.bf16.gmra.mrb[0].mxu0 %v602
        %v742 = vpop.f32.mrb[0].mxu0
        %v743 = vadd.f32 0.0, %v742
        %v744 = vpop.f32.mrb[0].mxu0
        %v745 = vpop.f32.mrb[0].mxu0
        %v746 = vadd.f32 0.0, %v745
        %v747 = vpop.f32.mrb[0].mxu0
        %748 = vmatprep.mubr.bf16.mxu0 0
        %749 = vmatmul.mubr.bf16.gmra.mrb[0].mxu0 %v605
        %v750 = vpop.f32.mrb[0].mxu0
        %v751 = vadd.f32 0.0, %v750
        %v752 = vpop.f32.mrb[0].mxu0
        %v753 = vpop.f32.mrb[0].mxu0
        %v754 = vadd.f32 0.0, %v753
        %v755 = vpop.f32.mrb[0].mxu0
        %756 = vmatprep.mubr.bf16.mxu0 0
        %757 = vmatmul.mubr.bf16.gmra.mrb[0].mxu0 %v608
        %v758 = vpop.f32.mrb[0].mxu0
        %v759 = vadd.f32 0.0, %v758
        %v760 = vpop.f32.mrb[0].mxu0
        %v761 = vpop.f32.mrb[0].mxu0
        %v762 = vadd.f32 0.0, %v761
        %v763 = vpop.f32.mrb[0].mxu0
        %764 = vmatprep.mubr.bf16.mxu0 0
        %765 = vmatmul.mubr.bf16.gmra.mrb[0].mxu0 %v611
        %v766 = vpop.f32.mrb[0].mxu0
        %v767 = vadd.f32 0.0, %v766
        %v768 = vpop.f32.mrb[0].mxu0
        %v769 = vpop.f32.mrb[0].mxu0
        %v770 = vadd.f32 0.0, %v769
        %v771 = vpop.f32.mrb[0].mxu0
        %772 = vmatprep.mubr.bf16.mxu0 0
        %773 = vmatmul.mubr.bf16.gmra.mrb[0].mxu0 %v614
        %v774 = vpop.f32.mrb[0].mxu0
        %v775 = vadd.f32 0.0, %v774
        %v776 = vpop.f32.mrb[0].mxu0
        %v777 = vpop.f32.mrb[0].mxu0
        %v778 = vadd.f32 0.0, %v777
        %v779 = vpop.f32.mrb[0].mxu0
        %780 = vdwg.mxu0
        %v813 = vunpack.c.l.b16 %v378
        %v814 = vunpack.c.l.b16 %v379
        %v815 = vunpack.c.l.b16 %v380
        %v816 = vunpack.c.l.b16 %v381
        %v817 = vunpack.c.l.b16 %v382
        %v818 = vunpack.c.l.b16 %v383
        %v819 = vunpack.c.l.b16 %v384
        %v820 = vunpack.c.l.b16 %v385
        %v821 = vunpack.c.l.b16 %v386
        %v822 = vunpack.c.l.b16 %v387
        %v823 = vunpack.c.l.b16 %v388
        %v824 = vunpack.c.l.b16 %v389
        %v825 = vunpack.c.l.b16 %v390
        %v826 = vunpack.c.l.b16 %v391
        %v827 = vunpack.c.l.b16 %v392
        %v828 = vunpack.c.l.b16 %v393
        %v829 = vunpack.c.l.b16 %v394
        %v830 = vunpack.c.l.b16 %v395
        %v831 = vunpack.c.l.b16 %v396
        %v832 = vunpack.c.l.b16 %v397
        %v833 = vunpack.c.l.b16 %v398
        %v834 = vunpack.c.l.b16 %v399
        %v835 = vunpack.c.l.b16 %v400
        %v836 = vunpack.c.l.b16 %v401
        %v837 = vunpack.c.l.b16 %v402
        %v838 = vunpack.c.l.b16 %v403
        %v839 = vunpack.c.l.b16 %v404
        %v840 = vunpack.c.l.b16 %v405
        %v841 = vunpack.c.l.b16 %v406
        %v842 = vunpack.c.l.b16 %v407
        %v843 = vunpack.c.l.b16 %v408
        %v844 = vunpack.c.l.b16 %v409
        %v845 = vpack.c.b16 %v814, %v813
        %v846 = vpack.c.b16 %v816, %v815
        %v847 = vpack.c.b16 %v818, %v817
        %v848 = vpack.c.b16 %v820, %v819
        %v849 = vpack.c.b16 %v822, %v821
        %v850 = vpack.c.b16 %v824, %v823
        %v851 = vpack.c.b16 %v826, %v825
        %v852 = vpack.c.b16 %v828, %v827
        %v853 = vpack.c.b16 %v830, %v829
        %v854 = vpack.c.b16 %v832, %v831
        %v855 = vpack.c.b16 %v834, %v833
        %v856 = vpack.c.b16 %v836, %v835
        %v857 = vpack.c.b16 %v838, %v837
        %v858 = vpack.c.b16 %v840, %v839
        %v859 = vpack.c.b16 %v842, %v841
        %v860 = vpack.c.b16 %v844, %v843
        %v870 = vunpack.c.l.b16 %v410
        %v871 = vunpack.c.l.b16 %v411
        %v872 = vunpack.c.l.b16 %v412
        %v873 = vunpack.c.l.b16 %v413
        %v874 = vunpack.c.l.b16 %v414
        %v875 = vunpack.c.l.b16 %v415
        %v876 = vunpack.c.l.b16 %v416
        %v877 = vunpack.c.l.b16 %v417
        %v878 = vunpack.c.l.b16 %v418
        %v879 = vpack.c.b16 %v871, %v870
        %v880 = vpack.c.b16 %v873, %v872
        %v881 = vpack.c.b16 %v875, %v874
        %v882 = vpack.c.b16 %v877, %v876
        %v883 = vpack.c.b16 %v878, %v878
        %v889 = vsel %vm567, %v845, 0
        %v892 = vsel %vm567, %v846, 0
        %v895 = vsel %vm567, %v847, 0
        %v898 = vsel %vm567, %v848, 0
        %v901 = vsel %vm567, %v849, 0
        %v904 = vsel %vm567, %v850, 0
        %v907 = vsel %vm567, %v851, 0
        %v910 = vsel %vm567, %v852, 0
        %v913 = vsel %vm567, %v853, 0
        %v916 = vsel %vm567, %v854, 0
        %v919 = vsel %vm567, %v855, 0
        %v922 = vsel %vm567, %v856, 0
        %v925 = vsel %vm567, %v857, 0
        %v928 = vsel %vm567, %v858, 0
        %v931 = vsel %vm567, %v859, 0
        %v934 = vsel %vm567, %v860, 0
        %v937 = vsel %vm616, %v883, 0
        %939 = vmatprep.subr.bf16.mxu0 0
        %940 = vmatpush1.bf16.msra.mxu0 %v879
        %941 = vmatprep.subr.bf16.mxu0 0
        %942 = vmatpush1.bf16.msra.mxu0 %v880
        %943 = vmatprep.subr.bf16.mxu0 0
        %944 = vmatpush1.bf16.msra.mxu0 %v881
        %945 = vmatprep.subr.bf16.mxu0 0
        %946 = vmatpush1.bf16.msra.mxu0 %v882
        %947 = vmatprep.subr.bf16.mxu0 0
        %948 = vmatpush1.bf16.msra.mxu0 %v937
        %949 = vmatprep.subr.bf16.mxu0 0
        %950 = vmatpush1.bf16.msra.mxu0 0
        %951 = vmatprep.subr.bf16.mxu0 0
        %952 = vmatpush1.bf16.msra.mxu0 0
        %953 = vmatprep.subr.bf16.mxu0 0
        %954 = vmatpush1.bf16.msra.mxu0 0
        %955 = vmatprep.subr.bf16.mxu0 0
        %956 = vmatpush1.bf16.msra.mxu0 0
        %957 = vmatprep.subr.bf16.mxu0 0
        %958 = vmatpush1.bf16.msra.mxu0 0
        %959 = vmatprep.subr.bf16.mxu0 0
        %960 = vmatpush1.bf16.msra.mxu0 0
        %961 = vmatprep.subr.bf16.mxu0 0
        %962 = vmatpush1.bf16.msra.mxu0 0
        %963 = vmatprep.subr.bf16.mxu0 0
        %964 = vmatpush1.bf16.msra.mxu0 0
        %965 = vmatprep.subr.bf16.mxu0 0
        %966 = vmatpush1.bf16.msra.mxu0 0
        %967 = vmatprep.subr.bf16.mxu0 0
        %968 = vmatpush1.bf16.msra.mxu0 0
        %969 = vmatprep.subr.bf16.mxu0 0
        %970 = vmatpush1.bf16.msra.mxu0 0
        %971 = vmatprep.mubr.bf16.mxu0 0
        %972 = vmatmul.mubr.bf16.gmra.mrb[0].mxu0 %v889
        %v973 = vpop.f32.mrb[0].mxu0
        %v974 = vadd.f32 %v655, %v973
        %v975 = vpop.f32.mrb[0].mxu0
        %v976 = vpop.f32.mrb[0].mxu0
        %v977 = vadd.f32 %v658, %v976
        %v978 = vpop.f32.mrb[0].mxu0
        %979 = vmatprep.mubr.bf16.mxu0 0
        %980 = vmatmul.mubr.bf16.gmra.mrb[0].mxu0 %v892
        %v981 = vpop.f32.mrb[0].mxu0
        %v982 = vadd.f32 %v663, %v981
        %v983 = vpop.f32.mrb[0].mxu0
        %v984 = vpop.f32.mrb[0].mxu0
        %v985 = vadd.f32 %v666, %v984
        %v986 = vpop.f32.mrb[0].mxu0
        %987 = vmatprep.mubr.bf16.mxu0 0
        %988 = vmatmul.mubr.bf16.gmra.mrb[0].mxu0 %v895
        %v989 = vpop.f32.mrb[0].mxu0
        %v990 = vadd.f32 %v671, %v989
        %v991 = vpop.f32.mrb[0].mxu0
        %v992 = vpop.f32.mrb[0].mxu0
        %v993 = vadd.f32 %v674, %v992
        %v994 = vpop.f32.mrb[0].mxu0
        %995 = vmatprep.mubr.bf16.mxu0 0
        %996 = vmatmul.mubr.bf16.gmra.mrb[0].mxu0 %v898
        %v997 = vpop.f32.mrb[0].mxu0
        %v998 = vadd.f32 %v679, %v997
        %v999 = vpop.f32.mrb[0].mxu0
        %v1000 = vpop.f32.mrb[0].mxu0
        %v1001 = vadd.f32 %v682, %v1000
        %v1002 = vpop.f32.mrb[0].mxu0
        %1003 = vmatprep.mubr.bf16.mxu0 0
        %1004 = vmatmul.mubr.bf16.gmra.mrb[0].mxu0 %v901
        %v1005 = vpop.f32.mrb[0].mxu0
        %v1006 = vadd.f32 %v687, %v1005
        %v1007 = vpop.f32.mrb[0].mxu0
        %v1008 = vpop.f32.mrb[0].mxu0
        %v1009 = vadd.f32 %v690, %v1008
        %v1010 = vpop.f32.mrb[0].mxu0
        %1011 = vmatprep.mubr.bf16.mxu0 0
        %1012 = vmatmul.mubr.bf16.gmra.mrb[0].mxu0 %v904
        %v1013 = vpop.f32.mrb[0].mxu0
        %v1014 = vadd.f32 %v695, %v1013
        %v1015 = vpop.f32.mrb[0].mxu0
        %v1016 = vpop.f32.mrb[0].mxu0
        %v1017 = vadd.f32 %v698, %v1016
        %v1018 = vpop.f32.mrb[0].mxu0
        %1019 = vmatprep.mubr.bf16.mxu0 0
        %1020 = vmatmul.mubr.bf16.gmra.mrb[0].mxu0 %v907
        %v1021 = vpop.f32.mrb[0].mxu0
        %v1022 = vadd.f32 %v703, %v1021
        %v1023 = vpop.f32.mrb[0].mxu0
        %v1024 = vpop.f32.mrb[0].mxu0
        %v1025 = vadd.f32 %v706, %v1024
        %v1026 = vpop.f32.mrb[0].mxu0
        %1027 = vmatprep.mubr.bf16.mxu0 0
        %1028 = vmatmul.mubr.bf16.gmra.mrb[0].mxu0 %v910
        %v1029 = vpop.f32.mrb[0].mxu0
        %v1030 = vadd.f32 %v711, %v1029
        %v1031 = vpop.f32.mrb[0].mxu0
        %v1032 = vpop.f32.mrb[0].mxu0
        %v1033 = vadd.f32 %v714, %v1032
        %v1034 = vpop.f32.mrb[0].mxu0
        %1035 = vmatprep.mubr.bf16.mxu0 0
        %1036 = vmatmul.mubr.bf16.gmra.mrb[0].mxu0 %v913
        %v1037 = vpop.f32.mrb[0].mxu0
        %v1038 = vadd.f32 %v719, %v1037
        %v1039 = vpop.f32.mrb[0].mxu0
        %v1040 = vpop.f32.mrb[0].mxu0
        %v1041 = vadd.f32 %v722, %v1040
        %v1042 = vpop.f32.mrb[0].mxu0
        %1043 = vmatprep.mubr.bf16.mxu0 0
        %1044 = vmatmul.mubr.bf16.gmra.mrb[0].mxu0 %v916
        %v1045 = vpop.f32.mrb[0].mxu0
        %v1046 = vadd.f32 %v727, %v1045
        %v1047 = vpop.f32.mrb[0].mxu0
        %v1048 = vpop.f32.mrb[0].mxu0
        %v1049 = vadd.f32 %v730, %v1048
        %v1050 = vpop.f32.mrb[0].mxu0
        %1051 = vmatprep.mubr.bf16.mxu0 0
        %1052 = vmatmul.mubr.bf16.gmra.mrb[0].mxu0 %v919
        %v1053 = vpop.f32.mrb[0].mxu0
        %v1054 = vadd.f32 %v735, %v1053
        %v1055 = vpop.f32.mrb[0].mxu0
        %v1056 = vpop.f32.mrb[0].mxu0
        %v1057 = vadd.f32 %v738, %v1056
        %v1058 = vpop.f32.mrb[0].mxu0
        %1059 = vmatprep.mubr.bf16.mxu0 0
        %1060 = vmatmul.mubr.bf16.gmra.mrb[0].mxu0 %v922
        %v1061 = vpop.f32.mrb[0].mxu0
        %v1062 = vadd.f32 %v743, %v1061
        %v1063 = vpop.f32.mrb[0].mxu0
        %v1064 = vpop.f32.mrb[0].mxu0
        %v1065 = vadd.f32 %v746, %v1064
        %v1066 = vpop.f32.mrb[0].mxu0
        %1067 = vmatprep.mubr.bf16.mxu0 0
        %1068 = vmatmul.mubr.bf16.gmra.mrb[0].mxu0 %v925
        %v1069 = vpop.f32.mrb[0].mxu0
        %v1070 = vadd.f32 %v751, %v1069
        %v1071 = vpop.f32.mrb[0].mxu0
        %v1072 = vpop.f32.mrb[0].mxu0
        %v1073 = vadd.f32 %v754, %v1072
        %v1074 = vpop.f32.mrb[0].mxu0
        %1075 = vmatprep.mubr.bf16.mxu0 0
        %1076 = vmatmul.mubr.bf16.gmra.mrb[0].mxu0 %v928
        %v1077 = vpop.f32.mrb[0].mxu0
        %v1078 = vadd.f32 %v759, %v1077
        %v1079 = vpop.f32.mrb[0].mxu0
        %v1080 = vpop.f32.mrb[0].mxu0
        %v1081 = vadd.f32 %v762, %v1080
        %v1082 = vpop.f32.mrb[0].mxu0
        %1083 = vmatprep.mubr.bf16.mxu0 0
        %1084 = vmatmul.mubr.bf16.gmra.mrb[0].mxu0 %v931
        %v1085 = vpop.f32.mrb[0].mxu0
        %v1086 = vadd.f32 %v767, %v1085
        %v1087 = vpop.f32.mrb[0].mxu0
        %v1088 = vpop.f32.mrb[0].mxu0
        %v1089 = vadd.f32 %v770, %v1088
        %v1090 = vpop.f32.mrb[0].mxu0
        %1091 = vmatprep.mubr.bf16.mxu0 0
        %1092 = vmatmul.mubr.bf16.gmra.mrb[0].mxu0 %v934
        %v1093 = vpop.f32.mrb[0].mxu0
        %v1094 = vadd.f32 %v775, %v1093
        %v1095 = vpop.f32.mrb[0].mxu0
        %v1096 = vpop.f32.mrb[0].mxu0
        %v1097 = vadd.f32 %v778, %v1096
        %v1098 = vpop.f32.mrb[0].mxu0
        %1099 = vdwg.mxu0
        %v1100 = vld [vmem:[#allocation10] sm:$0x1]
        %v1102 = vlaneseq
        %v1103 = vshrl.u32 %v1102, 7
        %v1104 = vsub.s32 0, %v1103
        %v1105 = vrot.slane %v1100, %v1104
        %v1107 = vadd.f32 %v974, %v1105
        %v1108 = vadd.f32 %v977, %v1105
        %v1109 = vadd.f32 %v982, %v1105
        %v1110 = vadd.f32 %v985, %v1105
        %v1111 = vadd.f32 %v990, %v1105
        %v1112 = vadd.f32 %v993, %v1105
        %v1113 = vadd.f32 %v998, %v1105
        %v1114 = vadd.f32 %v1001, %v1105
        %v1115 = vadd.f32 %v1006, %v1105
        %v1116 = vadd.f32 %v1009, %v1105
        %v1117 = vadd.f32 %v1014, %v1105
        %v1118 = vadd.f32 %v1017, %v1105
        %v1119 = vadd.f32 %v1022, %v1105
        %v1120 = vadd.f32 %v1025, %v1105
        %v1121 = vadd.f32 %v1030, %v1105
        %v1122 = vadd.f32 %v1033, %v1105
        %v1123 = vadd.f32 %v1038, %v1105
        %v1124 = vadd.f32 %v1041, %v1105
        %v1125 = vadd.f32 %v1046, %v1105
        %v1126 = vadd.f32 %v1049, %v1105
        %v1127 = vadd.f32 %v1054, %v1105
        %v1128 = vadd.f32 %v1057, %v1105
        %v1129 = vadd.f32 %v1062, %v1105
        %v1130 = vadd.f32 %v1065, %v1105
        %v1131 = vadd.f32 %v1070, %v1105
        %v1132 = vadd.f32 %v1073, %v1105
        %v1133 = vadd.f32 %v1078, %v1105
        %v1134 = vadd.f32 %v1081, %v1105
        %v1135 = vadd.f32 %v1086, %v1105
        %v1136 = vadd.f32 %v1089, %v1105
        %v1137 = vadd.f32 %v1094, %v1105
        %v1138 = vadd.f32 %v1097, %v1105
        %1139 = vst [vmem:[%s369] sm:$0xff] %v1107
        %1140 = vst [vmem:[%s369 + $0x8] sm:$0xff] %v1108
        %1141 = vst [vmem:[%s369 + $0x10] sm:$0xff] %v1109
        %1142 = vst [vmem:[%s369 + $0x18] sm:$0xff] %v1110
        %1143 = vst [vmem:[%s369 + $0x20] sm:$0xff] %v1111
        %1144 = vst [vmem:[%s369 + $0x28] sm:$0xff] %v1112
        %1145 = vst [vmem:[%s369 + $0x30] sm:$0xff] %v1113
        %1146 = vst [vmem:[%s369 + $0x38] sm:$0xff] %v1114
        %1147 = vst [vmem:[%s369 + $0x40] sm:$0xff] %v1115
        %1148 = vst [vmem:[%s369 + $0x48] sm:$0xff] %v1116
        %1149 = vst [vmem:[%s369 + $0x50] sm:$0xff] %v1117
        %1150 = vst [vmem:[%s369 + $0x58] sm:$0xff] %v1118
        %1151 = vst [vmem:[%s369 + $0x60] sm:$0xff] %v1119
        %1152 = vst [vmem:[%s369 + $0x68] sm:$0xff] %v1120
        %1153 = vst [vmem:[%s369 + $0x70] sm:$0xff] %v1121
        %1154 = vst [vmem:[%s369 + $0x78] sm:$0xff] %v1122
        %1155 = vst [vmem:[%s369 + $0x80] sm:$0xff] %v1123
        %1156 = vst [vmem:[%s369 + $0x88] sm:$0xff] %v1124
        %1157 = vst [vmem:[%s369 + $0x90] sm:$0xff] %v1125
        %1158 = vst [vmem:[%s369 + $0x98] sm:$0xff] %v1126
        %1159 = vst [vmem:[%s369 + $0xa0] sm:$0xff] %v1127
        %1160 = vst [vmem:[%s369 + $0xa8] sm:$0xff] %v1128
        %1161 = vst [vmem:[%s369 + $0xb0] sm:$0xff] %v1129
        %1162 = vst [vmem:[%s369 + $0xb8] sm:$0xff] %v1130
        %1163 = vst [vmem:[%s369 + $0xc0] sm:$0xff] %v1131
        %1164 = vst [vmem:[%s369 + $0xc8] sm:$0xff] %v1132
        %1165 = vst [vmem:[%s369 + $0xd0] sm:$0xff] %v1133
        %1166 = vst [vmem:[%s369 + $0xd8] sm:$0xff] %v1134
        %1167 = vst [vmem:[%s369 + $0xe0] sm:$0xff] %v1135
        %1168 = vst [vmem:[%s369 + $0xe8] sm:$0xff] %v1136
        %1169 = vst [vmem:[%s369 + $0xf0] sm:$0xff] %v1137
        %1170 = vst [vmem:[%s369 + $0xf8] sm:$0xff] %v1138
        %p1171 = scmp.eq.s32.totalorder %s30, 0
        // Predicated region
        $region61: #{decoder_block_forward.10} parent=39 // pred_check
          %p1172 = pneg %p1171
        $region62: #{decoder_block_forward.10} parent=39 // pred_check_branch
          %1174 = sbr.rel (%p1172) target = $region64
        $region63: #{decoder_block_forward.10} parent=39 // pred_region
          %1175 = vst [vmem:[#allocation12] sm:$0x1] 0.0
          %1176 = vst [vmem:[#allocation14] sm:$0x1] 0.0
        $region64: #{decoder_block_forward.10} parent=39 // pred_fallthru
          _
        %v1177 = vld [vmem:[#allocation12] sm:$0x1]
        %v1178 = vadd.f32 %v1107, %v1108
        %v1179 = vadd.f32 %v1178, %v1109
        %v1180 = vadd.f32 %v1179, %v1110
        %v1181 = vadd.f32 %v1180, %v1111
        %v1182 = vadd.f32 %v1181, %v1112
        %v1183 = vadd.f32 %v1182, %v1113
        %v1184 = vadd.f32 %v1183, %v1114
        %v1185 = vadd.f32 %v1184, %v1115
        %v1186 = vadd.f32 %v1185, %v1116
        %v1187 = vadd.f32 %v1186, %v1117
        %v1188 = vadd.f32 %v1187, %v1118
        %v1189 = vadd.f32 %v1188, %v1119
        %v1190 = vadd.f32 %v1189, %v1120
        %v1191 = vadd.f32 %v1190, %v1121
        %v1192 = vadd.f32 %v1191, %v1122
        %v1193 = vadd.f32 %v1192, %v1123
        %v1194 = vadd.f32 %v1193, %v1124
        %v1195 = vadd.f32 %v1194, %v1125
        %v1196 = vadd.f32 %v1195, %v1126
        %v1197 = vadd.f32 %v1196, %v1127
        %v1198 = vadd.f32 %v1197, %v1128
        %v1199 = vadd.f32 %v1198, %v1129
        %v1200 = vadd.f32 %v1199, %v1130
        %v1201 = vadd.f32 %v1200, %v1131
        %v1202 = vadd.f32 %v1201, %v1132
        %v1203 = vadd.f32 %v1202, %v1133
        %v1204 = vadd.f32 %v1203, %v1134
        %v1205 = vadd.f32 %v1204, %v1135
        %v1206 = vadd.f32 %v1205, %v1136
        %v1207 = vadd.f32 %v1206, %v1137
        %v1208 = vadd.f32 %v1207, %v1138
        %v1209 = vrot.slane %v1208, 4
        %v1210 = vadd.f32 %v1208, %v1209
        %v1211 = vrot.slane %v1210, 2
        %v1212 = vadd.f32 %v1210, %v1211
        %v1213 = vrot.slane %v1212, 1
        %v1214 = vadd.f32 %v1212, %v1213
        %v1215 = vadd.f32 %v1177, %v1214
        %1216 = vst [vmem:[#allocation12] sm:$0x1] %v1215
        %v1217 = vld [vmem:[#allocation14] sm:$0x1]
        %v1218 = vmul.f32 %v1107, %v1107
        %v1219 = vmul.f32 %v1108, %v1108
        %v1220 = vmul.f32 %v1109, %v1109
        %v1221 = vmul.f32 %v1110, %v1110
        %v1222 = vmul.f32 %v1111, %v1111
        %v1223 = vmul.f32 %v1112, %v1112
        %v1224 = vmul.f32 %v1113, %v1113
        %v1225 = vmul.f32 %v1114, %v1114
        %v1226 = vmul.f32 %v1115, %v1115
        %v1227 = vmul.f32 %v1116, %v1116
        %v1228 = vmul.f32 %v1117, %v1117
        %v1229 = vmul.f32 %v1118, %v1118
        %v1230 = vmul.f32 %v1119, %v1119
        %v1231 = vmul.f32 %v1120, %v1120
        %v1232 = vmul.f32 %v1121, %v1121
        %v1233 = vmul.f32 %v1122, %v1122
        %v1234 = vmul.f32 %v1123, %v1123
        %v1235 = vmul.f32 %v1124, %v1124
        %v1236 = vmul.f32 %v1125, %v1125
        %v1237 = vmul.f32 %v1126, %v1126
        %v1238 = vmul.f32 %v1127, %v1127
        %v1239 = vmul.f32 %v1128, %v1128
        %v1240 = vmul.f32 %v1129, %v1129
        %v1241 = vmul.f32 %v1130, %v1130
        %v1242 = vmul.f32 %v1131, %v1131
        %v1243 = vmul.f32 %v1132, %v1132
        %v1244 = vmul.f32 %v1133, %v1133
        %v1245 = vmul.f32 %v1134, %v1134
        %v1246 = vmul.f32 %v1135, %v1135
        %v1247 = vmul.f32 %v1136, %v1136
        %v1248 = vmul.f32 %v1137, %v1137
        %v1249 = vmul.f32 %v1138, %v1138
        %v1250 = vadd.f32 %v1218, %v1219
        %v1251 = vadd.f32 %v1250, %v1220
        %v1252 = vadd.f32 %v1251, %v1221
        %v1253 = vadd.f32 %v1252, %v1222
        %v1254 = vadd.f32 %v1253, %v1223
        %v1255 = vadd.f32 %v1254, %v1224
        %v1256 = vadd.f32 %v1255, %v1225
        %v1257 = vadd.f32 %v1256, %v1226
        %v1258 = vadd.f32 %v1257, %v1227
        %v1259 = vadd.f32 %v1258, %v1228
        %v1260 = vadd.f32 %v1259, %v1229
        %v1261 = vadd.f32 %v1260, %v1230
        %v1262 = vadd.f32 %v1261, %v1231
        %v1263 = vadd.f32 %v1262, %v1232
        %v1264 = vadd.f32 %v1263, %v1233
        %v1265 = vadd.f32 %v1264, %v1234
        %v1266 = vadd.f32 %v1265, %v1235
        %v1267 = vadd.f32 %v1266, %v1236
        %v1268 = vadd.f32 %v1267, %v1237
        %v1269 = vadd.f32 %v1268, %v1238
        %v1270 = vadd.f32 %v1269, %v1239
        %v1271 = vadd.f32 %v1270, %v1240
        %v1272 = vadd.f32 %v1271, %v1241
        %v1273 = vadd.f32 %v1272, %v1242
        %v1274 = vadd.f32 %v1273, %v1243
        %v1275 = vadd.f32 %v1274, %v1244
        %v1276 = vadd.f32 %v1275, %v1245
        %v1277 = vadd.f32 %v1276, %v1246
        %v1278 = vadd.f32 %v1277, %v1247
        %v1279 = vadd.f32 %v1278, %v1248
        %v1280 = vadd.f32 %v1279, %v1249
        %v1281 = vrot.slane %v1280, 4
        %v1282 = vadd.f32 %v1280, %v1281
        %v1283 = vrot.slane %v1282, 2
        %v1284 = vadd.f32 %v1282, %v1283
        %v1285 = vrot.slane %v1284, 1
        %v1286 = vadd.f32 %v1284, %v1285
        %v1287 = vadd.f32 %v1217, %v1286
        %1288 = vst [vmem:[#allocation14] sm:$0x1] %v1287
        %s1289 = sand.u32 %s153, 1
        %s1290 = scalar_lea.sflag [#allocation4], %s1289
        %s1291 = sand.u32 %s153, 1
        %s1292 = smul.addr %s1291, 256
        %s1293 = scalar_lea.vmem [#allocation11], %s1292
        // Predicated region
        $region65: #{decoder_block_forward.10} parent=39 // pred_check
          %p1294 = pneg %p163
        $region66: #{decoder_block_forward.10} parent=39 // pred_check_branch
          %1296 = sbr.rel (%p1294) target = $region68
        $region67: #{decoder_block_forward.10} parent=39 // pred_region
          %s1297 = smul.u32 32, %s30
          %s1299 = ssub.s32 4096, 4096
          %1300 = vsyncadd %s1290, %s1299
          %s1301 = smul.addr %s1297, 128
          %s1302 = scalar_lea.hbm %s5, %s1301
          %s1303 = sshll.u32 %s1293, 4
          %s1304 = int_to_ptr.vmem [resolvable:$true] %s1303
          %1309 = dma.vmem_to_hbm [thread:$0]  %s1304, 4096, %s1302, %s1290, 128, 128, 8
        $region68: #{decoder_block_forward.10} parent=39 // pred_fallthru
          _
        // Predicated region
        $region69: #{decoder_block_forward.10} parent=39 // pred_check
          %p1310 = pneg %p184
        $region70: #{decoder_block_forward.10} parent=39 // pred_check_branch
          %1312 = sbr.rel (%p1310) target = $region72
        $region71: #{decoder_block_forward.10} parent=39 // pred_region
          %s1314 = ssub.s32 16, 16
          %1315 = vsyncadd [#allocation13], %s1314
          %s1317 = sshll.u32 [#allocation12], 4
          %s1318 = int_to_ptr.vmem [resolvable:$true] %s1317
          %1320 = dma.vmem_to_hbm [thread:$0]  %s1318, 16, %s6, [#allocation13]
        $region72: #{decoder_block_forward.10} parent=39 // pred_fallthru
          _
        // Predicated region
        $region73: #{decoder_block_forward.10} parent=39 // pred_check
          %p1321 = pneg %p205
        $region74: #{decoder_block_forward.10} parent=39 // pred_check_branch
          %1323 = sbr.rel (%p1321) target = $region76
        $region75: #{decoder_block_forward.10} parent=39 // pred_region
          %s1325 = ssub.s32 16, 16
          %1326 = vsyncadd [#allocation13], %s1325
          %s1328 = sshll.u32 [#allocation14], 4
          %s1329 = int_to_ptr.vmem [resolvable:$true] %s1328
          %1331 = dma.vmem_to_hbm [thread:$0]  %s1329, 16, %s7, [#allocation13]
        $region76: #{decoder_block_forward.10} parent=39 // pred_fallthru
          _
        // Predicated region
        $region77: #{decoder_block_forward.10} parent=39 // pred_check
          %p1332 = pneg %p184
        $region78: #{decoder_block_forward.10} parent=39 // pred_check_branch
          %1334 = sbr.rel (%p1332) target = $region80
        $region79: #{decoder_block_forward.10} parent=39 // pred_region
          %1335 = dma.done [#allocation13], 16
        $region80: #{decoder_block_forward.10} parent=39 // pred_fallthru
          _
        // Predicated region
        $region81: #{decoder_block_forward.10} parent=39 // pred_check
          %p1336 = pneg %p205
        $region82: #{decoder_block_forward.10} parent=39 // pred_check_branch
          %1338 = sbr.rel (%p1336) target = $region84
        $region83: #{decoder_block_forward.10} parent=39 // pred_region
          %1339 = dma.done [#allocation13], 16
        $region84: #{decoder_block_forward.10} parent=39 // pred_fallthru
          _
      $region40: #{decoder_block_forward.10} parent=5 // pred_fallthru
        _
      %p1340 = scmp.le.s32.totalorder 2, %s25
      // Predicated region
      $region85: #{decoder_block_forward.10} parent=5 // pred_check
        %p1341 = pneg %p1340
      $region86: #{decoder_block_forward.10} parent=5 // pred_check_branch
        %1343 = sbr.rel (%p1341) target = $region88
      $region87: #{decoder_block_forward.10} parent=5 // pred_region
        %s1344 = ssub.s32 %s25, 2
        // Predicated region
        $region89: #{decoder_block_forward.10} parent=87 // pred_check
          %p1345 = pneg %p169
        $region90: #{decoder_block_forward.10} parent=87 // pred_check_branch
          %1347 = sbr.rel (%p1345) target = $region92
        $region91: #{decoder_block_forward.10} parent=87 // pred_region
          %s1348 = sand.u32 %s154, 1
          %s1349 = scalar_lea.sflag [#allocation4], %s1348
          %s1350 = sand.u32 %s154, 1
          %s1351 = smul.addr %s1350, 256
          %s1352 = scalar_lea.vmem [#allocation11], %s1351
          %1353 = dma.done %s1349, 4096
        $region92: #{decoder_block_forward.10} parent=87 // pred_fallthru
          _
      $region88: #{decoder_block_forward.10} parent=5 // pred_fallthru
        _
    $region6: #{decoder_block_forward.10} parent=1 // loop_footer
      %s29 = sadd.s32 1, %s25
    $region7: #{decoder_block_forward.10} parent=1 // loop_footer_branch
      %24 = sbr.rel target = $region3
    $region8: #{decoder_block_forward.10} parent=1 // loop_exit
      _
    %1354 = vsyncpa [#allocation3], 1
    %s1355 = scalar_lea.sflag [#allocation3], 1
    %1356 = vsyncpa %s1355, 1
    %1357 = vsyncpa [#allocation6], 1
    %s1358 = scalar_lea.sflag [#allocation6], 1
    %1359 = vsyncpa %s1358, 1
    %1360 = vsyncpa [#allocation9], 1
    %1361 = vsyncpa [#allocation4], 1
    %s1362 = scalar_lea.sflag [#allocation4], 1
    %1363 = vsyncpa %s1362, 1
    %1364 = vsyncpa [#allocation13], 1

// kernel: decoder_block_forward.12
$region0: #{decoder_block_forward.12}
  #allocation0 [shape = 'u32[]', space=smem, size = 0x4, offset = 0x4, fixed_abs, tag = 'smem constant byte address 0x4 - core index']
  #allocation1 [shape = 'u32[144,128]{1,0:T(1,128)}', space=vmem, size = 0x12000, scoped, tag = 'internal scratch']
  %s0 = inlined_call_operand.hbm [shape: bf16[512,72], index: 0, kind: input, shape index: {}]
  %s1 = inlined_call_operand.hbm [shape: bf16[72,128], index: 1, kind: input, shape index: {}]
  %s2 = inlined_call_operand.hbm [shape: f32[1,128], index: 2, kind: input, shape index: {}]
  %s3 = inlined_call_operand.hbm [shape: f32[512,128], index: 3, kind: output, shape index: {0}]
  %s4 = inlined_call_operand.hbm [shape: f32[1,128], index: 4, kind: output, shape index: {1}]
  %s5 = inlined_call_operand.hbm [shape: f32[1,128], index: 5, kind: output, shape index: {2}]
  %6 = xla_tuple %s3, %s4, %s5
  %s7 = sld [smem:[#allocation0]]
  $region77: #{decoder_block_forward.12} parent=0
    _
  %s9 = ssub.s32 1, %s7
  %s10 = scalar_select 0, %s9, %s7
  $region1: #{decoder_block_forward.12} parent=0
    #allocation2 [shape = 'u8[131072]{0}', space=vmem, size = 0x20000, scoped, tag = 'input window, operand 0']
    #allocation3 [shape = 's32[2]{0}', space=sflag, size = 0x8, scoped, tag = 'scoped memory for decoder_block_forward.12']
    #allocation4 [shape = 's32[2]{0}', space=sflag, size = 0x8, scoped, tag = 'scoped memory for decoder_block_forward.12']
    #allocation5 [shape = 'u8[18432]{0}', space=vmem, size = 0x4800, scoped, tag = 'input window, operand 1, single buffered']
    #allocation6 [shape = 's32[1]{0}', space=sflag, size = 0x4, scoped, tag = 'scoped memory for decoder_block_forward.12']
    #allocation7 [shape = 'u8[512]{0}', space=vmem, size = 0x400, scoped, tag = 'input window, operand 2, single buffered']
    #allocation8 [shape = 'u8[262144]{0}', space=vmem, size = 0x40000, scoped, tag = 'output window, operand 0']
    #allocation9 [shape = 'u8[512]{0}', space=vmem, size = 0x400, scoped, tag = 'output window, operand 1, single buffered']
    #allocation10 [shape = 's32[1]{0}', space=sflag, size = 0x4, scoped, tag = 'scoped memory for decoder_block_forward.12']
    #allocation11 [shape = 'u8[512]{0}', space=vmem, size = 0x400, scoped, tag = 'output window, operand 2, single buffered']
    %11 = vsyncpa [#allocation3], 0
    %s12 = scalar_lea.sflag [#allocation3], 1
    %13 = vsyncpa %s12, 0
    %14 = vsyncpa [#allocation6], 0
    %15 = vsyncpa [#allocation4], 0
    %s16 = scalar_lea.sflag [#allocation4], 1
    %17 = vsyncpa %s16, 0
    %18 = vsyncpa [#allocation10], 0
    loop: start=0, step=1, limit=4
    $region2: #{decoder_block_forward.12} parent=1 // loop_pre_header
      _
    $region3: #{decoder_block_forward.12} parent=1 // loop_header
      %s20 = sphi 0, %s24
      %p21 = scmp.ge.s32.totalorder %s20, 4
      %s30 = sphi 0, %s32
      %s33 = sphi 0, %s30
      %s34 = sphi 0, %s33
      %s50 = sphi 0, %s34
      %s54 = sphi 0, %s54
      %s56 = sphi 0, %s54
      %s57 = sphi 0, %s56
      %s71 = sphi 0, %s57
      %s75 = sphi 0, %s75
      %s77 = sphi 0, %s75
      %s78 = sphi 0, %s77
      %s92 = sphi 0, %s78
      %s98 = sphi 0, %s100
      %s101 = sphi 0, %s98
      %s102 = sphi 0, %s101
      %s118 = sphi 0, %s102
      %s122 = sphi 0, %s122
      %s124 = sphi 0, %s122
      %s125 = sphi 0, %s124
      %s139 = sphi 0, %s125
      %s143 = sphi 0, %s143
      %s145 = sphi 0, %s143
      %s146 = sphi 0, %s145
      %s160 = sphi 0, %s146
    $region4: #{decoder_block_forward.12} parent=1 // loop_header_branch
      %23 = sbr.rel (%p21) target = $region8
    $region5: #{decoder_block_forward.12} parent=1 // loop_body
      %s25 = ssub.s32 %s20, 1
      %s26 = ssub.s32 %s20, 2
      %s27 = sadd.s32 %s20, 1
      %s28 = ssub.s32 %s20, %s27
      %p29 = scmp.eq.s32.totalorder %s28, 0
      %s31 = sadd.s32 %s30, 1
      %s32 = scalar_select %p29, %s30, %s31
      %p35 = pneg %p29
      %p36 = scmp.eq.s32.totalorder %s20, 1
      %p37 = por %p35, %p36
      %p38 = scmp.ne.s32.totalorder %s30, %s33
      %p39 = scmp.eq.s32.totalorder %s20, 0
      %p40 = por %p38, %p39
      %p41 = scmp.ne.s32.totalorder %s30, %s33
      %p42 = scmp.eq.s32.totalorder %s25, 1
      %p43 = por %p41, %p42
      %p44 = scmp.ne.s32.totalorder %s33, %s34
      %p45 = scmp.eq.s32.totalorder %s25, 0
      %p46 = por %p44, %p45
      %p47 = scmp.ne.s32.totalorder %s33, %s34
      %p48 = scmp.eq.s32.totalorder %s26, 1
      %p49 = por %p47, %p48
      %p51 = scmp.ne.s32.totalorder %s34, %s50
      %p52 = scmp.eq.s32.totalorder %s26, 0
      %p53 = por %p51, %p52
      %s55 = sadd.s32 %s54, 1
      %p58 = scmp.eq.s32.totalorder %s20, 1
      %p59 = scmp.ne.s32.totalorder %s54, %s56
      %p60 = scmp.eq.s32.totalorder %s20, 0
      %p61 = por %p59, %p60
      %p62 = scmp.ne.s32.totalorder %s54, %s56
      %p63 = scmp.eq.s32.totalorder %s25, 1
      %p64 = por %p62, %p63
      %p65 = scmp.ne.s32.totalorder %s56, %s57
      %p66 = scmp.eq.s32.totalorder %s25, 0
      %p67 = por %p65, %p66
      %p68 = scmp.ne.s32.totalorder %s56, %s57
      %p69 = scmp.eq.s32.totalorder %s26, 1
      %p70 = por %p68, %p69
      %p72 = scmp.ne.s32.totalorder %s57, %s71
      %p73 = scmp.eq.s32.totalorder %s26, 0
      %p74 = por %p72, %p73
      %s76 = sadd.s32 %s75, 1
      %p79 = scmp.eq.s32.totalorder %s20, 1
      %p80 = scmp.ne.s32.totalorder %s75, %s77
      %p81 = scmp.eq.s32.totalorder %s20, 0
      %p82 = por %p80, %p81
      %p83 = scmp.ne.s32.totalorder %s75, %s77
      %p84 = scmp.eq.s32.totalorder %s25, 1
      %p85 = por %p83, %p84
      %p86 = scmp.ne.s32.totalorder %s77, %s78
      %p87 = scmp.eq.s32.totalorder %s25, 0
      %p88 = por %p86, %p87
      %p89 = scmp.ne.s32.totalorder %s77, %s78
      %p90 = scmp.eq.s32.totalorder %s26, 1
      %p91 = por %p89, %p90
      %p93 = scmp.ne.s32.totalorder %s78, %s92
      %p94 = scmp.eq.s32.totalorder %s26, 0
      %p95 = por %p93, %p94
      %s96 = ssub.s32 %s20, %s27
      %p97 = scmp.eq.s32.totalorder %s96, 0
      %s99 = sadd.s32 %s98, 1
      %s100 = scalar_select %p97, %s98, %s99
      %p103 = pneg %p97
      %p104 = scmp.eq.s32.totalorder %s20, 1
      %p105 = por %p103, %p104
      %p106 = scmp.ne.s32.totalorder %s98, %s101
      %p107 = scmp.eq.s32.totalorder %s20, 0
      %p108 = por %p106, %p107
      %p109 = scmp.ne.s32.totalorder %s98, %s101
      %p110 = scmp.eq.s32.totalorder %s25, 1
      %p111 = por %p109, %p110
      %p112 = scmp.ne.s32.totalorder %s101, %s102
      %p113 = scmp.eq.s32.totalorder %s25, 0
      %p114 = por %p112, %p113
      %p115 = scmp.ne.s32.totalorder %s101, %s102
      %p116 = scmp.eq.s32.totalorder %s26, 1
      %p117 = por %p115, %p116
      %p119 = scmp.ne.s32.totalorder %s102, %s118
      %p120 = scmp.eq.s32.totalorder %s26, 0
      %p121 = por %p119, %p120
      %s123 = sadd.s32 %s122, 1
      %p126 = scmp.eq.s32.totalorder %s20, 1
      %p127 = scmp.ne.s32.totalorder %s122, %s124
      %p128 = scmp.eq.s32.totalorder %s20, 0
      %p129 = por %p127, %p128
      %p130 = scmp.ne.s32.totalorder %s122, %s124
      %p131 = scmp.eq.s32.totalorder %s25, 1
      %p132 = por %p130, %p131
      %p133 = scmp.ne.s32.totalorder %s124, %s125
      %p134 = scmp.eq.s32.totalorder %s25, 0
      %p135 = por %p133, %p134
      %p136 = scmp.ne.s32.totalorder %s124, %s125
      %p137 = scmp.eq.s32.totalorder %s26, 1
      %p138 = por %p136, %p137
      %p140 = scmp.ne.s32.totalorder %s125, %s139
      %p141 = scmp.eq.s32.totalorder %s26, 0
      %p142 = por %p140, %p141
      %s144 = sadd.s32 %s143, 1
      %p147 = scmp.eq.s32.totalorder %s20, 1
      %p148 = scmp.ne.s32.totalorder %s143, %s145
      %p149 = scmp.eq.s32.totalorder %s20, 0
      %p150 = por %p148, %p149
      %p151 = scmp.ne.s32.totalorder %s143, %s145
      %p152 = scmp.eq.s32.totalorder %s25, 1
      %p153 = por %p151, %p152
      %p154 = scmp.ne.s32.totalorder %s145, %s146
      %p155 = scmp.eq.s32.totalorder %s25, 0
      %p156 = por %p154, %p155
      %p157 = scmp.ne.s32.totalorder %s145, %s146
      %p158 = scmp.eq.s32.totalorder %s26, 1
      %p159 = por %p157, %p158
      %p161 = scmp.ne.s32.totalorder %s146, %s160
      %p162 = scmp.eq.s32.totalorder %s26, 0
      %p163 = por %p161, %p162
      %p164 = scmp.le.s32.totalorder 1, %s20
      %p165 = scmp.lt.s32.totalorder %s20, 3
      %p166 = pnand %p164, %p165
      %p167 = pneg %p166
      // Predicated region
      $region9: #{decoder_block_forward.12} parent=5 // pred_check
        _
      $region10: #{decoder_block_forward.12} parent=5 // pred_check_branch
        %169 = sbr.rel (%p166) target = $region12
      $region11: #{decoder_block_forward.12} parent=5 // pred_region
        %s170 = ssub.s32 %s20, 1
        // Predicated region
        $region13: #{decoder_block_forward.12} parent=11 // pred_check
          %p171 = pneg %p67
        $region14: #{decoder_block_forward.12} parent=11 // pred_check_branch
          %173 = sbr.rel (%p171) target = $region16
        $region15: #{decoder_block_forward.12} parent=11 // pred_region
          %s175 = ssub.s32 576, 576
          %176 = vsyncadd [#allocation6], %s175
          %s177 = sshll.u32 [#allocation5], 4
          %s178 = int_to_ptr.vmem [resolvable:$true] %s177
          %183 = dma.hbm_to_vmem [thread:$0]  %s1, 576, %s178, [#allocation6], 64, 64, 4
        $region16: #{decoder_block_forward.12} parent=11 // pred_fallthru
          _
        // Predicated region
        $region17: #{decoder_block_forward.12} parent=11 // pred_check
          %p184 = pneg %p88
        $region18: #{decoder_block_forward.12} parent=11 // pred_check_branch
          %186 = sbr.rel (%p184) target = $region20
        $region19: #{decoder_block_forward.12} parent=11 // pred_region
          %s188 = ssub.s32 16, 16
          %189 = vsyncadd [#allocation6], %s188
          %s191 = sshll.u32 [#allocation7], 4
          %s192 = int_to_ptr.vmem [resolvable:$true] %s191
          %194 = dma.hbm_to_vmem [thread:$0]  %s2, 16, %s192, [#allocation6]
        $region20: #{decoder_block_forward.12} parent=11 // pred_fallthru
          _
      $region12: #{decoder_block_forward.12} parent=5 // pred_fallthru
        _
      %p195 = scmp.lt.s32.totalorder %s20, 2
      // Predicated region
      $region21: #{decoder_block_forward.12} parent=5 // pred_check
        %p196 = pneg %p195
      $region22: #{decoder_block_forward.12} parent=5 // pred_check_branch
        %198 = sbr.rel (%p196) target = $region24
      $region23: #{decoder_block_forward.12} parent=5 // pred_region
        // Predicated region
        $region25: #{decoder_block_forward.12} parent=23 // pred_check
          %p199 = pneg %p40
        $region26: #{decoder_block_forward.12} parent=23 // pred_check_branch
          %201 = sbr.rel (%p199) target = $region28
        $region27: #{decoder_block_forward.12} parent=23 // pred_region
          %s202 = sand.u32 %s30, 1
          %s203 = scalar_lea.sflag [#allocation3], %s202
          %s204 = sand.u32 %s30, 1
          %s205 = smul.addr %s204, 128
          %s206 = scalar_lea.vmem [#allocation2], %s205
          %s207 = smul.u32 32, %s20
          %s209 = ssub.s32 2048, 2048
          %210 = vsyncadd %s203, %s209
          %s211 = smul.addr %s207, 64
          %s212 = scalar_lea.hbm %s0, %s211
          %s213 = sshll.u32 %s206, 4
          %s214 = int_to_ptr.vmem [resolvable:$true] %s213
          %219 = dma.hbm_to_vmem [thread:$0]  %s212, 2048, %s214, %s203, 64, 64, 4
        $region28: #{decoder_block_forward.12} parent=23 // pred_fallthru
          _
      $region24: #{decoder_block_forward.12} parent=5 // pred_fallthru
        _
      %p220 = scmp.le.s32.totalorder 1, %s20
      %p221 = scmp.lt.s32.totalorder %s20, 3
      %p222 = pnand %p220, %p221
      %p223 = pneg %p222
      // Predicated region
      $region29: #{decoder_block_forward.12} parent=5 // pred_check
        _
      $region30: #{decoder_block_forward.12} parent=5 // pred_check_branch
        %225 = sbr.rel (%p222) target = $region32
      $region31: #{decoder_block_forward.12} parent=5 // pred_region
        %s226 = ssub.s32 %s20, 1
        %s227 = sand.u32 %s33, 1
        %s228 = scalar_lea.sflag [#allocation3], %s227
        %s229 = sand.u32 %s33, 1
        %s230 = smul.addr %s229, 128
        %s231 = scalar_lea.vmem [#allocation2], %s230
        // Predicated region
        $region33: #{decoder_block_forward.12} parent=31 // pred_check
          %p232 = pneg %p46
        $region34: #{decoder_block_forward.12} parent=31 // pred_check_branch
          %234 = sbr.rel (%p232) target = $region36
        $region35: #{decoder_block_forward.12} parent=31 // pred_region
          %235 = dma.done %s228, 2048
        $region36: #{decoder_block_forward.12} parent=31 // pred_fallthru
          _
        // Predicated region
        $region37: #{decoder_block_forward.12} parent=31 // pred_check
          %p236 = pneg %p67
        $region38: #{decoder_block_forward.12} parent=31 // pred_check_branch
          %238 = sbr.rel (%p236) target = $region40
        $region39: #{decoder_block_forward.12} parent=31 // pred_region
          %239 = dma.done [#allocation6], 576
        $region40: #{decoder_block_forward.12} parent=31 // pred_fallthru
          _
        // Predicated region
        $region41: #{decoder_block_forward.12} parent=31 // pred_check
          %p240 = pneg %p88
        $region42: #{decoder_block_forward.12} parent=31 // pred_check_branch
          %242 = sbr.rel (%p240) target = $region44
        $region43: #{decoder_block_forward.12} parent=31 // pred_region
          %243 = dma.done [#allocation6], 16
        $region44: #{decoder_block_forward.12} parent=31 // pred_fallthru
          _
        %s244 = sand.u32 %s33, 1
        %s245 = scalar_lea.sflag [#allocation3], %s244
        %s246 = sand.u32 %s33, 1
        %s247 = smul.addr %s246, 128
        %s248 = scalar_lea.vmem [#allocation2], %s247
        %p249 = pneg %p46
        %p250 = pneg %p43
        %p251 = pneg %p67
        %p252 = pneg %p64
        %p253 = pneg %p88
        %p254 = pneg %p85
        %p255 = pneg %p114
        %p256 = pneg %p111
        %s257 = sand.u32 %s101, 1
        %s258 = scalar_lea.sflag [#allocation4], %s257
        %s259 = sand.u32 %s101, 1
        %s260 = smul.addr %s259, 256
        %s261 = scalar_lea.vmem [#allocation8], %s260
        %p262 = pneg %p135
        %p263 = pneg %p132
        %p264 = pneg %p156
        %p265 = pneg %p153
        %s266 = smul.u32 32, %s25
        %s267 = smul.u32 32, %s25
        %v269 = vld [vmem:[%s231] sm:$0xf]
        %v270 = vld [vmem:[%s231 + $0x4] sm:$0xf]
        %v271 = vld [vmem:[%s231 + $0x8] sm:$0xf]
        %v272 = vld [vmem:[%s231 + $0xc] sm:$0xf]
        %v273 = vld [vmem:[%s231 + $0x10] sm:$0xf]
        %v274 = vld [vmem:[%s231 + $0x14] sm:$0xf]
        %v275 = vld [vmem:[%s231 + $0x18] sm:$0xf]
        %v276 = vld [vmem:[%s231 + $0x1c] sm:$0xf]
        %v277 = vld [vmem:[%s231 + $0x20] sm:$0xf]
        %v278 = vld [vmem:[%s231 + $0x24] sm:$0xf]
        %v279 = vld [vmem:[%s231 + $0x28] sm:$0xf]
        %v280 = vld [vmem:[%s231 + $0x2c] sm:$0xf]
        %v281 = vld [vmem:[%s231 + $0x30] sm:$0xf]
        %v282 = vld [vmem:[%s231 + $0x34] sm:$0xf]
        %v283 = vld [vmem:[%s231 + $0x38] sm:$0xf]
        %v284 = vld [vmem:[%s231 + $0x3c] sm:$0xf]
        %v285 = vld [vmem:[%s231 + $0x40] sm:$0xf]
        %v286 = vld [vmem:[%s231 + $0x44] sm:$0xf]
        %v287 = vld [vmem:[%s231 + $0x48] sm:$0xf]
        %v288 = vld [vmem:[%s231 + $0x4c] sm:$0xf]
        %v289 = vld [vmem:[%s231 + $0x50] sm:$0xf]
        %v290 = vld [vmem:[%s231 + $0x54] sm:$0xf]
        %v291 = vld [vmem:[%s231 + $0x58] sm:$0xf]
        %v292 = vld [vmem:[%s231 + $0x5c] sm:$0xf]
        %v293 = vld [vmem:[%s231 + $0x60] sm:$0xf]
        %v294 = vld [vmem:[%s231 + $0x64] sm:$0xf]
        %v295 = vld [vmem:[%s231 + $0x68] sm:$0xf]
        %v296 = vld [vmem:[%s231 + $0x6c] sm:$0xf]
        %v297 = vld [vmem:[%s231 + $0x70] sm:$0xf]
        %v298 = vld [vmem:[%s231 + $0x74] sm:$0xf]
        %v299 = vld [vmem:[%s231 + $0x78] sm:$0xf]
        %v300 = vld [vmem:[%s231 + $0x7c] sm:$0xf]
        %v301 = vld [vmem:[#allocation5] sm:$0xf]
        %v302 = vld [vmem:[#allocation5 + $0x4] sm:$0xf]
        %v303 = vld [vmem:[#allocation5 + $0x8] sm:$0xf]
        %v304 = vld [vmem:[#allocation5 + $0xc] sm:$0xf]
        %v305 = vld [vmem:[#allocation5 + $0x10] sm:$0xf]
        %v306 = vld [vmem:[#allocation5 + $0x14] sm:$0xf]
        %v307 = vld [vmem:[#allocation5 + $0x18] sm:$0xf]
        %v308 = vld [vmem:[#allocation5 + $0x1c] sm:$0xf]
        %v309 = vld [vmem:[#allocation5 + $0x20] sm:$0xf]
        %v310 = vld [vmem:[#allocation7] sm:$0x1]
        %v312 = vlaneseq
        %v313 = vshrl.u32 %v312, 7
        %v314 = vsub.s32 0, %v313
        %v315 = vrot.slane %v310, %v314
        %v349 = vunpack.c.l.b16 %v269
        %v350 = vunpack.c.l.b16 %v270
        %v351 = vunpack.c.l.b16 %v271
        %v352 = vunpack.c.l.b16 %v272
        %v353 = vunpack.c.l.b16 %v273
        %v354 = vunpack.c.l.b16 %v274
        %v355 = vunpack.c.l.b16 %v275
        %v356 = vunpack.c.l.b16 %v276
        %v357 = vunpack.c.l.b16 %v277
        %v358 = vunpack.c.l.b16 %v278
        %v359 = vunpack.c.l.b16 %v279
        %v360 = vunpack.c.l.b16 %v280
        %v361 = vunpack.c.l.b16 %v281
        %v362 = vunpack.c.l.b16 %v282
        %v363 = vunpack.c.l.b16 %v283
        %v364 = vunpack.c.l.b16 %v284
        %v365 = vunpack.c.l.b16 %v285
        %v366 = vunpack.c.l.b16 %v286
        %v367 = vunpack.c.l.b16 %v287
        %v368 = vunpack.c.l.b16 %v288
        %v369 = vunpack.c.l.b16 %v289
        %v370 = vunpack.c.l.b16 %v290
        %v371 = vunpack.c.l.b16 %v291
        %v372 = vunpack.c.l.b16 %v292
        %v373 = vunpack.c.l.b16 %v293
        %v374 = vunpack.c.l.b16 %v294
        %v375 = vunpack.c.l.b16 %v295
        %v376 = vunpack.c.l.b16 %v296
        %v377 = vunpack.c.l.b16 %v297
        %v378 = vunpack.c.l.b16 %v298
        %v379 = vunpack.c.l.b16 %v299
        %v380 = vunpack.c.l.b16 %v300
        %v381 = vpack.c.b16 %v350, %v349
        %v382 = vpack.c.b16 %v352, %v351
        %v383 = vpack.c.b16 %v354, %v353
        %v384 = vpack.c.b16 %v356, %v355
        %v385 = vpack.c.b16 %v358, %v357
        %v386 = vpack.c.b16 %v360, %v359
        %v387 = vpack.c.b16 %v362, %v361
        %v388 = vpack.c.b16 %v364, %v363
        %v389 = vpack.c.b16 %v366, %v365
        %v390 = vpack.c.b16 %v368, %v367
        %v391 = vpack.c.b16 %v370, %v369
        %v392 = vpack.c.b16 %v372, %v371
        %v393 = vpack.c.b16 %v374, %v373
        %v394 = vpack.c.b16 %v376, %v375
        %v395 = vpack.c.b16 %v378, %v377
        %v396 = vpack.c.b16 %v380, %v379
        %v406 = vunpack.c.l.b16 %v301
        %v407 = vunpack.c.l.b16 %v302
        %v408 = vunpack.c.l.b16 %v303
        %v409 = vunpack.c.l.b16 %v304
        %v410 = vunpack.c.l.b16 %v305
        %v411 = vunpack.c.l.b16 %v306
        %v412 = vunpack.c.l.b16 %v307
        %v413 = vunpack.c.l.b16 %v308
        %v414 = vunpack.c.l.b16 %v309
        %v415 = vpack.c.b16 %v407, %v406
        %v416 = vpack.c.b16 %v409, %v408
        %v417 = vpack.c.b16 %v411, %v410
        %v418 = vpack.c.b16 %v413, %v412
        %v419 = vpack.c.b16 %v414, %v414
        %vm424 = vcmask 588800
        %v426 = vsel %vm424, %v381, 0
        %v429 = vsel %vm424, %v382, 0
        %v432 = vsel %vm424, %v383, 0
        %v435 = vsel %vm424, %v384, 0
        %v438 = vsel %vm424, %v385, 0
        %v441 = vsel %vm424, %v386, 0
        %v444 = vsel %vm424, %v387, 0
        %v447 = vsel %vm424, %v388, 0
        %v450 = vsel %vm424, %v389, 0
        %v453 = vsel %vm424, %v390, 0
        %v456 = vsel %vm424, %v391, 0
        %v459 = vsel %vm424, %v392, 0
        %v462 = vsel %vm424, %v393, 0
        %v465 = vsel %vm424, %v394, 0
        %v468 = vsel %vm424, %v395, 0
        %v471 = vsel %vm424, %v396, 0
        %vm473 = vcmask 1043456
        %v475 = vsel %vm473, %v419, 0
        %477 = vmatprep.subr.bf16.mxu0 0
        %478 = vmatpush1.bf16.msra.mxu0 %v415
        %479 = vmatprep.subr.bf16.mxu0 0
        %480 = vmatpush1.bf16.msra.mxu0 %v416
        %481 = vmatprep.subr.bf16.mxu0 0
        %482 = vmatpush1.bf16.msra.mxu0 %v417
        %483 = vmatprep.subr.bf16.mxu0 0
        %484 = vmatpush1.bf16.msra.mxu0 %v418
        %485 = vmatprep.subr.bf16.mxu0 0
        %486 = vmatpush1.bf16.msra.mxu0 %v475
        %487 = vmatprep.subr.bf16.mxu0 0
        %488 = vmatpush1.bf16.msra.mxu0 0
        %489 = vmatprep.subr.bf16.mxu0 0
        %490 = vmatpush1.bf16.msra.mxu0 0
        %491 = vmatprep.subr.bf16.mxu0 0
        %492 = vmatpush1.bf16.msra.mxu0 0
        %493 = vmatprep.subr.bf16.mxu0 0
        %494 = vmatpush1.bf16.msra.mxu0 0
        %495 = vmatprep.subr.bf16.mxu0 0
        %496 = vmatpush1.bf16.msra.mxu0 0
        %497 = vmatprep.subr.bf16.mxu0 0
        %498 = vmatpush1.bf16.msra.mxu0 0
        %499 = vmatprep.subr.bf16.mxu0 0
        %500 = vmatpush1.bf16.msra.mxu0 0
        %501 = vmatprep.subr.bf16.mxu0 0
        %502 = vmatpush1.bf16.msra.mxu0 0
        %503 = vmatprep.subr.bf16.mxu0 0
        %504 = vmatpush1.bf16.msra.mxu0 0
        %505 = vmatprep.subr.bf16.mxu0 0
        %506 = vmatpush1.bf16.msra.mxu0 0
        %507 = vmatprep.subr.bf16.mxu0 0
        %508 = vmatpush1.bf16.msra.mxu0 0
        %509 = vmatprep.mubr.bf16.mxu0 0
        %510 = vmatmul.mubr.bf16.gmra.mrb[0].mxu0 %v426
        %v511 = vpop.f32.mrb[0].mxu0
        %v512 = vadd.f32 %v315, %v511
        %v513 = vpop.f32.mrb[0].mxu0
        %v514 = vpop.f32.mrb[0].mxu0
        %v515 = vadd.f32 %v315, %v514
        %v516 = vpop.f32.mrb[0].mxu0
        %517 = vmatprep.mubr.bf16.mxu0 0
        %518 = vmatmul.mubr.bf16.gmra.mrb[0].mxu0 %v429
        %v519 = vpop.f32.mrb[0].mxu0
        %v520 = vadd.f32 %v315, %v519
        %v521 = vpop.f32.mrb[0].mxu0
        %v522 = vpop.f32.mrb[0].mxu0
        %v523 = vadd.f32 %v315, %v522
        %v524 = vpop.f32.mrb[0].mxu0
        %525 = vmatprep.mubr.bf16.mxu0 0
        %526 = vmatmul.mubr.bf16.gmra.mrb[0].mxu0 %v432
        %v527 = vpop.f32.mrb[0].mxu0
        %v528 = vadd.f32 %v315, %v527
        %v529 = vpop.f32.mrb[0].mxu0
        %v530 = vpop.f32.mrb[0].mxu0
        %v531 = vadd.f32 %v315, %v530
        %v532 = vpop.f32.mrb[0].mxu0
        %533 = vmatprep.mubr.bf16.mxu0 0
        %534 = vmatmul.mubr.bf16.gmra.mrb[0].mxu0 %v435
        %v535 = vpop.f32.mrb[0].mxu0
        %v536 = vadd.f32 %v315, %v535
        %v537 = vpop.f32.mrb[0].mxu0
        %v538 = vpop.f32.mrb[0].mxu0
        %v539 = vadd.f32 %v315, %v538
        %v540 = vpop.f32.mrb[0].mxu0
        %541 = vmatprep.mubr.bf16.mxu0 0
        %542 = vmatmul.mubr.bf16.gmra.mrb[0].mxu0 %v438
        %v543 = vpop.f32.mrb[0].mxu0
        %v544 = vadd.f32 %v315, %v543
        %v545 = vpop.f32.mrb[0].mxu0
        %v546 = vpop.f32.mrb[0].mxu0
        %v547 = vadd.f32 %v315, %v546
        %v548 = vpop.f32.mrb[0].mxu0
        %549 = vmatprep.mubr.bf16.mxu0 0
        %550 = vmatmul.mubr.bf16.gmra.mrb[0].mxu0 %v441
        %v551 = vpop.f32.mrb[0].mxu0
        %v552 = vadd.f32 %v315, %v551
        %v553 = vpop.f32.mrb[0].mxu0
        %v554 = vpop.f32.mrb[0].mxu0
        %v555 = vadd.f32 %v315, %v554
        %v556 = vpop.f32.mrb[0].mxu0
        %557 = vmatprep.mubr.bf16.mxu0 0
        %558 = vmatmul.mubr.bf16.gmra.mrb[0].mxu0 %v444
        %v559 = vpop.f32.mrb[0].mxu0
        %v560 = vadd.f32 %v315, %v559
        %v561 = vpop.f32.mrb[0].mxu0
        %v562 = vpop.f32.mrb[0].mxu0
        %v563 = vadd.f32 %v315, %v562
        %v564 = vpop.f32.mrb[0].mxu0
        %565 = vmatprep.mubr.bf16.mxu0 0
        %566 = vmatmul.mubr.bf16.gmra.mrb[0].mxu0 %v447
        %v567 = vpop.f32.mrb[0].mxu0
        %v568 = vadd.f32 %v315, %v567
        %v569 = vpop.f32.mrb[0].mxu0
        %v570 = vpop.f32.mrb[0].mxu0
        %v571 = vadd.f32 %v315, %v570
        %v572 = vpop.f32.mrb[0].mxu0
        %573 = vmatprep.mubr.bf16.mxu0 0
        %574 = vmatmul.mubr.bf16.gmra.mrb[0].mxu0 %v450
        %v575 = vpop.f32.mrb[0].mxu0
        %v576 = vadd.f32 %v315, %v575
        %v577 = vpop.f32.mrb[0].mxu0
        %v578 = vpop.f32.mrb[0].mxu0
        %v579 = vadd.f32 %v315, %v578
        %v580 = vpop.f32.mrb[0].mxu0
        %581 = vmatprep.mubr.bf16.mxu0 0
        %582 = vmatmul.mubr.bf16.gmra.mrb[0].mxu0 %v453
        %v583 = vpop.f32.mrb[0].mxu0
        %v584 = vadd.f32 %v315, %v583
        %v585 = vpop.f32.mrb[0].mxu0
        %v586 = vpop.f32.mrb[0].mxu0
        %v587 = vadd.f32 %v315, %v586
        %v588 = vpop.f32.mrb[0].mxu0
        %589 = vmatprep.mubr.bf16.mxu0 0
        %590 = vmatmul.mubr.bf16.gmra.mrb[0].mxu0 %v456
        %v591 = vpop.f32.mrb[0].mxu0
        %v592 = vadd.f32 %v315, %v591
        %v593 = vpop.f32.mrb[0].mxu0
        %v594 = vpop.f32.mrb[0].mxu0
        %v595 = vadd.f32 %v315, %v594
        %v596 = vpop.f32.mrb[0].mxu0
        %597 = vmatprep.mubr.bf16.mxu0 0
        %598 = vmatmul.mubr.bf16.gmra.mrb[0].mxu0 %v459
        %v599 = vpop.f32.mrb[0].mxu0
        %v600 = vadd.f32 %v315, %v599
        %v601 = vpop.f32.mrb[0].mxu0
        %v602 = vpop.f32.mrb[0].mxu0
        %v603 = vadd.f32 %v315, %v602
        %v604 = vpop.f32.mrb[0].mxu0
        %605 = vmatprep.mubr.bf16.mxu0 0
        %606 = vmatmul.mubr.bf16.gmra.mrb[0].mxu0 %v462
        %v607 = vpop.f32.mrb[0].mxu0
        %v608 = vadd.f32 %v315, %v607
        %v609 = vpop.f32.mrb[0].mxu0
        %v610 = vpop.f32.mrb[0].mxu0
        %v611 = vadd.f32 %v315, %v610
        %v612 = vpop.f32.mrb[0].mxu0
        %613 = vmatprep.mubr.bf16.mxu0 0
        %614 = vmatmul.mubr.bf16.gmra.mrb[0].mxu0 %v465
        %v615 = vpop.f32.mrb[0].mxu0
        %v616 = vadd.f32 %v315, %v615
        %v617 = vpop.f32.mrb[0].mxu0
        %v618 = vpop.f32.mrb[0].mxu0
        %v619 = vadd.f32 %v315, %v618
        %v620 = vpop.f32.mrb[0].mxu0
        %621 = vmatprep.mubr.bf16.mxu0 0
        %622 = vmatmul.mubr.bf16.gmra.mrb[0].mxu0 %v468
        %v623 = vpop.f32.mrb[0].mxu0
        %v624 = vadd.f32 %v315, %v623
        %v625 = vpop.f32.mrb[0].mxu0
        %v626 = vpop.f32.mrb[0].mxu0
        %v627 = vadd.f32 %v315, %v626
        %v628 = vpop.f32.mrb[0].mxu0
        %629 = vmatprep.mubr.bf16.mxu0 0
        %630 = vmatmul.mubr.bf16.gmra.mrb[0].mxu0 %v471
        %v631 = vpop.f32.mrb[0].mxu0
        %v632 = vadd.f32 %v315, %v631
        %v633 = vpop.f32.mrb[0].mxu0
        %v634 = vpop.f32.mrb[0].mxu0
        %v635 = vadd.f32 %v315, %v634
        %v636 = vpop.f32.mrb[0].mxu0
        %637 = vdwg.mxu0
        %638 = vst [vmem:[%s261] sm:$0xff] %v512
        %639 = vst [vmem:[%s261 + $0x8] sm:$0xff] %v515
        %640 = vst [vmem:[%s261 + $0x10] sm:$0xff] %v520
        %641 = vst [vmem:[%s261 + $0x18] sm:$0xff] %v523
        %642 = vst [vmem:[%s261 + $0x20] sm:$0xff] %v528
        %643 = vst [vmem:[%s261 + $0x28] sm:$0xff] %v531
        %644 = vst [vmem:[%s261 + $0x30] sm:$0xff] %v536
        %645 = vst [vmem:[%s261 + $0x38] sm:$0xff] %v539
        %646 = vst [vmem:[%s261 + $0x40] sm:$0xff] %v544
        %647 = vst [vmem:[%s261 + $0x48] sm:$0xff] %v547
        %648 = vst [vmem:[%s261 + $0x50] sm:$0xff] %v552
        %649 = vst [vmem:[%s261 + $0x58] sm:$0xff] %v555
        %650 = vst [vmem:[%s261 + $0x60] sm:$0xff] %v560
        %651 = vst [vmem:[%s261 + $0x68] sm:$0xff] %v563
        %652 = vst [vmem:[%s261 + $0x70] sm:$0xff] %v568
        %653 = vst [vmem:[%s261 + $0x78] sm:$0xff] %v571
        %654 = vst [vmem:[%s261 + $0x80] sm:$0xff] %v576
        %655 = vst [vmem:[%s261 + $0x88] sm:$0xff] %v579
        %656 = vst [vmem:[%s261 + $0x90] sm:$0xff] %v584
        %657 = vst [vmem:[%s261 + $0x98] sm:$0xff] %v587
        %658 = vst [vmem:[%s261 + $0xa0] sm:$0xff] %v592
        %659 = vst [vmem:[%s261 + $0xa8] sm:$0xff] %v595
        %660 = vst [vmem:[%s261 + $0xb0] sm:$0xff] %v600
        %661 = vst [vmem:[%s261 + $0xb8] sm:$0xff] %v603
        %662 = vst [vmem:[%s261 + $0xc0] sm:$0xff] %v608
        %663 = vst [vmem:[%s261 + $0xc8] sm:$0xff] %v611
        %664 = vst [vmem:[%s261 + $0xd0] sm:$0xff] %v616
        %665 = vst [vmem:[%s261 + $0xd8] sm:$0xff] %v619
        %666 = vst [vmem:[%s261 + $0xe0] sm:$0xff] %v624
        %667 = vst [vmem:[%s261 + $0xe8] sm:$0xff] %v627
        %668 = vst [vmem:[%s261 + $0xf0] sm:$0xff] %v632
        %669 = vst [vmem:[%s261 + $0xf8] sm:$0xff] %v635
        %p670 = scmp.eq.s32.totalorder %s25, 0
        // Predicated region
        $region45: #{decoder_block_forward.12} parent=31 // pred_check
          %p671 = pneg %p670
        $region46: #{decoder_block_forward.12} parent=31 // pred_check_branch
          %673 = sbr.rel (%p671) target = $region48
        $region47: #{decoder_block_forward.12} parent=31 // pred_region
          %674 = vst [vmem:[#allocation9] sm:$0x1] 0.0
          %675 = vst [vmem:[#allocation11] sm:$0x1] 0.0
        $region48: #{decoder_block_forward.12} parent=31 // pred_fallthru
          _
        %v676 = vld [vmem:[#allocation9] sm:$0x1]
        %v677 = vadd.f32 %v512, %v515
        %v678 = vadd.f32 %v677, %v520
        %v679 = vadd.f32 %v678, %v523
        %v680 = vadd.f32 %v679, %v528
        %v681 = vadd.f32 %v680, %v531
        %v682 = vadd.f32 %v681, %v536
        %v683 = vadd.f32 %v682, %v539
        %v684 = vadd.f32 %v683, %v544
        %v685 = vadd.f32 %v684, %v547
        %v686 = vadd.f32 %v685, %v552
        %v687 = vadd.f32 %v686, %v555
        %v688 = vadd.f32 %v687, %v560
        %v689 = vadd.f32 %v688, %v563
        %v690 = vadd.f32 %v689, %v568
        %v691 = vadd.f32 %v690, %v571
        %v692 = vadd.f32 %v691, %v576
        %v693 = vadd.f32 %v692, %v579
        %v694 = vadd.f32 %v693, %v584
        %v695 = vadd.f32 %v694, %v587
        %v696 = vadd.f32 %v695, %v592
        %v697 = vadd.f32 %v696, %v595
        %v698 = vadd.f32 %v697, %v600
        %v699 = vadd.f32 %v698, %v603
        %v700 = vadd.f32 %v699, %v608
        %v701 = vadd.f32 %v700, %v611
        %v702 = vadd.f32 %v701, %v616
        %v703 = vadd.f32 %v702, %v619
        %v704 = vadd.f32 %v703, %v624
        %v705 = vadd.f32 %v704, %v627
        %v706 = vadd.f32 %v705, %v632
        %v707 = vadd.f32 %v706, %v635
        %v708 = vrot.slane %v707, 4
        %v709 = vadd.f32 %v707, %v708
        %v710 = vrot.slane %v709, 2
        %v711 = vadd.f32 %v709, %v710
        %v712 = vrot.slane %v711, 1
        %v713 = vadd.f32 %v711, %v712
        %v714 = vadd.f32 %v676, %v713
        %715 = vst [vmem:[#allocation9] sm:$0x1] %v714
        %v716 = vld [vmem:[#allocation11] sm:$0x1]
        %v717 = vmul.f32 %v512, %v512
        %v718 = vmul.f32 %v515, %v515
        %v719 = vmul.f32 %v520, %v520
        %v720 = vmul.f32 %v523, %v523
        %v721 = vmul.f32 %v528, %v528
        %v722 = vmul.f32 %v531, %v531
        %v723 = vmul.f32 %v536, %v536
        %v724 = vmul.f32 %v539, %v539
        %v725 = vmul.f32 %v544, %v544
        %v726 = vmul.f32 %v547, %v547
        %v727 = vmul.f32 %v552, %v552
        %v728 = vmul.f32 %v555, %v555
        %v729 = vmul.f32 %v560, %v560
        %v730 = vmul.f32 %v563, %v563
        %v731 = vmul.f32 %v568, %v568
        %v732 = vmul.f32 %v571, %v571
        %v733 = vmul.f32 %v576, %v576
        %v734 = vmul.f32 %v579, %v579
        %v735 = vmul.f32 %v584, %v584
        %v736 = vmul.f32 %v587, %v587
        %v737 = vmul.f32 %v592, %v592
        %v738 = vmul.f32 %v595, %v595
        %v739 = vmul.f32 %v600, %v600
        %v740 = vmul.f32 %v603, %v603
        %v741 = vmul.f32 %v608, %v608
        %v742 = vmul.f32 %v611, %v611
        %v743 = vmul.f32 %v616, %v616
        %v744 = vmul.f32 %v619, %v619
        %v745 = vmul.f32 %v624, %v624
        %v746 = vmul.f32 %v627, %v627
        %v747 = vmul.f32 %v632, %v632
        %v748 = vmul.f32 %v635, %v635
        %v749 = vadd.f32 %v717, %v718
        %v750 = vadd.f32 %v749, %v719
        %v751 = vadd.f32 %v750, %v720
        %v752 = vadd.f32 %v751, %v721
        %v753 = vadd.f32 %v752, %v722
        %v754 = vadd.f32 %v753, %v723
        %v755 = vadd.f32 %v754, %v724
        %v756 = vadd.f32 %v755, %v725
        %v757 = vadd.f32 %v756, %v726
        %v758 = vadd.f32 %v757, %v727
        %v759 = vadd.f32 %v758, %v728
        %v760 = vadd.f32 %v759, %v729
        %v761 = vadd.f32 %v760, %v730
        %v762 = vadd.f32 %v761, %v731
        %v763 = vadd.f32 %v762, %v732
        %v764 = vadd.f32 %v763, %v733
        %v765 = vadd.f32 %v764, %v734
        %v766 = vadd.f32 %v765, %v735
        %v767 = vadd.f32 %v766, %v736
        %v768 = vadd.f32 %v767, %v737
        %v769 = vadd.f32 %v768, %v738
        %v770 = vadd.f32 %v769, %v739
        %v771 = vadd.f32 %v770, %v740
        %v772 = vadd.f32 %v771, %v741
        %v773 = vadd.f32 %v772, %v742
        %v774 = vadd.f32 %v773, %v743
        %v775 = vadd.f32 %v774, %v744
        %v776 = vadd.f32 %v775, %v745
        %v777 = vadd.f32 %v776, %v746
        %v778 = vadd.f32 %v777, %v747
        %v779 = vadd.f32 %v778, %v748
        %v780 = vrot.slane %v779, 4
        %v781 = vadd.f32 %v779, %v780
        %v782 = vrot.slane %v781, 2
        %v783 = vadd.f32 %v781, %v782
        %v784 = vrot.slane %v783, 1
        %v785 = vadd.f32 %v783, %v784
        %v786 = vadd.f32 %v716, %v785
        %787 = vst [vmem:[#allocation11] sm:$0x1] %v786
        %s788 = sand.u32 %s101, 1
        %s789 = scalar_lea.sflag [#allocation4], %s788
        %s790 = sand.u32 %s101, 1
        %s791 = smul.addr %s790, 256
        %s792 = scalar_lea.vmem [#allocation8], %s791
        // Predicated region
        $region49: #{decoder_block_forward.12} parent=31 // pred_check
          %p793 = pneg %p111
        $region50: #{decoder_block_forward.12} parent=31 // pred_check_branch
          %795 = sbr.rel (%p793) target = $region52
        $region51: #{decoder_block_forward.12} parent=31 // pred_region
          %s796 = smul.u32 32, %s25
          %s798 = ssub.s32 4096, 4096
          %799 = vsyncadd %s789, %s798
          %s800 = smul.addr %s796, 128
          %s801 = scalar_lea.hbm %s3, %s800
          %s802 = sshll.u32 %s792, 4
          %s803 = int_to_ptr.vmem [resolvable:$true] %s802
          %808 = dma.vmem_to_hbm [thread:$0]  %s803, 4096, %s801, %s789, 128, 128, 8
        $region52: #{decoder_block_forward.12} parent=31 // pred_fallthru
          _
        // Predicated region
        $region53: #{decoder_block_forward.12} parent=31 // pred_check
          %p809 = pneg %p132
        $region54: #{decoder_block_forward.12} parent=31 // pred_check_branch
          %811 = sbr.rel (%p809) target = $region56
        $region55: #{decoder_block_forward.12} parent=31 // pred_region
          %s813 = ssub.s32 16, 16
          %814 = vsyncadd [#allocation10], %s813
          %s816 = sshll.u32 [#allocation9], 4
          %s817 = int_to_ptr.vmem [resolvable:$true] %s816
          %819 = dma.vmem_to_hbm [thread:$0]  %s817, 16, %s4, [#allocation10]
        $region56: #{decoder_block_forward.12} parent=31 // pred_fallthru
          _
        // Predicated region
        $region57: #{decoder_block_forward.12} parent=31 // pred_check
          %p820 = pneg %p153
        $region58: #{decoder_block_forward.12} parent=31 // pred_check_branch
          %822 = sbr.rel (%p820) target = $region60
        $region59: #{decoder_block_forward.12} parent=31 // pred_region
          %s824 = ssub.s32 16, 16
          %825 = vsyncadd [#allocation10], %s824
          %s827 = sshll.u32 [#allocation11], 4
          %s828 = int_to_ptr.vmem [resolvable:$true] %s827
          %830 = dma.vmem_to_hbm [thread:$0]  %s828, 16, %s5, [#allocation10]
        $region60: #{decoder_block_forward.12} parent=31 // pred_fallthru
          _
        // Predicated region
        $region61: #{decoder_block_forward.12} parent=31 // pred_check
          %p831 = pneg %p132
        $region62: #{decoder_block_forward.12} parent=31 // pred_check_branch
          %833 = sbr.rel (%p831) target = $region64
        $region63: #{decoder_block_forward.12} parent=31 // pred_region
          %834 = dma.done [#allocation10], 16
        $region64: #{decoder_block_forward.12} parent=31 // pred_fallthru
          _
        // Predicated region
        $region65: #{decoder_block_forward.12} parent=31 // pred_check
          %p835 = pneg %p153
        $region66: #{decoder_block_forward.12} parent=31 // pred_check_branch
          %837 = sbr.rel (%p835) target = $region68
        $region67: #{decoder_block_forward.12} parent=31 // pred_region
          %838 = dma.done [#allocation10], 16
        $region68: #{decoder_block_forward.12} parent=31 // pred_fallthru
          _
      $region32: #{decoder_block_forward.12} parent=5 // pred_fallthru
        _
      %p839 = scmp.le.s32.totalorder 2, %s20
      // Predicated region
      $region69: #{decoder_block_forward.12} parent=5 // pred_check
        %p840 = pneg %p839
      $region70: #{decoder_block_forward.12} parent=5 // pred_check_branch
        %842 = sbr.rel (%p840) target = $region72
      $region71: #{decoder_block_forward.12} parent=5 // pred_region
        %s843 = ssub.s32 %s20, 2
        // Predicated region
        $region73: #{decoder_block_forward.12} parent=71 // pred_check
          %p844 = pneg %p117
        $region74: #{decoder_block_forward.12} parent=71 // pred_check_branch
          %846 = sbr.rel (%p844) target = $region76
        $region75: #{decoder_block_forward.12} parent=71 // pred_region
          %s847 = sand.u32 %s102, 1
          %s848 = scalar_lea.sflag [#allocation4], %s847
          %s849 = sand.u32 %s102, 1
          %s850 = smul.addr %s849, 256
          %s851 = scalar_lea.vmem [#allocation8], %s850
          %852 = dma.done %s848, 4096
        $region76: #{decoder_block_forward.12} parent=71 // pred_fallthru
          _
      $region72: #{decoder_block_forward.12} parent=5 // pred_fallthru
        _
    $region6: #{decoder_block_forward.12} parent=1 // loop_footer
      %s24 = sadd.s32 1, %s20
    $region7: #{decoder_block_forward.12} parent=1 // loop_footer_branch
      %19 = sbr.rel target = $region3
    $region8: #{decoder_block_forward.12} parent=1 // loop_exit
      _
    %853 = vsyncpa [#allocation3], 1
    %s854 = scalar_lea.sflag [#allocation3], 1
    %855 = vsyncpa %s854, 1
    %856 = vsyncpa [#allocation6], 1
    %857 = vsyncpa [#allocation4], 1
    %s858 = scalar_lea.sflag [#allocation4], 1
    %859 = vsyncpa %s858, 1
    %860 = vsyncpa [#allocation10], 1

// kernel: decoder_block_forward.14
$region0: #{decoder_block_forward.14}
  #allocation0 [shape = 'u32[]', space=smem, size = 0x4, offset = 0x4, fixed_abs, tag = 'smem constant byte address 0x4 - core index']
  #allocation1 [shape = 'u32[144,128]{1,0:T(1,128)}', space=vmem, size = 0x12000, scoped, tag = 'internal scratch']
  %s0 = inlined_call_operand.hbm [shape: bf16[512,72], index: 0, kind: input, shape index: {}]
  %s1 = inlined_call_operand.hbm [shape: bf16[512,72], index: 1, kind: input, shape index: {}]
  %s2 = inlined_call_operand.hbm [shape: bf16[512,72], index: 2, kind: input, shape index: {}]
  %s3 = inlined_call_operand.hbm [shape: bf16[72,128], index: 3, kind: input, shape index: {}]
  %s4 = inlined_call_operand.hbm [shape: bf16[72,128], index: 4, kind: input, shape index: {}]
  %s5 = inlined_call_operand.hbm [shape: bf16[72,128], index: 5, kind: input, shape index: {}]
  %s6 = inlined_call_operand.hbm [shape: f32[1,128], index: 6, kind: input, shape index: {}]
  %s7 = inlined_call_operand.hbm [shape: f32[512,128], index: 7, kind: output, shape index: {0}]
  %s8 = inlined_call_operand.hbm [shape: f32[1,128], index: 8, kind: output, shape index: {1}]
  %s9 = inlined_call_operand.hbm [shape: f32[1,128], index: 9, kind: output, shape index: {2}]
  %10 = xla_tuple %s7, %s8, %s9
  %s11 = sld [smem:[#allocation0]]
  $region109: #{decoder_block_forward.14} parent=0
    _
  %s13 = ssub.s32 1, %s11
  %s14 = scalar_select 0, %s13, %s11
  $region1: #{decoder_block_forward.14} parent=0
    #allocation2 [shape = 'u8[131072]{0}', space=vmem, size = 0x20000, scoped, tag = 'input window, operand 0']
    #allocation3 [shape = 's32[2]{0}', space=sflag, size = 0x8, scoped, tag = 'scoped memory for decoder_block_forward.14']
    #allocation4 [shape = 's32[2]{0}', space=sflag, size = 0x8, scoped, tag = 'scoped memory for decoder_block_forward.14']
    #allocation5 [shape = 'u8[131072]{0}', space=vmem, size = 0x20000, scoped, tag = 'input window, operand 1']
    #allocation6 [shape = 's32[2]{0}', space=sflag, size = 0x8, scoped, tag = 'scoped memory for decoder_block_forward.14']
    #allocation7 [shape = 'u8[131072]{0}', space=vmem, size = 0x20000, scoped, tag = 'input window, operand 2']
    #allocation8 [shape = 'u8[18432]{0}', space=vmem, size = 0x4800, scoped, tag = 'input window, operand 3, single buffered']
    #allocation9 [shape = 's32[1]{0}', space=sflag, size = 0x4, scoped, tag = 'scoped memory for decoder_block_forward.14']
    #allocation10 [shape = 'u8[18432]{0}', space=vmem, size = 0x4800, scoped, tag = 'input window, operand 4, single buffered']
    #allocation11 [shape = 'u8[18432]{0}', space=vmem, size = 0x4800, scoped, tag = 'input window, operand 5, single buffered']
    #allocation12 [shape = 's32[1]{0}', space=sflag, size = 0x4, scoped, tag = 'scoped memory for decoder_block_forward.14']
    #allocation13 [shape = 'u8[512]{0}', space=vmem, size = 0x400, scoped, tag = 'input window, operand 6, single buffered']
    #allocation14 [shape = 'u8[262144]{0}', space=vmem, size = 0x40000, scoped, tag = 'output window, operand 0']
    #allocation15 [shape = 'u8[512]{0}', space=vmem, size = 0x400, scoped, tag = 'output window, operand 1, single buffered']
    #allocation16 [shape = 's32[1]{0}', space=sflag, size = 0x4, scoped, tag = 'scoped memory for decoder_block_forward.14']
    #allocation17 [shape = 'u8[512]{0}', space=vmem, size = 0x400, scoped, tag = 'output window, operand 2, single buffered']
    %15 = vsyncpa [#allocation3], 0
    %s16 = scalar_lea.sflag [#allocation3], 1
    %17 = vsyncpa %s16, 0
    %18 = vsyncpa [#allocation6], 0
    %s19 = scalar_lea.sflag [#allocation6], 1
    %20 = vsyncpa %s19, 0
    %21 = vsyncpa [#allocation9], 0
    %22 = vsyncpa [#allocation12], 0
    %23 = vsyncpa [#allocation4], 0
    %s24 = scalar_lea.sflag [#allocation4], 1
    %25 = vsyncpa %s24, 0
    %26 = vsyncpa [#allocation16], 0
    loop: start=0, step=1, limit=4
    $region2: #{decoder_block_forward.14} parent=1 // loop_pre_header
      _
    $region3: #{decoder_block_forward.14} parent=1 // loop_header
      %s28 = sphi 0, %s32
      %p29 = scmp.ge.s32.totalorder %s28, 4
      %s38 = sphi 0, %s40
      %s41 = sphi 0, %s38
      %s42 = sphi 0, %s41
      %s58 = sphi 0, %s42
      %s64 = sphi 0, %s66
      %s67 = sphi 0, %s64
      %s68 = sphi 0, %s67
      %s84 = sphi 0, %s68
      %s90 = sphi 0, %s92
      %s93 = sphi 0, %s90
      %s94 = sphi 0, %s93
      %s110 = sphi 0, %s94
      %s114 = sphi 0, %s114
      %s116 = sphi 0, %s114
      %s117 = sphi 0, %s116
      %s131 = sphi 0, %s117
      %s135 = sphi 0, %s135
      %s137 = sphi 0, %s135
      %s138 = sphi 0, %s137
      %s152 = sphi 0, %s138
      %s156 = sphi 0, %s156
      %s158 = sphi 0, %s156
      %s159 = sphi 0, %s158
      %s173 = sphi 0, %s159
      %s177 = sphi 0, %s177
      %s179 = sphi 0, %s177
      %s180 = sphi 0, %s179
      %s194 = sphi 0, %s180
      %s200 = sphi 0, %s202
      %s203 = sphi 0, %s200
      %s204 = sphi 0, %s203
      %s220 = sphi 0, %s204
      %s224 = sphi 0, %s224
      %s226 = sphi 0, %s224
      %s227 = sphi 0, %s226
      %s241 = sphi 0, %s227
      %s245 = sphi 0, %s245
      %s247 = sphi 0, %s245
      %s248 = sphi 0, %s247
      %s262 = sphi 0, %s248
    $region4: #{decoder_block_forward.14} parent=1 // loop_header_branch
      %31 = sbr.rel (%p29) target = $region8
    $region5: #{decoder_block_forward.14} parent=1 // loop_body
      %s33 = ssub.s32 %s28, 1
      %s34 = ssub.s32 %s28, 2
      %s35 = sadd.s32 %s28, 1
      %s36 = ssub.s32 %s28, %s35
      %p37 = scmp.eq.s32.totalorder %s36, 0
      %s39 = sadd.s32 %s38, 1
      %s40 = scalar_select %p37, %s38, %s39
      %p43 = pneg %p37
      %p44 = scmp.eq.s32.totalorder %s28, 1
      %p45 = por %p43, %p44
      %p46 = scmp.ne.s32.totalorder %s38, %s41
      %p47 = scmp.eq.s32.totalorder %s28, 0
      %p48 = por %p46, %p47
      %p49 = scmp.ne.s32.totalorder %s38, %s41
      %p50 = scmp.eq.s32.totalorder %s33, 1
      %p51 = por %p49, %p50
      %p52 = scmp.ne.s32.totalorder %s41, %s42
      %p53 = scmp.eq.s32.totalorder %s33, 0
      %p54 = por %p52, %p53
      %p55 = scmp.ne.s32.totalorder %s41, %s42
      %p56 = scmp.eq.s32.totalorder %s34, 1
      %p57 = por %p55, %p56
      %p59 = scmp.ne.s32.totalorder %s42, %s58
      %p60 = scmp.eq.s32.totalorder %s34, 0
      %p61 = por %p59, %p60
      %s62 = ssub.s32 %s28, %s35
      %p63 = scmp.eq.s32.totalorder %s62, 0
      %s65 = sadd.s32 %s64, 1
      %s66 = scalar_select %p63, %s64, %s65
      %p69 = pneg %p63
      %p70 = scmp.eq.s32.totalorder %s28, 1
      %p71 = por %p69, %p70
      %p72 = scmp.ne.s32.totalorder %s64, %s67
      %p73 = scmp.eq.s32.totalorder %s28, 0
      %p74 = por %p72, %p73
      %p75 = scmp.ne.s32.totalorder %s64, %s67
      %p76 = scmp.eq.s32.totalorder %s33, 1
      %p77 = por %p75, %p76
      %p78 = scmp.ne.s32.totalorder %s67, %s68
      %p79 = scmp.eq.s32.totalorder %s33, 0
      %p80 = por %p78, %p79
      %p81 = scmp.ne.s32.totalorder %s67, %s68
      %p82 = scmp.eq.s32.totalorder %s34, 1
      %p83 = por %p81, %p82
      %p85 = scmp.ne.s32.totalorder %s68, %s84
      %p86 = scmp.eq.s32.totalorder %s34, 0
      %p87 = por %p85, %p86
      %s88 = ssub.s32 %s28, %s35
      %p89 = scmp.eq.s32.totalorder %s88, 0
      %s91 = sadd.s32 %s90, 1
      %s92 = scalar_select %p89, %s90, %s91
      %p95 = pneg %p89
      %p96 = scmp.eq.s32.totalorder %s28, 1
      %p97 = por %p95, %p96
      %p98 = scmp.ne.s32.totalorder %s90, %s93
      %p99 = scmp.eq.s32.totalorder %s28, 0
      %p100 = por %p98, %p99
      %p101 = scmp.ne.s32.totalorder %s90, %s93
      %p102 = scmp.eq.s32.totalorder %s33, 1
      %p103 = por %p101, %p102
      %p104 = scmp.ne.s32.totalorder %s93, %s94
      %p105 = scmp.eq.s32.totalorder %s33, 0
      %p106 = por %p104, %p105
      %p107 = scmp.ne.s32.totalorder %s93, %s94
      %p108 = scmp.eq.s32.totalorder %s34, 1
      %p109 = por %p107, %p108
      %p111 = scmp.ne.s32.totalorder %s94, %s110
      %p112 = scmp.eq.s32.totalorder %s34, 0
      %p113 = por %p111, %p112
      %s115 = sadd.s32 %s114, 1
      %p118 = scmp.eq.s32.totalorder %s28, 1
      %p119 = scmp.ne.s32.totalorder %s114, %s116
      %p120 = scmp.eq.s32.totalorder %s28, 0
      %p121 = por %p119, %p120
      %p122 = scmp.ne.s32.totalorder %s114, %s116
      %p123 = scmp.eq.s32.totalorder %s33, 1
      %p124 = por %p122, %p123
      %p125 = scmp.ne.s32.totalorder %s116, %s117
      %p126 = scmp.eq.s32.totalorder %s33, 0
      %p127 = por %p125, %p126
      %p128 = scmp.ne.s32.totalorder %s116, %s117
      %p129 = scmp.eq.s32.totalorder %s34, 1
      %p130 = por %p128, %p129
      %p132 = scmp.ne.s32.totalorder %s117, %s131
      %p133 = scmp.eq.s32.totalorder %s34, 0
      %p134 = por %p132, %p133
      %s136 = sadd.s32 %s135, 1
      %p139 = scmp.eq.s32.totalorder %s28, 1
      %p140 = scmp.ne.s32.totalorder %s135, %s137
      %p141 = scmp.eq.s32.totalorder %s28, 0
      %p142 = por %p140, %p141
      %p143 = scmp.ne.s32.totalorder %s135, %s137
      %p144 = scmp.eq.s32.totalorder %s33, 1
      %p145 = por %p143, %p144
      %p146 = scmp.ne.s32.totalorder %s137, %s138
      %p147 = scmp.eq.s32.totalorder %s33, 0
      %p148 = por %p146, %p147
      %p149 = scmp.ne.s32.totalorder %s137, %s138
      %p150 = scmp.eq.s32.totalorder %s34, 1
      %p151 = por %p149, %p150
      %p153 = scmp.ne.s32.totalorder %s138, %s152
      %p154 = scmp.eq.s32.totalorder %s34, 0
      %p155 = por %p153, %p154
      %s157 = sadd.s32 %s156, 1
      %p160 = scmp.eq.s32.totalorder %s28, 1
      %p161 = scmp.ne.s32.totalorder %s156, %s158
      %p162 = scmp.eq.s32.totalorder %s28, 0
      %p163 = por %p161, %p162
      %p164 = scmp.ne.s32.totalorder %s156, %s158
      %p165 = scmp.eq.s32.totalorder %s33, 1
      %p166 = por %p164, %p165
      %p167 = scmp.ne.s32.totalorder %s158, %s159
      %p168 = scmp.eq.s32.totalorder %s33, 0
      %p169 = por %p167, %p168
      %p170 = scmp.ne.s32.totalorder %s158, %s159
      %p171 = scmp.eq.s32.totalorder %s34, 1
      %p172 = por %p170, %p171
      %p174 = scmp.ne.s32.totalorder %s159, %s173
      %p175 = scmp.eq.s32.totalorder %s34, 0
      %p176 = por %p174, %p175
      %s178 = sadd.s32 %s177, 1
      %p181 = scmp.eq.s32.totalorder %s28, 1
      %p182 = scmp.ne.s32.totalorder %s177, %s179
      %p183 = scmp.eq.s32.totalorder %s28, 0
      %p184 = por %p182, %p183
      %p185 = scmp.ne.s32.totalorder %s177, %s179
      %p186 = scmp.eq.s32.totalorder %s33, 1
      %p187 = por %p185, %p186
      %p188 = scmp.ne.s32.totalorder %s179, %s180
      %p189 = scmp.eq.s32.totalorder %s33, 0
      %p190 = por %p188, %p189
      %p191 = scmp.ne.s32.totalorder %s179, %s180
      %p192 = scmp.eq.s32.totalorder %s34, 1
      %p193 = por %p191, %p192
      %p195 = scmp.ne.s32.totalorder %s180, %s194
      %p196 = scmp.eq.s32.totalorder %s34, 0
      %p197 = por %p195, %p196
      %s198 = ssub.s32 %s28, %s35
      %p199 = scmp.eq.s32.totalorder %s198, 0
      %s201 = sadd.s32 %s200, 1
      %s202 = scalar_select %p199, %s200, %s201
      %p205 = pneg %p199
      %p206 = scmp.eq.s32.totalorder %s28, 1
      %p207 = por %p205, %p206
      %p208 = scmp.ne.s32.totalorder %s200, %s203
      %p209 = scmp.eq.s32.totalorder %s28, 0
      %p210 = por %p208, %p209
      %p211 = scmp.ne.s32.totalorder %s200, %s203
      %p212 = scmp.eq.s32.totalorder %s33, 1
      %p213 = por %p211, %p212
      %p214 = scmp.ne.s32.totalorder %s203, %s204
      %p215 = scmp.eq.s32.totalorder %s33, 0
      %p216 = por %p214, %p215
      %p217 = scmp.ne.s32.totalorder %s203, %s204
      %p218 = scmp.eq.s32.totalorder %s34, 1
      %p219 = por %p217, %p218
      %p221 = scmp.ne.s32.totalorder %s204, %s220
      %p222 = scmp.eq.s32.totalorder %s34, 0
      %p223 = por %p221, %p222
      %s225 = sadd.s32 %s224, 1
      %p228 = scmp.eq.s32.totalorder %s28, 1
      %p229 = scmp.ne.s32.totalorder %s224, %s226
      %p230 = scmp.eq.s32.totalorder %s28, 0
      %p231 = por %p229, %p230
      %p232 = scmp.ne.s32.totalorder %s224, %s226
      %p233 = scmp.eq.s32.totalorder %s33, 1
      %p234 = por %p232, %p233
      %p235 = scmp.ne.s32.totalorder %s226, %s227
      %p236 = scmp.eq.s32.totalorder %s33, 0
      %p237 = por %p235, %p236
      %p238 = scmp.ne.s32.totalorder %s226, %s227
      %p239 = scmp.eq.s32.totalorder %s34, 1
      %p240 = por %p238, %p239
      %p242 = scmp.ne.s32.totalorder %s227, %s241
      %p243 = scmp.eq.s32.totalorder %s34, 0
      %p244 = por %p242, %p243
      %s246 = sadd.s32 %s245, 1
      %p249 = scmp.eq.s32.totalorder %s28, 1
      %p250 = scmp.ne.s32.totalorder %s245, %s247
      %p251 = scmp.eq.s32.totalorder %s28, 0
      %p252 = por %p250, %p251
      %p253 = scmp.ne.s32.totalorder %s245, %s247
      %p254 = scmp.eq.s32.totalorder %s33, 1
      %p255 = por %p253, %p254
      %p256 = scmp.ne.s32.totalorder %s247, %s248
      %p257 = scmp.eq.s32.totalorder %s33, 0
      %p258 = por %p256, %p257
      %p259 = scmp.ne.s32.totalorder %s247, %s248
      %p260 = scmp.eq.s32.totalorder %s34, 1
      %p261 = por %p259, %p260
      %p263 = scmp.ne.s32.totalorder %s248, %s262
      %p264 = scmp.eq.s32.totalorder %s34, 0
      %p265 = por %p263, %p264
      %p266 = scmp.le.s32.totalorder 1, %s28
      %p267 = scmp.lt.s32.totalorder %s28, 3
      %p268 = pnand %p266, %p267
      %p269 = pneg %p268
      // Predicated region
      $region9: #{decoder_block_forward.14} parent=5 // pred_check
        _
      $region10: #{decoder_block_forward.14} parent=5 // pred_check_branch
        %271 = sbr.rel (%p268) target = $region12
      $region11: #{decoder_block_forward.14} parent=5 // pred_region
        %s272 = ssub.s32 %s28, 1
        // Predicated region
        $region13: #{decoder_block_forward.14} parent=11 // pred_check
          %p273 = pneg %p127
        $region14: #{decoder_block_forward.14} parent=11 // pred_check_branch
          %275 = sbr.rel (%p273) target = $region16
        $region15: #{decoder_block_forward.14} parent=11 // pred_region
          %s277 = ssub.s32 576, 576
          %278 = vsyncadd [#allocation9], %s277
          %s279 = sshll.u32 [#allocation8], 4
          %s280 = int_to_ptr.vmem [resolvable:$true] %s279
          %285 = dma.hbm_to_vmem [thread:$0]  %s3, 576, %s280, [#allocation9], 64, 64, 4
        $region16: #{decoder_block_forward.14} parent=11 // pred_fallthru
          _
        // Predicated region
        $region17: #{decoder_block_forward.14} parent=11 // pred_check
          %p286 = pneg %p148
        $region18: #{decoder_block_forward.14} parent=11 // pred_check_branch
          %288 = sbr.rel (%p286) target = $region20
        $region19: #{decoder_block_forward.14} parent=11 // pred_region
          %s290 = ssub.s32 576, 576
          %291 = vsyncadd [#allocation9], %s290
          %s292 = sshll.u32 [#allocation10], 4
          %s293 = int_to_ptr.vmem [resolvable:$true] %s292
          %298 = dma.hbm_to_vmem [thread:$0]  %s4, 576, %s293, [#allocation9], 64, 64, 4
        $region20: #{decoder_block_forward.14} parent=11 // pred_fallthru
          _
        // Predicated region
        $region21: #{decoder_block_forward.14} parent=11 // pred_check
          %p299 = pneg %p169
        $region22: #{decoder_block_forward.14} parent=11 // pred_check_branch
          %301 = sbr.rel (%p299) target = $region24
        $region23: #{decoder_block_forward.14} parent=11 // pred_region
          %s303 = ssub.s32 576, 576
          %304 = vsyncadd [#allocation12], %s303
          %s305 = sshll.u32 [#allocation11], 4
          %s306 = int_to_ptr.vmem [resolvable:$true] %s305
          %311 = dma.hbm_to_vmem [thread:$0]  %s5, 576, %s306, [#allocation12], 64, 64, 4
        $region24: #{decoder_block_forward.14} parent=11 // pred_fallthru
          _
        // Predicated region
        $region25: #{decoder_block_forward.14} parent=11 // pred_check
          %p312 = pneg %p190
        $region26: #{decoder_block_forward.14} parent=11 // pred_check_branch
          %314 = sbr.rel (%p312) target = $region28
        $region27: #{decoder_block_forward.14} parent=11 // pred_region
          %s316 = ssub.s32 16, 16
          %317 = vsyncadd [#allocation12], %s316
          %s319 = sshll.u32 [#allocation13], 4
          %s320 = int_to_ptr.vmem [resolvable:$true] %s319
          %322 = dma.hbm_to_vmem [thread:$0]  %s6, 16, %s320, [#allocation12]
        $region28: #{decoder_block_forward.14} parent=11 // pred_fallthru
          _
      $region12: #{decoder_block_forward.14} parent=5 // pred_fallthru
        _
      %p323 = scmp.lt.s32.totalorder %s28, 2
      // Predicated region
      $region29: #{decoder_block_forward.14} parent=5 // pred_check
        %p324 = pneg %p323
      $region30: #{decoder_block_forward.14} parent=5 // pred_check_branch
        %326 = sbr.rel (%p324) target = $region32
      $region31: #{decoder_block_forward.14} parent=5 // pred_region
        // Predicated region
        $region33: #{decoder_block_forward.14} parent=31 // pred_check
          %p327 = pneg %p48
        $region34: #{decoder_block_forward.14} parent=31 // pred_check_branch
          %329 = sbr.rel (%p327) target = $region36
        $region35: #{decoder_block_forward.14} parent=31 // pred_region
          %s330 = sand.u32 %s38, 1
          %s331 = scalar_lea.sflag [#allocation3], %s330
          %s332 = sand.u32 %s38, 1
          %s333 = smul.addr %s332, 128
          %s334 = scalar_lea.vmem [#allocation2], %s333
          %s335 = smul.u32 32, %s28
          %s337 = ssub.s32 2048, 2048
          %338 = vsyncadd %s331, %s337
          %s339 = smul.addr %s335, 64
          %s340 = scalar_lea.hbm %s0, %s339
          %s341 = sshll.u32 %s334, 4
          %s342 = int_to_ptr.vmem [resolvable:$true] %s341
          %347 = dma.hbm_to_vmem [thread:$0]  %s340, 2048, %s342, %s331, 64, 64, 4
        $region36: #{decoder_block_forward.14} parent=31 // pred_fallthru
          _
        // Predicated region
        $region37: #{decoder_block_forward.14} parent=31 // pred_check
          %p348 = pneg %p74
        $region38: #{decoder_block_forward.14} parent=31 // pred_check_branch
          %350 = sbr.rel (%p348) target = $region40
        $region39: #{decoder_block_forward.14} parent=31 // pred_region
          %s351 = sand.u32 %s28, 1
          %s352 = scalar_lea.sflag [#allocation6], %s351
          %s353 = sand.u32 %s64, 1
          %s354 = smul.addr %s353, 128
          %s355 = scalar_lea.vmem [#allocation5], %s354
          %s356 = smul.u32 32, %s28
          %s358 = ssub.s32 2048, 2048
          %359 = vsyncadd %s352, %s358
          %s360 = smul.addr %s356, 64
          %s361 = scalar_lea.hbm %s1, %s360
          %s362 = sshll.u32 %s355, 4
          %s363 = int_to_ptr.vmem [resolvable:$true] %s362
          %368 = dma.hbm_to_vmem [thread:$0]  %s361, 2048, %s363, %s352, 64, 64, 4
        $region40: #{decoder_block_forward.14} parent=31 // pred_fallthru
          _
        // Predicated region
        $region41: #{decoder_block_forward.14} parent=31 // pred_check
          %p369 = pneg %p100
        $region42: #{decoder_block_forward.14} parent=31 // pred_check_branch
          %371 = sbr.rel (%p369) target = $region44
        $region43: #{decoder_block_forward.14} parent=31 // pred_region
          %s372 = sand.u32 %s28, 1
          %s373 = scalar_lea.sflag [#allocation6], %s372
          %s374 = sand.u32 %s90, 1
          %s375 = smul.addr %s374, 128
          %s376 = scalar_lea.vmem [#allocation7], %s375
          %s377 = smul.u32 32, %s28
          %s379 = ssub.s32 2048, 2048
          %380 = vsyncadd %s373, %s379
          %s381 = smul.addr %s377, 64
          %s382 = scalar_lea.hbm %s2, %s381
          %s383 = sshll.u32 %s376, 4
          %s384 = int_to_ptr.vmem [resolvable:$true] %s383
          %389 = dma.hbm_to_vmem [thread:$0]  %s382, 2048, %s384, %s373, 64, 64, 4
        $region44: #{decoder_block_forward.14} parent=31 // pred_fallthru
          _
      $region32: #{decoder_block_forward.14} parent=5 // pred_fallthru
        _
      %p390 = scmp.le.s32.totalorder 1, %s28
      %p391 = scmp.lt.s32.totalorder %s28, 3
      %p392 = pnand %p390, %p391
      %p393 = pneg %p392
      // Predicated region
      $region45: #{decoder_block_forward.14} parent=5 // pred_check
        _
      $region46: #{decoder_block_forward.14} parent=5 // pred_check_branch
        %395 = sbr.rel (%p392) target = $region48
      $region47: #{decoder_block_forward.14} parent=5 // pred_region
        %s396 = ssub.s32 %s28, 1
        %s397 = sand.u32 %s41, 1
        %s398 = scalar_lea.sflag [#allocation3], %s397
        %s399 = sand.u32 %s41, 1
        %s400 = smul.addr %s399, 128
        %s401 = scalar_lea.vmem [#allocation2], %s400
        // Predicated region
        $region49: #{decoder_block_forward.14} parent=47 // pred_check
          %p402 = pneg %p54
        $region50: #{decoder_block_forward.14} parent=47 // pred_check_branch
          %404 = sbr.rel (%p402) target = $region52
        $region51: #{decoder_block_forward.14} parent=47 // pred_region
          %405 = dma.done %s398, 2048
        $region52: #{decoder_block_forward.14} parent=47 // pred_fallthru
          _
        %s406 = sand.u32 %s33, 1
        %s407 = scalar_lea.sflag [#allocation6], %s406
        %s408 = sand.u32 %s67, 1
        %s409 = smul.addr %s408, 128
        %s410 = scalar_lea.vmem [#allocation5], %s409
        // Predicated region
        $region53: #{decoder_block_forward.14} parent=47 // pred_check
          %p411 = pneg %p80
        $region54: #{decoder_block_forward.14} parent=47 // pred_check_branch
          %413 = sbr.rel (%p411) target = $region56
        $region55: #{decoder_block_forward.14} parent=47 // pred_region
          %414 = dma.done %s407, 2048
        $region56: #{decoder_block_forward.14} parent=47 // pred_fallthru
          _
        %s415 = sand.u32 %s33, 1
        %s416 = scalar_lea.sflag [#allocation6], %s415
        %s417 = sand.u32 %s93, 1
        %s418 = smul.addr %s417, 128
        %s419 = scalar_lea.vmem [#allocation7], %s418
        // Predicated region
        $region57: #{decoder_block_forward.14} parent=47 // pred_check
          %p420 = pneg %p106
        $region58: #{decoder_block_forward.14} parent=47 // pred_check_branch
          %422 = sbr.rel (%p420) target = $region60
        $region59: #{decoder_block_forward.14} parent=47 // pred_region
          %423 = dma.done %s416, 2048
        $region60: #{decoder_block_forward.14} parent=47 // pred_fallthru
          _
        // Predicated region
        $region61: #{decoder_block_forward.14} parent=47 // pred_check
          %p424 = pneg %p127
        $region62: #{decoder_block_forward.14} parent=47 // pred_check_branch
          %426 = sbr.rel (%p424) target = $region64
        $region63: #{decoder_block_forward.14} parent=47 // pred_region
          %427 = dma.done [#allocation9], 576
        $region64: #{decoder_block_forward.14} parent=47 // pred_fallthru
          _
        // Predicated region
        $region65: #{decoder_block_forward.14} parent=47 // pred_check
          %p428 = pneg %p148
        $region66: #{decoder_block_forward.14} parent=47 // pred_check_branch
          %430 = sbr.rel (%p428) target = $region68
        $region67: #{decoder_block_forward.14} parent=47 // pred_region
          %431 = dma.done [#allocation9], 576
        $region68: #{decoder_block_forward.14} parent=47 // pred_fallthru
          _
        // Predicated region
        $region69: #{decoder_block_forward.14} parent=47 // pred_check
          %p432 = pneg %p169
        $region70: #{decoder_block_forward.14} parent=47 // pred_check_branch
          %434 = sbr.rel (%p432) target = $region72
        $region71: #{decoder_block_forward.14} parent=47 // pred_region
          %435 = dma.done [#allocation12], 576
        $region72: #{decoder_block_forward.14} parent=47 // pred_fallthru
          _
        // Predicated region
        $region73: #{decoder_block_forward.14} parent=47 // pred_check
          %p436 = pneg %p190
        $region74: #{decoder_block_forward.14} parent=47 // pred_check_branch
          %438 = sbr.rel (%p436) target = $region76
        $region75: #{decoder_block_forward.14} parent=47 // pred_region
          %439 = dma.done [#allocation12], 16
        $region76: #{decoder_block_forward.14} parent=47 // pred_fallthru
          _
        %s440 = sand.u32 %s41, 1
        %s441 = scalar_lea.sflag [#allocation3], %s440
        %s442 = sand.u32 %s41, 1
        %s443 = smul.addr %s442, 128
        %s444 = scalar_lea.vmem [#allocation2], %s443
        %p445 = pneg %p54
        %p446 = pneg %p51
        %s447 = sand.u32 %s33, 1
        %s448 = scalar_lea.sflag [#allocation6], %s447
        %s449 = sand.u32 %s67, 1
        %s450 = smul.addr %s449, 128
        %s451 = scalar_lea.vmem [#allocation5], %s450
        %p452 = pneg %p80
        %p453 = pneg %p77
        %s454 = sand.u32 %s33, 1
        %s455 = scalar_lea.sflag [#allocation6], %s454
        %s456 = sand.u32 %s93, 1
        %s457 = smul.addr %s456, 128
        %s458 = scalar_lea.vmem [#allocation7], %s457
        %p459 = pneg %p106
        %p460 = pneg %p103
        %p461 = pneg %p127
        %p462 = pneg %p124
        %p463 = pneg %p148
        %p464 = pneg %p145
        %p465 = pneg %p169
        %p466 = pneg %p166
        %p467 = pneg %p190
        %p468 = pneg %p187
        %p469 = pneg %p216
        %p470 = pneg %p213
        %s471 = sand.u32 %s203, 1
        %s472 = scalar_lea.sflag [#allocation4], %s471
        %s473 = sand.u32 %s203, 1
        %s474 = smul.addr %s473, 256
        %s475 = scalar_lea.vmem [#allocation14], %s474
        %p476 = pneg %p237
        %p477 = pneg %p234
        %p478 = pneg %p258
        %p479 = pneg %p255
        %s480 = smul.u32 32, %s33
        %s481 = smul.u32 32, %s33
        %s482 = smul.u32 32, %s33
        %s483 = smul.u32 32, %s33
        %v485 = vld [vmem:[%s401] sm:$0xf]
        %v486 = vld [vmem:[%s401 + $0x4] sm:$0xf]
        %v487 = vld [vmem:[%s401 + $0x8] sm:$0xf]
        %v488 = vld [vmem:[%s401 + $0xc] sm:$0xf]
        %v489 = vld [vmem:[%s401 + $0x10] sm:$0xf]
        %v490 = vld [vmem:[%s401 + $0x14] sm:$0xf]
        %v491 = vld [vmem:[%s401 + $0x18] sm:$0xf]
        %v492 = vld [vmem:[%s401 + $0x1c] sm:$0xf]
        %v493 = vld [vmem:[%s401 + $0x20] sm:$0xf]
        %v494 = vld [vmem:[%s401 + $0x24] sm:$0xf]
        %v495 = vld [vmem:[%s401 + $0x28] sm:$0xf]
        %v496 = vld [vmem:[%s401 + $0x2c] sm:$0xf]
        %v497 = vld [vmem:[%s401 + $0x30] sm:$0xf]
        %v498 = vld [vmem:[%s401 + $0x34] sm:$0xf]
        %v499 = vld [vmem:[%s401 + $0x38] sm:$0xf]
        %v500 = vld [vmem:[%s401 + $0x3c] sm:$0xf]
        %v501 = vld [vmem:[%s401 + $0x40] sm:$0xf]
        %v502 = vld [vmem:[%s401 + $0x44] sm:$0xf]
        %v503 = vld [vmem:[%s401 + $0x48] sm:$0xf]
        %v504 = vld [vmem:[%s401 + $0x4c] sm:$0xf]
        %v505 = vld [vmem:[%s401 + $0x50] sm:$0xf]
        %v506 = vld [vmem:[%s401 + $0x54] sm:$0xf]
        %v507 = vld [vmem:[%s401 + $0x58] sm:$0xf]
        %v508 = vld [vmem:[%s401 + $0x5c] sm:$0xf]
        %v509 = vld [vmem:[%s401 + $0x60] sm:$0xf]
        %v510 = vld [vmem:[%s401 + $0x64] sm:$0xf]
        %v511 = vld [vmem:[%s401 + $0x68] sm:$0xf]
        %v512 = vld [vmem:[%s401 + $0x6c] sm:$0xf]
        %v513 = vld [vmem:[%s401 + $0x70] sm:$0xf]
        %v514 = vld [vmem:[%s401 + $0x74] sm:$0xf]
        %v515 = vld [vmem:[%s401 + $0x78] sm:$0xf]
        %v516 = vld [vmem:[%s401 + $0x7c] sm:$0xf]
        %v517 = vld [vmem:[#allocation8] sm:$0xf]
        %v518 = vld [vmem:[#allocation8 + $0x4] sm:$0xf]
        %v519 = vld [vmem:[#allocation8 + $0x8] sm:$0xf]
        %v520 = vld [vmem:[#allocation8 + $0xc] sm:$0xf]
        %v521 = vld [vmem:[#allocation8 + $0x10] sm:$0xf]
        %v522 = vld [vmem:[#allocation8 + $0x14] sm:$0xf]
        %v523 = vld [vmem:[#allocation8 + $0x18] sm:$0xf]
        %v524 = vld [vmem:[#allocation8 + $0x1c] sm:$0xf]
        %v525 = vld [vmem:[#allocation8 + $0x20] sm:$0xf]
        %v526 = vld [vmem:[%s410] sm:$0xf]
        %v527 = vld [vmem:[%s410 + $0x4] sm:$0xf]
        %v528 = vld [vmem:[%s410 + $0x8] sm:$0xf]
        %v529 = vld [vmem:[%s410 + $0xc] sm:$0xf]
        %v530 = vld [vmem:[%s410 + $0x10] sm:$0xf]
        %v531 = vld [vmem:[%s410 + $0x14] sm:$0xf]
        %v532 = vld [vmem:[%s410 + $0x18] sm:$0xf]
        %v533 = vld [vmem:[%s410 + $0x1c] sm:$0xf]
        %v534 = vld [vmem:[%s410 + $0x20] sm:$0xf]
        %v535 = vld [vmem:[%s410 + $0x24] sm:$0xf]
        %v536 = vld [vmem:[%s410 + $0x28] sm:$0xf]
        %v537 = vld [vmem:[%s410 + $0x2c] sm:$0xf]
        %v538 = vld [vmem:[%s410 + $0x30] sm:$0xf]
        %v539 = vld [vmem:[%s410 + $0x34] sm:$0xf]
        %v540 = vld [vmem:[%s410 + $0x38] sm:$0xf]
        %v541 = vld [vmem:[%s410 + $0x3c] sm:$0xf]
        %v542 = vld [vmem:[%s410 + $0x40] sm:$0xf]
        %v543 = vld [vmem:[%s410 + $0x44] sm:$0xf]
        %v544 = vld [vmem:[%s410 + $0x48] sm:$0xf]
        %v545 = vld [vmem:[%s410 + $0x4c] sm:$0xf]
        %v546 = vld [vmem:[%s410 + $0x50] sm:$0xf]
        %v547 = vld [vmem:[%s410 + $0x54] sm:$0xf]
        %v548 = vld [vmem:[%s410 + $0x58] sm:$0xf]
        %v549 = vld [vmem:[%s410 + $0x5c] sm:$0xf]
        %v550 = vld [vmem:[%s410 + $0x60] sm:$0xf]
        %v551 = vld [vmem:[%s410 + $0x64] sm:$0xf]
        %v552 = vld [vmem:[%s410 + $0x68] sm:$0xf]
        %v553 = vld [vmem:[%s410 + $0x6c] sm:$0xf]
        %v554 = vld [vmem:[%s410 + $0x70] sm:$0xf]
        %v555 = vld [vmem:[%s410 + $0x74] sm:$0xf]
        %v556 = vld [vmem:[%s410 + $0x78] sm:$0xf]
        %v557 = vld [vmem:[%s410 + $0x7c] sm:$0xf]
        %v558 = vld [vmem:[#allocation10] sm:$0xf]
        %v559 = vld [vmem:[#allocation10 + $0x4] sm:$0xf]
        %v560 = vld [vmem:[#allocation10 + $0x8] sm:$0xf]
        %v561 = vld [vmem:[#allocation10 + $0xc] sm:$0xf]
        %v562 = vld [vmem:[#allocation10 + $0x10] sm:$0xf]
        %v563 = vld [vmem:[#allocation10 + $0x14] sm:$0xf]
        %v564 = vld [vmem:[#allocation10 + $0x18] sm:$0xf]
        %v565 = vld [vmem:[#allocation10 + $0x1c] sm:$0xf]
        %v566 = vld [vmem:[#allocation10 + $0x20] sm:$0xf]
        %v599 = vunpack.c.l.b16 %v526
        %v600 = vunpack.c.l.b16 %v527
        %v601 = vunpack.c.l.b16 %v528
        %v602 = vunpack.c.l.b16 %v529
        %v603 = vunpack.c.l.b16 %v530
        %v604 = vunpack.c.l.b16 %v531
        %v605 = vunpack.c.l.b16 %v532
        %v606 = vunpack.c.l.b16 %v533
        %v607 = vunpack.c.l.b16 %v534
        %v608 = vunpack.c.l.b16 %v535
        %v609 = vunpack.c.l.b16 %v536
        %v610 = vunpack.c.l.b16 %v537
        %v611 = vunpack.c.l.b16 %v538
        %v612 = vunpack.c.l.b16 %v539
        %v613 = vunpack.c.l.b16 %v540
        %v614 = vunpack.c.l.b16 %v541
        %v615 = vunpack.c.l.b16 %v542
        %v616 = vunpack.c.l.b16 %v543
        %v617 = vunpack.c.l.b16 %v544
        %v618 = vunpack.c.l.b16 %v545
        %v619 = vunpack.c.l.b16 %v546
        %v620 = vunpack.c.l.b16 %v547
        %v621 = vunpack.c.l.b16 %v548
        %v622 = vunpack.c.l.b16 %v549
        %v623 = vunpack.c.l.b16 %v550
        %v624 = vunpack.c.l.b16 %v551
        %v625 = vunpack.c.l.b16 %v552
        %v626 = vunpack.c.l.b16 %v553
        %v627 = vunpack.c.l.b16 %v554
        %v628 = vunpack.c.l.b16 %v555
        %v629 = vunpack.c.l.b16 %v556
        %v630 = vunpack.c.l.b16 %v557
        %v631 = vpack.c.b16 %v600, %v599
        %v632 = vpack.c.b16 %v602, %v601
        %v633 = vpack.c.b16 %v604, %v603
        %v634 = vpack.c.b16 %v606, %v605
        %v635 = vpack.c.b16 %v608, %v607
        %v636 = vpack.c.b16 %v610, %v609
        %v637 = vpack.c.b16 %v612, %v611
        %v638 = vpack.c.b16 %v614, %v613
        %v639 = vpack.c.b16 %v616, %v615
        %v640 = vpack.c.b16 %v618, %v617
        %v641 = vpack.c.b16 %v620, %v619
        %v642 = vpack.c.b16 %v622, %v621
        %v643 = vpack.c.b16 %v624, %v623
        %v644 = vpack.c.b16 %v626, %v625
        %v645 = vpack.c.b16 %v628, %v627
        %v646 = vpack.c.b16 %v630, %v629
        %v656 = vunpack.c.l.b16 %v558
        %v657 = vunpack.c.l.b16 %v559
        %v658 = vunpack.c.l.b16 %v560
        %v659 = vunpack.c.l.b16 %v561
        %v660 = vunpack.c.l.b16 %v562
        %v661 = vunpack.c.l.b16 %v563
        %v662 = vunpack.c.l.b16 %v564
        %v663 = vunpack.c.l.b16 %v565
        %v664 = vunpack.c.l.b16 %v566
        %v665 = vpack.c.b16 %v657, %v656
        %v666 = vpack.c.b16 %v659, %v658
        %v667 = vpack.c.b16 %v661, %v660
        %v668 = vpack.c.b16 %v663, %v662
        %v669 = vpack.c.b16 %v664, %v664
        %vm674 = vcmask 588800
        %v676 = vsel %vm674, %v631, 0
        %v679 = vsel %vm674, %v632, 0
        %v682 = vsel %vm674, %v633, 0
        %v685 = vsel %vm674, %v634, 0
        %v688 = vsel %vm674, %v635, 0
        %v691 = vsel %vm674, %v636, 0
        %v694 = vsel %vm674, %v637, 0
        %v697 = vsel %vm674, %v638, 0
        %v700 = vsel %vm674, %v639, 0
        %v703 = vsel %vm674, %v640, 0
        %v706 = vsel %vm674, %v641, 0
        %v709 = vsel %vm674, %v642, 0
        %v712 = vsel %vm674, %v643, 0
        %v715 = vsel %vm674, %v644, 0
        %v718 = vsel %vm674, %v645, 0
        %v721 = vsel %vm674, %v646, 0
        %vm723 = vcmask 1043456
        %v725 = vsel %vm723, %v669, 0
        %727 = vmatprep.subr.bf16.mxu0 0
        %728 = vmatpush1.bf16.msra.mxu0 %v665
        %729 = vmatprep.subr.bf16.mxu0 0
        %730 = vmatpush1.bf16.msra.mxu0 %v666
        %731 = vmatprep.subr.bf16.mxu0 0
        %732 = vmatpush1.bf16.msra.mxu0 %v667
        %733 = vmatprep.subr.bf16.mxu0 0
        %734 = vmatpush1.bf16.msra.mxu0 %v668
        %735 = vmatprep.subr.bf16.mxu0 0
        %736 = vmatpush1.bf16.msra.mxu0 %v725
        %737 = vmatprep.subr.bf16.mxu0 0
        %738 = vmatpush1.bf16.msra.mxu0 0
        %739 = vmatprep.subr.bf16.mxu0 0
        %740 = vmatpush1.bf16.msra.mxu0 0
        %741 = vmatprep.subr.bf16.mxu0 0
        %742 = vmatpush1.bf16.msra.mxu0 0
        %743 = vmatprep.subr.bf16.mxu0 0
        %744 = vmatpush1.bf16.msra.mxu0 0
        %745 = vmatprep.subr.bf16.mxu0 0
        %746 = vmatpush1.bf16.msra.mxu0 0
        %747 = vmatprep.subr.bf16.mxu0 0
        %748 = vmatpush1.bf16.msra.mxu0 0
        %749 = vmatprep.subr.bf16.mxu0 0
        %750 = vmatpush1.bf16.msra.mxu0 0
        %751 = vmatprep.subr.bf16.mxu0 0
        %752 = vmatpush1.bf16.msra.mxu0 0
        %753 = vmatprep.subr.bf16.mxu0 0
        %754 = vmatpush1.bf16.msra.mxu0 0
        %755 = vmatprep.subr.bf16.mxu0 0
        %756 = vmatpush1.bf16.msra.mxu0 0
        %757 = vmatprep.subr.bf16.mxu0 0
        %758 = vmatpush1.bf16.msra.mxu0 0
        %759 = vmatprep.mubr.bf16.mxu0 0
        %760 = vmatmul.mubr.bf16.gmra.mrb[0].mxu0 %v676
        %v761 = vpop.f32.mrb[0].mxu0
        %v762 = vadd.f32 0.0, %v761
        %v763 = vpop.f32.mrb[0].mxu0
        %v764 = vpop.f32.mrb[0].mxu0
        %v765 = vadd.f32 0.0, %v764
        %v766 = vpop.f32.mrb[0].mxu0
        %767 = vmatprep.mubr.bf16.mxu0 0
        %768 = vmatmul.mubr.bf16.gmra.mrb[0].mxu0 %v679
        %v769 = vpop.f32.mrb[0].mxu0
        %v770 = vadd.f32 0.0, %v769
        %v771 = vpop.f32.mrb[0].mxu0
        %v772 = vpop.f32.mrb[0].mxu0
        %v773 = vadd.f32 0.0, %v772
        %v774 = vpop.f32.mrb[0].mxu0
        %775 = vmatprep.mubr.bf16.mxu0 0
        %776 = vmatmul.mubr.bf16.gmra.mrb[0].mxu0 %v682
        %v777 = vpop.f32.mrb[0].mxu0
        %v778 = vadd.f32 0.0, %v777
        %v779 = vpop.f32.mrb[0].mxu0
        %v780 = vpop.f32.mrb[0].mxu0
        %v781 = vadd.f32 0.0, %v780
        %v782 = vpop.f32.mrb[0].mxu0
        %783 = vmatprep.mubr.bf16.mxu0 0
        %784 = vmatmul.mubr.bf16.gmra.mrb[0].mxu0 %v685
        %v785 = vpop.f32.mrb[0].mxu0
        %v786 = vadd.f32 0.0, %v785
        %v787 = vpop.f32.mrb[0].mxu0
        %v788 = vpop.f32.mrb[0].mxu0
        %v789 = vadd.f32 0.0, %v788
        %v790 = vpop.f32.mrb[0].mxu0
        %791 = vmatprep.mubr.bf16.mxu0 0
        %792 = vmatmul.mubr.bf16.gmra.mrb[0].mxu0 %v688
        %v793 = vpop.f32.mrb[0].mxu0
        %v794 = vadd.f32 0.0, %v793
        %v795 = vpop.f32.mrb[0].mxu0
        %v796 = vpop.f32.mrb[0].mxu0
        %v797 = vadd.f32 0.0, %v796
        %v798 = vpop.f32.mrb[0].mxu0
        %799 = vmatprep.mubr.bf16.mxu0 0
        %800 = vmatmul.mubr.bf16.gmra.mrb[0].mxu0 %v691
        %v801 = vpop.f32.mrb[0].mxu0
        %v802 = vadd.f32 0.0, %v801
        %v803 = vpop.f32.mrb[0].mxu0
        %v804 = vpop.f32.mrb[0].mxu0
        %v805 = vadd.f32 0.0, %v804
        %v806 = vpop.f32.mrb[0].mxu0
        %807 = vmatprep.mubr.bf16.mxu0 0
        %808 = vmatmul.mubr.bf16.gmra.mrb[0].mxu0 %v694
        %v809 = vpop.f32.mrb[0].mxu0
        %v810 = vadd.f32 0.0, %v809
        %v811 = vpop.f32.mrb[0].mxu0
        %v812 = vpop.f32.mrb[0].mxu0
        %v813 = vadd.f32 0.0, %v812
        %v814 = vpop.f32.mrb[0].mxu0
        %815 = vmatprep.mubr.bf16.mxu0 0
        %816 = vmatmul.mubr.bf16.gmra.mrb[0].mxu0 %v697
        %v817 = vpop.f32.mrb[0].mxu0
        %v818 = vadd.f32 0.0, %v817
        %v819 = vpop.f32.mrb[0].mxu0
        %v820 = vpop.f32.mrb[0].mxu0
        %v821 = vadd.f32 0.0, %v820
        %v822 = vpop.f32.mrb[0].mxu0
        %823 = vmatprep.mubr.bf16.mxu0 0
        %824 = vmatmul.mubr.bf16.gmra.mrb[0].mxu0 %v700
        %v825 = vpop.f32.mrb[0].mxu0
        %v826 = vadd.f32 0.0, %v825
        %v827 = vpop.f32.mrb[0].mxu0
        %v828 = vpop.f32.mrb[0].mxu0
        %v829 = vadd.f32 0.0, %v828
        %v830 = vpop.f32.mrb[0].mxu0
        %831 = vmatprep.mubr.bf16.mxu0 0
        %832 = vmatmul.mubr.bf16.gmra.mrb[0].mxu0 %v703
        %v833 = vpop.f32.mrb[0].mxu0
        %v834 = vadd.f32 0.0, %v833
        %v835 = vpop.f32.mrb[0].mxu0
        %v836 = vpop.f32.mrb[0].mxu0
        %v837 = vadd.f32 0.0, %v836
        %v838 = vpop.f32.mrb[0].mxu0
        %839 = vmatprep.mubr.bf16.mxu0 0
        %840 = vmatmul.mubr.bf16.gmra.mrb[0].mxu0 %v706
        %v841 = vpop.f32.mrb[0].mxu0
        %v842 = vadd.f32 0.0, %v841
        %v843 = vpop.f32.mrb[0].mxu0
        %v844 = vpop.f32.mrb[0].mxu0
        %v845 = vadd.f32 0.0, %v844
        %v846 = vpop.f32.mrb[0].mxu0
        %847 = vmatprep.mubr.bf16.mxu0 0
        %848 = vmatmul.mubr.bf16.gmra.mrb[0].mxu0 %v709
        %v849 = vpop.f32.mrb[0].mxu0
        %v850 = vadd.f32 0.0, %v849
        %v851 = vpop.f32.mrb[0].mxu0
        %v852 = vpop.f32.mrb[0].mxu0
        %v853 = vadd.f32 0.0, %v852
        %v854 = vpop.f32.mrb[0].mxu0
        %855 = vmatprep.mubr.bf16.mxu0 0
        %856 = vmatmul.mubr.bf16.gmra.mrb[0].mxu0 %v712
        %v857 = vpop.f32.mrb[0].mxu0
        %v858 = vadd.f32 0.0, %v857
        %v859 = vpop.f32.mrb[0].mxu0
        %v860 = vpop.f32.mrb[0].mxu0
        %v861 = vadd.f32 0.0, %v860
        %v862 = vpop.f32.mrb[0].mxu0
        %863 = vmatprep.mubr.bf16.mxu0 0
        %864 = vmatmul.mubr.bf16.gmra.mrb[0].mxu0 %v715
        %v865 = vpop.f32.mrb[0].mxu0
        %v866 = vadd.f32 0.0, %v865
        %v867 = vpop.f32.mrb[0].mxu0
        %v868 = vpop.f32.mrb[0].mxu0
        %v869 = vadd.f32 0.0, %v868
        %v870 = vpop.f32.mrb[0].mxu0
        %871 = vmatprep.mubr.bf16.mxu0 0
        %872 = vmatmul.mubr.bf16.gmra.mrb[0].mxu0 %v718
        %v873 = vpop.f32.mrb[0].mxu0
        %v874 = vadd.f32 0.0, %v873
        %v875 = vpop.f32.mrb[0].mxu0
        %v876 = vpop.f32.mrb[0].mxu0
        %v877 = vadd.f32 0.0, %v876
        %v878 = vpop.f32.mrb[0].mxu0
        %879 = vmatprep.mubr.bf16.mxu0 0
        %880 = vmatmul.mubr.bf16.gmra.mrb[0].mxu0 %v721
        %v881 = vpop.f32.mrb[0].mxu0
        %v882 = vadd.f32 0.0, %v881
        %v883 = vpop.f32.mrb[0].mxu0
        %v884 = vpop.f32.mrb[0].mxu0
        %v885 = vadd.f32 0.0, %v884
        %v886 = vpop.f32.mrb[0].mxu0
        %887 = vdwg.mxu0
        %v920 = vunpack.c.l.b16 %v485
        %v921 = vunpack.c.l.b16 %v486
        %v922 = vunpack.c.l.b16 %v487
        %v923 = vunpack.c.l.b16 %v488
        %v924 = vunpack.c.l.b16 %v489
        %v925 = vunpack.c.l.b16 %v490
        %v926 = vunpack.c.l.b16 %v491
        %v927 = vunpack.c.l.b16 %v492
        %v928 = vunpack.c.l.b16 %v493
        %v929 = vunpack.c.l.b16 %v494
        %v930 = vunpack.c.l.b16 %v495
        %v931 = vunpack.c.l.b16 %v496
        %v932 = vunpack.c.l.b16 %v497
        %v933 = vunpack.c.l.b16 %v498
        %v934 = vunpack.c.l.b16 %v499
        %v935 = vunpack.c.l.b16 %v500
        %v936 = vunpack.c.l.b16 %v501
        %v937 = vunpack.c.l.b16 %v502
        %v938 = vunpack.c.l.b16 %v503
        %v939 = vunpack.c.l.b16 %v504
        %v940 = vunpack.c.l.b16 %v505
        %v941 = vunpack.c.l.b16 %v506
        %v942 = vunpack.c.l.b16 %v507
        %v943 = vunpack.c.l.b16 %v508
        %v944 = vunpack.c.l.b16 %v509
        %v945 = vunpack.c.l.b16 %v510
        %v946 = vunpack.c.l.b16 %v511
        %v947 = vunpack.c.l.b16 %v512
        %v948 = vunpack.c.l.b16 %v513
        %v949 = vunpack.c.l.b16 %v514
        %v950 = vunpack.c.l.b16 %v515
        %v951 = vunpack.c.l.b16 %v516
        %v952 = vpack.c.b16 %v921, %v920
        %v953 = vpack.c.b16 %v923, %v922
        %v954 = vpack.c.b16 %v925, %v924
        %v955 = vpack.c.b16 %v927, %v926
        %v956 = vpack.c.b16 %v929, %v928
        %v957 = vpack.c.b16 %v931, %v930
        %v958 = vpack.c.b16 %v933, %v932
        %v959 = vpack.c.b16 %v935, %v934
        %v960 = vpack.c.b16 %v937, %v936
        %v961 = vpack.c.b16 %v939, %v938
        %v962 = vpack.c.b16 %v941, %v940
        %v963 = vpack.c.b16 %v943, %v942
        %v964 = vpack.c.b16 %v945, %v944
        %v965 = vpack.c.b16 %v947, %v946
        %v966 = vpack.c.b16 %v949, %v948
        %v967 = vpack.c.b16 %v951, %v950
        %v977 = vunpack.c.l.b16 %v517
        %v978 = vunpack.c.l.b16 %v518
        %v979 = vunpack.c.l.b16 %v519
        %v980 = vunpack.c.l.b16 %v520
        %v981 = vunpack.c.l.b16 %v521
        %v982 = vunpack.c.l.b16 %v522
        %v983 = vunpack.c.l.b16 %v523
        %v984 = vunpack.c.l.b16 %v524
        %v985 = vunpack.c.l.b16 %v525
        %v986 = vpack.c.b16 %v978, %v977
        %v987 = vpack.c.b16 %v980, %v979
        %v988 = vpack.c.b16 %v982, %v981
        %v989 = vpack.c.b16 %v984, %v983
        %v990 = vpack.c.b16 %v985, %v985
        %v996 = vsel %vm674, %v952, 0
        %v999 = vsel %vm674, %v953, 0
        %v1002 = vsel %vm674, %v954, 0
        %v1005 = vsel %vm674, %v955, 0
        %v1008 = vsel %vm674, %v956, 0
        %v1011 = vsel %vm674, %v957, 0
        %v1014 = vsel %vm674, %v958, 0
        %v1017 = vsel %vm674, %v959, 0
        %v1020 = vsel %vm674, %v960, 0
        %v1023 = vsel %vm674, %v961, 0
        %v1026 = vsel %vm674, %v962, 0
        %v1029 = vsel %vm674, %v963, 0
        %v1032 = vsel %vm674, %v964, 0
        %v1035 = vsel %vm674, %v965, 0
        %v1038 = vsel %vm674, %v966, 0
        %v1041 = vsel %vm674, %v967, 0
        %v1044 = vsel %vm723, %v990, 0
        %1046 = vmatprep.subr.bf16.mxu0 0
        %1047 = vmatpush1.bf16.msra.mxu0 %v986
        %1048 = vmatprep.subr.bf16.mxu0 0
        %1049 = vmatpush1.bf16.msra.mxu0 %v987
        %1050 = vmatprep.subr.bf16.mxu0 0
        %1051 = vmatpush1.bf16.msra.mxu0 %v988
        %1052 = vmatprep.subr.bf16.mxu0 0
        %1053 = vmatpush1.bf16.msra.mxu0 %v989
        %1054 = vmatprep.subr.bf16.mxu0 0
        %1055 = vmatpush1.bf16.msra.mxu0 %v1044
        %1056 = vmatprep.subr.bf16.mxu0 0
        %1057 = vmatpush1.bf16.msra.mxu0 0
        %1058 = vmatprep.subr.bf16.mxu0 0
        %1059 = vmatpush1.bf16.msra.mxu0 0
        %1060 = vmatprep.subr.bf16.mxu0 0
        %1061 = vmatpush1.bf16.msra.mxu0 0
        %1062 = vmatprep.subr.bf16.mxu0 0
        %1063 = vmatpush1.bf16.msra.mxu0 0
        %1064 = vmatprep.subr.bf16.mxu0 0
        %1065 = vmatpush1.bf16.msra.mxu0 0
        %1066 = vmatprep.subr.bf16.mxu0 0
        %1067 = vmatpush1.bf16.msra.mxu0 0
        %1068 = vmatprep.subr.bf16.mxu0 0
        %1069 = vmatpush1.bf16.msra.mxu0 0
        %1070 = vmatprep.subr.bf16.mxu0 0
        %1071 = vmatpush1.bf16.msra.mxu0 0
        %1072 = vmatprep.subr.bf16.mxu0 0
        %1073 = vmatpush1.bf16.msra.mxu0 0
        %1074 = vmatprep.subr.bf16.mxu0 0
        %1075 = vmatpush1.bf16.msra.mxu0 0
        %1076 = vmatprep.subr.bf16.mxu0 0
        %1077 = vmatpush1.bf16.msra.mxu0 0
        %1078 = vmatprep.mubr.bf16.mxu0 0
        %1079 = vmatmul.mubr.bf16.gmra.mrb[0].mxu0 %v996
        %v1080 = vpop.f32.mrb[0].mxu0
        %v1081 = vadd.f32 %v762, %v1080
        %v1082 = vpop.f32.mrb[0].mxu0
        %v1083 = vpop.f32.mrb[0].mxu0
        %v1084 = vadd.f32 %v765, %v1083
        %v1085 = vpop.f32.mrb[0].mxu0
        %1086 = vmatprep.mubr.bf16.mxu0 0
        %1087 = vmatmul.mubr.bf16.gmra.mrb[0].mxu0 %v999
        %v1088 = vpop.f32.mrb[0].mxu0
        %v1089 = vadd.f32 %v770, %v1088
        %v1090 = vpop.f32.mrb[0].mxu0
        %v1091 = vpop.f32.mrb[0].mxu0
        %v1092 = vadd.f32 %v773, %v1091
        %v1093 = vpop.f32.mrb[0].mxu0
        %1094 = vmatprep.mubr.bf16.mxu0 0
        %1095 = vmatmul.mubr.bf16.gmra.mrb[0].mxu0 %v1002
        %v1096 = vpop.f32.mrb[0].mxu0
        %v1097 = vadd.f32 %v778, %v1096
        %v1098 = vpop.f32.mrb[0].mxu0
        %v1099 = vpop.f32.mrb[0].mxu0
        %v1100 = vadd.f32 %v781, %v1099
        %v1101 = vpop.f32.mrb[0].mxu0
        %1102 = vmatprep.mubr.bf16.mxu0 0
        %1103 = vmatmul.mubr.bf16.gmra.mrb[0].mxu0 %v1005
        %v1104 = vpop.f32.mrb[0].mxu0
        %v1105 = vadd.f32 %v786, %v1104
        %v1106 = vpop.f32.mrb[0].mxu0
        %v1107 = vpop.f32.mrb[0].mxu0
        %v1108 = vadd.f32 %v789, %v1107
        %v1109 = vpop.f32.mrb[0].mxu0
        %1110 = vmatprep.mubr.bf16.mxu0 0
        %1111 = vmatmul.mubr.bf16.gmra.mrb[0].mxu0 %v1008
        %v1112 = vpop.f32.mrb[0].mxu0
        %v1113 = vadd.f32 %v794, %v1112
        %v1114 = vpop.f32.mrb[0].mxu0
        %v1115 = vpop.f32.mrb[0].mxu0
        %v1116 = vadd.f32 %v797, %v1115
        %v1117 = vpop.f32.mrb[0].mxu0
        %1118 = vmatprep.mubr.bf16.mxu0 0
        %1119 = vmatmul.mubr.bf16.gmra.mrb[0].mxu0 %v1011
        %v1120 = vpop.f32.mrb[0].mxu0
        %v1121 = vadd.f32 %v802, %v1120
        %v1122 = vpop.f32.mrb[0].mxu0
        %v1123 = vpop.f32.mrb[0].mxu0
        %v1124 = vadd.f32 %v805, %v1123
        %v1125 = vpop.f32.mrb[0].mxu0
        %1126 = vmatprep.mubr.bf16.mxu0 0
        %1127 = vmatmul.mubr.bf16.gmra.mrb[0].mxu0 %v1014
        %v1128 = vpop.f32.mrb[0].mxu0
        %v1129 = vadd.f32 %v810, %v1128
        %v1130 = vpop.f32.mrb[0].mxu0
        %v1131 = vpop.f32.mrb[0].mxu0
        %v1132 = vadd.f32 %v813, %v1131
        %v1133 = vpop.f32.mrb[0].mxu0
        %1134 = vmatprep.mubr.bf16.mxu0 0
        %1135 = vmatmul.mubr.bf16.gmra.mrb[0].mxu0 %v1017
        %v1136 = vpop.f32.mrb[0].mxu0
        %v1137 = vadd.f32 %v818, %v1136
        %v1138 = vpop.f32.mrb[0].mxu0
        %v1139 = vpop.f32.mrb[0].mxu0
        %v1140 = vadd.f32 %v821, %v1139
        %v1141 = vpop.f32.mrb[0].mxu0
        %1142 = vmatprep.mubr.bf16.mxu0 0
        %1143 = vmatmul.mubr.bf16.gmra.mrb[0].mxu0 %v1020
        %v1144 = vpop.f32.mrb[0].mxu0
        %v1145 = vadd.f32 %v826, %v1144
        %v1146 = vpop.f32.mrb[0].mxu0
        %v1147 = vpop.f32.mrb[0].mxu0
        %v1148 = vadd.f32 %v829, %v1147
        %v1149 = vpop.f32.mrb[0].mxu0
        %1150 = vmatprep.mubr.bf16.mxu0 0
        %1151 = vmatmul.mubr.bf16.gmra.mrb[0].mxu0 %v1023
        %v1152 = vpop.f32.mrb[0].mxu0
        %v1153 = vadd.f32 %v834, %v1152
        %v1154 = vpop.f32.mrb[0].mxu0
        %v1155 = vpop.f32.mrb[0].mxu0
        %v1156 = vadd.f32 %v837, %v1155
        %v1157 = vpop.f32.mrb[0].mxu0
        %1158 = vmatprep.mubr.bf16.mxu0 0
        %1159 = vmatmul.mubr.bf16.gmra.mrb[0].mxu0 %v1026
        %v1160 = vpop.f32.mrb[0].mxu0
        %v1161 = vadd.f32 %v842, %v1160
        %v1162 = vpop.f32.mrb[0].mxu0
        %v1163 = vpop.f32.mrb[0].mxu0
        %v1164 = vadd.f32 %v845, %v1163
        %v1165 = vpop.f32.mrb[0].mxu0
        %1166 = vmatprep.mubr.bf16.mxu0 0
        %1167 = vmatmul.mubr.bf16.gmra.mrb[0].mxu0 %v1029
        %v1168 = vpop.f32.mrb[0].mxu0
        %v1169 = vadd.f32 %v850, %v1168
        %v1170 = vpop.f32.mrb[0].mxu0
        %v1171 = vpop.f32.mrb[0].mxu0
        %v1172 = vadd.f32 %v853, %v1171
        %v1173 = vpop.f32.mrb[0].mxu0
        %1174 = vmatprep.mubr.bf16.mxu0 0
        %1175 = vmatmul.mubr.bf16.gmra.mrb[0].mxu0 %v1032
        %v1176 = vpop.f32.mrb[0].mxu0
        %v1177 = vadd.f32 %v858, %v1176
        %v1178 = vpop.f32.mrb[0].mxu0
        %v1179 = vpop.f32.mrb[0].mxu0
        %v1180 = vadd.f32 %v861, %v1179
        %v1181 = vpop.f32.mrb[0].mxu0
        %1182 = vmatprep.mubr.bf16.mxu0 0
        %1183 = vmatmul.mubr.bf16.gmra.mrb[0].mxu0 %v1035
        %v1184 = vpop.f32.mrb[0].mxu0
        %v1185 = vadd.f32 %v866, %v1184
        %v1186 = vpop.f32.mrb[0].mxu0
        %v1187 = vpop.f32.mrb[0].mxu0
        %v1188 = vadd.f32 %v869, %v1187
        %v1189 = vpop.f32.mrb[0].mxu0
        %1190 = vmatprep.mubr.bf16.mxu0 0
        %1191 = vmatmul.mubr.bf16.gmra.mrb[0].mxu0 %v1038
        %v1192 = vpop.f32.mrb[0].mxu0
        %v1193 = vadd.f32 %v874, %v1192
        %v1194 = vpop.f32.mrb[0].mxu0
        %v1195 = vpop.f32.mrb[0].mxu0
        %v1196 = vadd.f32 %v877, %v1195
        %v1197 = vpop.f32.mrb[0].mxu0
        %1198 = vmatprep.mubr.bf16.mxu0 0
        %1199 = vmatmul.mubr.bf16.gmra.mrb[0].mxu0 %v1041
        %v1200 = vpop.f32.mrb[0].mxu0
        %v1201 = vadd.f32 %v882, %v1200
        %v1202 = vpop.f32.mrb[0].mxu0
        %v1203 = vpop.f32.mrb[0].mxu0
        %v1204 = vadd.f32 %v885, %v1203
        %v1205 = vpop.f32.mrb[0].mxu0
        %1206 = vdwg.mxu0
        %v1207 = vld [vmem:[%s419] sm:$0xf]
        %v1208 = vld [vmem:[%s419 + $0x4] sm:$0xf]
        %v1209 = vld [vmem:[%s419 + $0x8] sm:$0xf]
        %v1210 = vld [vmem:[%s419 + $0xc] sm:$0xf]
        %v1211 = vld [vmem:[%s419 + $0x10] sm:$0xf]
        %v1212 = vld [vmem:[%s419 + $0x14] sm:$0xf]
        %v1213 = vld [vmem:[%s419 + $0x18] sm:$0xf]
        %v1214 = vld [vmem:[%s419 + $0x1c] sm:$0xf]
        %v1215 = vld [vmem:[%s419 + $0x20] sm:$0xf]
        %v1216 = vld [vmem:[%s419 + $0x24] sm:$0xf]
        %v1217 = vld [vmem:[%s419 + $0x28] sm:$0xf]
        %v1218 = vld [vmem:[%s419 + $0x2c] sm:$0xf]
        %v1219 = vld [vmem:[%s419 + $0x30] sm:$0xf]
        %v1220 = vld [vmem:[%s419 + $0x34] sm:$0xf]
        %v1221 = vld [vmem:[%s419 + $0x38] sm:$0xf]
        %v1222 = vld [vmem:[%s419 + $0x3c] sm:$0xf]
        %v1223 = vld [vmem:[%s419 + $0x40] sm:$0xf]
        %v1224 = vld [vmem:[%s419 + $0x44] sm:$0xf]
        %v1225 = vld [vmem:[%s419 + $0x48] sm:$0xf]
        %v1226 = vld [vmem:[%s419 + $0x4c] sm:$0xf]
        %v1227 = vld [vmem:[%s419 + $0x50] sm:$0xf]
        %v1228 = vld [vmem:[%s419 + $0x54] sm:$0xf]
        %v1229 = vld [vmem:[%s419 + $0x58] sm:$0xf]
        %v1230 = vld [vmem:[%s419 + $0x5c] sm:$0xf]
        %v1231 = vld [vmem:[%s419 + $0x60] sm:$0xf]
        %v1232 = vld [vmem:[%s419 + $0x64] sm:$0xf]
        %v1233 = vld [vmem:[%s419 + $0x68] sm:$0xf]
        %v1234 = vld [vmem:[%s419 + $0x6c] sm:$0xf]
        %v1235 = vld [vmem:[%s419 + $0x70] sm:$0xf]
        %v1236 = vld [vmem:[%s419 + $0x74] sm:$0xf]
        %v1237 = vld [vmem:[%s419 + $0x78] sm:$0xf]
        %v1238 = vld [vmem:[%s419 + $0x7c] sm:$0xf]
        %v1239 = vld [vmem:[#allocation11] sm:$0xf]
        %v1240 = vld [vmem:[#allocation11 + $0x4] sm:$0xf]
        %v1241 = vld [vmem:[#allocation11 + $0x8] sm:$0xf]
        %v1242 = vld [vmem:[#allocation11 + $0xc] sm:$0xf]
        %v1243 = vld [vmem:[#allocation11 + $0x10] sm:$0xf]
        %v1244 = vld [vmem:[#allocation11 + $0x14] sm:$0xf]
        %v1245 = vld [vmem:[#allocation11 + $0x18] sm:$0xf]
        %v1246 = vld [vmem:[#allocation11 + $0x1c] sm:$0xf]
        %v1247 = vld [vmem:[#allocation11 + $0x20] sm:$0xf]
        %v1280 = vunpack.c.l.b16 %v1207
        %v1281 = vunpack.c.l.b16 %v1208
        %v1282 = vunpack.c.l.b16 %v1209
        %v1283 = vunpack.c.l.b16 %v1210
        %v1284 = vunpack.c.l.b16 %v1211
        %v1285 = vunpack.c.l.b16 %v1212
        %v1286 = vunpack.c.l.b16 %v1213
        %v1287 = vunpack.c.l.b16 %v1214
        %v1288 = vunpack.c.l.b16 %v1215
        %v1289 = vunpack.c.l.b16 %v1216
        %v1290 = vunpack.c.l.b16 %v1217
        %v1291 = vunpack.c.l.b16 %v1218
        %v1292 = vunpack.c.l.b16 %v1219
        %v1293 = vunpack.c.l.b16 %v1220
        %v1294 = vunpack.c.l.b16 %v1221
        %v1295 = vunpack.c.l.b16 %v1222
        %v1296 = vunpack.c.l.b16 %v1223
        %v1297 = vunpack.c.l.b16 %v1224
        %v1298 = vunpack.c.l.b16 %v1225
        %v1299 = vunpack.c.l.b16 %v1226
        %v1300 = vunpack.c.l.b16 %v1227
        %v1301 = vunpack.c.l.b16 %v1228
        %v1302 = vunpack.c.l.b16 %v1229
        %v1303 = vunpack.c.l.b16 %v1230
        %v1304 = vunpack.c.l.b16 %v1231
        %v1305 = vunpack.c.l.b16 %v1232
        %v1306 = vunpack.c.l.b16 %v1233
        %v1307 = vunpack.c.l.b16 %v1234
        %v1308 = vunpack.c.l.b16 %v1235
        %v1309 = vunpack.c.l.b16 %v1236
        %v1310 = vunpack.c.l.b16 %v1237
        %v1311 = vunpack.c.l.b16 %v1238
        %v1312 = vpack.c.b16 %v1281, %v1280
        %v1313 = vpack.c.b16 %v1283, %v1282
        %v1314 = vpack.c.b16 %v1285, %v1284
        %v1315 = vpack.c.b16 %v1287, %v1286
        %v1316 = vpack.c.b16 %v1289, %v1288
        %v1317 = vpack.c.b16 %v1291, %v1290
        %v1318 = vpack.c.b16 %v1293, %v1292
        %v1319 = vpack.c.b16 %v1295, %v1294
        %v1320 = vpack.c.b16 %v1297, %v1296
        %v1321 = vpack.c.b16 %v1299, %v1298
        %v1322 = vpack.c.b16 %v1301, %v1300
        %v1323 = vpack.c.b16 %v1303, %v1302
        %v1324 = vpack.c.b16 %v1305, %v1304
        %v1325 = vpack.c.b16 %v1307, %v1306
        %v1326 = vpack.c.b16 %v1309, %v1308
        %v1327 = vpack.c.b16 %v1311, %v1310
        %v1337 = vunpack.c.l.b16 %v1239
        %v1338 = vunpack.c.l.b16 %v1240
        %v1339 = vunpack.c.l.b16 %v1241
        %v1340 = vunpack.c.l.b16 %v1242
        %v1341 = vunpack.c.l.b16 %v1243
        %v1342 = vunpack.c.l.b16 %v1244
        %v1343 = vunpack.c.l.b16 %v1245
        %v1344 = vunpack.c.l.b16 %v1246
        %v1345 = vunpack.c.l.b16 %v1247
        %v1346 = vpack.c.b16 %v1338, %v1337
        %v1347 = vpack.c.b16 %v1340, %v1339
        %v1348 = vpack.c.b16 %v1342, %v1341
        %v1349 = vpack.c.b16 %v1344, %v1343
        %v1350 = vpack.c.b16 %v1345, %v1345
        %v1356 = vsel %vm674, %v1312, 0
        %v1359 = vsel %vm674, %v1313, 0
        %v1362 = vsel %vm674, %v1314, 0
        %v1365 = vsel %vm674, %v1315, 0
        %v1368 = vsel %vm674, %v1316, 0
        %v1371 = vsel %vm674, %v1317, 0
        %v1374 = vsel %vm674, %v1318, 0
        %v1377 = vsel %vm674, %v1319, 0
        %v1380 = vsel %vm674, %v1320, 0
        %v1383 = vsel %vm674, %v1321, 0
        %v1386 = vsel %vm674, %v1322, 0
        %v1389 = vsel %vm674, %v1323, 0
        %v1392 = vsel %vm674, %v1324, 0
        %v1395 = vsel %vm674, %v1325, 0
        %v1398 = vsel %vm674, %v1326, 0
        %v1401 = vsel %vm674, %v1327, 0
        %v1404 = vsel %vm723, %v1350, 0
        %1406 = vmatprep.subr.bf16.mxu0 0
        %1407 = vmatpush1.bf16.msra.mxu0 %v1346
        %1408 = vmatprep.subr.bf16.mxu0 0
        %1409 = vmatpush1.bf16.msra.mxu0 %v1347
        %1410 = vmatprep.subr.bf16.mxu0 0
        %1411 = vmatpush1.bf16.msra.mxu0 %v1348
        %1412 = vmatprep.subr.bf16.mxu0 0
        %1413 = vmatpush1.bf16.msra.mxu0 %v1349
        %1414 = vmatprep.subr.bf16.mxu0 0
        %1415 = vmatpush1.bf16.msra.mxu0 %v1404
        %1416 = vmatprep.subr.bf16.mxu0 0
        %1417 = vmatpush1.bf16.msra.mxu0 0
        %1418 = vmatprep.subr.bf16.mxu0 0
        %1419 = vmatpush1.bf16.msra.mxu0 0
        %1420 = vmatprep.subr.bf16.mxu0 0
        %1421 = vmatpush1.bf16.msra.mxu0 0
        %1422 = vmatprep.subr.bf16.mxu0 0
        %1423 = vmatpush1.bf16.msra.mxu0 0
        %1424 = vmatprep.subr.bf16.mxu0 0
        %1425 = vmatpush1.bf16.msra.mxu0 0
        %1426 = vmatprep.subr.bf16.mxu0 0
        %1427 = vmatpush1.bf16.msra.mxu0 0
        %1428 = vmatprep.subr.bf16.mxu0 0
        %1429 = vmatpush1.bf16.msra.mxu0 0
        %1430 = vmatprep.subr.bf16.mxu0 0
        %1431 = vmatpush1.bf16.msra.mxu0 0
        %1432 = vmatprep.subr.bf16.mxu0 0
        %1433 = vmatpush1.bf16.msra.mxu0 0
        %1434 = vmatprep.subr.bf16.mxu0 0
        %1435 = vmatpush1.bf16.msra.mxu0 0
        %1436 = vmatprep.subr.bf16.mxu0 0
        %1437 = vmatpush1.bf16.msra.mxu0 0
        %1438 = vmatprep.mubr.bf16.mxu0 0
        %1439 = vmatmul.mubr.bf16.gmra.mrb[0].mxu0 %v1356
        %v1440 = vpop.f32.mrb[0].mxu0
        %v1441 = vadd.f32 0.0, %v1440
        %v1442 = vpop.f32.mrb[0].mxu0
        %v1443 = vpop.f32.mrb[0].mxu0
        %v1444 = vadd.f32 0.0, %v1443
        %v1445 = vpop.f32.mrb[0].mxu0
        %1446 = vmatprep.mubr.bf16.mxu0 0
        %1447 = vmatmul.mubr.bf16.gmra.mrb[0].mxu0 %v1359
        %v1448 = vpop.f32.mrb[0].mxu0
        %v1449 = vadd.f32 0.0, %v1448
        %v1450 = vpop.f32.mrb[0].mxu0
        %v1451 = vpop.f32.mrb[0].mxu0
        %v1452 = vadd.f32 0.0, %v1451
        %v1453 = vpop.f32.mrb[0].mxu0
        %1454 = vmatprep.mubr.bf16.mxu0 0
        %1455 = vmatmul.mubr.bf16.gmra.mrb[0].mxu0 %v1362
        %v1456 = vpop.f32.mrb[0].mxu0
        %v1457 = vadd.f32 0.0, %v1456
        %v1458 = vpop.f32.mrb[0].mxu0
        %v1459 = vpop.f32.mrb[0].mxu0
        %v1460 = vadd.f32 0.0, %v1459
        %v1461 = vpop.f32.mrb[0].mxu0
        %1462 = vmatprep.mubr.bf16.mxu0 0
        %1463 = vmatmul.mubr.bf16.gmra.mrb[0].mxu0 %v1365
        %v1464 = vpop.f32.mrb[0].mxu0
        %v1465 = vadd.f32 0.0, %v1464
        %v1466 = vpop.f32.mrb[0].mxu0
        %v1467 = vpop.f32.mrb[0].mxu0
        %v1468 = vadd.f32 0.0, %v1467
        %v1469 = vpop.f32.mrb[0].mxu0
        %1470 = vmatprep.mubr.bf16.mxu0 0
        %1471 = vmatmul.mubr.bf16.gmra.mrb[0].mxu0 %v1368
        %v1472 = vpop.f32.mrb[0].mxu0
        %v1473 = vadd.f32 0.0, %v1472
        %v1474 = vpop.f32.mrb[0].mxu0
        %v1475 = vpop.f32.mrb[0].mxu0
        %v1476 = vadd.f32 0.0, %v1475
        %v1477 = vpop.f32.mrb[0].mxu0
        %1478 = vmatprep.mubr.bf16.mxu0 0
        %1479 = vmatmul.mubr.bf16.gmra.mrb[0].mxu0 %v1371
        %v1480 = vpop.f32.mrb[0].mxu0
        %v1481 = vadd.f32 0.0, %v1480
        %v1482 = vpop.f32.mrb[0].mxu0
        %v1483 = vpop.f32.mrb[0].mxu0
        %v1484 = vadd.f32 0.0, %v1483
        %v1485 = vpop.f32.mrb[0].mxu0
        %1486 = vmatprep.mubr.bf16.mxu0 0
        %1487 = vmatmul.mubr.bf16.gmra.mrb[0].mxu0 %v1374
        %v1488 = vpop.f32.mrb[0].mxu0
        %v1489 = vadd.f32 0.0, %v1488
        %v1490 = vpop.f32.mrb[0].mxu0
        %v1491 = vpop.f32.mrb[0].mxu0
        %v1492 = vadd.f32 0.0, %v1491
        %v1493 = vpop.f32.mrb[0].mxu0
        %1494 = vmatprep.mubr.bf16.mxu0 0
        %1495 = vmatmul.mubr.bf16.gmra.mrb[0].mxu0 %v1377
        %v1496 = vpop.f32.mrb[0].mxu0
        %v1497 = vadd.f32 0.0, %v1496
        %v1498 = vpop.f32.mrb[0].mxu0
        %v1499 = vpop.f32.mrb[0].mxu0
        %v1500 = vadd.f32 0.0, %v1499
        %v1501 = vpop.f32.mrb[0].mxu0
        %1502 = vmatprep.mubr.bf16.mxu0 0
        %1503 = vmatmul.mubr.bf16.gmra.mrb[0].mxu0 %v1380
        %v1504 = vpop.f32.mrb[0].mxu0
        %v1505 = vadd.f32 0.0, %v1504
        %v1506 = vpop.f32.mrb[0].mxu0
        %v1507 = vpop.f32.mrb[0].mxu0
        %v1508 = vadd.f32 0.0, %v1507
        %v1509 = vpop.f32.mrb[0].mxu0
        %1510 = vmatprep.mubr.bf16.mxu0 0
        %1511 = vmatmul.mubr.bf16.gmra.mrb[0].mxu0 %v1383
        %v1512 = vpop.f32.mrb[0].mxu0
        %v1513 = vadd.f32 0.0, %v1512
        %v1514 = vpop.f32.mrb[0].mxu0
        %v1515 = vpop.f32.mrb[0].mxu0
        %v1516 = vadd.f32 0.0, %v1515
        %v1517 = vpop.f32.mrb[0].mxu0
        %1518 = vmatprep.mubr.bf16.mxu0 0
        %1519 = vmatmul.mubr.bf16.gmra.mrb[0].mxu0 %v1386
        %v1520 = vpop.f32.mrb[0].mxu0
        %v1521 = vadd.f32 0.0, %v1520
        %v1522 = vpop.f32.mrb[0].mxu0
        %v1523 = vpop.f32.mrb[0].mxu0
        %v1524 = vadd.f32 0.0, %v1523
        %v1525 = vpop.f32.mrb[0].mxu0
        %1526 = vmatprep.mubr.bf16.mxu0 0
        %1527 = vmatmul.mubr.bf16.gmra.mrb[0].mxu0 %v1389
        %v1528 = vpop.f32.mrb[0].mxu0
        %v1529 = vadd.f32 0.0, %v1528
        %v1530 = vpop.f32.mrb[0].mxu0
        %v1531 = vpop.f32.mrb[0].mxu0
        %v1532 = vadd.f32 0.0, %v1531
        %v1533 = vpop.f32.mrb[0].mxu0
        %1534 = vmatprep.mubr.bf16.mxu0 0
        %1535 = vmatmul.mubr.bf16.gmra.mrb[0].mxu0 %v1392
        %v1536 = vpop.f32.mrb[0].mxu0
        %v1537 = vadd.f32 0.0, %v1536
        %v1538 = vpop.f32.mrb[0].mxu0
        %v1539 = vpop.f32.mrb[0].mxu0
        %v1540 = vadd.f32 0.0, %v1539
        %v1541 = vpop.f32.mrb[0].mxu0
        %1542 = vmatprep.mubr.bf16.mxu0 0
        %1543 = vmatmul.mubr.bf16.gmra.mrb[0].mxu0 %v1395
        %v1544 = vpop.f32.mrb[0].mxu0
        %v1545 = vadd.f32 0.0, %v1544
        %v1546 = vpop.f32.mrb[0].mxu0
        %v1547 = vpop.f32.mrb[0].mxu0
        %v1548 = vadd.f32 0.0, %v1547
        %v1549 = vpop.f32.mrb[0].mxu0
        %1550 = vmatprep.mubr.bf16.mxu0 0
        %1551 = vmatmul.mubr.bf16.gmra.mrb[0].mxu0 %v1398
        %v1552 = vpop.f32.mrb[0].mxu0
        %v1553 = vadd.f32 0.0, %v1552
        %v1554 = vpop.f32.mrb[0].mxu0
        %v1555 = vpop.f32.mrb[0].mxu0
        %v1556 = vadd.f32 0.0, %v1555
        %v1557 = vpop.f32.mrb[0].mxu0
        %1558 = vmatprep.mubr.bf16.mxu0 0
        %1559 = vmatmul.mubr.bf16.gmra.mrb[0].mxu0 %v1401
        %v1560 = vpop.f32.mrb[0].mxu0
        %v1561 = vadd.f32 0.0, %v1560
        %v1562 = vpop.f32.mrb[0].mxu0
        %v1563 = vpop.f32.mrb[0].mxu0
        %v1564 = vadd.f32 0.0, %v1563
        %v1565 = vpop.f32.mrb[0].mxu0
        %1566 = vdwg.mxu0
        %v1567 = vadd.f32 %v1081, %v1441
        %v1568 = vadd.f32 %v1084, %v1444
        %v1569 = vadd.f32 %v1089, %v1449
        %v1570 = vadd.f32 %v1092, %v1452
        %v1571 = vadd.f32 %v1097, %v1457
        %v1572 = vadd.f32 %v1100, %v1460
        %v1573 = vadd.f32 %v1105, %v1465
        %v1574 = vadd.f32 %v1108, %v1468
        %v1575 = vadd.f32 %v1113, %v1473
        %v1576 = vadd.f32 %v1116, %v1476
        %v1577 = vadd.f32 %v1121, %v1481
        %v1578 = vadd.f32 %v1124, %v1484
        %v1579 = vadd.f32 %v1129, %v1489
        %v1580 = vadd.f32 %v1132, %v1492
        %v1581 = vadd.f32 %v1137, %v1497
        %v1582 = vadd.f32 %v1140, %v1500
        %v1583 = vadd.f32 %v1145, %v1505
        %v1584 = vadd.f32 %v1148, %v1508
        %v1585 = vadd.f32 %v1153, %v1513
        %v1586 = vadd.f32 %v1156, %v1516
        %v1587 = vadd.f32 %v1161, %v1521
        %v1588 = vadd.f32 %v1164, %v1524
        %v1589 = vadd.f32 %v1169, %v1529
        %v1590 = vadd.f32 %v1172, %v1532
        %v1591 = vadd.f32 %v1177, %v1537
        %v1592 = vadd.f32 %v1180, %v1540
        %v1593 = vadd.f32 %v1185, %v1545
        %v1594 = vadd.f32 %v1188, %v1548
        %v1595 = vadd.f32 %v1193, %v1553
        %v1596 = vadd.f32 %v1196, %v1556
        %v1597 = vadd.f32 %v1201, %v1561
        %v1598 = vadd.f32 %v1204, %v1564
        %v1599 = vld [vmem:[#allocation13] sm:$0x1]
        %v1601 = vlaneseq
        %v1602 = vshrl.u32 %v1601, 7
        %v1603 = vsub.s32 0, %v1602
        %v1604 = vrot.slane %v1599, %v1603
        %v1606 = vadd.f32 %v1567, %v1604
        %v1607 = vadd.f32 %v1568, %v1604
        %v1608 = vadd.f32 %v1569, %v1604
        %v1609 = vadd.f32 %v1570, %v1604
        %v1610 = vadd.f32 %v1571, %v1604
        %v1611 = vadd.f32 %v1572, %v1604
        %v1612 = vadd.f32 %v1573, %v1604
        %v1613 = vadd.f32 %v1574, %v1604
        %v1614 = vadd.f32 %v1575, %v1604
        %v1615 = vadd.f32 %v1576, %v1604
        %v1616 = vadd.f32 %v1577, %v1604
        %v1617 = vadd.f32 %v1578, %v1604
        %v1618 = vadd.f32 %v1579, %v1604
        %v1619 = vadd.f32 %v1580, %v1604
        %v1620 = vadd.f32 %v1581, %v1604
        %v1621 = vadd.f32 %v1582, %v1604
        %v1622 = vadd.f32 %v1583, %v1604
        %v1623 = vadd.f32 %v1584, %v1604
        %v1624 = vadd.f32 %v1585, %v1604
        %v1625 = vadd.f32 %v1586, %v1604
        %v1626 = vadd.f32 %v1587, %v1604
        %v1627 = vadd.f32 %v1588, %v1604
        %v1628 = vadd.f32 %v1589, %v1604
        %v1629 = vadd.f32 %v1590, %v1604
        %v1630 = vadd.f32 %v1591, %v1604
        %v1631 = vadd.f32 %v1592, %v1604
        %v1632 = vadd.f32 %v1593, %v1604
        %v1633 = vadd.f32 %v1594, %v1604
        %v1634 = vadd.f32 %v1595, %v1604
        %v1635 = vadd.f32 %v1596, %v1604
        %v1636 = vadd.f32 %v1597, %v1604
        %v1637 = vadd.f32 %v1598, %v1604
        %1638 = vst [vmem:[%s475] sm:$0xff] %v1606
        %1639 = vst [vmem:[%s475 + $0x8] sm:$0xff] %v1607
        %1640 = vst [vmem:[%s475 + $0x10] sm:$0xff] %v1608
        %1641 = vst [vmem:[%s475 + $0x18] sm:$0xff] %v1609
        %1642 = vst [vmem:[%s475 + $0x20] sm:$0xff] %v1610
        %1643 = vst [vmem:[%s475 + $0x28] sm:$0xff] %v1611
        %1644 = vst [vmem:[%s475 + $0x30] sm:$0xff] %v1612
        %1645 = vst [vmem:[%s475 + $0x38] sm:$0xff] %v1613
        %1646 = vst [vmem:[%s475 + $0x40] sm:$0xff] %v1614
        %1647 = vst [vmem:[%s475 + $0x48] sm:$0xff] %v1615
        %1648 = vst [vmem:[%s475 + $0x50] sm:$0xff] %v1616
        %1649 = vst [vmem:[%s475 + $0x58] sm:$0xff] %v1617
        %1650 = vst [vmem:[%s475 + $0x60] sm:$0xff] %v1618
        %1651 = vst [vmem:[%s475 + $0x68] sm:$0xff] %v1619
        %1652 = vst [vmem:[%s475 + $0x70] sm:$0xff] %v1620
        %1653 = vst [vmem:[%s475 + $0x78] sm:$0xff] %v1621
        %1654 = vst [vmem:[%s475 + $0x80] sm:$0xff] %v1622
        %1655 = vst [vmem:[%s475 + $0x88] sm:$0xff] %v1623
        %1656 = vst [vmem:[%s475 + $0x90] sm:$0xff] %v1624
        %1657 = vst [vmem:[%s475 + $0x98] sm:$0xff] %v1625
        %1658 = vst [vmem:[%s475 + $0xa0] sm:$0xff] %v1626
        %1659 = vst [vmem:[%s475 + $0xa8] sm:$0xff] %v1627
        %1660 = vst [vmem:[%s475 + $0xb0] sm:$0xff] %v1628
        %1661 = vst [vmem:[%s475 + $0xb8] sm:$0xff] %v1629
        %1662 = vst [vmem:[%s475 + $0xc0] sm:$0xff] %v1630
        %1663 = vst [vmem:[%s475 + $0xc8] sm:$0xff] %v1631
        %1664 = vst [vmem:[%s475 + $0xd0] sm:$0xff] %v1632
        %1665 = vst [vmem:[%s475 + $0xd8] sm:$0xff] %v1633
        %1666 = vst [vmem:[%s475 + $0xe0] sm:$0xff] %v1634
        %1667 = vst [vmem:[%s475 + $0xe8] sm:$0xff] %v1635
        %1668 = vst [vmem:[%s475 + $0xf0] sm:$0xff] %v1636
        %1669 = vst [vmem:[%s475 + $0xf8] sm:$0xff] %v1637
        %p1670 = scmp.eq.s32.totalorder %s33, 0
        // Predicated region
        $region77: #{decoder_block_forward.14} parent=47 // pred_check
          %p1671 = pneg %p1670
        $region78: #{decoder_block_forward.14} parent=47 // pred_check_branch
          %1673 = sbr.rel (%p1671) target = $region80
        $region79: #{decoder_block_forward.14} parent=47 // pred_region
          %1674 = vst [vmem:[#allocation15] sm:$0x1] 0.0
          %1675 = vst [vmem:[#allocation17] sm:$0x1] 0.0
        $region80: #{decoder_block_forward.14} parent=47 // pred_fallthru
          _
        %v1676 = vld [vmem:[#allocation15] sm:$0x1]
        %v1677 = vadd.f32 %v1606, %v1607
        %v1678 = vadd.f32 %v1677, %v1608
        %v1679 = vadd.f32 %v1678, %v1609
        %v1680 = vadd.f32 %v1679, %v1610
        %v1681 = vadd.f32 %v1680, %v1611
        %v1682 = vadd.f32 %v1681, %v1612
        %v1683 = vadd.f32 %v1682, %v1613
        %v1684 = vadd.f32 %v1683, %v1614
        %v1685 = vadd.f32 %v1684, %v1615
        %v1686 = vadd.f32 %v1685, %v1616
        %v1687 = vadd.f32 %v1686, %v1617
        %v1688 = vadd.f32 %v1687, %v1618
        %v1689 = vadd.f32 %v1688, %v1619
        %v1690 = vadd.f32 %v1689, %v1620
        %v1691 = vadd.f32 %v1690, %v1621
        %v1692 = vadd.f32 %v1691, %v1622
        %v1693 = vadd.f32 %v1692, %v1623
        %v1694 = vadd.f32 %v1693, %v1624
        %v1695 = vadd.f32 %v1694, %v1625
        %v1696 = vadd.f32 %v1695, %v1626
        %v1697 = vadd.f32 %v1696, %v1627
        %v1698 = vadd.f32 %v1697, %v1628
        %v1699 = vadd.f32 %v1698, %v1629
        %v1700 = vadd.f32 %v1699, %v1630
        %v1701 = vadd.f32 %v1700, %v1631
        %v1702 = vadd.f32 %v1701, %v1632
        %v1703 = vadd.f32 %v1702, %v1633
        %v1704 = vadd.f32 %v1703, %v1634
        %v1705 = vadd.f32 %v1704, %v1635
        %v1706 = vadd.f32 %v1705, %v1636
        %v1707 = vadd.f32 %v1706, %v1637
        %v1708 = vrot.slane %v1707, 4
        %v1709 = vadd.f32 %v1707, %v1708
        %v1710 = vrot.slane %v1709, 2
        %v1711 = vadd.f32 %v1709, %v1710
        %v1712 = vrot.slane %v1711, 1
        %v1713 = vadd.f32 %v1711, %v1712
        %v1714 = vadd.f32 %v1676, %v1713
        %1715 = vst [vmem:[#allocation15] sm:$0x1] %v1714
        %v1716 = vld [vmem:[#allocation17] sm:$0x1]
        %v1717 = vmul.f32 %v1606, %v1606
        %v1718 = vmul.f32 %v1607, %v1607
        %v1719 = vmul.f32 %v1608, %v1608
        %v1720 = vmul.f32 %v1609, %v1609
        %v1721 = vmul.f32 %v1610, %v1610
        %v1722 = vmul.f32 %v1611, %v1611
        %v1723 = vmul.f32 %v1612, %v1612
        %v1724 = vmul.f32 %v1613, %v1613
        %v1725 = vmul.f32 %v1614, %v1614
        %v1726 = vmul.f32 %v1615, %v1615
        %v1727 = vmul.f32 %v1616, %v1616
        %v1728 = vmul.f32 %v1617, %v1617
        %v1729 = vmul.f32 %v1618, %v1618
        %v1730 = vmul.f32 %v1619, %v1619
        %v1731 = vmul.f32 %v1620, %v1620
        %v1732 = vmul.f32 %v1621, %v1621
        %v1733 = vmul.f32 %v1622, %v1622
        %v1734 = vmul.f32 %v1623, %v1623
        %v1735 = vmul.f32 %v1624, %v1624
        %v1736 = vmul.f32 %v1625, %v1625
        %v1737 = vmul.f32 %v1626, %v1626
        %v1738 = vmul.f32 %v1627, %v1627
        %v1739 = vmul.f32 %v1628, %v1628
        %v1740 = vmul.f32 %v1629, %v1629
        %v1741 = vmul.f32 %v1630, %v1630
        %v1742 = vmul.f32 %v1631, %v1631
        %v1743 = vmul.f32 %v1632, %v1632
        %v1744 = vmul.f32 %v1633, %v1633
        %v1745 = vmul.f32 %v1634, %v1634
        %v1746 = vmul.f32 %v1635, %v1635
        %v1747 = vmul.f32 %v1636, %v1636
        %v1748 = vmul.f32 %v1637, %v1637
        %v1749 = vadd.f32 %v1717, %v1718
        %v1750 = vadd.f32 %v1749, %v1719
        %v1751 = vadd.f32 %v1750, %v1720
        %v1752 = vadd.f32 %v1751, %v1721
        %v1753 = vadd.f32 %v1752, %v1722
        %v1754 = vadd.f32 %v1753, %v1723
        %v1755 = vadd.f32 %v1754, %v1724
        %v1756 = vadd.f32 %v1755, %v1725
        %v1757 = vadd.f32 %v1756, %v1726
        %v1758 = vadd.f32 %v1757, %v1727
        %v1759 = vadd.f32 %v1758, %v1728
        %v1760 = vadd.f32 %v1759, %v1729
        %v1761 = vadd.f32 %v1760, %v1730
        %v1762 = vadd.f32 %v1761, %v1731
        %v1763 = vadd.f32 %v1762, %v1732
        %v1764 = vadd.f32 %v1763, %v1733
        %v1765 = vadd.f32 %v1764, %v1734
        %v1766 = vadd.f32 %v1765, %v1735
        %v1767 = vadd.f32 %v1766, %v1736
        %v1768 = vadd.f32 %v1767, %v1737
        %v1769 = vadd.f32 %v1768, %v1738
        %v1770 = vadd.f32 %v1769, %v1739
        %v1771 = vadd.f32 %v1770, %v1740
        %v1772 = vadd.f32 %v1771, %v1741
        %v1773 = vadd.f32 %v1772, %v1742
        %v1774 = vadd.f32 %v1773, %v1743
        %v1775 = vadd.f32 %v1774, %v1744
        %v1776 = vadd.f32 %v1775, %v1745
        %v1777 = vadd.f32 %v1776, %v1746
        %v1778 = vadd.f32 %v1777, %v1747
        %v1779 = vadd.f32 %v1778, %v1748
        %v1780 = vrot.slane %v1779, 4
        %v1781 = vadd.f32 %v1779, %v1780
        %v1782 = vrot.slane %v1781, 2
        %v1783 = vadd.f32 %v1781, %v1782
        %v1784 = vrot.slane %v1783, 1
        %v1785 = vadd.f32 %v1783, %v1784
        %v1786 = vadd.f32 %v1716, %v1785
        %1787 = vst [vmem:[#allocation17] sm:$0x1] %v1786
        %s1788 = sand.u32 %s203, 1
        %s1789 = scalar_lea.sflag [#allocation4], %s1788
        %s1790 = sand.u32 %s203, 1
        %s1791 = smul.addr %s1790, 256
        %s1792 = scalar_lea.vmem [#allocation14], %s1791
        // Predicated region
        $region81: #{decoder_block_forward.14} parent=47 // pred_check
          %p1793 = pneg %p213
        $region82: #{decoder_block_forward.14} parent=47 // pred_check_branch
          %1795 = sbr.rel (%p1793) target = $region84
        $region83: #{decoder_block_forward.14} parent=47 // pred_region
          %s1796 = smul.u32 32, %s33
          %s1798 = ssub.s32 4096, 4096
          %1799 = vsyncadd %s1789, %s1798
          %s1800 = smul.addr %s1796, 128
          %s1801 = scalar_lea.hbm %s7, %s1800
          %s1802 = sshll.u32 %s1792, 4
          %s1803 = int_to_ptr.vmem [resolvable:$true] %s1802
          %1808 = dma.vmem_to_hbm [thread:$0]  %s1803, 4096, %s1801, %s1789, 128, 128, 8
        $region84: #{decoder_block_forward.14} parent=47 // pred_fallthru
          _
        // Predicated region
        $region85: #{decoder_block_forward.14} parent=47 // pred_check
          %p1809 = pneg %p234
        $region86: #{decoder_block_forward.14} parent=47 // pred_check_branch
          %1811 = sbr.rel (%p1809) target = $region88
        $region87: #{decoder_block_forward.14} parent=47 // pred_region
          %s1813 = ssub.s32 16, 16
          %1814 = vsyncadd [#allocation16], %s1813
          %s1816 = sshll.u32 [#allocation15], 4
          %s1817 = int_to_ptr.vmem [resolvable:$true] %s1816
          %1819 = dma.vmem_to_hbm [thread:$0]  %s1817, 16, %s8, [#allocation16]
        $region88: #{decoder_block_forward.14} parent=47 // pred_fallthru
          _
        // Predicated region
        $region89: #{decoder_block_forward.14} parent=47 // pred_check
          %p1820 = pneg %p255
        $region90: #{decoder_block_forward.14} parent=47 // pred_check_branch
          %1822 = sbr.rel (%p1820) target = $region92
        $region91: #{decoder_block_forward.14} parent=47 // pred_region
          %s1824 = ssub.s32 16, 16
          %1825 = vsyncadd [#allocation16], %s1824
          %s1827 = sshll.u32 [#allocation17], 4
          %s1828 = int_to_ptr.vmem [resolvable:$true] %s1827
          %1830 = dma.vmem_to_hbm [thread:$0]  %s1828, 16, %s9, [#allocation16]
        $region92: #{decoder_block_forward.14} parent=47 // pred_fallthru
          _
        // Predicated region
        $region93: #{decoder_block_forward.14} parent=47 // pred_check
          %p1831 = pneg %p234
        $region94: #{decoder_block_forward.14} parent=47 // pred_check_branch
          %1833 = sbr.rel (%p1831) target = $region96
        $region95: #{decoder_block_forward.14} parent=47 // pred_region
          %1834 = dma.done [#allocation16], 16
        $region96: #{decoder_block_forward.14} parent=47 // pred_fallthru
          _
        // Predicated region
        $region97: #{decoder_block_forward.14} parent=47 // pred_check
          %p1835 = pneg %p255
        $region98: #{decoder_block_forward.14} parent=47 // pred_check_branch
          %1837 = sbr.rel (%p1835) target = $region100
        $region99: #{decoder_block_forward.14} parent=47 // pred_region
          %1838 = dma.done [#allocation16], 16
        $region100: #{decoder_block_forward.14} parent=47 // pred_fallthru
          _
      $region48: #{decoder_block_forward.14} parent=5 // pred_fallthru
        _
      %p1839 = scmp.le.s32.totalorder 2, %s28
      // Predicated region
      $region101: #{decoder_block_forward.14} parent=5 // pred_check
        %p1840 = pneg %p1839
      $region102: #{decoder_block_forward.14} parent=5 // pred_check_branch
        %1842 = sbr.rel (%p1840) target = $region104
      $region103: #{decoder_block_forward.14} parent=5 // pred_region
        %s1843 = ssub.s32 %s28, 2
        // Predicated region
        $region105: #{decoder_block_forward.14} parent=103 // pred_check
          %p1844 = pneg %p219
        $region106: #{decoder_block_forward.14} parent=103 // pred_check_branch
          %1846 = sbr.rel (%p1844) target = $region108
        $region107: #{decoder_block_forward.14} parent=103 // pred_region
          %s1847 = sand.u32 %s204, 1
          %s1848 = scalar_lea.sflag [#allocation4], %s1847
          %s1849 = sand.u32 %s204, 1
          %s1850 = smul.addr %s1849, 256
          %s1851 = scalar_lea.vmem [#allocation14], %s1850
          %1852 = dma.done %s1848, 4096
        $region108: #{decoder_block_forward.14} parent=103 // pred_fallthru
          _
      $region104: #{decoder_block_forward.14} parent=5 // pred_fallthru
        _
    $region6: #{decoder_block_forward.14} parent=1 // loop_footer
      %s32 = sadd.s32 1, %s28
    $region7: #{decoder_block_forward.14} parent=1 // loop_footer_branch
      %27 = sbr.rel target = $region3
    $region8: #{decoder_block_forward.14} parent=1 // loop_exit
      _
    %1853 = vsyncpa [#allocation3], 1
    %s1854 = scalar_lea.sflag [#allocation3], 1
    %1855 = vsyncpa %s1854, 1
    %1856 = vsyncpa [#allocation6], 1
    %s1857 = scalar_lea.sflag [#allocation6], 1
    %1858 = vsyncpa %s1857, 1
    %1859 = vsyncpa [#allocation9], 1
    %1860 = vsyncpa [#allocation12], 1
    %1861 = vsyncpa [#allocation4], 1
    %s1862 = scalar_lea.sflag [#allocation4], 1
    %1863 = vsyncpa %s1862, 1
    %1864 = vsyncpa [#allocation16], 1

</llo_original>
